<compile_context>
chip_gen: v6e
topology: v6e:2x2x1
jax: 0.10.0
libtpu: 0.0.40
codegen_flags: <defaults>
</compile_context>

<pallas_src>
import math
import jax
import jax.numpy as jnp
from jax.experimental import pallas as pl
from jax.experimental.pallas import tpu as pltpu

# ---------------- small synthetic CLIP config ----------------
PATCH = 4
HIDDEN = 32
HEADS = 2
HEAD_DIM = HIDDEN // HEADS
INTER = 64
LAYERS = 3
EPS = 1e-5
SELECT_LAYER = -2          # args.mm_vision_select_layer (LLaVA default)
S2_SCALES = [8, 16, 24]    # scaled-down analogue of '336,672,1008'
SPLIT = 8                  # s2_split_size = smallest scale
CIN = 3
GRID_SIDE = SPLIT // PATCH                 # 2 patches per side per tile
NUM_PATCHES = GRID_SIDE * GRID_SIDE        # 4
SEQ = NUM_PATCHES + 1                      # 5 (cls + patches)
SEQ_PAD = 8                                # pad 5 -> 8 so per-tile seq dim is sublane aligned
PATCH_DIM = CIN * PATCH * PATCH            # 48

# hidden_states has LAYERS+1 entries; hidden_states[SELECT_LAYER] only needs this many layers:
LAYERS_USED = SELECT_LAYER % (LAYERS + 1)  # = 2 for select_layer=-2 (skip unused last layer)
NVEC = 10                                  # packed per-layer vector rows (see pack_params)


# ---------------- fused Pallas kernel ----------------
def clip_tower_kernel(tok_ref, addc_ref, pw_ref, embv_ref,
                      wqkv_ref, wo_ref, w1_ref, w2_ref, vecs_ref,
                      out_ref, h_ref):
    """One (tile-block, layer) grid step of the fused CLIP tower.

    Grid = (tile_blocks, LAYERS_USED).  Activations persist in h_ref (VMEM scratch) across the
    layer axis; layer weights are streamed one layer per grid step.

    tok_ref  : (ROWS, PATCH_DIM)  ROWS = tiles_blk*SEQ_PAD; cls + pad rows are zero placeholders
    addc_ref : (SEQ_PAD, D)       cls token + position embedding per token slot (pad rows zero)
    pw_ref   : (PATCH_DIM, D)     flattened conv patch-embed weight (bf16)
    embv_ref : (2, D)             [pre_layrnorm gamma; beta]
    wqkv_ref : (D, 3D)            this layer's fused q/k/v projection (bf16)
    wo_ref   : (D, D)             this layer's out projection (bf16)
    w1_ref   : (D, INTER)         mlp fc1 (bf16)
    w2_ref   : (INTER, D)         mlp fc2 (bf16)
    vecs_ref : (NVEC, INTER)      this layer's packed LN/bias vectors (f32)
    out_ref  : (ROWS, D)          hidden_states[select_layer] rows (written at last layer step)
    h_ref    : (ROWS, D) scratch  residual stream
    """
    ROWS = tok_ref.shape[0]
    TB = ROWS // SEQ_PAD
    l = pl.program_id(1)
    bf16, f32 = jnp.bfloat16, jnp.float32

    def ln(x, g, b):
        mu = jnp.mean(x, axis=-1, keepdims=True)
        var = jnp.mean((x - mu) ** 2, axis=-1, keepdims=True)
        return (x - mu) * jax.lax.rsqrt(var + EPS) * g + b

    # --- embeddings: patch conv (one big matmul) + cls/pos + pre-LN, first layer step only ---
    @pl.when(l == 0)
    def _():
        emb = jnp.dot(tok_ref[...].astype(bf16), pw_ref[...],
                      preferred_element_type=f32)                      # (ROWS, D)
        x = emb + jnp.tile(addc_ref[...], (TB, 1))                     # broadcast cls+pos rows
        embv = embv_ref[...]
        h_ref[...] = ln(x, embv[0:1, :], embv[1:2, :])

    h = h_ref[...]

    # --- unpack this layer's packed LN/bias vectors ---
    vec = vecs_ref[...]                                                # (NVEC, INTER)
    ln1_g, ln1_b = vec[0:1, :HIDDEN], vec[1:2, :HIDDEN]
    bq, bk, bv = vec[2:3, :HIDDEN], vec[3:4, :HIDDEN], vec[4:5, :HIDDEN]
    bo = vec[5:6, :HIDDEN]
    ln2_g, ln2_b = vec[6:7, :HIDDEN], vec[7:8, :HIDDEN]
    b2 = vec[8:9, :HIDDEN]
    b1 = vec[9:10, :]                                                  # (1, INTER)

    # key-pad mask for the 3 padded token slots per tile, generated in-kernel (no HBM mask).
    kidx = jax.lax.broadcasted_iota(jnp.int32, (SEQ_PAD, SEQ_PAD), 1)
    neg_mask = jnp.where(kidx < SEQ, 0.0, -1e30).astype(f32)           # (SEQ_PAD, SEQ_PAD)

    scale = HEAD_DIM ** -0.5

    # --- LN1 + fused QKV projection over the whole flattened tile batch ---
    xn = ln(h, ln1_g, ln1_b)
    qkv = jnp.dot(xn.astype(bf16), wqkv_ref[...],
                  preferred_element_type=f32)                          # (ROWS, 3D)
    q = (qkv[:, 0:HIDDEN] + bq) * scale                                # CLIP scales q after bias
    k = qkv[:, HIDDEN:2 * HIDDEN] + bk
    v = qkv[:, 2 * HIDDEN:3 * HIDDEN] + bv

    # --- per-tile batched multi-head attention (O(tiles * SEQ_PAD^2)) ---
    q3 = q.reshape(TB, SEQ_PAD, HIDDEN)
    k3 = k.reshape(TB, SEQ_PAD, HIDDEN)
    v3 = v.reshape(TB, SEQ_PAD, HIDDEN)
    wo = wo_ref[...]
    attn = None
    for hh in range(HEADS):
        sl = slice(hh * HEAD_DIM, (hh + 1) * HEAD_DIM)
        s = jnp.einsum('bqd,bkd->bqk',
                       q3[:, :, sl].astype(bf16), k3[:, :, sl].astype(bf16),
                       preferred_element_type=f32)                     # (TB, SP, SP) f32
        s = s + neg_mask[None, :, :]
        s = s - jnp.max(s, axis=-1, keepdims=True)
        e = jnp.exp(s)
        p = e / jnp.sum(e, axis=-1, keepdims=True)                     # exact softmax (f32)
        o = jnp.einsum('bqk,bkd->bqd', p.astype(bf16), v3[:, :, sl].astype(bf16),
                       preferred_element_type=f32)                     # (TB, SP, HD)
        # project each head by its own rows of Wo and sum -> no lane-axis concat needed.
        part = jnp.dot(o.reshape(ROWS, HEAD_DIM).astype(bf16), wo[sl, :],
                       preferred_element_type=f32)                     # (ROWS, D)
        attn = part if attn is None else attn + part
    h = h + attn + bo

    # --- LN2 + MLP (quick_gelu as in CLIP) ---
    x2 = ln(h, ln2_g, ln2_b)
    f = jnp.dot(x2.astype(bf16), w1_ref[...], preferred_element_type=f32) + b1
    f = f * jax.nn.sigmoid(1.702 * f)
    f = jnp.dot(f.astype(bf16), w2_ref[...], preferred_element_type=f32) + b2
    h = h + f

    h_ref[...] = h

    # TODO(synk): output lane width is HIDDEN=32 (<128) so this store is lane-masked; at real
    # CLIP sizes (D>=768) it becomes lane-dense automatically.
    @pl.when(l == pl.num_programs(1) - 1)
    def _():
        out_ref[...] = h


def clip_tower_fused(tok_flat, pk, num_blocks, rows_blk):
    total_rows = tok_flat.shape[0]
    return pl.pallas_call(
        clip_tower_kernel,
        out_shape=jax.ShapeDtypeStruct((total_rows, HIDDEN), jnp.float32),
        grid=(num_blocks, LAYERS_USED),
        in_specs=[
            pl.BlockSpec((rows_blk, PATCH_DIM), lambda i, l: (i, 0)),          # tokens (blocked)
            pl.BlockSpec((SEQ_PAD, HIDDEN), lambda i, l: (0, 0)),              # cls+pos constant
            pl.BlockSpec((PATCH_DIM, HIDDEN), lambda i, l: (0, 0)),            # patch-embed W
            pl.BlockSpec((2, HIDDEN), lambda i, l: (0, 0)),                    # pre-LN gamma/beta
            pl.BlockSpec((None, HIDDEN, 3 * HIDDEN), lambda i, l: (l, 0, 0)),  # Wqkv[l] streamed
            pl.BlockSpec((None, HIDDEN, HIDDEN), lambda i, l: (l, 0, 0)),      # Wo[l]
            pl.BlockSpec((None, HIDDEN, INTER), lambda i, l: (l, 0, 0)),       # W1[l]
            pl.BlockSpec((None, INTER, HIDDEN), lambda i, l: (l, 0, 0)),       # W2[l]
            pl.BlockSpec((None, NVEC, INTER), lambda i, l: (l, 0, 0)),         # packed biases/LN
        ],
        out_specs=pl.BlockSpec((rows_blk, HIDDEN), lambda i, l: (i, 0)),
        scratch_shapes=[pltpu.VMEM((rows_blk, HIDDEN), jnp.float32)],          # residual stream
        compiler_params=pltpu.CompilerParams(
            dimension_semantics=("parallel", "arbitrary")),
    )(tok_flat, pk['addc_base'], pk['patch_w'], pk['emb_vec'],
      pk['wqkv'], pk['wo'], pk['w1'], pk['w2'], pk['vecs'])


# ---------------- glue (plain JAX) ----------------
def _num_tile_blocks(num_tiles):
    """1 block on single-core chips (v5e/v6e); 2 'parallel' blocks on v7x (2 TensorCores)."""
    try:
        kind = jax.devices()[0].device_kind.lower()
    except Exception:
        kind = ""
    if (('v7' in kind) or ('7x' in kind)) and num_tiles >= 2:
        return 2
    return 1


def extract_patches(x):
    """NCHW image tile -> (B, num_patches, C*P*P) patch rows (matches conv flatten order)."""
    B, C, H, W = x.shape
    gh, gw = H // PATCH, W // PATCH
    x = x.reshape(B, C, gh, PATCH, gw, PATCH)
    x = x.transpose(0, 2, 4, 1, 3, 5)               # (B, gh, gw, C, P, P)
    return x.reshape(B, gh * gw, C * PATCH * PATCH)


def forward_feature(pk, images):
    """CLIPVisionTowerS2.forward_feature: ViT + hidden_states[select_layer][:, 1:] ('patch')."""
    T = images.shape[0]
    patches = extract_patches(images)                                   # (T, Np, C*P*P)
    # cls slot gets a zero patch row (its value lives in the additive constant); 3 zero pad rows.
    tok = jnp.concatenate(
        [jnp.zeros((T, 1, PATCH_DIM), jnp.float32), patches,
         jnp.zeros((T, SEQ_PAD - SEQ, PATCH_DIM), jnp.float32)], axis=1)  # (T, SEQ_PAD, PD)

    num_blocks = _num_tile_blocks(T)
    tiles_blk = -(-T // num_blocks)
    T_pad = num_blocks * tiles_blk
    if T_pad > T:
        tok = jnp.concatenate(
            [tok, jnp.zeros((T_pad - T, SEQ_PAD, PATCH_DIM), jnp.float32)], axis=0)

    rows_blk = tiles_blk * SEQ_PAD                                      # multiple of 8 by design
    tok_flat = tok.reshape(T_pad * SEQ_PAD, PATCH_DIM)

    out = clip_tower_fused(tok_flat, pk, num_blocks, rows_blk)
    h = out.reshape(T_pad, SEQ_PAD, HIDDEN)
    return h[:T, 1:SEQ, :]                              # drop cls, drop seq/tile padding


def split_chessboard(x, num_split):
    B, C, H, W = x.shape
    h, w = H // num_split, W // num_split
    tiles = [x[:, :, i * h:(i + 1) * h, j * w:(j + 1) * w]
             for i in range(num_split) for j in range(num_split)]
    return jnp.concatenate(tiles, axis=0)


def merge_chessboard(x, num_split):
    B = x.shape[0]
    b = B // (num_split ** 2)
    rows = []
    for i in range(num_split):
        rows.append(jnp.concatenate(
            [x[(i * num_split + j) * b:(i * num_split + j + 1) * b] for j in range(num_split)],
            axis=-1))
    return jnp.concatenate(rows, axis=-2)


def area_downsample(x, out_size):
    """F.interpolate(mode='area') for integer factors = average pooling."""
    B, C, H, W = x.shape
    k = H // out_size
    return x.reshape(B, C, out_size, k, out_size, k).mean(axis=(3, 5))


def multiscale_forward(forward_fn, images, img_sizes, max_split_size):
    """s2wrapper.forward (output_shape='bnc', num_prefix_token=0, resize_output_to_idx=0).

    All scales' tiles are concatenated and pushed through ONE fused kernel pass.
    """
    b, c, _, _ = images.shape
    num_splits = [math.ceil(s / max_split_size) for s in img_sizes]

    tiles, counts = [], []
    for size, ns in zip(img_sizes, num_splits):
        # TODO(synk): jax.image.resize 'cubic' approximates torch F.interpolate bicubic
        # (align_corners=False); outputs are not bit-identical to the PyTorch tower.
        x = jax.image.resize(images.astype(jnp.float32), (b, c, size, size), method='cubic')
        x = split_chessboard(x, ns)                   # (ns*ns*b, C, split, split)
        tiles.append(x)
        counts.append(x.shape[0])

    all_tiles = jnp.concatenate(tiles, axis=0)        # (sum ns^2 * b, C, split, split)
    feats_all = forward_fn(all_tiles)                 # single fused ViT pass

    outs, off = [], 0
    for ns, cnt in zip(num_splits, counts):
        feat = feats_all[off:off + cnt]               # (cnt, n, D)
        off += cnt
        n, d = feat.shape[1], feat.shape[2]
        g = int(round(math.sqrt(n)))
        feat = jnp.transpose(feat, (0, 2, 1)).reshape(cnt, d, g, g)   # b (h w) c -> b c h w
        outs.append(merge_chessboard(feat, ns))       # (b, D, g*ns, g*ns)

    out_size = outs[0].shape[-2]
    out = jnp.concatenate([area_downsample(o, out_size) for o in outs], axis=1)
    B, Cc, Hh, Ww = out.shape
    return out.transpose(0, 2, 3, 1).reshape(B, Hh * Ww, Cc)   # b c h w -> b (h w) c


# ---------------- deterministic parameter init + packing ----------------
def init_params(key):
    keys = jax.random.split(key, 3 + LAYERS)

    def nrm(k, shape, s=0.02):
        return jax.random.normal(k, shape, jnp.float32) * s

    params = {
        'patch_w': nrm(keys[0], (PATCH_DIM, HIDDEN)),         # conv weight flattened, no bias
        'cls': nrm(keys[1], (1, HIDDEN)),
        'pos': nrm(keys[2], (SEQ, HIDDEN)),
        'pre_g': jnp.ones((1, HIDDEN), jnp.float32),
        'pre_b': jnp.zeros((1, HIDDEN), jnp.float32),
        'layers': [],
    }
    for l in range(LAYERS):
        lk = jax.random.split(keys[3 + l], 6)
        params['layers'].append({
            'ln1_g': jnp.ones((1, HIDDEN), jnp.float32), 'ln1_b': jnp.zeros((1, HIDDEN), jnp.float32),
            'wq': nrm(lk[0], (HIDDEN, HIDDEN)), 'bq': jnp.zeros((1, HIDDEN), jnp.float32),
            'wk': nrm(lk[1], (HIDDEN, HIDDEN)), 'bk': jnp.zeros((1, HIDDEN), jnp.float32),
            'wv': nrm(lk[2], (HIDDEN, HIDDEN)), 'bv': jnp.zeros((1, HIDDEN), jnp.float32),
            'wo': nrm(lk[3], (HIDDEN, HIDDEN)), 'bo': jnp.zeros((1, HIDDEN), jnp.float32),
            'ln2_g': jnp.ones((1, HIDDEN), jnp.float32), 'ln2_b': jnp.zeros((1, HIDDEN), jnp.float32),
            'w1': nrm(lk[4], (HIDDEN, INTER)), 'b1': jnp.zeros((1, INTER), jnp.float32),
            'w2': nrm(lk[5], (INTER, HIDDEN)), 'b2': jnp.zeros((1, HIDDEN), jnp.float32),
        })
    return params


def pack_params(params):
    """Pack PyTorch-style per-layer params into the fused kernel's streamed layout.

    Weight matrices are stored bf16 (MXU operands); LN/bias vectors stay f32.
    """
    assert INTER >= HIDDEN
    bf16 = jnp.bfloat16
    cls, pos = params['cls'], params['pos']
    # additive embedding constant per token slot: cls row = cls + pos[0]; patch rows = pos[1:];
    # padded slots (SEQ..SEQ_PAD-1) = 0 so pad rows stay exactly zero before pre-LN.
    addc_rows = jnp.concatenate([cls + pos[0:1], pos[1:]], axis=0)                 # (SEQ, D)
    addc_base = jnp.concatenate(
        [addc_rows, jnp.zeros((SEQ_PAD - SEQ, HIDDEN), jnp.float32)], axis=0)      # (SEQ_PAD, D)
    emb_vec = jnp.concatenate([params['pre_g'], params['pre_b']], axis=0)          # (2, D)

    pad = jnp.zeros((1, INTER - HIDDEN), jnp.float32)

    def r64(v):
        return jnp.concatenate([v, pad], axis=1)

    wqkv, wo, w1, w2, vecs = [], [], [], [], []
    for lp in params['layers'][:LAYERS_USED]:
        wqkv.append(jnp.concatenate([lp['wq'], lp['wk'], lp['wv']], axis=1))       # (D, 3D)
        wo.append(lp['wo'])
        w1.append(lp['w1'])
        w2.append(lp['w2'])
        vecs.append(jnp.concatenate([
            r64(lp['ln1_g']), r64(lp['ln1_b']), r64(lp['bq']), r64(lp['bk']),
            r64(lp['bv']), r64(lp['bo']), r64(lp['ln2_g']), r64(lp['ln2_b']),
            r64(lp['b2']), lp['b1']], axis=0))                                     # (NVEC, INTER)

    return {
        'patch_w': params['patch_w'].astype(bf16),
        'emb_vec': emb_vec,
        'addc_base': addc_base,
        'wqkv': jnp.stack(wqkv).astype(bf16),
        'wo': jnp.stack(wo).astype(bf16),
        'w1': jnp.stack(w1).astype(bf16),
        'w2': jnp.stack(w2).astype(bf16),
        'vecs': jnp.stack(vecs),
    }


# ---------------- main ----------------
if __name__ == "__main__":
    key = jax.random.PRNGKey(0)
    pkey, ikey = jax.random.split(key)
    params = init_params(pkey)
    packed = pack_params(params)

    # PyTorch-style NCHW input images
    images = jax.random.normal(ikey, (2, 3, 16, 16), jnp.float32)

    @jax.jit
    def tower_forward(imgs):
        return multiscale_forward(lambda x: forward_feature(packed, x),
                                  imgs, S2_SCALES, SPLIT)

    out = tower_forward(images)
    jax.block_until_ready(out)

    expected = (2, NUM_PATCHES, HIDDEN * len(S2_SCALES))   # hidden_size = D * num_scales
    assert out.shape == expected, (out.shape, expected)
    assert bool(jnp.all(jnp.isfinite(out)))
    print("KERNEL_OK")
</pallas_src>

<mosaic_0001>
module attributes {stable_mosaic.version = 11 : i64} {
  func.func @clip_tower_kernel(%arg0: i32, %arg1: i32, %arg2: memref<224x48xf32, #tpu.memory_space<vmem>>, %arg3: memref<8x32xf32, #tpu.memory_space<vmem>>, %arg4: memref<48x32xbf16, #tpu.memory_space<vmem>>, %arg5: memref<2x32xf32, #tpu.memory_space<vmem>>, %arg6: memref<1x32x96xbf16, #tpu.memory_space<vmem>>, %arg7: memref<1x32x32xbf16, #tpu.memory_space<vmem>>, %arg8: memref<1x32x64xbf16, #tpu.memory_space<vmem>>, %arg9: memref<1x64x32xbf16, #tpu.memory_space<vmem>>, %arg10: memref<1x10x64xf32, #tpu.memory_space<vmem>>, %arg11: memref<224x32xf32, #tpu.memory_space<vmem>>, %arg12: memref<224x32xf32, #tpu.memory_space<vmem>>) attributes {dimension_semantics = [#tpu.dimension_semantics<parallel>, #tpu.dimension_semantics<arbitrary>], iteration_bounds = array<i64: 1, 2>, scalar_prefetch = 0 : i64, scratch_operands = 1 : i64, tpu.core_type = #tpu.core_type<tc>, window_params = [{transform_indices = @transform_0, window_bounds = array<i64: 224, 48>}, {pipeline_mode = #tpu.pipeline_mode<synchronous>, transform_indices = @transform_1, window_bounds = array<i64: 8, 32>}, {pipeline_mode = #tpu.pipeline_mode<synchronous>, transform_indices = @transform_2, window_bounds = array<i64: 48, 32>}, {pipeline_mode = #tpu.pipeline_mode<synchronous>, transform_indices = @transform_3, window_bounds = array<i64: 2, 32>}, {transform_indices = @transform_4, window_bounds = array<i64: 1, 32, 96>}, {transform_indices = @transform_5, window_bounds = array<i64: 1, 32, 32>}, {transform_indices = @transform_6, window_bounds = array<i64: 1, 32, 64>}, {transform_indices = @transform_7, window_bounds = array<i64: 1, 64, 32>}, {transform_indices = @transform_8, window_bounds = array<i64: 1, 10, 64>}, {transform_indices = @transform_9, window_bounds = array<i64: 224, 32>}]} {
    %c0_i32 = arith.constant 0 : i32
    %0 = arith.cmpi eq, %arg1, %c0_i32 : i32
    %1 = arith.extui %0 : i1 to i32
    %c0_i32_0 = arith.constant 0 : i32
    %2 = arith.cmpi ne, %1, %c0_i32_0 : i32
    scf.if %2 {
      %c0_47 = arith.constant 0 : index
      %c0_48 = arith.constant 0 : index
      %165 = vector.load %arg2[%c0_47, %c0_48] : memref<224x48xf32, #tpu.memory_space<vmem>>, vector<224x48xf32>
      %166 = arith.truncf %165 : vector<224x48xf32> to vector<224x48xbf16>
      %c0_49 = arith.constant 0 : index
      %c0_50 = arith.constant 0 : index
      %167 = vector.load %arg4[%c0_49, %c0_50] : memref<48x32xbf16, #tpu.memory_space<vmem>>, vector<48x32xbf16>
      %cst_51 = arith.constant dense<0.000000e+00> : vector<224x32xf32>
      %168 = tpu.matmul %166, %167, %cst_51 {dimension_numbers = #tpu.dot_dimension_numbers<[1], [0], [0], [1], [0, 0, 1, 1], [], []>} : vector<224x48xbf16>, vector<48x32xbf16>, vector<224x32xf32> -> vector<224x32xf32>
      %c0_52 = arith.constant 0 : index
      %c0_53 = arith.constant 0 : index
      %169 = vector.load %arg3[%c0_52, %c0_53] : memref<8x32xf32, #tpu.memory_space<vmem>>, vector<8x32xf32>
      %170 = tpu.concatenate %169, %169, %169, %169, %169, %169, %169, %169, %169, %169, %169, %169, %169, %169, %169, %169, %169, %169, %169, %169, %169, %169, %169, %169, %169, %169, %169, %169 in 0 : vector<8x32xf32>, vector<8x32xf32>, vector<8x32xf32>, vector<8x32xf32>, vector<8x32xf32>, vector<8x32xf32>, vector<8x32xf32>, vector<8x32xf32>, vector<8x32xf32>, vector<8x32xf32>, vector<8x32xf32>, vector<8x32xf32>, vector<8x32xf32>, vector<8x32xf32>, vector<8x32xf32>, vector<8x32xf32>, vector<8x32xf32>, vector<8x32xf32>, vector<8x32xf32>, vector<8x32xf32>, vector<8x32xf32>, vector<8x32xf32>, vector<8x32xf32>, vector<8x32xf32>, vector<8x32xf32>, vector<8x32xf32>, vector<8x32xf32>, vector<8x32xf32> -> vector<224x32xf32>
      %171 = arith.addf %168, %170 : vector<224x32xf32>
      %c0_54 = arith.constant 0 : index
      %c0_55 = arith.constant 0 : index
      %172 = vector.load %arg5[%c0_54, %c0_55] : memref<2x32xf32, #tpu.memory_space<vmem>>, vector<2x32xf32>
      %173 = vector.extract_strided_slice %172 {offsets = [0, 0], sizes = [1, 32], strides = [1, 1]} : vector<2x32xf32> to vector<1x32xf32>
      %174 = vector.extract_strided_slice %172 {offsets = [1, 0], sizes = [1, 32], strides = [1, 1]} : vector<2x32xf32> to vector<1x32xf32>
      %cst_56 = arith.constant dense<0.000000e+00> : vector<224xf32>
      %175 = vector.multi_reduction <add>, %171, %cst_56 [1] : vector<224x32xf32> to vector<224xf32>
      %176 = vector.shape_cast %175 : vector<224xf32> to vector<224x1xf32>
      %cst_57 = arith.constant 3.200000e+01 : f32
      %177 = vector.broadcast %cst_57 : f32 to vector<224x1xf32>
      %178 = arith.divf %176, %177 : vector<224x1xf32>
      %179 = vector.broadcast %178 : vector<224x1xf32> to vector<224x32xf32>
      %180 = arith.subf %171, %179 : vector<224x32xf32>
      %181 = arith.mulf %180, %180 : vector<224x32xf32>
      %cst_58 = arith.constant dense<0.000000e+00> : vector<224xf32>
      %182 = vector.multi_reduction <add>, %181, %cst_58 [1] : vector<224x32xf32> to vector<224xf32>
      %183 = vector.shape_cast %182 : vector<224xf32> to vector<224x1xf32>
      %cst_59 = arith.constant 3.200000e+01 : f32
      %184 = vector.broadcast %cst_59 : f32 to vector<224x1xf32>
      %185 = arith.divf %183, %184 : vector<224x1xf32>
      %186 = vector.broadcast %178 : vector<224x1xf32> to vector<224x32xf32>
      %187 = arith.subf %171, %186 : vector<224x32xf32>
      %cst_60 = arith.constant 9.99999974E-6 : f32
      %188 = vector.broadcast %cst_60 : f32 to vector<224x1xf32>
      %189 = arith.addf %185, %188 : vector<224x1xf32>
      %190 = math.rsqrt %189 : vector<224x1xf32>
      %191 = vector.broadcast %190 : vector<224x1xf32> to vector<224x32xf32>
      %192 = arith.mulf %187, %191 : vector<224x32xf32>
      %193 = vector.broadcast %173 : vector<1x32xf32> to vector<224x32xf32>
      %194 = arith.mulf %192, %193 : vector<224x32xf32>
      %195 = vector.broadcast %174 : vector<1x32xf32> to vector<224x32xf32>
      %196 = arith.addf %194, %195 : vector<224x32xf32>
      %c0_61 = arith.constant 0 : index
      %c0_62 = arith.constant 0 : index
      %197 = vector.load %arg12[%c0_61, %c0_62] : memref<224x32xf32, #tpu.memory_space<vmem>>, vector<224x32xf32>
      tpu.vector_store %arg12[%c0_61, %c0_62], %196 {strides = array<i32>} : memref<224x32xf32, #tpu.memory_space<vmem>>, vector<224x32xf32>,
    } else {
    }
    %c0 = arith.constant 0 : index
    %c0_1 = arith.constant 0 : index
    %3 = vector.load %arg12[%c0, %c0_1] : memref<224x32xf32, #tpu.memory_space<vmem>>, vector<224x32xf32>
    %c0_2 = arith.constant 0 : index
    %c0_3 = arith.constant 0 : index
    %c0_4 = arith.constant 0 : index
    %4 = vector.load %arg10[%c0_2, %c0_3, %c0_4] : memref<1x10x64xf32, #tpu.memory_space<vmem>>, vector<1x10x64xf32>
    %5 = vector.shape_cast %4 : vector<1x10x64xf32> to vector<10x64xf32>
    %6 = vector.extract_strided_slice %5 {offsets = [0, 0], sizes = [1, 32], strides = [1, 1]} : vector<10x64xf32> to vector<1x32xf32>
    %7 = vector.extract_strided_slice %5 {offsets = [1, 0], sizes = [1, 32], strides = [1, 1]} : vector<10x64xf32> to vector<1x32xf32>
    %8 = vector.extract_strided_slice %5 {offsets = [2, 0], sizes = [1, 32], strides = [1, 1]} : vector<10x64xf32> to vector<1x32xf32>
    %9 = vector.extract_strided_slice %5 {offsets = [3, 0], sizes = [1, 32], strides = [1, 1]} : vector<10x64xf32> to vector<1x32xf32>
    %10 = vector.extract_strided_slice %5 {offsets = [4, 0], sizes = [1, 32], strides = [1, 1]} : vector<10x64xf32> to vector<1x32xf32>
    %11 = vector.extract_strided_slice %5 {offsets = [5, 0], sizes = [1, 32], strides = [1, 1]} : vector<10x64xf32> to vector<1x32xf32>
    %12 = vector.extract_strided_slice %5 {offsets = [6, 0], sizes = [1, 32], strides = [1, 1]} : vector<10x64xf32> to vector<1x32xf32>
    %13 = vector.extract_strided_slice %5 {offsets = [7, 0], sizes = [1, 32], strides = [1, 1]} : vector<10x64xf32> to vector<1x32xf32>
    %14 = vector.extract_strided_slice %5 {offsets = [8, 0], sizes = [1, 32], strides = [1, 1]} : vector<10x64xf32> to vector<1x32xf32>
    %15 = vector.extract_strided_slice %5 {offsets = [9, 0], sizes = [1, 64], strides = [1, 1]} : vector<10x64xf32> to vector<1x64xf32>
    %16 = tpu.iota {dimensions = array<i32: 1>} : vector<8x8xi32>
    %c5_i32 = arith.constant 5 : i32
    %17 = vector.broadcast %c5_i32 : i32 to vector<8x8xi32>
    %18 = arith.cmpi slt, %16, %17 : vector<8x8xi32>
    %cst = arith.constant 0.000000e+00 : f32
    %cst_5 = arith.constant -1.000000e+30 : f32
    %19 = vector.broadcast %cst : f32 to vector<8x8xf32>
    %20 = vector.broadcast %cst_5 : f32 to vector<8x8xf32>
    %21 = arith.select %18, %19, %20 : vector<8x8xi1>, vector<8x8xf32>
    %cst_6 = arith.constant dense<0.000000e+00> : vector<224xf32>
    %22 = vector.multi_reduction <add>, %3, %cst_6 [1] : vector<224x32xf32> to vector<224xf32>
    %23 = vector.shape_cast %22 : vector<224xf32> to vector<224x1xf32>
    %cst_7 = arith.constant 3.200000e+01 : f32
    %24 = vector.broadcast %cst_7 : f32 to vector<224x1xf32>
    %25 = arith.divf %23, %24 : vector<224x1xf32>
    %26 = vector.broadcast %25 : vector<224x1xf32> to vector<224x32xf32>
    %27 = arith.subf %3, %26 : vector<224x32xf32>
    %28 = arith.mulf %27, %27 : vector<224x32xf32>
    %cst_8 = arith.constant dense<0.000000e+00> : vector<224xf32>
    %29 = vector.multi_reduction <add>, %28, %cst_8 [1] : vector<224x32xf32> to vector<224xf32>
    %30 = vector.shape_cast %29 : vector<224xf32> to vector<224x1xf32>
    %cst_9 = arith.constant 3.200000e+01 : f32
    %31 = vector.broadcast %cst_9 : f32 to vector<224x1xf32>
    %32 = arith.divf %30, %31 : vector<224x1xf32>
    %33 = vector.broadcast %25 : vector<224x1xf32> to vector<224x32xf32>
    %34 = arith.subf %3, %33 : vector<224x32xf32>
    %cst_10 = arith.constant 9.99999974E-6 : f32
    %35 = vector.broadcast %cst_10 : f32 to vector<224x1xf32>
    %36 = arith.addf %32, %35 : vector<224x1xf32>
    %37 = math.rsqrt %36 : vector<224x1xf32>
    %38 = vector.broadcast %37 : vector<224x1xf32> to vector<224x32xf32>
    %39 = arith.mulf %34, %38 : vector<224x32xf32>
    %40 = vector.broadcast %6 : vector<1x32xf32> to vector<224x32xf32>
    %41 = arith.mulf %39, %40 : vector<224x32xf32>
    %42 = vector.broadcast %7 : vector<1x32xf32> to vector<224x32xf32>
    %43 = arith.addf %41, %42 : vector<224x32xf32>
    %44 = arith.truncf %43 : vector<224x32xf32> to vector<224x32xbf16>
    %c0_11 = arith.constant 0 : index
    %c0_12 = arith.constant 0 : index
    %c0_13 = arith.constant 0 : index
    %45 = vector.load %arg6[%c0_11, %c0_12, %c0_13] : memref<1x32x96xbf16, #tpu.memory_space<vmem>>, vector<1x32x96xbf16>
    %46 = vector.shape_cast %45 : vector<1x32x96xbf16> to vector<32x96xbf16>
    %cst_14 = arith.constant dense<0.000000e+00> : vector<224x96xf32>
    %47 = tpu.matmul %44, %46, %cst_14 {dimension_numbers = #tpu.dot_dimension_numbers<[1], [0], [0], [1], [0, 0, 1, 1], [], []>} : vector<224x32xbf16>, vector<32x96xbf16>, vector<224x96xf32> -> vector<224x96xf32>
    %48 = vector.extract_strided_slice %47 {offsets = [0, 0], sizes = [224, 32], strides = [1, 1]} : vector<224x96xf32> to vector<224x32xf32>
    %49 = vector.broadcast %8 : vector<1x32xf32> to vector<224x32xf32>
    %50 = arith.addf %48, %49 : vector<224x32xf32>
    %cst_15 = arith.constant 2.500000e-01 : f32
    %51 = vector.broadcast %cst_15 : f32 to vector<224x32xf32>
    %52 = arith.mulf %50, %51 : vector<224x32xf32>
    %53 = vector.extract_strided_slice %47 {offsets = [0, 32], sizes = [224, 32], strides = [1, 1]} : vector<224x96xf32> to vector<224x32xf32>
    %54 = vector.broadcast %9 : vector<1x32xf32> to vector<224x32xf32>
    %55 = arith.addf %53, %54 : vector<224x32xf32>
    %56 = vector.extract_strided_slice %47 {offsets = [0, 64], sizes = [224, 32], strides = [1, 1]} : vector<224x96xf32> to vector<224x32xf32>
    %57 = vector.broadcast %10 : vector<1x32xf32> to vector<224x32xf32>
    %58 = arith.addf %56, %57 : vector<224x32xf32>
    %59 = vector.shape_cast %52 : vector<224x32xf32> to vector<28x8x32xf32>
    %60 = vector.shape_cast %55 : vector<224x32xf32> to vector<28x8x32xf32>
    %61 = vector.shape_cast %58 : vector<224x32xf32> to vector<28x8x32xf32>
    %c0_16 = arith.constant 0 : index
    %c0_17 = arith.constant 0 : index
    %c0_18 = arith.constant 0 : index
    %62 = vector.load %arg7[%c0_16, %c0_17, %c0_18] : memref<1x32x32xbf16, #tpu.memory_space<vmem>>, vector<1x32x32xbf16>
    %63 = vector.shape_cast %62 : vector<1x32x32xbf16> to vector<32x32xbf16>
    %64 = vector.extract_strided_slice %59 {offsets = [0, 0, 0], sizes = [28, 8, 16], strides = [1, 1, 1]} : vector<28x8x32xf32> to vector<28x8x16xf32>
    %65 = arith.truncf %64 : vector<28x8x16xf32> to vector<28x8x16xbf16>
    %66 = vector.extract_strided_slice %60 {offsets = [0, 0, 0], sizes = [28, 8, 16], strides = [1, 1, 1]} : vector<28x8x32xf32> to vector<28x8x16xf32>
    %67 = arith.truncf %66 : vector<28x8x16xf32> to vector<28x8x16xbf16>
    "tpu.trace_start"() <{level = 10 : i32, message = "bqd,bkd->bqk"}> : () -> ()
    %cst_19 = arith.constant dense<0.000000e+00> : vector<28x8x8xf32>
    %68 = tpu.matmul %65, %67, %cst_19 {dimension_numbers = #tpu.dot_dimension_numbers<[2], [2], [1], [1], [0, 0, 0, 1, 1, 1], [0], [0]>} : vector<28x8x16xbf16>, vector<28x8x16xbf16>, vector<28x8x8xf32> -> vector<28x8x8xf32>
    "tpu.trace_stop"() : () -> ()
    %69 = vector.shape_cast %21 : vector<8x8xf32> to vector<1x8x8xf32>
    %70 = vector.broadcast %69 : vector<1x8x8xf32> to vector<28x8x8xf32>
    %71 = arith.addf %68, %70 : vector<28x8x8xf32>
    %cst_20 = arith.constant dense<0xFF800000> : vector<28x8xf32>
    %72 = vector.multi_reduction <maximumf>, %71, %cst_20 [2] : vector<28x8x8xf32> to vector<28x8xf32>
    %73 = vector.shape_cast %72 : vector<28x8xf32> to vector<28x8x1xf32>
    %74 = vector.broadcast %73 : vector<28x8x1xf32> to vector<28x8x8xf32>
    %75 = arith.subf %71, %74 : vector<28x8x8xf32>
    %76 = math.exp %75 : vector<28x8x8xf32>
    %cst_21 = arith.constant dense<0.000000e+00> : vector<28x8xf32>
    %77 = vector.multi_reduction <add>, %76, %cst_21 [2] : vector<28x8x8xf32> to vector<28x8xf32>
    %78 = vector.shape_cast %77 : vector<28x8xf32> to vector<28x8x1xf32>
    %79 = vector.broadcast %78 : vector<28x8x1xf32> to vector<28x8x8xf32>
    %80 = arith.divf %76, %79 : vector<28x8x8xf32>
    %81 = arith.truncf %80 : vector<28x8x8xf32> to vector<28x8x8xbf16>
    %82 = vector.extract_strided_slice %61 {offsets = [0, 0, 0], sizes = [28, 8, 16], strides = [1, 1, 1]} : vector<28x8x32xf32> to vector<28x8x16xf32>
    %83 = arith.truncf %82 : vector<28x8x16xf32> to vector<28x8x16xbf16>
    "tpu.trace_start"() <{level = 10 : i32, message = "bqk,bkd->bqd"}> : () -> ()
    %cst_22 = arith.constant dense<0.000000e+00> : vector<28x8x16xf32>
    %84 = tpu.matmul %81, %83, %cst_22 {dimension_numbers = #tpu.dot_dimension_numbers<[2], [1], [1], [2], [0, 0, 0, 1, 1, 2], [0], [0]>} : vector<28x8x8xbf16>, vector<28x8x16xbf16>, vector<28x8x16xf32> -> vector<28x8x16xf32>
    "tpu.trace_stop"() : () -> ()
    %85 = vector.shape_cast %84 : vector<28x8x16xf32> to vector<224x16xf32>
    %86 = arith.truncf %85 : vector<224x16xf32> to vector<224x16xbf16>
    %87 = vector.extract_strided_slice %63 {offsets = [0, 0], sizes = [16, 32], strides = [1, 1]} : vector<32x32xbf16> to vector<16x32xbf16>
    %cst_23 = arith.constant dense<0.000000e+00> : vector<224x32xf32>
    %88 = tpu.matmul %86, %87, %cst_23 {dimension_numbers = #tpu.dot_dimension_numbers<[1], [0], [0], [1], [0, 0, 1, 1], [], []>} : vector<224x16xbf16>, vector<16x32xbf16>, vector<224x32xf32> -> vector<224x32xf32>
    %89 = vector.extract_strided_slice %59 {offsets = [0, 0, 16], sizes = [28, 8, 16], strides = [1, 1, 1]} : vector<28x8x32xf32> to vector<28x8x16xf32>
    %90 = arith.truncf %89 : vector<28x8x16xf32> to vector<28x8x16xbf16>
    %91 = vector.extract_strided_slice %60 {offsets = [0, 0, 16], sizes = [28, 8, 16], strides = [1, 1, 1]} : vector<28x8x32xf32> to vector<28x8x16xf32>
    %92 = arith.truncf %91 : vector<28x8x16xf32> to vector<28x8x16xbf16>
    "tpu.trace_start"() <{level = 10 : i32, message = "bqd,bkd->bqk"}> : () -> ()
    %cst_24 = arith.constant dense<0.000000e+00> : vector<28x8x8xf32>
    %93 = tpu.matmul %90, %92, %cst_24 {dimension_numbers = #tpu.dot_dimension_numbers<[2], [2], [1], [1], [0, 0, 0, 1, 1, 1], [0], [0]>} : vector<28x8x16xbf16>, vector<28x8x16xbf16>, vector<28x8x8xf32> -> vector<28x8x8xf32>
    "tpu.trace_stop"() : () -> ()
    %94 = vector.shape_cast %21 : vector<8x8xf32> to vector<1x8x8xf32>
    %95 = vector.broadcast %94 : vector<1x8x8xf32> to vector<28x8x8xf32>
    %96 = arith.addf %93, %95 : vector<28x8x8xf32>
    %cst_25 = arith.constant dense<0xFF800000> : vector<28x8xf32>
    %97 = vector.multi_reduction <maximumf>, %96, %cst_25 [2] : vector<28x8x8xf32> to vector<28x8xf32>
    %98 = vector.shape_cast %97 : vector<28x8xf32> to vector<28x8x1xf32>
    %99 = vector.broadcast %98 : vector<28x8x1xf32> to vector<28x8x8xf32>
    %100 = arith.subf %96, %99 : vector<28x8x8xf32>
    %101 = math.exp %100 : vector<28x8x8xf32>
    %cst_26 = arith.constant dense<0.000000e+00> : vector<28x8xf32>
    %102 = vector.multi_reduction <add>, %101, %cst_26 [2] : vector<28x8x8xf32> to vector<28x8xf32>
    %103 = vector.shape_cast %102 : vector<28x8xf32> to vector<28x8x1xf32>
    %104 = vector.broadcast %103 : vector<28x8x1xf32> to vector<28x8x8xf32>
    %105 = arith.divf %101, %104 : vector<28x8x8xf32>
    %106 = arith.truncf %105 : vector<28x8x8xf32> to vector<28x8x8xbf16>
    %107 = vector.extract_strided_slice %61 {offsets = [0, 0, 16], sizes = [28, 8, 16], strides = [1, 1, 1]} : vector<28x8x32xf32> to vector<28x8x16xf32>
    %108 = arith.truncf %107 : vector<28x8x16xf32> to vector<28x8x16xbf16>
    "tpu.trace_start"() <{level = 10 : i32, message = "bqk,bkd->bqd"}> : () -> ()
    %cst_27 = arith.constant dense<0.000000e+00> : vector<28x8x16xf32>
    %109 = tpu.matmul %106, %108, %cst_27 {dimension_numbers = #tpu.dot_dimension_numbers<[2], [1], [1], [2], [0, 0, 0, 1, 1, 2], [0], [0]>} : vector<28x8x8xbf16>, vector<28x8x16xbf16>, vector<28x8x16xf32> -> vector<28x8x16xf32>
    "tpu.trace_stop"() : () -> ()
    %110 = vector.shape_cast %109 : vector<28x8x16xf32> to vector<224x16xf32>
    %111 = arith.truncf %110 : vector<224x16xf32> to vector<224x16xbf16>
    %112 = vector.extract_strided_slice %63 {offsets = [16, 0], sizes = [16, 32], strides = [1, 1]} : vector<32x32xbf16> to vector<16x32xbf16>
    %cst_28 = arith.constant dense<0.000000e+00> : vector<224x32xf32>
    %113 = tpu.matmul %111, %112, %cst_28 {dimension_numbers = #tpu.dot_dimension_numbers<[1], [0], [0], [1], [0, 0, 1, 1], [], []>} : vector<224x16xbf16>, vector<16x32xbf16>, vector<224x32xf32> -> vector<224x32xf32>
    %114 = arith.addf %88, %113 : vector<224x32xf32>
    %115 = arith.addf %3, %114 : vector<224x32xf32>
    %116 = vector.broadcast %11 : vector<1x32xf32> to vector<224x32xf32>
    %117 = arith.addf %115, %116 : vector<224x32xf32>
    %cst_29 = arith.constant dense<0.000000e+00> : vector<224xf32>
    %118 = vector.multi_reduction <add>, %117, %cst_29 [1] : vector<224x32xf32> to vector<224xf32>
    %119 = vector.shape_cast %118 : vector<224xf32> to vector<224x1xf32>
    %cst_30 = arith.constant 3.200000e+01 : f32
    %120 = vector.broadcast %cst_30 : f32 to vector<224x1xf32>
    %121 = arith.divf %119, %120 : vector<224x1xf32>
    %122 = vector.broadcast %121 : vector<224x1xf32> to vector<224x32xf32>
    %123 = arith.subf %117, %122 : vector<224x32xf32>
    %124 = arith.mulf %123, %123 : vector<224x32xf32>
    %cst_31 = arith.constant dense<0.000000e+00> : vector<224xf32>
    %125 = vector.multi_reduction <add>, %124, %cst_31 [1] : vector<224x32xf32> to vector<224xf32>
    %126 = vector.shape_cast %125 : vector<224xf32> to vector<224x1xf32>
    %cst_32 = arith.constant 3.200000e+01 : f32
    %127 = vector.broadcast %cst_32 : f32 to vector<224x1xf32>
    %128 = arith.divf %126, %127 : vector<224x1xf32>
    %129 = vector.broadcast %121 : vector<224x1xf32> to vector<224x32xf32>
    %130 = arith.subf %117, %129 : vector<224x32xf32>
    %cst_33 = arith.constant 9.99999974E-6 : f32
    %131 = vector.broadcast %cst_33 : f32 to vector<224x1xf32>
    %132 = arith.addf %128, %131 : vector<224x1xf32>
    %133 = math.rsqrt %132 : vector<224x1xf32>
    %134 = vector.broadcast %133 : vector<224x1xf32> to vector<224x32xf32>
    %135 = arith.mulf %130, %134 : vector<224x32xf32>
    %136 = vector.broadcast %12 : vector<1x32xf32> to vector<224x32xf32>
    %137 = arith.mulf %135, %136 : vector<224x32xf32>
    %138 = vector.broadcast %13 : vector<1x32xf32> to vector<224x32xf32>
    %139 = arith.addf %137, %138 : vector<224x32xf32>
    %140 = arith.truncf %139 : vector<224x32xf32> to vector<224x32xbf16>
    %c0_34 = arith.constant 0 : index
    %c0_35 = arith.constant 0 : index
    %c0_36 = arith.constant 0 : index
    %141 = vector.load %arg8[%c0_34, %c0_35, %c0_36] : memref<1x32x64xbf16, #tpu.memory_space<vmem>>, vector<1x32x64xbf16>
    %142 = vector.shape_cast %141 : vector<1x32x64xbf16> to vector<32x64xbf16>
    %cst_37 = arith.constant dense<0.000000e+00> : vector<224x64xf32>
    %143 = tpu.matmul %140, %142, %cst_37 {dimension_numbers = #tpu.dot_dimension_numbers<[1], [0], [0], [1], [0, 0, 1, 1], [], []>} : vector<224x32xbf16>, vector<32x64xbf16>, vector<224x64xf32> -> vector<224x64xf32>
    %144 = vector.broadcast %15 : vector<1x64xf32> to vector<224x64xf32>
    %145 = arith.addf %143, %144 : vector<224x64xf32>
    %cst_38 = arith.constant 1.702000e+00 : f32
    %146 = vector.broadcast %cst_38 : f32 to vector<224x64xf32>
    %147 = arith.mulf %146, %145 : vector<224x64xf32>
    %148 = arith.negf %147 : vector<224x64xf32>
    %149 = math.exp %148 : vector<224x64xf32>
    %cst_39 = arith.constant 1.000000e+00 : f32
    %150 = vector.broadcast %cst_39 : f32 to vector<224x64xf32>
    %151 = arith.addf %150, %149 : vector<224x64xf32>
    %152 = arith.divf %150, %151 : vector<224x64xf32>
    %153 = arith.mulf %145, %152 : vector<224x64xf32>
    %154 = arith.truncf %153 : vector<224x64xf32> to vector<224x64xbf16>
    %c0_40 = arith.constant 0 : index
    %c0_41 = arith.constant 0 : index
    %c0_42 = arith.constant 0 : index
    %155 = vector.load %arg9[%c0_40, %c0_41, %c0_42] : memref<1x64x32xbf16, #tpu.memory_space<vmem>>, vector<1x64x32xbf16>
    %156 = vector.shape_cast %155 : vector<1x64x32xbf16> to vector<64x32xbf16>
    %cst_43 = arith.constant dense<0.000000e+00> : vector<224x32xf32>
    %157 = tpu.matmul %154, %156, %cst_43 {dimension_numbers = #tpu.dot_dimension_numbers<[1], [0], [0], [1], [0, 0, 1, 1], [], []>} : vector<224x64xbf16>, vector<64x32xbf16>, vector<224x32xf32> -> vector<224x32xf32>
    %158 = vector.broadcast %14 : vector<1x32xf32> to vector<224x32xf32>
    %159 = arith.addf %157, %158 : vector<224x32xf32>
    %160 = arith.addf %117, %159 : vector<224x32xf32>
    %c0_44 = arith.constant 0 : index
    %c0_45 = arith.constant 0 : index
    %161 = vector.load %arg12[%c0_44, %c0_45] : memref<224x32xf32, #tpu.memory_space<vmem>>, vector<224x32xf32>
    tpu.vector_store %arg12[%c0_44, %c0_45], %160 {strides = array<i32>} : memref<224x32xf32, #tpu.memory_space<vmem>>, vector<224x32xf32>,
    %c1_i32 = arith.constant 1 : i32
    %162 = arith.cmpi eq, %arg1, %c1_i32 : i32
    %163 = arith.extui %162 : i1 to i32
    %c0_i32_46 = arith.constant 0 : i32
    %164 = arith.cmpi ne, %163, %c0_i32_46 : i32
    scf.if %164 {
      %c0_47 = arith.constant 0 : index
      %c0_48 = arith.constant 0 : index
      %165 = vector.load %arg11[%c0_47, %c0_48] : memref<224x32xf32, #tpu.memory_space<vmem>>, vector<224x32xf32>
      tpu.vector_store %arg11[%c0_47, %c0_48], %160 {strides = array<i32>} : memref<224x32xf32, #tpu.memory_space<vmem>>, vector<224x32xf32>,
    } else {
    }
    return
  }
  func.func @transform_0(%arg0: i32, %arg1: i32) -> (i32, i32) {
    %c0_i32 = arith.constant 0 : i32
    %c0_i32_0 = arith.constant 0 : i32
    return %arg0, %c0_i32 : i32, i32
  }
  func.func @transform_1(%arg0: i32, %arg1: i32) -> (i32, i32) {
    %c0_i32 = arith.constant 0 : i32
    %c0_i32_0 = arith.constant 0 : i32
    %c0_i32_1 = arith.constant 0 : i32
    return %c0_i32, %c0_i32_0 : i32, i32
  }
  func.func @transform_2(%arg0: i32, %arg1: i32) -> (i32, i32) {
    %c0_i32 = arith.constant 0 : i32
    %c0_i32_0 = arith.constant 0 : i32
    %c0_i32_1 = arith.constant 0 : i32
    return %c0_i32, %c0_i32_0 : i32, i32
  }
  func.func @transform_3(%arg0: i32, %arg1: i32) -> (i32, i32) {
    %c0_i32 = arith.constant 0 : i32
    %c0_i32_0 = arith.constant 0 : i32
    %c0_i32_1 = arith.constant 0 : i32
    return %c0_i32, %c0_i32_0 : i32, i32
  }
  func.func @transform_4(%arg0: i32, %arg1: i32) -> (i32, i32, i32) {
    %c0_i32 = arith.constant 0 : i32
    %c0_i32_0 = arith.constant 0 : i32
    %c0_i32_1 = arith.constant 0 : i32
    return %arg1, %c0_i32, %c0_i32_0 : i32, i32, i32
  }
  func.func @transform_5(%arg0: i32, %arg1: i32) -> (i32, i32, i32) {
    %c0_i32 = arith.constant 0 : i32
    %c0_i32_0 = arith.constant 0 : i32
    %c0_i32_1 = arith.constant 0 : i32
    return %arg1, %c0_i32, %c0_i32_0 : i32, i32, i32
  }
  func.func @transform_6(%arg0: i32, %arg1: i32) -> (i32, i32, i32) {
    %c0_i32 = arith.constant 0 : i32
    %c0_i32_0 = arith.constant 0 : i32
    %c0_i32_1 = arith.constant 0 : i32
    return %arg1, %c0_i32, %c0_i32_0 : i32, i32, i32
  }
  func.func @transform_7(%arg0: i32, %arg1: i32) -> (i32, i32, i32) {
    %c0_i32 = arith.constant 0 : i32
    %c0_i32_0 = arith.constant 0 : i32
    %c0_i32_1 = arith.constant 0 : i32
    return %arg1, %c0_i32, %c0_i32_0 : i32, i32, i32
  }
  func.func @transform_8(%arg0: i32, %arg1: i32) -> (i32, i32, i32) {
    %c0_i32 = arith.constant 0 : i32
    %c0_i32_0 = arith.constant 0 : i32
    %c0_i32_1 = arith.constant 0 : i32
    return %arg1, %c0_i32, %c0_i32_0 : i32, i32, i32
  }
  func.func @transform_9(%arg0: i32, %arg1: i32) -> (i32, i32) {
    %c0_i32 = arith.constant 0 : i32
    %c0_i32_0 = arith.constant 0 : i32
    return %arg0, %c0_i32 : i32, i32
  }
}

</mosaic_0001>

<llo_original>
// kernel: tower_forward.1
$region0: #{tower_forward.1}
  #allocation0 [shape = 'u32[]', space=smem, size = 0x4, offset = 0x4, fixed_abs, tag = 'smem constant byte address 0x4 - core index']
  #allocation1 [shape = 'u32[144,128]{1,0:T(1,128)}', space=vmem, size = 0x12000, scoped, tag = 'internal scratch']
  #allocation2 [shape = 'f32[224,32]{1,0:T(8,128)}', space=vmem, size = 0x1c000, scoped, tag = 'scratch operand']
  %s0 = inlined_call_operand.vmem [shape: f32[224,48], index: 0, kind: input, shape index: {}]
  %s1 = inlined_call_operand.vmem [shape: f32[8,32], index: 1, kind: input, shape index: {}]
  %s2 = inlined_call_operand.vmem [shape: bf16[48,32], index: 2, kind: input, shape index: {}]
  %s3 = inlined_call_operand.vmem [shape: f32[2,32], index: 3, kind: input, shape index: {}]
  %s4 = inlined_call_operand.vmem [shape: bf16[2,32,96], index: 4, kind: input, shape index: {}]
  %s5 = inlined_call_operand.vmem [shape: bf16[2,32,32], index: 5, kind: input, shape index: {}]
  %s6 = inlined_call_operand.vmem [shape: bf16[2,32,64], index: 6, kind: input, shape index: {}]
  %s7 = inlined_call_operand.vmem [shape: bf16[2,64,32], index: 7, kind: input, shape index: {}]
  %s8 = inlined_call_operand.vmem [shape: f32[2,10,64], index: 8, kind: input, shape index: {}]
  %s9 = inlined_call_operand.vmem [shape: f32[224,32], index: 9, kind: output, shape index: {}]
  %s10 = sld [smem:[#allocation0]]
  $region77: #{tower_forward.1} parent=0
    _
  %s12 = ssub.s32 1, %s10
  %s13 = scalar_select 0, %s12, %s10
  loop: start=0, step=1, limit=4
  $region2: #{tower_forward.1} parent=0 // loop_pre_header
    _
  $region3: #{tower_forward.1} parent=0 // loop_header
    %s15 = sphi 0, %s19
    %p16 = scmp.ge.s32.totalorder %s15, 4
    %s22 = sphi 0, %s34
    %s23 = sphi 0, %s30
    %s24 = sphi 0, %s22
    %s25 = sphi 0, %s23
    %s26 = sphi 0, %s24
    %s27 = sphi 0, %s25
    %s37 = sphi 0, %s39
    %s40 = sphi 0, %s37
    %s41 = sphi 0, %s40
    %s57 = sphi 0, %s41
    %s61 = sphi 0, %s61
    %s63 = sphi 0, %s61
    %s64 = sphi 0, %s63
    %s78 = sphi 0, %s64
    %s82 = sphi 0, %s82
    %s84 = sphi 0, %s82
    %s85 = sphi 0, %s84
    %s99 = sphi 0, %s85
    %s103 = sphi 0, %s103
    %s105 = sphi 0, %s103
    %s106 = sphi 0, %s105
    %s120 = sphi 0, %s106
    %s126 = sphi 0, %s128
    %s129 = sphi 0, %s126
    %s130 = sphi 0, %s129
    %s146 = sphi 0, %s130
    %s152 = sphi 0, %s154
    %s155 = sphi 0, %s152
    %s156 = sphi 0, %s155
    %s172 = sphi 0, %s156
    %s178 = sphi 0, %s180
    %s181 = sphi 0, %s178
    %s182 = sphi 0, %s181
    %s198 = sphi 0, %s182
    %s204 = sphi 0, %s206
    %s207 = sphi 0, %s204
    %s208 = sphi 0, %s207
    %s224 = sphi 0, %s208
    %s230 = sphi 0, %s232
    %s233 = sphi 0, %s230
    %s234 = sphi 0, %s233
    %s250 = sphi 0, %s234
    %s256 = sphi 0, %s258
    %s259 = sphi 0, %s256
    %s260 = sphi 0, %s259
    %s276 = sphi 0, %s260
  $region4: #{tower_forward.1} parent=0 // loop_header_branch
    %18 = sbr.rel (%p16) target = $region8
  $region5: #{tower_forward.1} parent=0 // loop_body
    %s20 = ssub.s32 %s15, 1
    %s21 = ssub.s32 %s15, 2
    %s28 = sadd.s32 1, %s23
    %p29 = scmp.ge.s32.totalorder %s28, 2
    %s30 = scalar_select %p29, 0, %s28
    %s31 = sadd.s32 1, %s22
    %s32 = scalar_select %p29, %s31, %s22
    %p33 = scmp.ge.s32.totalorder %s32, 1
    %s34 = scalar_select %p33, 0, %s32
    %s35 = ssub.s32 %s22, %s34
    %p36 = scmp.eq.s32.totalorder %s35, 0
    %s38 = sadd.s32 %s37, 1
    %s39 = scalar_select %p36, %s37, %s38
    %p42 = pneg %p36
    %p43 = scmp.eq.s32.totalorder %s15, 1
    %p44 = por %p42, %p43
    %p45 = scmp.ne.s32.totalorder %s37, %s40
    %p46 = scmp.eq.s32.totalorder %s15, 0
    %p47 = por %p45, %p46
    %p48 = scmp.ne.s32.totalorder %s37, %s40
    %p49 = scmp.eq.s32.totalorder %s20, 1
    %p50 = por %p48, %p49
    %p51 = scmp.ne.s32.totalorder %s40, %s41
    %p52 = scmp.eq.s32.totalorder %s20, 0
    %p53 = por %p51, %p52
    %p54 = scmp.ne.s32.totalorder %s40, %s41
    %p55 = scmp.eq.s32.totalorder %s21, 1
    %p56 = por %p54, %p55
    %p58 = scmp.ne.s32.totalorder %s41, %s57
    %p59 = scmp.eq.s32.totalorder %s21, 0
    %p60 = por %p58, %p59
    %s62 = sadd.s32 %s61, 1
    %p65 = scmp.eq.s32.totalorder %s15, 1
    %p66 = scmp.ne.s32.totalorder %s61, %s63
    %p67 = scmp.eq.s32.totalorder %s15, 0
    %p68 = por %p66, %p67
    %p69 = scmp.ne.s32.totalorder %s61, %s63
    %p70 = scmp.eq.s32.totalorder %s20, 1
    %p71 = por %p69, %p70
    %p72 = scmp.ne.s32.totalorder %s63, %s64
    %p73 = scmp.eq.s32.totalorder %s20, 0
    %p74 = por %p72, %p73
    %p75 = scmp.ne.s32.totalorder %s63, %s64
    %p76 = scmp.eq.s32.totalorder %s21, 1
    %p77 = por %p75, %p76
    %p79 = scmp.ne.s32.totalorder %s64, %s78
    %p80 = scmp.eq.s32.totalorder %s21, 0
    %p81 = por %p79, %p80
    %s83 = sadd.s32 %s82, 1
    %p86 = scmp.eq.s32.totalorder %s15, 1
    %p87 = scmp.ne.s32.totalorder %s82, %s84
    %p88 = scmp.eq.s32.totalorder %s15, 0
    %p89 = por %p87, %p88
    %p90 = scmp.ne.s32.totalorder %s82, %s84
    %p91 = scmp.eq.s32.totalorder %s20, 1
    %p92 = por %p90, %p91
    %p93 = scmp.ne.s32.totalorder %s84, %s85
    %p94 = scmp.eq.s32.totalorder %s20, 0
    %p95 = por %p93, %p94
    %p96 = scmp.ne.s32.totalorder %s84, %s85
    %p97 = scmp.eq.s32.totalorder %s21, 1
    %p98 = por %p96, %p97
    %p100 = scmp.ne.s32.totalorder %s85, %s99
    %p101 = scmp.eq.s32.totalorder %s21, 0
    %p102 = por %p100, %p101
    %s104 = sadd.s32 %s103, 1
    %p107 = scmp.eq.s32.totalorder %s15, 1
    %p108 = scmp.ne.s32.totalorder %s103, %s105
    %p109 = scmp.eq.s32.totalorder %s15, 0
    %p110 = por %p108, %p109
    %p111 = scmp.ne.s32.totalorder %s103, %s105
    %p112 = scmp.eq.s32.totalorder %s20, 1
    %p113 = por %p111, %p112
    %p114 = scmp.ne.s32.totalorder %s105, %s106
    %p115 = scmp.eq.s32.totalorder %s20, 0
    %p116 = por %p114, %p115
    %p117 = scmp.ne.s32.totalorder %s105, %s106
    %p118 = scmp.eq.s32.totalorder %s21, 1
    %p119 = por %p117, %p118
    %p121 = scmp.ne.s32.totalorder %s106, %s120
    %p122 = scmp.eq.s32.totalorder %s21, 0
    %p123 = por %p121, %p122
    %s124 = ssub.s32 %s23, %s30
    %p125 = scmp.eq.s32.totalorder %s124, 0
    %s127 = sadd.s32 %s126, 1
    %s128 = scalar_select %p125, %s126, %s127
    %p131 = pneg %p125
    %p132 = scmp.eq.s32.totalorder %s15, 1
    %p133 = por %p131, %p132
    %p134 = scmp.ne.s32.totalorder %s126, %s129
    %p135 = scmp.eq.s32.totalorder %s15, 0
    %p136 = por %p134, %p135
    %p137 = scmp.ne.s32.totalorder %s126, %s129
    %p138 = scmp.eq.s32.totalorder %s20, 1
    %p139 = por %p137, %p138
    %p140 = scmp.ne.s32.totalorder %s129, %s130
    %p141 = scmp.eq.s32.totalorder %s20, 0
    %p142 = por %p140, %p141
    %p143 = scmp.ne.s32.totalorder %s129, %s130
    %p144 = scmp.eq.s32.totalorder %s21, 1
    %p145 = por %p143, %p144
    %p147 = scmp.ne.s32.totalorder %s130, %s146
    %p148 = scmp.eq.s32.totalorder %s21, 0
    %p149 = por %p147, %p148
    %s150 = ssub.s32 %s23, %s30
    %p151 = scmp.eq.s32.totalorder %s150, 0
    %s153 = sadd.s32 %s152, 1
    %s154 = scalar_select %p151, %s152, %s153
    %p157 = pneg %p151
    %p158 = scmp.eq.s32.totalorder %s15, 1
    %p159 = por %p157, %p158
    %p160 = scmp.ne.s32.totalorder %s152, %s155
    %p161 = scmp.eq.s32.totalorder %s15, 0
    %p162 = por %p160, %p161
    %p163 = scmp.ne.s32.totalorder %s152, %s155
    %p164 = scmp.eq.s32.totalorder %s20, 1
    %p165 = por %p163, %p164
    %p166 = scmp.ne.s32.totalorder %s155, %s156
    %p167 = scmp.eq.s32.totalorder %s20, 0
    %p168 = por %p166, %p167
    %p169 = scmp.ne.s32.totalorder %s155, %s156
    %p170 = scmp.eq.s32.totalorder %s21, 1
    %p171 = por %p169, %p170
    %p173 = scmp.ne.s32.totalorder %s156, %s172
    %p174 = scmp.eq.s32.totalorder %s21, 0
    %p175 = por %p173, %p174
    %s176 = ssub.s32 %s23, %s30
    %p177 = scmp.eq.s32.totalorder %s176, 0
    %s179 = sadd.s32 %s178, 1
    %s180 = scalar_select %p177, %s178, %s179
    %p183 = pneg %p177
    %p184 = scmp.eq.s32.totalorder %s15, 1
    %p185 = por %p183, %p184
    %p186 = scmp.ne.s32.totalorder %s178, %s181
    %p187 = scmp.eq.s32.totalorder %s15, 0
    %p188 = por %p186, %p187
    %p189 = scmp.ne.s32.totalorder %s178, %s181
    %p190 = scmp.eq.s32.totalorder %s20, 1
    %p191 = por %p189, %p190
    %p192 = scmp.ne.s32.totalorder %s181, %s182
    %p193 = scmp.eq.s32.totalorder %s20, 0
    %p194 = por %p192, %p193
    %p195 = scmp.ne.s32.totalorder %s181, %s182
    %p196 = scmp.eq.s32.totalorder %s21, 1
    %p197 = por %p195, %p196
    %p199 = scmp.ne.s32.totalorder %s182, %s198
    %p200 = scmp.eq.s32.totalorder %s21, 0
    %p201 = por %p199, %p200
    %s202 = ssub.s32 %s23, %s30
    %p203 = scmp.eq.s32.totalorder %s202, 0
    %s205 = sadd.s32 %s204, 1
    %s206 = scalar_select %p203, %s204, %s205
    %p209 = pneg %p203
    %p210 = scmp.eq.s32.totalorder %s15, 1
    %p211 = por %p209, %p210
    %p212 = scmp.ne.s32.totalorder %s204, %s207
    %p213 = scmp.eq.s32.totalorder %s15, 0
    %p214 = por %p212, %p213
    %p215 = scmp.ne.s32.totalorder %s204, %s207
    %p216 = scmp.eq.s32.totalorder %s20, 1
    %p217 = por %p215, %p216
    %p218 = scmp.ne.s32.totalorder %s207, %s208
    %p219 = scmp.eq.s32.totalorder %s20, 0
    %p220 = por %p218, %p219
    %p221 = scmp.ne.s32.totalorder %s207, %s208
    %p222 = scmp.eq.s32.totalorder %s21, 1
    %p223 = por %p221, %p222
    %p225 = scmp.ne.s32.totalorder %s208, %s224
    %p226 = scmp.eq.s32.totalorder %s21, 0
    %p227 = por %p225, %p226
    %s228 = ssub.s32 %s23, %s30
    %p229 = scmp.eq.s32.totalorder %s228, 0
    %s231 = sadd.s32 %s230, 1
    %s232 = scalar_select %p229, %s230, %s231
    %p235 = pneg %p229
    %p236 = scmp.eq.s32.totalorder %s15, 1
    %p237 = por %p235, %p236
    %p238 = scmp.ne.s32.totalorder %s230, %s233
    %p239 = scmp.eq.s32.totalorder %s15, 0
    %p240 = por %p238, %p239
    %p241 = scmp.ne.s32.totalorder %s230, %s233
    %p242 = scmp.eq.s32.totalorder %s20, 1
    %p243 = por %p241, %p242
    %p244 = scmp.ne.s32.totalorder %s233, %s234
    %p245 = scmp.eq.s32.totalorder %s20, 0
    %p246 = por %p244, %p245
    %p247 = scmp.ne.s32.totalorder %s233, %s234
    %p248 = scmp.eq.s32.totalorder %s21, 1
    %p249 = por %p247, %p248
    %p251 = scmp.ne.s32.totalorder %s234, %s250
    %p252 = scmp.eq.s32.totalorder %s21, 0
    %p253 = por %p251, %p252
    %s254 = ssub.s32 %s22, %s34
    %p255 = scmp.eq.s32.totalorder %s254, 0
    %s257 = sadd.s32 %s256, 1
    %s258 = scalar_select %p255, %s256, %s257
    %p261 = pneg %p255
    %p262 = scmp.eq.s32.totalorder %s15, 1
    %p263 = por %p261, %p262
    %p264 = scmp.ne.s32.totalorder %s256, %s259
    %p265 = scmp.eq.s32.totalorder %s15, 0
    %p266 = por %p264, %p265
    %p267 = scmp.ne.s32.totalorder %s256, %s259
    %p268 = scmp.eq.s32.totalorder %s20, 1
    %p269 = por %p267, %p268
    %p270 = scmp.ne.s32.totalorder %s259, %s260
    %p271 = scmp.eq.s32.totalorder %s20, 0
    %p272 = por %p270, %p271
    %p273 = scmp.ne.s32.totalorder %s259, %s260
    %p274 = scmp.eq.s32.totalorder %s21, 1
    %p275 = por %p273, %p274
    %p277 = scmp.ne.s32.totalorder %s260, %s276
    %p278 = scmp.eq.s32.totalorder %s21, 0
    %p279 = por %p277, %p278
    %p280 = scmp.le.s32.totalorder 1, %s15
    %p281 = scmp.lt.s32.totalorder %s15, 3
    %p282 = pnand %p280, %p281
    %p283 = pneg %p282
    // Predicated region
    $region9: #{tower_forward.1} parent=5 // pred_check
      _
    $region10: #{tower_forward.1} parent=5 // pred_check_branch
      %285 = sbr.rel (%p282) target = $region12
    $region11: #{tower_forward.1} parent=5 // pred_region
      %s286 = ssub.s32 %s15, 1
      // Predicated region
      $region13: #{tower_forward.1} parent=11 // pred_check
        %p287 = pneg %p53
      $region14: #{tower_forward.1} parent=11 // pred_check_branch
        %289 = sbr.rel (%p287) target = $region16
      $region15: #{tower_forward.1} parent=11 // pred_region
        %s290 = smul.u32 28, %s24
        %p291 = scmp.lt.s32.totalorder %s290, 27
        %s292 = scalar_select %p291, %s290, 27
        %s293 = smul.addr %s292, 8
        %s294 = scalar_lea.vmem %s0, %s293
        %s295 = smul.u32 28, %s24
      $region16: #{tower_forward.1} parent=11 // pred_fallthru
        _
      // Predicated region
      $region17: #{tower_forward.1} parent=11 // pred_check
        %p296 = pneg %p74
      $region18: #{tower_forward.1} parent=11 // pred_check_branch
        %298 = sbr.rel (%p296) target = $region20
      $region19: #{tower_forward.1} parent=11 // pred_region
        _
      $region20: #{tower_forward.1} parent=11 // pred_fallthru
        _
      // Predicated region
      $region21: #{tower_forward.1} parent=11 // pred_check
        %p299 = pneg %p95
      $region22: #{tower_forward.1} parent=11 // pred_check_branch
        %301 = sbr.rel (%p299) target = $region24
      $region23: #{tower_forward.1} parent=11 // pred_region
        _
      $region24: #{tower_forward.1} parent=11 // pred_fallthru
        _
      // Predicated region
      $region25: #{tower_forward.1} parent=11 // pred_check
        %p302 = pneg %p116
      $region26: #{tower_forward.1} parent=11 // pred_check_branch
        %304 = sbr.rel (%p302) target = $region28
      $region27: #{tower_forward.1} parent=11 // pred_region
        _
      $region28: #{tower_forward.1} parent=11 // pred_fallthru
        _
    $region12: #{tower_forward.1} parent=5 // pred_fallthru
      _
    %p305 = scmp.lt.s32.totalorder %s15, 2
    // Predicated region
    $region29: #{tower_forward.1} parent=5 // pred_check
      %p306 = pneg %p305
    $region30: #{tower_forward.1} parent=5 // pred_check_branch
      %308 = sbr.rel (%p306) target = $region32
    $region31: #{tower_forward.1} parent=5 // pred_region
      // Predicated region
      $region33: #{tower_forward.1} parent=31 // pred_check
        %p309 = pneg %p136
      $region34: #{tower_forward.1} parent=31 // pred_check_branch
        %311 = sbr.rel (%p309) target = $region36
      $region35: #{tower_forward.1} parent=31 // pred_region
        %p312 = scmp.lt.s32.totalorder %s23, 1
        %s313 = scalar_select %p312, %s23, 1
        %s314 = smul.addr %s313, 4
        %s315 = smul.addr %s314, 4
        %s316 = scalar_lea.vmem %s4, %s315
      $region36: #{tower_forward.1} parent=31 // pred_fallthru
        _
      // Predicated region
      $region37: #{tower_forward.1} parent=31 // pred_check
        %p317 = pneg %p162
      $region38: #{tower_forward.1} parent=31 // pred_check_branch
        %319 = sbr.rel (%p317) target = $region40
      $region39: #{tower_forward.1} parent=31 // pred_region
        %p320 = scmp.lt.s32.totalorder %s23, 1
        %s321 = scalar_select %p320, %s23, 1
        %s322 = smul.addr %s321, 4
        %s323 = smul.addr %s322, 4
        %s324 = scalar_lea.vmem %s5, %s323
      $region40: #{tower_forward.1} parent=31 // pred_fallthru
        _
      // Predicated region
      $region41: #{tower_forward.1} parent=31 // pred_check
        %p325 = pneg %p188
      $region42: #{tower_forward.1} parent=31 // pred_check_branch
        %327 = sbr.rel (%p325) target = $region44
      $region43: #{tower_forward.1} parent=31 // pred_region
        %p328 = scmp.lt.s32.totalorder %s23, 1
        %s329 = scalar_select %p328, %s23, 1
        %s330 = smul.addr %s329, 4
        %s331 = smul.addr %s330, 4
        %s332 = scalar_lea.vmem %s6, %s331
      $region44: #{tower_forward.1} parent=31 // pred_fallthru
        _
      // Predicated region
      $region45: #{tower_forward.1} parent=31 // pred_check
        %p333 = pneg %p214
      $region46: #{tower_forward.1} parent=31 // pred_check_branch
        %335 = sbr.rel (%p333) target = $region48
      $region47: #{tower_forward.1} parent=31 // pred_region
        %p336 = scmp.lt.s32.totalorder %s23, 1
        %s337 = scalar_select %p336, %s23, 1
        %s338 = smul.addr %s337, 8
        %s339 = smul.addr %s338, 4
        %s340 = scalar_lea.vmem %s7, %s339
      $region48: #{tower_forward.1} parent=31 // pred_fallthru
        _
      // Predicated region
      $region49: #{tower_forward.1} parent=31 // pred_check
        %p341 = pneg %p240
      $region50: #{tower_forward.1} parent=31 // pred_check_branch
        %343 = sbr.rel (%p341) target = $region52
      $region51: #{tower_forward.1} parent=31 // pred_region
        %p344 = scmp.lt.s32.totalorder %s23, 1
        %s345 = scalar_select %p344, %s23, 1
        %s346 = smul.addr %s345, 2
        %s347 = smul.addr %s346, 8
        %s348 = scalar_lea.vmem %s8, %s347
      $region52: #{tower_forward.1} parent=31 // pred_fallthru
        _
    $region32: #{tower_forward.1} parent=5 // pred_fallthru
      _
    %p349 = scmp.le.s32.totalorder 1, %s15
    %p350 = scmp.lt.s32.totalorder %s15, 3
    %p351 = pnand %p349, %p350
    %p352 = pneg %p351
    // Predicated region
    $region53: #{tower_forward.1} parent=5 // pred_check
      _
    $region54: #{tower_forward.1} parent=5 // pred_check_branch
      %354 = sbr.rel (%p351) target = $region56
    $region55: #{tower_forward.1} parent=5 // pred_region
      %s355 = ssub.s32 %s15, 1
      %s356 = smul.u32 28, %s24
      %p357 = scmp.lt.s32.totalorder %s356, 27
      %s358 = scalar_select %p357, %s356, 27
      %s359 = smul.addr %s358, 8
      %s360 = scalar_lea.vmem %s0, %s359
      %p361 = pneg %p53
      %p362 = pneg %p50
      %p363 = pneg %p74
      %p364 = pneg %p71
      %p365 = pneg %p95
      %p366 = pneg %p92
      %p367 = pneg %p116
      %p368 = pneg %p113
      %p369 = scmp.lt.s32.totalorder %s25, 1
      %s370 = scalar_select %p369, %s25, 1
      %s371 = smul.addr %s370, 4
      %s372 = smul.addr %s371, 4
      %s373 = scalar_lea.vmem %s4, %s372
      %p374 = pneg %p142
      %p375 = pneg %p139
      %p376 = scmp.lt.s32.totalorder %s25, 1
      %s377 = scalar_select %p376, %s25, 1
      %s378 = smul.addr %s377, 4
      %s379 = smul.addr %s378, 4
      %s380 = scalar_lea.vmem %s5, %s379
      %p381 = pneg %p168
      %p382 = pneg %p165
      %p383 = scmp.lt.s32.totalorder %s25, 1
      %s384 = scalar_select %p383, %s25, 1
      %s385 = smul.addr %s384, 4
      %s386 = smul.addr %s385, 4
      %s387 = scalar_lea.vmem %s6, %s386
      %p388 = pneg %p194
      %p389 = pneg %p191
      %p390 = scmp.lt.s32.totalorder %s25, 1
      %s391 = scalar_select %p390, %s25, 1
      %s392 = smul.addr %s391, 8
      %s393 = smul.addr %s392, 4
      %s394 = scalar_lea.vmem %s7, %s393
      %p395 = pneg %p220
      %p396 = pneg %p217
      %p397 = scmp.lt.s32.totalorder %s25, 1
      %s398 = scalar_select %p397, %s25, 1
      %s399 = smul.addr %s398, 2
      %s400 = smul.addr %s399, 8
      %s401 = scalar_lea.vmem %s8, %s400
      %p402 = pneg %p246
      %p403 = pneg %p243
      %p404 = pneg %p272
      %p405 = pneg %p269
      %s406 = smul.u32 28, %s24
      %p407 = scmp.lt.s32.totalorder %s406, 27
      %s408 = scalar_select %p407, %s406, 27
      %s409 = smul.addr %s408, 8
      %s410 = scalar_lea.vmem %s9, %s409
      %s411 = smul.u32 28, %s24
      %p412 = scmp.lt.s32.totalorder %s411, 27
      %s413 = scalar_select %p412, %s411, 27
      %s414 = smul.addr %s413, 8
      %s415 = scalar_lea.vmem %s0, %s414
      %s416 = smul.u32 28, %s24
      %p417 = scmp.lt.s32.totalorder %s25, 1
      %s418 = scalar_select %p417, %s25, 1
      %s419 = smul.addr %s418, 4
      %s420 = smul.addr %s419, 4
      %s421 = scalar_lea.vmem %s4, %s420
      %p422 = scmp.lt.s32.totalorder %s25, 1
      %s423 = scalar_select %p422, %s25, 1
      %s424 = smul.addr %s423, 4
      %s425 = smul.addr %s424, 4
      %s426 = scalar_lea.vmem %s5, %s425
      %p427 = scmp.lt.s32.totalorder %s25, 1
      %s428 = scalar_select %p427, %s25, 1
      %s429 = smul.addr %s428, 4
      %s430 = smul.addr %s429, 4
      %s431 = scalar_lea.vmem %s6, %s430
      %p432 = scmp.lt.s32.totalorder %s25, 1
      %s433 = scalar_select %p432, %s25, 1
      %s434 = smul.addr %s433, 8
      %s435 = smul.addr %s434, 4
      %s436 = scalar_lea.vmem %s7, %s435
      %p437 = scmp.lt.s32.totalorder %s25, 1
      %s438 = scalar_select %p437, %s25, 1
      %s439 = smul.addr %s438, 2
      %s440 = smul.addr %s439, 8
      %s441 = scalar_lea.vmem %s8, %s440
      %s442 = smul.u32 28, %s24
      %p443 = scmp.lt.s32.totalorder %s442, 27
      %s444 = scalar_select %p443, %s442, 27
      %s445 = smul.addr %s444, 8
      %s446 = scalar_lea.vmem %s9, %s445
      %s447 = smul.u32 28, %s24
      %p449 = scmp.eq.s32.totalorder %s25, 0
      // Predicated region
      $region57: #{tower_forward.1} parent=55 // pred_check
        %p450 = pneg %p449
      $region58: #{tower_forward.1} parent=55 // pred_check_branch
        %452 = sbr.rel (%p450) target = $region60
      $region59: #{tower_forward.1} parent=55 // pred_region
        %v453 = vld [vmem:[%s415] sm:$0xff]
        %v454 = vld [vmem:[%s415 + $0x8] sm:$0xff]
        %v455 = vld [vmem:[%s415 + $0x10] sm:$0xff]
        %v456 = vld [vmem:[%s415 + $0x18] sm:$0xff]
        %v457 = vld [vmem:[%s415 + $0x20] sm:$0xff]
        %v458 = vld [vmem:[%s415 + $0x28] sm:$0xff]
        %v459 = vld [vmem:[%s415 + $0x30] sm:$0xff]
        %v460 = vld [vmem:[%s415 + $0x38] sm:$0xff]
        %v461 = vld [vmem:[%s415 + $0x40] sm:$0xff]
        %v462 = vld [vmem:[%s415 + $0x48] sm:$0xff]
        %v463 = vld [vmem:[%s415 + $0x50] sm:$0xff]
        %v464 = vld [vmem:[%s415 + $0x58] sm:$0xff]
        %v465 = vld [vmem:[%s415 + $0x60] sm:$0xff]
        %v466 = vld [vmem:[%s415 + $0x68] sm:$0xff]
        %v467 = vld [vmem:[%s415 + $0x70] sm:$0xff]
        %v468 = vld [vmem:[%s415 + $0x78] sm:$0xff]
        %v469 = vld [vmem:[%s415 + $0x80] sm:$0xff]
        %v470 = vld [vmem:[%s415 + $0x88] sm:$0xff]
        %v471 = vld [vmem:[%s415 + $0x90] sm:$0xff]
        %v472 = vld [vmem:[%s415 + $0x98] sm:$0xff]
        %v473 = vld [vmem:[%s415 + $0xa0] sm:$0xff]
        %v474 = vld [vmem:[%s415 + $0xa8] sm:$0xff]
        %v475 = vld [vmem:[%s415 + $0xb0] sm:$0xff]
        %v476 = vld [vmem:[%s415 + $0xb8] sm:$0xff]
        %v477 = vld [vmem:[%s415 + $0xc0] sm:$0xff]
        %v478 = vld [vmem:[%s415 + $0xc8] sm:$0xff]
        %v479 = vld [vmem:[%s415 + $0xd0] sm:$0xff]
        %v480 = vld [vmem:[%s415 + $0xd8] sm:$0xff]
        %v481 = vpack.c.bf16 %v454, %v453
        %v482 = vpack.c.bf16 %v456, %v455
        %v483 = vpack.c.bf16 %v458, %v457
        %v484 = vpack.c.bf16 %v460, %v459
        %v485 = vpack.c.bf16 %v462, %v461
        %v486 = vpack.c.bf16 %v464, %v463
        %v487 = vpack.c.bf16 %v466, %v465
        %v488 = vpack.c.bf16 %v468, %v467
        %v489 = vpack.c.bf16 %v470, %v469
        %v490 = vpack.c.bf16 %v472, %v471
        %v491 = vpack.c.bf16 %v474, %v473
        %v492 = vpack.c.bf16 %v476, %v475
        %v493 = vpack.c.bf16 %v478, %v477
        %v494 = vpack.c.bf16 %v480, %v479
        %v495 = vld [vmem:[%s2] sm:$0xf]
        %v496 = vld [vmem:[%s2 + $0x4] sm:$0xf]
        %v497 = vld [vmem:[%s2 + $0x8] sm:$0xf]
        %v498 = vld [vmem:[%s2 + $0xc] sm:$0xf]
        %v499 = vld [vmem:[%s2 + $0x10] sm:$0xf]
        %v500 = vld [vmem:[%s2 + $0x14] sm:$0xf]
        %v501 = vld [vmem:[%s1] sm:$0xff]
        %v508 = vunpack.c.l.b16 %v495
        %v509 = vunpack.c.l.b16 %v496
        %v510 = vunpack.c.l.b16 %v497
        %v511 = vunpack.c.l.b16 %v498
        %v512 = vunpack.c.l.b16 %v499
        %v513 = vunpack.c.l.b16 %v500
        %v514 = vpack.c.b16 %v509, %v508
        %v515 = vpack.c.b16 %v511, %v510
        %v516 = vpack.c.b16 %v513, %v512
        %vm520 = vcmask 392192
        %v522 = vsel %vm520, %v481, 0
        %v525 = vsel %vm520, %v482, 0
        %v528 = vsel %vm520, %v483, 0
        %v531 = vsel %vm520, %v484, 0
        %v534 = vsel %vm520, %v485, 0
        %v537 = vsel %vm520, %v486, 0
        %v540 = vsel %vm520, %v487, 0
        %v543 = vsel %vm520, %v488, 0
        %v546 = vsel %vm520, %v489, 0
        %v549 = vsel %vm520, %v490, 0
        %v552 = vsel %vm520, %v491, 0
        %v555 = vsel %vm520, %v492, 0
        %v558 = vsel %vm520, %v493, 0
        %v561 = vsel %vm520, %v494, 0
        %563 = vmatprep.subr.bf16.mxu0 0
        %564 = vmatpush1.bf16.msra.mxu0 0
        %565 = vmatprep.subr.bf16.mxu0 0
        %566 = vmatpush1.bf16.msra.mxu0 0
        %567 = vmatprep.subr.bf16.mxu0 0
        %568 = vmatpush1.bf16.msra.mxu0 0
        %569 = vmatprep.subr.bf16.mxu0 0
        %570 = vmatpush1.bf16.msra.mxu0 0
        %571 = vmatprep.subr.bf16.mxu0 0
        %572 = vmatpush1.bf16.msra.mxu0 0
        %573 = vmatprep.subr.bf16.mxu0 0
        %574 = vmatpush1.bf16.msra.mxu0 %v516
        %575 = vmatprep.subr.bf16.mxu0 0
        %576 = vmatpush1.bf16.msra.mxu0 %v515
        %577 = vmatprep.subr.bf16.mxu0 0
        %578 = vmatpush1.bf16.msra.mxu0 %v514
        %579 = vmatprep.subr.bf16.mxu0 0
        %580 = vmatpush2.bf16.msra.mxu0 0
        %581 = vmatprep.subr.bf16.mxu0 0
        %582 = vmatpush2.bf16.msra.mxu0 0
        %583 = vmatprep.subr.bf16.mxu0 0
        %584 = vmatpush2.bf16.msra.mxu0 0
        %585 = vmatprep.subr.bf16.mxu0 0
        %586 = vmatpush2.bf16.msra.mxu0 0
        %587 = vmatprep.subr.bf16.mxu0 0
        %588 = vmatpush2.bf16.msra.mxu0 0
        %589 = vmatprep.subr.bf16.mxu0 0
        %590 = vmatpush2.bf16.msra.mxu0 0
        %591 = vmatprep.subr.bf16.mxu0 0
        %592 = vmatpush2.bf16.msra.mxu0 0
        %593 = vmatprep.subr.bf16.mxu0 0
        %594 = vmatpush2.bf16.msra.mxu0 0
        %595 = vmatprep.mubr.bf16.mxu0 0
        %596 = vmatmul.mubr.bf16.gmra.mxu0 %v522
        %v597 = vpop.f32.mrf.mxu0
        %v598 = vadd.f32 %v501, %v597
        %v599 = vpop.f32.mrf.mxu0
        %v600 = vpop.f32.mrf.mxu0
        %v601 = vadd.f32 %v501, %v600
        %v602 = vpop.f32.mrf.mxu0
        %603 = vmatprep.mubr.bf16.mxu0 0
        %604 = vmatmul.mubr.bf16.gmra.mxu0 %v525
        %v605 = vpop.f32.mrf.mxu0
        %v606 = vadd.f32 %v501, %v605
        %v607 = vpop.f32.mrf.mxu0
        %v608 = vpop.f32.mrf.mxu0
        %v609 = vadd.f32 %v501, %v608
        %v610 = vpop.f32.mrf.mxu0
        %611 = vmatprep.mubr.bf16.mxu0 0
        %612 = vmatmul.mubr.bf16.gmra.mxu0 %v528
        %v613 = vpop.f32.mrf.mxu0
        %v614 = vadd.f32 %v501, %v613
        %v615 = vpop.f32.mrf.mxu0
        %v616 = vpop.f32.mrf.mxu0
        %v617 = vadd.f32 %v501, %v616
        %v618 = vpop.f32.mrf.mxu0
        %619 = vmatprep.mubr.bf16.mxu0 0
        %620 = vmatmul.mubr.bf16.gmra.mxu0 %v531
        %v621 = vpop.f32.mrf.mxu0
        %v622 = vadd.f32 %v501, %v621
        %v623 = vpop.f32.mrf.mxu0
        %v624 = vpop.f32.mrf.mxu0
        %v625 = vadd.f32 %v501, %v624
        %v626 = vpop.f32.mrf.mxu0
        %627 = vmatprep.mubr.bf16.mxu0 0
        %628 = vmatmul.mubr.bf16.gmra.mxu0 %v534
        %v629 = vpop.f32.mrf.mxu0
        %v630 = vadd.f32 %v501, %v629
        %v631 = vpop.f32.mrf.mxu0
        %v632 = vpop.f32.mrf.mxu0
        %v633 = vadd.f32 %v501, %v632
        %v634 = vpop.f32.mrf.mxu0
        %635 = vmatprep.mubr.bf16.mxu0 0
        %636 = vmatmul.mubr.bf16.gmra.mxu0 %v537
        %v637 = vpop.f32.mrf.mxu0
        %v638 = vadd.f32 %v501, %v637
        %v639 = vpop.f32.mrf.mxu0
        %v640 = vpop.f32.mrf.mxu0
        %v641 = vadd.f32 %v501, %v640
        %v642 = vpop.f32.mrf.mxu0
        %643 = vmatprep.mubr.bf16.mxu0 0
        %644 = vmatmul.mubr.bf16.gmra.mxu0 %v540
        %v645 = vpop.f32.mrf.mxu0
        %v646 = vadd.f32 %v501, %v645
        %v647 = vpop.f32.mrf.mxu0
        %v648 = vpop.f32.mrf.mxu0
        %v649 = vadd.f32 %v501, %v648
        %v650 = vpop.f32.mrf.mxu0
        %651 = vmatprep.mubr.bf16.mxu0 0
        %652 = vmatmul.mubr.bf16.gmra.mxu0 %v543
        %v653 = vpop.f32.mrf.mxu0
        %v654 = vadd.f32 %v501, %v653
        %v655 = vpop.f32.mrf.mxu0
        %v656 = vpop.f32.mrf.mxu0
        %v657 = vadd.f32 %v501, %v656
        %v658 = vpop.f32.mrf.mxu0
        %659 = vmatprep.mubr.bf16.mxu0 0
        %660 = vmatmul.mubr.bf16.gmra.mxu0 %v546
        %v661 = vpop.f32.mrf.mxu0
        %v662 = vadd.f32 %v501, %v661
        %v663 = vpop.f32.mrf.mxu0
        %v664 = vpop.f32.mrf.mxu0
        %v665 = vadd.f32 %v501, %v664
        %v666 = vpop.f32.mrf.mxu0
        %667 = vmatprep.mubr.bf16.mxu0 0
        %668 = vmatmul.mubr.bf16.gmra.mxu0 %v549
        %v669 = vpop.f32.mrf.mxu0
        %v670 = vadd.f32 %v501, %v669
        %v671 = vpop.f32.mrf.mxu0
        %v672 = vpop.f32.mrf.mxu0
        %v673 = vadd.f32 %v501, %v672
        %v674 = vpop.f32.mrf.mxu0
        %675 = vmatprep.mubr.bf16.mxu0 0
        %676 = vmatmul.mubr.bf16.gmra.mxu0 %v552
        %v677 = vpop.f32.mrf.mxu0
        %v678 = vadd.f32 %v501, %v677
        %v679 = vpop.f32.mrf.mxu0
        %v680 = vpop.f32.mrf.mxu0
        %v681 = vadd.f32 %v501, %v680
        %v682 = vpop.f32.mrf.mxu0
        %683 = vmatprep.mubr.bf16.mxu0 0
        %684 = vmatmul.mubr.bf16.gmra.mxu0 %v555
        %v685 = vpop.f32.mrf.mxu0
        %v686 = vadd.f32 %v501, %v685
        %v687 = vpop.f32.mrf.mxu0
        %v688 = vpop.f32.mrf.mxu0
        %v689 = vadd.f32 %v501, %v688
        %v690 = vpop.f32.mrf.mxu0
        %691 = vmatprep.mubr.bf16.mxu0 0
        %692 = vmatmul.mubr.bf16.gmra.mxu0 %v558
        %v693 = vpop.f32.mrf.mxu0
        %v694 = vadd.f32 %v501, %v693
        %v695 = vpop.f32.mrf.mxu0
        %v696 = vpop.f32.mrf.mxu0
        %v697 = vadd.f32 %v501, %v696
        %v698 = vpop.f32.mrf.mxu0
        %699 = vmatprep.mubr.bf16.mxu0 0
        %700 = vmatmul.mubr.bf16.gmra.mxu0 %v561
        %v701 = vpop.f32.mrf.mxu0
        %v702 = vadd.f32 %v501, %v701
        %v703 = vpop.f32.mrf.mxu0
        %v704 = vpop.f32.mrf.mxu0
        %v705 = vadd.f32 %v501, %v704
        %v706 = vpop.f32.mrf.mxu0
        %707 = vdwg.mxu0
        %v708 = vld [vmem:[%s3] sm:$0x3]
        %vm709 = vcmask 261120
        %v710 = vsel %vm709, %v598, 0.0
        %711 = vadd.xlane.f32.xlu0 %v710
        %v712 = vpop.xlane.xlu0 %711
        %v713 = vsel %vm709, %v601, 0.0
        %714 = vadd.xlane.f32.xlu0 %v713
        %v715 = vpop.xlane.xlu0 %714
        %v716 = vsel %vm709, %v606, 0.0
        %717 = vadd.xlane.f32.xlu0 %v716
        %v718 = vpop.xlane.xlu0 %717
        %v719 = vsel %vm709, %v609, 0.0
        %720 = vadd.xlane.f32.xlu0 %v719
        %v721 = vpop.xlane.xlu0 %720
        %v722 = vsel %vm709, %v614, 0.0
        %723 = vadd.xlane.f32.xlu0 %v722
        %v724 = vpop.xlane.xlu0 %723
        %v725 = vsel %vm709, %v617, 0.0
        %726 = vadd.xlane.f32.xlu0 %v725
        %v727 = vpop.xlane.xlu0 %726
        %v728 = vsel %vm709, %v622, 0.0
        %729 = vadd.xlane.f32.xlu0 %v728
        %v730 = vpop.xlane.xlu0 %729
        %v731 = vsel %vm709, %v625, 0.0
        %732 = vadd.xlane.f32.xlu0 %v731
        %v733 = vpop.xlane.xlu0 %732
        %v734 = vsel %vm709, %v630, 0.0
        %735 = vadd.xlane.f32.xlu0 %v734
        %v736 = vpop.xlane.xlu0 %735
        %v737 = vsel %vm709, %v633, 0.0
        %738 = vadd.xlane.f32.xlu0 %v737
        %v739 = vpop.xlane.xlu0 %738
        %v740 = vsel %vm709, %v638, 0.0
        %741 = vadd.xlane.f32.xlu0 %v740
        %v742 = vpop.xlane.xlu0 %741
        %v743 = vsel %vm709, %v641, 0.0
        %744 = vadd.xlane.f32.xlu0 %v743
        %v745 = vpop.xlane.xlu0 %744
        %v746 = vsel %vm709, %v646, 0.0
        %747 = vadd.xlane.f32.xlu0 %v746
        %v748 = vpop.xlane.xlu0 %747
        %v749 = vsel %vm709, %v649, 0.0
        %750 = vadd.xlane.f32.xlu0 %v749
        %v751 = vpop.xlane.xlu0 %750
        %v752 = vsel %vm709, %v654, 0.0
        %753 = vadd.xlane.f32.xlu0 %v752
        %v754 = vpop.xlane.xlu0 %753
        %v755 = vsel %vm709, %v657, 0.0
        %756 = vadd.xlane.f32.xlu0 %v755
        %v757 = vpop.xlane.xlu0 %756
        %v758 = vsel %vm709, %v662, 0.0
        %759 = vadd.xlane.f32.xlu0 %v758
        %v760 = vpop.xlane.xlu0 %759
        %v761 = vsel %vm709, %v665, 0.0
        %762 = vadd.xlane.f32.xlu0 %v761
        %v763 = vpop.xlane.xlu0 %762
        %v764 = vsel %vm709, %v670, 0.0
        %765 = vadd.xlane.f32.xlu0 %v764
        %v766 = vpop.xlane.xlu0 %765
        %v767 = vsel %vm709, %v673, 0.0
        %768 = vadd.xlane.f32.xlu0 %v767
        %v769 = vpop.xlane.xlu0 %768
        %v770 = vsel %vm709, %v678, 0.0
        %771 = vadd.xlane.f32.xlu0 %v770
        %v772 = vpop.xlane.xlu0 %771
        %v773 = vsel %vm709, %v681, 0.0
        %774 = vadd.xlane.f32.xlu0 %v773
        %v775 = vpop.xlane.xlu0 %774
        %v776 = vsel %vm709, %v686, 0.0
        %777 = vadd.xlane.f32.xlu0 %v776
        %v778 = vpop.xlane.xlu0 %777
        %v779 = vsel %vm709, %v689, 0.0
        %780 = vadd.xlane.f32.xlu0 %v779
        %v781 = vpop.xlane.xlu0 %780
        %v782 = vsel %vm709, %v694, 0.0
        %783 = vadd.xlane.f32.xlu0 %v782
        %v784 = vpop.xlane.xlu0 %783
        %v785 = vsel %vm709, %v697, 0.0
        %786 = vadd.xlane.f32.xlu0 %v785
        %v787 = vpop.xlane.xlu0 %786
        %v788 = vsel %vm709, %v702, 0.0
        %789 = vadd.xlane.f32.xlu0 %v788
        %v790 = vpop.xlane.xlu0 %789
        %v791 = vsel %vm709, %v705, 0.0
        %792 = vadd.xlane.f32.xlu0 %v791
        %v793 = vpop.xlane.xlu0 %792
        %v794 = vrcp.pop 32.0
        %v795 = vmul.f32 %v712, %v794
        %v796 = vmul.f32 %v715, %v794
        %v797 = vmul.f32 %v718, %v794
        %v798 = vmul.f32 %v721, %v794
        %v799 = vmul.f32 %v724, %v794
        %v800 = vmul.f32 %v727, %v794
        %v801 = vmul.f32 %v730, %v794
        %v802 = vmul.f32 %v733, %v794
        %v803 = vmul.f32 %v736, %v794
        %v804 = vmul.f32 %v739, %v794
        %v805 = vmul.f32 %v742, %v794
        %v806 = vmul.f32 %v745, %v794
        %v807 = vmul.f32 %v748, %v794
        %v808 = vmul.f32 %v751, %v794
        %v809 = vmul.f32 %v754, %v794
        %v810 = vmul.f32 %v757, %v794
        %v811 = vmul.f32 %v760, %v794
        %v812 = vmul.f32 %v763, %v794
        %v813 = vmul.f32 %v766, %v794
        %v814 = vmul.f32 %v769, %v794
        %v815 = vmul.f32 %v772, %v794
        %v816 = vmul.f32 %v775, %v794
        %v817 = vmul.f32 %v778, %v794
        %v818 = vmul.f32 %v781, %v794
        %v819 = vmul.f32 %v784, %v794
        %v820 = vmul.f32 %v787, %v794
        %v821 = vmul.f32 %v790, %v794
        %v822 = vmul.f32 %v793, %v794
        %v823 = vsub.f32 %v598, %v795
        %v824 = vsub.f32 %v601, %v796
        %v825 = vsub.f32 %v606, %v797
        %v826 = vsub.f32 %v609, %v798
        %v827 = vsub.f32 %v614, %v799
        %v828 = vsub.f32 %v617, %v800
        %v829 = vsub.f32 %v622, %v801
        %v830 = vsub.f32 %v625, %v802
        %v831 = vsub.f32 %v630, %v803
        %v832 = vsub.f32 %v633, %v804
        %v833 = vsub.f32 %v638, %v805
        %v834 = vsub.f32 %v641, %v806
        %v835 = vsub.f32 %v646, %v807
        %v836 = vsub.f32 %v649, %v808
        %v837 = vsub.f32 %v654, %v809
        %v838 = vsub.f32 %v657, %v810
        %v839 = vsub.f32 %v662, %v811
        %v840 = vsub.f32 %v665, %v812
        %v841 = vsub.f32 %v670, %v813
        %v842 = vsub.f32 %v673, %v814
        %v843 = vsub.f32 %v678, %v815
        %v844 = vsub.f32 %v681, %v816
        %v845 = vsub.f32 %v686, %v817
        %v846 = vsub.f32 %v689, %v818
        %v847 = vsub.f32 %v694, %v819
        %v848 = vsub.f32 %v697, %v820
        %v849 = vsub.f32 %v702, %v821
        %v850 = vsub.f32 %v705, %v822
        %v851 = vmul.f32 %v823, %v823
        %v852 = vmul.f32 %v824, %v824
        %v853 = vmul.f32 %v825, %v825
        %v854 = vmul.f32 %v826, %v826
        %v855 = vmul.f32 %v827, %v827
        %v856 = vmul.f32 %v828, %v828
        %v857 = vmul.f32 %v829, %v829
        %v858 = vmul.f32 %v830, %v830
        %v859 = vmul.f32 %v831, %v831
        %v860 = vmul.f32 %v832, %v832
        %v861 = vmul.f32 %v833, %v833
        %v862 = vmul.f32 %v834, %v834
        %v863 = vmul.f32 %v835, %v835
        %v864 = vmul.f32 %v836, %v836
        %v865 = vmul.f32 %v837, %v837
        %v866 = vmul.f32 %v838, %v838
        %v867 = vmul.f32 %v839, %v839
        %v868 = vmul.f32 %v840, %v840
        %v869 = vmul.f32 %v841, %v841
        %v870 = vmul.f32 %v842, %v842
        %v871 = vmul.f32 %v843, %v843
        %v872 = vmul.f32 %v844, %v844
        %v873 = vmul.f32 %v845, %v845
        %v874 = vmul.f32 %v846, %v846
        %v875 = vmul.f32 %v847, %v847
        %v876 = vmul.f32 %v848, %v848
        %v877 = vmul.f32 %v849, %v849
        %v878 = vmul.f32 %v850, %v850
        %v879 = vsel %vm709, %v851, 0.0
        %880 = vadd.xlane.f32.xlu0 %v879
        %v881 = vpop.xlane.xlu0 %880
        %v882 = vsel %vm709, %v852, 0.0
        %883 = vadd.xlane.f32.xlu0 %v882
        %v884 = vpop.xlane.xlu0 %883
        %v885 = vsel %vm709, %v853, 0.0
        %886 = vadd.xlane.f32.xlu0 %v885
        %v887 = vpop.xlane.xlu0 %886
        %v888 = vsel %vm709, %v854, 0.0
        %889 = vadd.xlane.f32.xlu0 %v888
        %v890 = vpop.xlane.xlu0 %889
        %v891 = vsel %vm709, %v855, 0.0
        %892 = vadd.xlane.f32.xlu0 %v891
        %v893 = vpop.xlane.xlu0 %892
        %v894 = vsel %vm709, %v856, 0.0
        %895 = vadd.xlane.f32.xlu0 %v894
        %v896 = vpop.xlane.xlu0 %895
        %v897 = vsel %vm709, %v857, 0.0
        %898 = vadd.xlane.f32.xlu0 %v897
        %v899 = vpop.xlane.xlu0 %898
        %v900 = vsel %vm709, %v858, 0.0
        %901 = vadd.xlane.f32.xlu0 %v900
        %v902 = vpop.xlane.xlu0 %901
        %v903 = vsel %vm709, %v859, 0.0
        %904 = vadd.xlane.f32.xlu0 %v903
        %v905 = vpop.xlane.xlu0 %904
        %v906 = vsel %vm709, %v860, 0.0
        %907 = vadd.xlane.f32.xlu0 %v906
        %v908 = vpop.xlane.xlu0 %907
        %v909 = vsel %vm709, %v861, 0.0
        %910 = vadd.xlane.f32.xlu0 %v909
        %v911 = vpop.xlane.xlu0 %910
        %v912 = vsel %vm709, %v862, 0.0
        %913 = vadd.xlane.f32.xlu0 %v912
        %v914 = vpop.xlane.xlu0 %913
        %v915 = vsel %vm709, %v863, 0.0
        %916 = vadd.xlane.f32.xlu0 %v915
        %v917 = vpop.xlane.xlu0 %916
        %v918 = vsel %vm709, %v864, 0.0
        %919 = vadd.xlane.f32.xlu0 %v918
        %v920 = vpop.xlane.xlu0 %919
        %v921 = vsel %vm709, %v865, 0.0
        %922 = vadd.xlane.f32.xlu0 %v921
        %v923 = vpop.xlane.xlu0 %922
        %v924 = vsel %vm709, %v866, 0.0
        %925 = vadd.xlane.f32.xlu0 %v924
        %v926 = vpop.xlane.xlu0 %925
        %v927 = vsel %vm709, %v867, 0.0
        %928 = vadd.xlane.f32.xlu0 %v927
        %v929 = vpop.xlane.xlu0 %928
        %v930 = vsel %vm709, %v868, 0.0
        %931 = vadd.xlane.f32.xlu0 %v930
        %v932 = vpop.xlane.xlu0 %931
        %v933 = vsel %vm709, %v869, 0.0
        %934 = vadd.xlane.f32.xlu0 %v933
        %v935 = vpop.xlane.xlu0 %934
        %v936 = vsel %vm709, %v870, 0.0
        %937 = vadd.xlane.f32.xlu0 %v936
        %v938 = vpop.xlane.xlu0 %937
        %v939 = vsel %vm709, %v871, 0.0
        %940 = vadd.xlane.f32.xlu0 %v939
        %v941 = vpop.xlane.xlu0 %940
        %v942 = vsel %vm709, %v872, 0.0
        %943 = vadd.xlane.f32.xlu0 %v942
        %v944 = vpop.xlane.xlu0 %943
        %v945 = vsel %vm709, %v873, 0.0
        %946 = vadd.xlane.f32.xlu0 %v945
        %v947 = vpop.xlane.xlu0 %946
        %v948 = vsel %vm709, %v874, 0.0
        %949 = vadd.xlane.f32.xlu0 %v948
        %v950 = vpop.xlane.xlu0 %949
        %v951 = vsel %vm709, %v875, 0.0
        %952 = vadd.xlane.f32.xlu0 %v951
        %v953 = vpop.xlane.xlu0 %952
        %v954 = vsel %vm709, %v876, 0.0
        %955 = vadd.xlane.f32.xlu0 %v954
        %v956 = vpop.xlane.xlu0 %955
        %v957 = vsel %vm709, %v877, 0.0
        %958 = vadd.xlane.f32.xlu0 %v957
        %v959 = vpop.xlane.xlu0 %958
        %v960 = vsel %vm709, %v878, 0.0
        %961 = vadd.xlane.f32.xlu0 %v960
        %v962 = vpop.xlane.xlu0 %961
        %v963 = vmul.f32 %v881, %v794
        %v964 = vmul.f32 %v884, %v794
        %v965 = vmul.f32 %v887, %v794
        %v966 = vmul.f32 %v890, %v794
        %v967 = vmul.f32 %v893, %v794
        %v968 = vmul.f32 %v896, %v794
        %v969 = vmul.f32 %v899, %v794
        %v970 = vmul.f32 %v902, %v794
        %v971 = vmul.f32 %v905, %v794
        %v972 = vmul.f32 %v908, %v794
        %v973 = vmul.f32 %v911, %v794
        %v974 = vmul.f32 %v914, %v794
        %v975 = vmul.f32 %v917, %v794
        %v976 = vmul.f32 %v920, %v794
        %v977 = vmul.f32 %v923, %v794
        %v978 = vmul.f32 %v926, %v794
        %v979 = vmul.f32 %v929, %v794
        %v980 = vmul.f32 %v932, %v794
        %v981 = vmul.f32 %v935, %v794
        %v982 = vmul.f32 %v938, %v794
        %v983 = vmul.f32 %v941, %v794
        %v984 = vmul.f32 %v944, %v794
        %v985 = vmul.f32 %v947, %v794
        %v986 = vmul.f32 %v950, %v794
        %v987 = vmul.f32 %v953, %v794
        %v988 = vmul.f32 %v956, %v794
        %v989 = vmul.f32 %v959, %v794
        %v990 = vmul.f32 %v962, %v794
        %v991 = vadd.f32 %v963, 1e-05
        %v992 = vadd.f32 %v964, 1e-05
        %v993 = vadd.f32 %v965, 1e-05
        %v994 = vadd.f32 %v966, 1e-05
        %v995 = vadd.f32 %v967, 1e-05
        %v996 = vadd.f32 %v968, 1e-05
        %v997 = vadd.f32 %v969, 1e-05
        %v998 = vadd.f32 %v970, 1e-05
        %v999 = vadd.f32 %v971, 1e-05
        %v1000 = vadd.f32 %v972, 1e-05
        %v1001 = vadd.f32 %v973, 1e-05
        %v1002 = vadd.f32 %v974, 1e-05
        %v1003 = vadd.f32 %v975, 1e-05
        %v1004 = vadd.f32 %v976, 1e-05
        %v1005 = vadd.f32 %v977, 1e-05
        %v1006 = vadd.f32 %v978, 1e-05
        %v1007 = vadd.f32 %v979, 1e-05
        %v1008 = vadd.f32 %v980, 1e-05
        %v1009 = vadd.f32 %v981, 1e-05
        %v1010 = vadd.f32 %v982, 1e-05
        %v1011 = vadd.f32 %v983, 1e-05
        %v1012 = vadd.f32 %v984, 1e-05
        %v1013 = vadd.f32 %v985, 1e-05
        %v1014 = vadd.f32 %v986, 1e-05
        %v1015 = vadd.f32 %v987, 1e-05
        %v1016 = vadd.f32 %v988, 1e-05
        %v1017 = vadd.f32 %v989, 1e-05
        %v1018 = vadd.f32 %v990, 1e-05
        %v1019 = vrsqrt.pop %v991
        %v1020 = vrsqrt.pop %v992
        %v1021 = vrsqrt.pop %v993
        %v1022 = vrsqrt.pop %v994
        %v1023 = vrsqrt.pop %v995
        %v1024 = vrsqrt.pop %v996
        %v1025 = vrsqrt.pop %v997
        %v1026 = vrsqrt.pop %v998
        %v1027 = vrsqrt.pop %v999
        %v1028 = vrsqrt.pop %v1000
        %v1029 = vrsqrt.pop %v1001
        %v1030 = vrsqrt.pop %v1002
        %v1031 = vrsqrt.pop %v1003
        %v1032 = vrsqrt.pop %v1004
        %v1033 = vrsqrt.pop %v1005
        %v1034 = vrsqrt.pop %v1006
        %v1035 = vrsqrt.pop %v1007
        %v1036 = vrsqrt.pop %v1008
        %v1037 = vrsqrt.pop %v1009
        %v1038 = vrsqrt.pop %v1010
        %v1039 = vrsqrt.pop %v1011
        %v1040 = vrsqrt.pop %v1012
        %v1041 = vrsqrt.pop %v1013
        %v1042 = vrsqrt.pop %v1014
        %v1043 = vrsqrt.pop %v1015
        %v1044 = vrsqrt.pop %v1016
        %v1045 = vrsqrt.pop %v1017
        %v1046 = vrsqrt.pop %v1018
        %v1047 = vmul.f32 %v823, %v1019
        %v1048 = vmul.f32 %v824, %v1020
        %v1049 = vmul.f32 %v825, %v1021
        %v1050 = vmul.f32 %v826, %v1022
        %v1051 = vmul.f32 %v827, %v1023
        %v1052 = vmul.f32 %v828, %v1024
        %v1053 = vmul.f32 %v829, %v1025
        %v1054 = vmul.f32 %v830, %v1026
        %v1055 = vmul.f32 %v831, %v1027
        %v1056 = vmul.f32 %v832, %v1028
        %v1057 = vmul.f32 %v833, %v1029
        %v1058 = vmul.f32 %v834, %v1030
        %v1059 = vmul.f32 %v835, %v1031
        %v1060 = vmul.f32 %v836, %v1032
        %v1061 = vmul.f32 %v837, %v1033
        %v1062 = vmul.f32 %v838, %v1034
        %v1063 = vmul.f32 %v839, %v1035
        %v1064 = vmul.f32 %v840, %v1036
        %v1065 = vmul.f32 %v841, %v1037
        %v1066 = vmul.f32 %v842, %v1038
        %v1067 = vmul.f32 %v843, %v1039
        %v1068 = vmul.f32 %v844, %v1040
        %v1069 = vmul.f32 %v845, %v1041
        %v1070 = vmul.f32 %v846, %v1042
        %v1071 = vmul.f32 %v847, %v1043
        %v1072 = vmul.f32 %v848, %v1044
        %v1073 = vmul.f32 %v849, %v1045
        %v1074 = vmul.f32 %v850, %v1046
        %v1075 = vlaneseq
        %v1076 = vshrl.u32 %v1075, 7
        %v1077 = vsub.s32 0, %v1076
        %v1078 = vrot.slane %v708, %v1077
        %v1079 = vmul.f32 %v1047, %v1078
        %v1080 = vmul.f32 %v1048, %v1078
        %v1081 = vmul.f32 %v1049, %v1078
        %v1082 = vmul.f32 %v1050, %v1078
        %v1083 = vmul.f32 %v1051, %v1078
        %v1084 = vmul.f32 %v1052, %v1078
        %v1085 = vmul.f32 %v1053, %v1078
        %v1086 = vmul.f32 %v1054, %v1078
        %v1087 = vmul.f32 %v1055, %v1078
        %v1088 = vmul.f32 %v1056, %v1078
        %v1089 = vmul.f32 %v1057, %v1078
        %v1090 = vmul.f32 %v1058, %v1078
        %v1091 = vmul.f32 %v1059, %v1078
        %v1092 = vmul.f32 %v1060, %v1078
        %v1093 = vmul.f32 %v1061, %v1078
        %v1094 = vmul.f32 %v1062, %v1078
        %v1095 = vmul.f32 %v1063, %v1078
        %v1096 = vmul.f32 %v1064, %v1078
        %v1097 = vmul.f32 %v1065, %v1078
        %v1098 = vmul.f32 %v1066, %v1078
        %v1099 = vmul.f32 %v1067, %v1078
        %v1100 = vmul.f32 %v1068, %v1078
        %v1101 = vmul.f32 %v1069, %v1078
        %v1102 = vmul.f32 %v1070, %v1078
        %v1103 = vmul.f32 %v1071, %v1078
        %v1104 = vmul.f32 %v1072, %v1078
        %v1105 = vmul.f32 %v1073, %v1078
        %v1106 = vmul.f32 %v1074, %v1078
        %v1107 = vlaneseq
        %v1108 = vshrl.u32 %v1107, 7
        %v1109 = vsub.s32 1, %v1108
        %v1110 = vrot.slane %v708, %v1109
        %v1111 = vadd.f32 %v1079, %v1110
        %v1112 = vadd.f32 %v1080, %v1110
        %v1113 = vadd.f32 %v1081, %v1110
        %v1114 = vadd.f32 %v1082, %v1110
        %v1115 = vadd.f32 %v1083, %v1110
        %v1116 = vadd.f32 %v1084, %v1110
        %v1117 = vadd.f32 %v1085, %v1110
        %v1118 = vadd.f32 %v1086, %v1110
        %v1119 = vadd.f32 %v1087, %v1110
        %v1120 = vadd.f32 %v1088, %v1110
        %v1121 = vadd.f32 %v1089, %v1110
        %v1122 = vadd.f32 %v1090, %v1110
        %v1123 = vadd.f32 %v1091, %v1110
        %v1124 = vadd.f32 %v1092, %v1110
        %v1125 = vadd.f32 %v1093, %v1110
        %v1126 = vadd.f32 %v1094, %v1110
        %v1127 = vadd.f32 %v1095, %v1110
        %v1128 = vadd.f32 %v1096, %v1110
        %v1129 = vadd.f32 %v1097, %v1110
        %v1130 = vadd.f32 %v1098, %v1110
        %v1131 = vadd.f32 %v1099, %v1110
        %v1132 = vadd.f32 %v1100, %v1110
        %v1133 = vadd.f32 %v1101, %v1110
        %v1134 = vadd.f32 %v1102, %v1110
        %v1135 = vadd.f32 %v1103, %v1110
        %v1136 = vadd.f32 %v1104, %v1110
        %v1137 = vadd.f32 %v1105, %v1110
        %v1138 = vadd.f32 %v1106, %v1110
        %1139 = vst.msk [vmem:[#allocation2] sm:$0xff] %vm709, %v1111
        %1140 = vst.msk [vmem:[#allocation2 + $0x8] sm:$0xff] %vm709, %v1112
        %1141 = vst.msk [vmem:[#allocation2 + $0x10] sm:$0xff] %vm709, %v1113
        %1142 = vst.msk [vmem:[#allocation2 + $0x18] sm:$0xff] %vm709, %v1114
        %1143 = vst.msk [vmem:[#allocation2 + $0x20] sm:$0xff] %vm709, %v1115
        %1144 = vst.msk [vmem:[#allocation2 + $0x28] sm:$0xff] %vm709, %v1116
        %1145 = vst.msk [vmem:[#allocation2 + $0x30] sm:$0xff] %vm709, %v1117
        %1146 = vst.msk [vmem:[#allocation2 + $0x38] sm:$0xff] %vm709, %v1118
        %1147 = vst.msk [vmem:[#allocation2 + $0x40] sm:$0xff] %vm709, %v1119
        %1148 = vst.msk [vmem:[#allocation2 + $0x48] sm:$0xff] %vm709, %v1120
        %1149 = vst.msk [vmem:[#allocation2 + $0x50] sm:$0xff] %vm709, %v1121
        %1150 = vst.msk [vmem:[#allocation2 + $0x58] sm:$0xff] %vm709, %v1122
        %1151 = vst.msk [vmem:[#allocation2 + $0x60] sm:$0xff] %vm709, %v1123
        %1152 = vst.msk [vmem:[#allocation2 + $0x68] sm:$0xff] %vm709, %v1124
        %1153 = vst.msk [vmem:[#allocation2 + $0x70] sm:$0xff] %vm709, %v1125
        %1154 = vst.msk [vmem:[#allocation2 + $0x78] sm:$0xff] %vm709, %v1126
        %1155 = vst.msk [vmem:[#allocation2 + $0x80] sm:$0xff] %vm709, %v1127
        %1156 = vst.msk [vmem:[#allocation2 + $0x88] sm:$0xff] %vm709, %v1128
        %1157 = vst.msk [vmem:[#allocation2 + $0x90] sm:$0xff] %vm709, %v1129
        %1158 = vst.msk [vmem:[#allocation2 + $0x98] sm:$0xff] %vm709, %v1130
        %1159 = vst.msk [vmem:[#allocation2 + $0xa0] sm:$0xff] %vm709, %v1131
        %1160 = vst.msk [vmem:[#allocation2 + $0xa8] sm:$0xff] %vm709, %v1132
        %1161 = vst.msk [vmem:[#allocation2 + $0xb0] sm:$0xff] %vm709, %v1133
        %1162 = vst.msk [vmem:[#allocation2 + $0xb8] sm:$0xff] %vm709, %v1134
        %1163 = vst.msk [vmem:[#allocation2 + $0xc0] sm:$0xff] %vm709, %v1135
        %1164 = vst.msk [vmem:[#allocation2 + $0xc8] sm:$0xff] %vm709, %v1136
        %1165 = vst.msk [vmem:[#allocation2 + $0xd0] sm:$0xff] %vm709, %v1137
        %1166 = vst.msk [vmem:[#allocation2 + $0xd8] sm:$0xff] %vm709, %v1138
      $region60: #{tower_forward.1} parent=55 // pred_fallthru
        _
      %v1167 = vld [vmem:[#allocation2] sm:$0xff]
      %v1168 = vld [vmem:[#allocation2 + $0x8] sm:$0xff]
      %v1169 = vld [vmem:[#allocation2 + $0x10] sm:$0xff]
      %v1170 = vld [vmem:[#allocation2 + $0x18] sm:$0xff]
      %v1171 = vld [vmem:[#allocation2 + $0x20] sm:$0xff]
      %v1172 = vld [vmem:[#allocation2 + $0x28] sm:$0xff]
      %v1173 = vld [vmem:[#allocation2 + $0x30] sm:$0xff]
      %v1174 = vld [vmem:[#allocation2 + $0x38] sm:$0xff]
      %v1175 = vld [vmem:[#allocation2 + $0x40] sm:$0xff]
      %v1176 = vld [vmem:[#allocation2 + $0x48] sm:$0xff]
      %v1177 = vld [vmem:[#allocation2 + $0x50] sm:$0xff]
      %v1178 = vld [vmem:[#allocation2 + $0x58] sm:$0xff]
      %v1179 = vld [vmem:[#allocation2 + $0x60] sm:$0xff]
      %v1180 = vld [vmem:[#allocation2 + $0x68] sm:$0xff]
      %v1181 = vld [vmem:[#allocation2 + $0x70] sm:$0xff]
      %v1182 = vld [vmem:[#allocation2 + $0x78] sm:$0xff]
      %v1183 = vld [vmem:[#allocation2 + $0x80] sm:$0xff]
      %v1184 = vld [vmem:[#allocation2 + $0x88] sm:$0xff]
      %v1185 = vld [vmem:[#allocation2 + $0x90] sm:$0xff]
      %v1186 = vld [vmem:[#allocation2 + $0x98] sm:$0xff]
      %v1187 = vld [vmem:[#allocation2 + $0xa0] sm:$0xff]
      %v1188 = vld [vmem:[#allocation2 + $0xa8] sm:$0xff]
      %v1189 = vld [vmem:[#allocation2 + $0xb0] sm:$0xff]
      %v1190 = vld [vmem:[#allocation2 + $0xb8] sm:$0xff]
      %v1191 = vld [vmem:[#allocation2 + $0xc0] sm:$0xff]
      %v1192 = vld [vmem:[#allocation2 + $0xc8] sm:$0xff]
      %v1193 = vld [vmem:[#allocation2 + $0xd0] sm:$0xff]
      %v1194 = vld [vmem:[#allocation2 + $0xd8] sm:$0xff]
      %v1195 = vld [vmem:[%s441] sm:$0xff]
      %v1196 = vld [vmem:[%s441 + $0x8] sm:$0x3]
      %v1197 = vlaneseq
      %v1198 = vand.u32 %v1197, 127
      %vm1199 = vcmp.lt.s32.totalorder %v1198, 5
      %v1200 = vsel %vm1199, 0.0, -1e+30
      %vm1201 = vcmask 261120
      %v1202 = vsel %vm1201, %v1167, 0.0
      %1203 = vadd.xlane.f32.xlu0 %v1202
      %v1204 = vpop.xlane.xlu0 %1203
      %v1205 = vsel %vm1201, %v1168, 0.0
      %1206 = vadd.xlane.f32.xlu0 %v1205
      %v1207 = vpop.xlane.xlu0 %1206
      %v1208 = vsel %vm1201, %v1169, 0.0
      %1209 = vadd.xlane.f32.xlu0 %v1208
      %v1210 = vpop.xlane.xlu0 %1209
      %v1211 = vsel %vm1201, %v1170, 0.0
      %1212 = vadd.xlane.f32.xlu0 %v1211
      %v1213 = vpop.xlane.xlu0 %1212
      %v1214 = vsel %vm1201, %v1171, 0.0
      %1215 = vadd.xlane.f32.xlu0 %v1214
      %v1216 = vpop.xlane.xlu0 %1215
      %v1217 = vsel %vm1201, %v1172, 0.0
      %1218 = vadd.xlane.f32.xlu0 %v1217
      %v1219 = vpop.xlane.xlu0 %1218
      %v1220 = vsel %vm1201, %v1173, 0.0
      %1221 = vadd.xlane.f32.xlu0 %v1220
      %v1222 = vpop.xlane.xlu0 %1221
      %v1223 = vsel %vm1201, %v1174, 0.0
      %1224 = vadd.xlane.f32.xlu0 %v1223
      %v1225 = vpop.xlane.xlu0 %1224
      %v1226 = vsel %vm1201, %v1175, 0.0
      %1227 = vadd.xlane.f32.xlu0 %v1226
      %v1228 = vpop.xlane.xlu0 %1227
      %v1229 = vsel %vm1201, %v1176, 0.0
      %1230 = vadd.xlane.f32.xlu0 %v1229
      %v1231 = vpop.xlane.xlu0 %1230
      %v1232 = vsel %vm1201, %v1177, 0.0
      %1233 = vadd.xlane.f32.xlu0 %v1232
      %v1234 = vpop.xlane.xlu0 %1233
      %v1235 = vsel %vm1201, %v1178, 0.0
      %1236 = vadd.xlane.f32.xlu0 %v1235
      %v1237 = vpop.xlane.xlu0 %1236
      %v1238 = vsel %vm1201, %v1179, 0.0
      %1239 = vadd.xlane.f32.xlu0 %v1238
      %v1240 = vpop.xlane.xlu0 %1239
      %v1241 = vsel %vm1201, %v1180, 0.0
      %1242 = vadd.xlane.f32.xlu0 %v1241
      %v1243 = vpop.xlane.xlu0 %1242
      %v1244 = vsel %vm1201, %v1181, 0.0
      %1245 = vadd.xlane.f32.xlu0 %v1244
      %v1246 = vpop.xlane.xlu0 %1245
      %v1247 = vsel %vm1201, %v1182, 0.0
      %1248 = vadd.xlane.f32.xlu0 %v1247
      %v1249 = vpop.xlane.xlu0 %1248
      %v1250 = vsel %vm1201, %v1183, 0.0
      %1251 = vadd.xlane.f32.xlu0 %v1250
      %v1252 = vpop.xlane.xlu0 %1251
      %v1253 = vsel %vm1201, %v1184, 0.0
      %1254 = vadd.xlane.f32.xlu0 %v1253
      %v1255 = vpop.xlane.xlu0 %1254
      %v1256 = vsel %vm1201, %v1185, 0.0
      %1257 = vadd.xlane.f32.xlu0 %v1256
      %v1258 = vpop.xlane.xlu0 %1257
      %v1259 = vsel %vm1201, %v1186, 0.0
      %1260 = vadd.xlane.f32.xlu0 %v1259
      %v1261 = vpop.xlane.xlu0 %1260
      %v1262 = vsel %vm1201, %v1187, 0.0
      %1263 = vadd.xlane.f32.xlu0 %v1262
      %v1264 = vpop.xlane.xlu0 %1263
      %v1265 = vsel %vm1201, %v1188, 0.0
      %1266 = vadd.xlane.f32.xlu0 %v1265
      %v1267 = vpop.xlane.xlu0 %1266
      %v1268 = vsel %vm1201, %v1189, 0.0
      %1269 = vadd.xlane.f32.xlu0 %v1268
      %v1270 = vpop.xlane.xlu0 %1269
      %v1271 = vsel %vm1201, %v1190, 0.0
      %1272 = vadd.xlane.f32.xlu0 %v1271
      %v1273 = vpop.xlane.xlu0 %1272
      %v1274 = vsel %vm1201, %v1191, 0.0
      %1275 = vadd.xlane.f32.xlu0 %v1274
      %v1276 = vpop.xlane.xlu0 %1275
      %v1277 = vsel %vm1201, %v1192, 0.0
      %1278 = vadd.xlane.f32.xlu0 %v1277
      %v1279 = vpop.xlane.xlu0 %1278
      %v1280 = vsel %vm1201, %v1193, 0.0
      %1281 = vadd.xlane.f32.xlu0 %v1280
      %v1282 = vpop.xlane.xlu0 %1281
      %v1283 = vsel %vm1201, %v1194, 0.0
      %1284 = vadd.xlane.f32.xlu0 %v1283
      %v1285 = vpop.xlane.xlu0 %1284
      %v1286 = vrcp.pop 32.0
      %v1287 = vmul.f32 %v1204, %v1286
      %v1288 = vmul.f32 %v1207, %v1286
      %v1289 = vmul.f32 %v1210, %v1286
      %v1290 = vmul.f32 %v1213, %v1286
      %v1291 = vmul.f32 %v1216, %v1286
      %v1292 = vmul.f32 %v1219, %v1286
      %v1293 = vmul.f32 %v1222, %v1286
      %v1294 = vmul.f32 %v1225, %v1286
      %v1295 = vmul.f32 %v1228, %v1286
      %v1296 = vmul.f32 %v1231, %v1286
      %v1297 = vmul.f32 %v1234, %v1286
      %v1298 = vmul.f32 %v1237, %v1286
      %v1299 = vmul.f32 %v1240, %v1286
      %v1300 = vmul.f32 %v1243, %v1286
      %v1301 = vmul.f32 %v1246, %v1286
      %v1302 = vmul.f32 %v1249, %v1286
      %v1303 = vmul.f32 %v1252, %v1286
      %v1304 = vmul.f32 %v1255, %v1286
      %v1305 = vmul.f32 %v1258, %v1286
      %v1306 = vmul.f32 %v1261, %v1286
      %v1307 = vmul.f32 %v1264, %v1286
      %v1308 = vmul.f32 %v1267, %v1286
      %v1309 = vmul.f32 %v1270, %v1286
      %v1310 = vmul.f32 %v1273, %v1286
      %v1311 = vmul.f32 %v1276, %v1286
      %v1312 = vmul.f32 %v1279, %v1286
      %v1313 = vmul.f32 %v1282, %v1286
      %v1314 = vmul.f32 %v1285, %v1286
      %v1315 = vsub.f32 %v1167, %v1287
      %v1316 = vsub.f32 %v1168, %v1288
      %v1317 = vsub.f32 %v1169, %v1289
      %v1318 = vsub.f32 %v1170, %v1290
      %v1319 = vsub.f32 %v1171, %v1291
      %v1320 = vsub.f32 %v1172, %v1292
      %v1321 = vsub.f32 %v1173, %v1293
      %v1322 = vsub.f32 %v1174, %v1294
      %v1323 = vsub.f32 %v1175, %v1295
      %v1324 = vsub.f32 %v1176, %v1296
      %v1325 = vsub.f32 %v1177, %v1297
      %v1326 = vsub.f32 %v1178, %v1298
      %v1327 = vsub.f32 %v1179, %v1299
      %v1328 = vsub.f32 %v1180, %v1300
      %v1329 = vsub.f32 %v1181, %v1301
      %v1330 = vsub.f32 %v1182, %v1302
      %v1331 = vsub.f32 %v1183, %v1303
      %v1332 = vsub.f32 %v1184, %v1304
      %v1333 = vsub.f32 %v1185, %v1305
      %v1334 = vsub.f32 %v1186, %v1306
      %v1335 = vsub.f32 %v1187, %v1307
      %v1336 = vsub.f32 %v1188, %v1308
      %v1337 = vsub.f32 %v1189, %v1309
      %v1338 = vsub.f32 %v1190, %v1310
      %v1339 = vsub.f32 %v1191, %v1311
      %v1340 = vsub.f32 %v1192, %v1312
      %v1341 = vsub.f32 %v1193, %v1313
      %v1342 = vsub.f32 %v1194, %v1314
      %v1343 = vmul.f32 %v1315, %v1315
      %v1344 = vmul.f32 %v1316, %v1316
      %v1345 = vmul.f32 %v1317, %v1317
      %v1346 = vmul.f32 %v1318, %v1318
      %v1347 = vmul.f32 %v1319, %v1319
      %v1348 = vmul.f32 %v1320, %v1320
      %v1349 = vmul.f32 %v1321, %v1321
      %v1350 = vmul.f32 %v1322, %v1322
      %v1351 = vmul.f32 %v1323, %v1323
      %v1352 = vmul.f32 %v1324, %v1324
      %v1353 = vmul.f32 %v1325, %v1325
      %v1354 = vmul.f32 %v1326, %v1326
      %v1355 = vmul.f32 %v1327, %v1327
      %v1356 = vmul.f32 %v1328, %v1328
      %v1357 = vmul.f32 %v1329, %v1329
      %v1358 = vmul.f32 %v1330, %v1330
      %v1359 = vmul.f32 %v1331, %v1331
      %v1360 = vmul.f32 %v1332, %v1332
      %v1361 = vmul.f32 %v1333, %v1333
      %v1362 = vmul.f32 %v1334, %v1334
      %v1363 = vmul.f32 %v1335, %v1335
      %v1364 = vmul.f32 %v1336, %v1336
      %v1365 = vmul.f32 %v1337, %v1337
      %v1366 = vmul.f32 %v1338, %v1338
      %v1367 = vmul.f32 %v1339, %v1339
      %v1368 = vmul.f32 %v1340, %v1340
      %v1369 = vmul.f32 %v1341, %v1341
      %v1370 = vmul.f32 %v1342, %v1342
      %v1371 = vsel %vm1201, %v1343, 0.0
      %1372 = vadd.xlane.f32.xlu0 %v1371
      %v1373 = vpop.xlane.xlu0 %1372
      %v1374 = vsel %vm1201, %v1344, 0.0
      %1375 = vadd.xlane.f32.xlu0 %v1374
      %v1376 = vpop.xlane.xlu0 %1375
      %v1377 = vsel %vm1201, %v1345, 0.0
      %1378 = vadd.xlane.f32.xlu0 %v1377
      %v1379 = vpop.xlane.xlu0 %1378
      %v1380 = vsel %vm1201, %v1346, 0.0
      %1381 = vadd.xlane.f32.xlu0 %v1380
      %v1382 = vpop.xlane.xlu0 %1381
      %v1383 = vsel %vm1201, %v1347, 0.0
      %1384 = vadd.xlane.f32.xlu0 %v1383
      %v1385 = vpop.xlane.xlu0 %1384
      %v1386 = vsel %vm1201, %v1348, 0.0
      %1387 = vadd.xlane.f32.xlu0 %v1386
      %v1388 = vpop.xlane.xlu0 %1387
      %v1389 = vsel %vm1201, %v1349, 0.0
      %1390 = vadd.xlane.f32.xlu0 %v1389
      %v1391 = vpop.xlane.xlu0 %1390
      %v1392 = vsel %vm1201, %v1350, 0.0
      %1393 = vadd.xlane.f32.xlu0 %v1392
      %v1394 = vpop.xlane.xlu0 %1393
      %v1395 = vsel %vm1201, %v1351, 0.0
      %1396 = vadd.xlane.f32.xlu0 %v1395
      %v1397 = vpop.xlane.xlu0 %1396
      %v1398 = vsel %vm1201, %v1352, 0.0
      %1399 = vadd.xlane.f32.xlu0 %v1398
      %v1400 = vpop.xlane.xlu0 %1399
      %v1401 = vsel %vm1201, %v1353, 0.0
      %1402 = vadd.xlane.f32.xlu0 %v1401
      %v1403 = vpop.xlane.xlu0 %1402
      %v1404 = vsel %vm1201, %v1354, 0.0
      %1405 = vadd.xlane.f32.xlu0 %v1404
      %v1406 = vpop.xlane.xlu0 %1405
      %v1407 = vsel %vm1201, %v1355, 0.0
      %1408 = vadd.xlane.f32.xlu0 %v1407
      %v1409 = vpop.xlane.xlu0 %1408
      %v1410 = vsel %vm1201, %v1356, 0.0
      %1411 = vadd.xlane.f32.xlu0 %v1410
      %v1412 = vpop.xlane.xlu0 %1411
      %v1413 = vsel %vm1201, %v1357, 0.0
      %1414 = vadd.xlane.f32.xlu0 %v1413
      %v1415 = vpop.xlane.xlu0 %1414
      %v1416 = vsel %vm1201, %v1358, 0.0
      %1417 = vadd.xlane.f32.xlu0 %v1416
      %v1418 = vpop.xlane.xlu0 %1417
      %v1419 = vsel %vm1201, %v1359, 0.0
      %1420 = vadd.xlane.f32.xlu0 %v1419
      %v1421 = vpop.xlane.xlu0 %1420
      %v1422 = vsel %vm1201, %v1360, 0.0
      %1423 = vadd.xlane.f32.xlu0 %v1422
      %v1424 = vpop.xlane.xlu0 %1423
      %v1425 = vsel %vm1201, %v1361, 0.0
      %1426 = vadd.xlane.f32.xlu0 %v1425
      %v1427 = vpop.xlane.xlu0 %1426
      %v1428 = vsel %vm1201, %v1362, 0.0
      %1429 = vadd.xlane.f32.xlu0 %v1428
      %v1430 = vpop.xlane.xlu0 %1429
      %v1431 = vsel %vm1201, %v1363, 0.0
      %1432 = vadd.xlane.f32.xlu0 %v1431
      %v1433 = vpop.xlane.xlu0 %1432
      %v1434 = vsel %vm1201, %v1364, 0.0
      %1435 = vadd.xlane.f32.xlu0 %v1434
      %v1436 = vpop.xlane.xlu0 %1435
      %v1437 = vsel %vm1201, %v1365, 0.0
      %1438 = vadd.xlane.f32.xlu0 %v1437
      %v1439 = vpop.xlane.xlu0 %1438
      %v1440 = vsel %vm1201, %v1366, 0.0
      %1441 = vadd.xlane.f32.xlu0 %v1440
      %v1442 = vpop.xlane.xlu0 %1441
      %v1443 = vsel %vm1201, %v1367, 0.0
      %1444 = vadd.xlane.f32.xlu0 %v1443
      %v1445 = vpop.xlane.xlu0 %1444
      %v1446 = vsel %vm1201, %v1368, 0.0
      %1447 = vadd.xlane.f32.xlu0 %v1446
      %v1448 = vpop.xlane.xlu0 %1447
      %v1449 = vsel %vm1201, %v1369, 0.0
      %1450 = vadd.xlane.f32.xlu0 %v1449
      %v1451 = vpop.xlane.xlu0 %1450
      %v1452 = vsel %vm1201, %v1370, 0.0
      %1453 = vadd.xlane.f32.xlu0 %v1452
      %v1454 = vpop.xlane.xlu0 %1453
      %v1455 = vmul.f32 %v1373, %v1286
      %v1456 = vmul.f32 %v1376, %v1286
      %v1457 = vmul.f32 %v1379, %v1286
      %v1458 = vmul.f32 %v1382, %v1286
      %v1459 = vmul.f32 %v1385, %v1286
      %v1460 = vmul.f32 %v1388, %v1286
      %v1461 = vmul.f32 %v1391, %v1286
      %v1462 = vmul.f32 %v1394, %v1286
      %v1463 = vmul.f32 %v1397, %v1286
      %v1464 = vmul.f32 %v1400, %v1286
      %v1465 = vmul.f32 %v1403, %v1286
      %v1466 = vmul.f32 %v1406, %v1286
      %v1467 = vmul.f32 %v1409, %v1286
      %v1468 = vmul.f32 %v1412, %v1286
      %v1469 = vmul.f32 %v1415, %v1286
      %v1470 = vmul.f32 %v1418, %v1286
      %v1471 = vmul.f32 %v1421, %v1286
      %v1472 = vmul.f32 %v1424, %v1286
      %v1473 = vmul.f32 %v1427, %v1286
      %v1474 = vmul.f32 %v1430, %v1286
      %v1475 = vmul.f32 %v1433, %v1286
      %v1476 = vmul.f32 %v1436, %v1286
      %v1477 = vmul.f32 %v1439, %v1286
      %v1478 = vmul.f32 %v1442, %v1286
      %v1479 = vmul.f32 %v1445, %v1286
      %v1480 = vmul.f32 %v1448, %v1286
      %v1481 = vmul.f32 %v1451, %v1286
      %v1482 = vmul.f32 %v1454, %v1286
      %v1483 = vadd.f32 %v1455, 1e-05
      %v1484 = vadd.f32 %v1456, 1e-05
      %v1485 = vadd.f32 %v1457, 1e-05
      %v1486 = vadd.f32 %v1458, 1e-05
      %v1487 = vadd.f32 %v1459, 1e-05
      %v1488 = vadd.f32 %v1460, 1e-05
      %v1489 = vadd.f32 %v1461, 1e-05
      %v1490 = vadd.f32 %v1462, 1e-05
      %v1491 = vadd.f32 %v1463, 1e-05
      %v1492 = vadd.f32 %v1464, 1e-05
      %v1493 = vadd.f32 %v1465, 1e-05
      %v1494 = vadd.f32 %v1466, 1e-05
      %v1495 = vadd.f32 %v1467, 1e-05
      %v1496 = vadd.f32 %v1468, 1e-05
      %v1497 = vadd.f32 %v1469, 1e-05
      %v1498 = vadd.f32 %v1470, 1e-05
      %v1499 = vadd.f32 %v1471, 1e-05
      %v1500 = vadd.f32 %v1472, 1e-05
      %v1501 = vadd.f32 %v1473, 1e-05
      %v1502 = vadd.f32 %v1474, 1e-05
      %v1503 = vadd.f32 %v1475, 1e-05
      %v1504 = vadd.f32 %v1476, 1e-05
      %v1505 = vadd.f32 %v1477, 1e-05
      %v1506 = vadd.f32 %v1478, 1e-05
      %v1507 = vadd.f32 %v1479, 1e-05
      %v1508 = vadd.f32 %v1480, 1e-05
      %v1509 = vadd.f32 %v1481, 1e-05
      %v1510 = vadd.f32 %v1482, 1e-05
      %v1511 = vrsqrt.pop %v1483
      %v1512 = vrsqrt.pop %v1484
      %v1513 = vrsqrt.pop %v1485
      %v1514 = vrsqrt.pop %v1486
      %v1515 = vrsqrt.pop %v1487
      %v1516 = vrsqrt.pop %v1488
      %v1517 = vrsqrt.pop %v1489
      %v1518 = vrsqrt.pop %v1490
      %v1519 = vrsqrt.pop %v1491
      %v1520 = vrsqrt.pop %v1492
      %v1521 = vrsqrt.pop %v1493
      %v1522 = vrsqrt.pop %v1494
      %v1523 = vrsqrt.pop %v1495
      %v1524 = vrsqrt.pop %v1496
      %v1525 = vrsqrt.pop %v1497
      %v1526 = vrsqrt.pop %v1498
      %v1527 = vrsqrt.pop %v1499
      %v1528 = vrsqrt.pop %v1500
      %v1529 = vrsqrt.pop %v1501
      %v1530 = vrsqrt.pop %v1502
      %v1531 = vrsqrt.pop %v1503
      %v1532 = vrsqrt.pop %v1504
      %v1533 = vrsqrt.pop %v1505
      %v1534 = vrsqrt.pop %v1506
      %v1535 = vrsqrt.pop %v1507
      %v1536 = vrsqrt.pop %v1508
      %v1537 = vrsqrt.pop %v1509
      %v1538 = vrsqrt.pop %v1510
      %v1539 = vmul.f32 %v1315, %v1511
      %v1540 = vmul.f32 %v1316, %v1512
      %v1541 = vmul.f32 %v1317, %v1513
      %v1542 = vmul.f32 %v1318, %v1514
      %v1543 = vmul.f32 %v1319, %v1515
      %v1544 = vmul.f32 %v1320, %v1516
      %v1545 = vmul.f32 %v1321, %v1517
      %v1546 = vmul.f32 %v1322, %v1518
      %v1547 = vmul.f32 %v1323, %v1519
      %v1548 = vmul.f32 %v1324, %v1520
      %v1549 = vmul.f32 %v1325, %v1521
      %v1550 = vmul.f32 %v1326, %v1522
      %v1551 = vmul.f32 %v1327, %v1523
      %v1552 = vmul.f32 %v1328, %v1524
      %v1553 = vmul.f32 %v1329, %v1525
      %v1554 = vmul.f32 %v1330, %v1526
      %v1555 = vmul.f32 %v1331, %v1527
      %v1556 = vmul.f32 %v1332, %v1528
      %v1557 = vmul.f32 %v1333, %v1529
      %v1558 = vmul.f32 %v1334, %v1530
      %v1559 = vmul.f32 %v1335, %v1531
      %v1560 = vmul.f32 %v1336, %v1532
      %v1561 = vmul.f32 %v1337, %v1533
      %v1562 = vmul.f32 %v1338, %v1534
      %v1563 = vmul.f32 %v1339, %v1535
      %v1564 = vmul.f32 %v1340, %v1536
      %v1565 = vmul.f32 %v1341, %v1537
      %v1566 = vmul.f32 %v1342, %v1538
      %v1567 = vlaneseq
      %v1568 = vshrl.u32 %v1567, 7
      %v1569 = vsub.s32 0, %v1568
      %v1570 = vrot.slane %v1195, %v1569
      %v1571 = vmul.f32 %v1539, %v1570
      %v1572 = vmul.f32 %v1540, %v1570
      %v1573 = vmul.f32 %v1541, %v1570
      %v1574 = vmul.f32 %v1542, %v1570
      %v1575 = vmul.f32 %v1543, %v1570
      %v1576 = vmul.f32 %v1544, %v1570
      %v1577 = vmul.f32 %v1545, %v1570
      %v1578 = vmul.f32 %v1546, %v1570
      %v1579 = vmul.f32 %v1547, %v1570
      %v1580 = vmul.f32 %v1548, %v1570
      %v1581 = vmul.f32 %v1549, %v1570
      %v1582 = vmul.f32 %v1550, %v1570
      %v1583 = vmul.f32 %v1551, %v1570
      %v1584 = vmul.f32 %v1552, %v1570
      %v1585 = vmul.f32 %v1553, %v1570
      %v1586 = vmul.f32 %v1554, %v1570
      %v1587 = vmul.f32 %v1555, %v1570
      %v1588 = vmul.f32 %v1556, %v1570
      %v1589 = vmul.f32 %v1557, %v1570
      %v1590 = vmul.f32 %v1558, %v1570
      %v1591 = vmul.f32 %v1559, %v1570
      %v1592 = vmul.f32 %v1560, %v1570
      %v1593 = vmul.f32 %v1561, %v1570
      %v1594 = vmul.f32 %v1562, %v1570
      %v1595 = vmul.f32 %v1563, %v1570
      %v1596 = vmul.f32 %v1564, %v1570
      %v1597 = vmul.f32 %v1565, %v1570
      %v1598 = vmul.f32 %v1566, %v1570
      %v1599 = vlaneseq
      %v1600 = vshrl.u32 %v1599, 7
      %v1601 = vsub.s32 1, %v1600
      %v1602 = vrot.slane %v1195, %v1601
      %v1603 = vadd.f32 %v1571, %v1602
      %v1604 = vadd.f32 %v1572, %v1602
      %v1605 = vadd.f32 %v1573, %v1602
      %v1606 = vadd.f32 %v1574, %v1602
      %v1607 = vadd.f32 %v1575, %v1602
      %v1608 = vadd.f32 %v1576, %v1602
      %v1609 = vadd.f32 %v1577, %v1602
      %v1610 = vadd.f32 %v1578, %v1602
      %v1611 = vadd.f32 %v1579, %v1602
      %v1612 = vadd.f32 %v1580, %v1602
      %v1613 = vadd.f32 %v1581, %v1602
      %v1614 = vadd.f32 %v1582, %v1602
      %v1615 = vadd.f32 %v1583, %v1602
      %v1616 = vadd.f32 %v1584, %v1602
      %v1617 = vadd.f32 %v1585, %v1602
      %v1618 = vadd.f32 %v1586, %v1602
      %v1619 = vadd.f32 %v1587, %v1602
      %v1620 = vadd.f32 %v1588, %v1602
      %v1621 = vadd.f32 %v1589, %v1602
      %v1622 = vadd.f32 %v1590, %v1602
      %v1623 = vadd.f32 %v1591, %v1602
      %v1624 = vadd.f32 %v1592, %v1602
      %v1625 = vadd.f32 %v1593, %v1602
      %v1626 = vadd.f32 %v1594, %v1602
      %v1627 = vadd.f32 %v1595, %v1602
      %v1628 = vadd.f32 %v1596, %v1602
      %v1629 = vadd.f32 %v1597, %v1602
      %v1630 = vadd.f32 %v1598, %v1602
      %v1631 = vpack.c.bf16 %v1604, %v1603
      %v1632 = vpack.c.bf16 %v1606, %v1605
      %v1633 = vpack.c.bf16 %v1608, %v1607
      %v1634 = vpack.c.bf16 %v1610, %v1609
      %v1635 = vpack.c.bf16 %v1612, %v1611
      %v1636 = vpack.c.bf16 %v1614, %v1613
      %v1637 = vpack.c.bf16 %v1616, %v1615
      %v1638 = vpack.c.bf16 %v1618, %v1617
      %v1639 = vpack.c.bf16 %v1620, %v1619
      %v1640 = vpack.c.bf16 %v1622, %v1621
      %v1641 = vpack.c.bf16 %v1624, %v1623
      %v1642 = vpack.c.bf16 %v1626, %v1625
      %v1643 = vpack.c.bf16 %v1628, %v1627
      %v1644 = vpack.c.bf16 %v1630, %v1629
      %v1645 = vld [vmem:[%s421] sm:$0xf]
      %v1646 = vld [vmem:[%s421 + $0x4] sm:$0xf]
      %v1647 = vld [vmem:[%s421 + $0x8] sm:$0xf]
      %v1648 = vld [vmem:[%s421 + $0xc] sm:$0xf]
      %v1653 = vunpack.c.l.b16 %v1645
      %v1654 = vunpack.c.l.b16 %v1646
      %v1655 = vunpack.c.l.b16 %v1647
      %v1656 = vunpack.c.l.b16 %v1648
      %v1657 = vpack.c.b16 %v1654, %v1653
      %v1658 = vpack.c.b16 %v1656, %v1655
      %v1662 = vsel %vm1201, %v1631, 0
      %v1665 = vsel %vm1201, %v1632, 0
      %v1668 = vsel %vm1201, %v1633, 0
      %v1671 = vsel %vm1201, %v1634, 0
      %v1674 = vsel %vm1201, %v1635, 0
      %v1677 = vsel %vm1201, %v1636, 0
      %v1680 = vsel %vm1201, %v1637, 0
      %v1683 = vsel %vm1201, %v1638, 0
      %v1686 = vsel %vm1201, %v1639, 0
      %v1689 = vsel %vm1201, %v1640, 0
      %v1692 = vsel %vm1201, %v1641, 0
      %v1695 = vsel %vm1201, %v1642, 0
      %v1698 = vsel %vm1201, %v1643, 0
      %v1701 = vsel %vm1201, %v1644, 0
      %1703 = vmatprep.subr.bf16.mxu0 0
      %1704 = vmatpush1.bf16.msra.mxu0 0
      %1705 = vmatprep.subr.bf16.mxu0 0
      %1706 = vmatpush1.bf16.msra.mxu0 0
      %1707 = vmatprep.subr.bf16.mxu0 0
      %1708 = vmatpush1.bf16.msra.mxu0 0
      %1709 = vmatprep.subr.bf16.mxu0 0
      %1710 = vmatpush1.bf16.msra.mxu0 0
      %1711 = vmatprep.subr.bf16.mxu0 0
      %1712 = vmatpush1.bf16.msra.mxu0 0
      %1713 = vmatprep.subr.bf16.mxu0 0
      %1714 = vmatpush1.bf16.msra.mxu0 0
      %1715 = vmatprep.subr.bf16.mxu0 0
      %1716 = vmatpush1.bf16.msra.mxu0 %v1658
      %1717 = vmatprep.subr.bf16.mxu0 0
      %1718 = vmatpush1.bf16.msra.mxu0 %v1657
      %1719 = vmatprep.subr.bf16.mxu0 0
      %1720 = vmatpush2.bf16.msra.mxu0 0
      %1721 = vmatprep.subr.bf16.mxu0 0
      %1722 = vmatpush2.bf16.msra.mxu0 0
      %1723 = vmatprep.subr.bf16.mxu0 0
      %1724 = vmatpush2.bf16.msra.mxu0 0
      %1725 = vmatprep.subr.bf16.mxu0 0
      %1726 = vmatpush2.bf16.msra.mxu0 0
      %1727 = vmatprep.subr.bf16.mxu0 0
      %1728 = vmatpush2.bf16.msra.mxu0 0
      %1729 = vmatprep.subr.bf16.mxu0 0
      %1730 = vmatpush2.bf16.msra.mxu0 0
      %1731 = vmatprep.subr.bf16.mxu0 0
      %1732 = vmatpush2.bf16.msra.mxu0 0
      %1733 = vmatprep.subr.bf16.mxu0 0
      %1734 = vmatpush2.bf16.msra.mxu0 0
      %1735 = vmatprep.mubr.bf16.mxu0 0
      %1736 = vmatmul.mubr.bf16.gmra.mxu0 %v1662
      %v1737 = vpop.f32.mrf.mxu0
      %v1738 = vadd.f32 0.0, %v1737
      %v1739 = vpop.f32.mrf.mxu0
      %v1740 = vpop.f32.mrf.mxu0
      %v1741 = vadd.f32 0.0, %v1740
      %v1742 = vpop.f32.mrf.mxu0
      %1743 = vmatprep.mubr.bf16.mxu0 0
      %1744 = vmatmul.mubr.bf16.gmra.mxu0 %v1665
      %v1745 = vpop.f32.mrf.mxu0
      %v1746 = vadd.f32 0.0, %v1745
      %v1747 = vpop.f32.mrf.mxu0
      %v1748 = vpop.f32.mrf.mxu0
      %v1749 = vadd.f32 0.0, %v1748
      %v1750 = vpop.f32.mrf.mxu0
      %1751 = vmatprep.mubr.bf16.mxu0 0
      %1752 = vmatmul.mubr.bf16.gmra.mxu0 %v1668
      %v1753 = vpop.f32.mrf.mxu0
      %v1754 = vadd.f32 0.0, %v1753
      %v1755 = vpop.f32.mrf.mxu0
      %v1756 = vpop.f32.mrf.mxu0
      %v1757 = vadd.f32 0.0, %v1756
      %v1758 = vpop.f32.mrf.mxu0
      %1759 = vmatprep.mubr.bf16.mxu0 0
      %1760 = vmatmul.mubr.bf16.gmra.mxu0 %v1671
      %v1761 = vpop.f32.mrf.mxu0
      %v1762 = vadd.f32 0.0, %v1761
      %v1763 = vpop.f32.mrf.mxu0
      %v1764 = vpop.f32.mrf.mxu0
      %v1765 = vadd.f32 0.0, %v1764
      %v1766 = vpop.f32.mrf.mxu0
      %1767 = vmatprep.mubr.bf16.mxu0 0
      %1768 = vmatmul.mubr.bf16.gmra.mxu0 %v1674
      %v1769 = vpop.f32.mrf.mxu0
      %v1770 = vadd.f32 0.0, %v1769
      %v1771 = vpop.f32.mrf.mxu0
      %v1772 = vpop.f32.mrf.mxu0
      %v1773 = vadd.f32 0.0, %v1772
      %v1774 = vpop.f32.mrf.mxu0
      %1775 = vmatprep.mubr.bf16.mxu0 0
      %1776 = vmatmul.mubr.bf16.gmra.mxu0 %v1677
      %v1777 = vpop.f32.mrf.mxu0
      %v1778 = vadd.f32 0.0, %v1777
      %v1779 = vpop.f32.mrf.mxu0
      %v1780 = vpop.f32.mrf.mxu0
      %v1781 = vadd.f32 0.0, %v1780
      %v1782 = vpop.f32.mrf.mxu0
      %1783 = vmatprep.mubr.bf16.mxu0 0
      %1784 = vmatmul.mubr.bf16.gmra.mxu0 %v1680
      %v1785 = vpop.f32.mrf.mxu0
      %v1786 = vadd.f32 0.0, %v1785
      %v1787 = vpop.f32.mrf.mxu0
      %v1788 = vpop.f32.mrf.mxu0
      %v1789 = vadd.f32 0.0, %v1788
      %v1790 = vpop.f32.mrf.mxu0
      %1791 = vmatprep.mubr.bf16.mxu0 0
      %1792 = vmatmul.mubr.bf16.gmra.mxu0 %v1683
      %v1793 = vpop.f32.mrf.mxu0
      %v1794 = vadd.f32 0.0, %v1793
      %v1795 = vpop.f32.mrf.mxu0
      %v1796 = vpop.f32.mrf.mxu0
      %v1797 = vadd.f32 0.0, %v1796
      %v1798 = vpop.f32.mrf.mxu0
      %1799 = vmatprep.mubr.bf16.mxu0 0
      %1800 = vmatmul.mubr.bf16.gmra.mxu0 %v1686
      %v1801 = vpop.f32.mrf.mxu0
      %v1802 = vadd.f32 0.0, %v1801
      %v1803 = vpop.f32.mrf.mxu0
      %v1804 = vpop.f32.mrf.mxu0
      %v1805 = vadd.f32 0.0, %v1804
      %v1806 = vpop.f32.mrf.mxu0
      %1807 = vmatprep.mubr.bf16.mxu0 0
      %1808 = vmatmul.mubr.bf16.gmra.mxu0 %v1689
      %v1809 = vpop.f32.mrf.mxu0
      %v1810 = vadd.f32 0.0, %v1809
      %v1811 = vpop.f32.mrf.mxu0
      %v1812 = vpop.f32.mrf.mxu0
      %v1813 = vadd.f32 0.0, %v1812
      %v1814 = vpop.f32.mrf.mxu0
      %1815 = vmatprep.mubr.bf16.mxu0 0
      %1816 = vmatmul.mubr.bf16.gmra.mxu0 %v1692
      %v1817 = vpop.f32.mrf.mxu0
      %v1818 = vadd.f32 0.0, %v1817
      %v1819 = vpop.f32.mrf.mxu0
      %v1820 = vpop.f32.mrf.mxu0
      %v1821 = vadd.f32 0.0, %v1820
      %v1822 = vpop.f32.mrf.mxu0
      %1823 = vmatprep.mubr.bf16.mxu0 0
      %1824 = vmatmul.mubr.bf16.gmra.mxu0 %v1695
      %v1825 = vpop.f32.mrf.mxu0
      %v1826 = vadd.f32 0.0, %v1825
      %v1827 = vpop.f32.mrf.mxu0
      %v1828 = vpop.f32.mrf.mxu0
      %v1829 = vadd.f32 0.0, %v1828
      %v1830 = vpop.f32.mrf.mxu0
      %1831 = vmatprep.mubr.bf16.mxu0 0
      %1832 = vmatmul.mubr.bf16.gmra.mxu0 %v1698
      %v1833 = vpop.f32.mrf.mxu0
      %v1834 = vadd.f32 0.0, %v1833
      %v1835 = vpop.f32.mrf.mxu0
      %v1836 = vpop.f32.mrf.mxu0
      %v1837 = vadd.f32 0.0, %v1836
      %v1838 = vpop.f32.mrf.mxu0
      %1839 = vmatprep.mubr.bf16.mxu0 0
      %1840 = vmatmul.mubr.bf16.gmra.mxu0 %v1701
      %v1841 = vpop.f32.mrf.mxu0
      %v1842 = vadd.f32 0.0, %v1841
      %v1843 = vpop.f32.mrf.mxu0
      %v1844 = vpop.f32.mrf.mxu0
      %v1845 = vadd.f32 0.0, %v1844
      %v1846 = vpop.f32.mrf.mxu0
      %1847 = vdwg.mxu0
      %v1848 = vlaneseq
      %v1849 = vshrl.u32 %v1848, 7
      %v1850 = vsub.s32 2, %v1849
      %v1851 = vrot.slane %v1195, %v1850
      %v1852 = vadd.f32 %v1738, %v1851
      %v1853 = vadd.f32 %v1741, %v1851
      %v1854 = vadd.f32 %v1746, %v1851
      %v1855 = vadd.f32 %v1749, %v1851
      %v1856 = vadd.f32 %v1754, %v1851
      %v1857 = vadd.f32 %v1757, %v1851
      %v1858 = vadd.f32 %v1762, %v1851
      %v1859 = vadd.f32 %v1765, %v1851
      %v1860 = vadd.f32 %v1770, %v1851
      %v1861 = vadd.f32 %v1773, %v1851
      %v1862 = vadd.f32 %v1778, %v1851
      %v1863 = vadd.f32 %v1781, %v1851
      %v1864 = vadd.f32 %v1786, %v1851
      %v1865 = vadd.f32 %v1789, %v1851
      %v1866 = vadd.f32 %v1794, %v1851
      %v1867 = vadd.f32 %v1797, %v1851
      %v1868 = vadd.f32 %v1802, %v1851
      %v1869 = vadd.f32 %v1805, %v1851
      %v1870 = vadd.f32 %v1810, %v1851
      %v1871 = vadd.f32 %v1813, %v1851
      %v1872 = vadd.f32 %v1818, %v1851
      %v1873 = vadd.f32 %v1821, %v1851
      %v1874 = vadd.f32 %v1826, %v1851
      %v1875 = vadd.f32 %v1829, %v1851
      %v1876 = vadd.f32 %v1834, %v1851
      %v1877 = vadd.f32 %v1837, %v1851
      %v1878 = vadd.f32 %v1842, %v1851
      %v1879 = vadd.f32 %v1845, %v1851
      %v1880 = vmul.f32 %v1852, 0.25
      %v1881 = vmul.f32 %v1853, 0.25
      %v1882 = vmul.f32 %v1854, 0.25
      %v1883 = vmul.f32 %v1855, 0.25
      %v1884 = vmul.f32 %v1856, 0.25
      %v1885 = vmul.f32 %v1857, 0.25
      %v1886 = vmul.f32 %v1858, 0.25
      %v1887 = vmul.f32 %v1859, 0.25
      %v1888 = vmul.f32 %v1860, 0.25
      %v1889 = vmul.f32 %v1861, 0.25
      %v1890 = vmul.f32 %v1862, 0.25
      %v1891 = vmul.f32 %v1863, 0.25
      %v1892 = vmul.f32 %v1864, 0.25
      %v1893 = vmul.f32 %v1865, 0.25
      %v1894 = vmul.f32 %v1866, 0.25
      %v1895 = vmul.f32 %v1867, 0.25
      %v1896 = vmul.f32 %v1868, 0.25
      %v1897 = vmul.f32 %v1869, 0.25
      %v1898 = vmul.f32 %v1870, 0.25
      %v1899 = vmul.f32 %v1871, 0.25
      %v1900 = vmul.f32 %v1872, 0.25
      %v1901 = vmul.f32 %v1873, 0.25
      %v1902 = vmul.f32 %v1874, 0.25
      %v1903 = vmul.f32 %v1875, 0.25
      %v1904 = vmul.f32 %v1876, 0.25
      %v1905 = vmul.f32 %v1877, 0.25
      %v1906 = vmul.f32 %v1878, 0.25
      %v1907 = vmul.f32 %v1879, 0.25
      %v1908 = vlaneseq
      %v1909 = vshrl.u32 %v1908, 7
      %v1910 = vsub.s32 3, %v1909
      %v1911 = vrot.slane %v1195, %v1910
      %1913 = vrot.lane.b32.xlu0 %v1911, 32
      %v1914 = vpop.permute.xlu0 %1913
      %v1916 = vadd.f32 %v1738, %v1914
      %v1917 = vadd.f32 %v1741, %v1914
      %v1918 = vadd.f32 %v1746, %v1914
      %v1919 = vadd.f32 %v1749, %v1914
      %v1920 = vadd.f32 %v1754, %v1914
      %v1921 = vadd.f32 %v1757, %v1914
      %v1922 = vadd.f32 %v1762, %v1914
      %v1923 = vadd.f32 %v1765, %v1914
      %v1924 = vadd.f32 %v1770, %v1914
      %v1925 = vadd.f32 %v1773, %v1914
      %v1926 = vadd.f32 %v1778, %v1914
      %v1927 = vadd.f32 %v1781, %v1914
      %v1928 = vadd.f32 %v1786, %v1914
      %v1929 = vadd.f32 %v1789, %v1914
      %v1930 = vadd.f32 %v1794, %v1914
      %v1931 = vadd.f32 %v1797, %v1914
      %v1932 = vadd.f32 %v1802, %v1914
      %v1933 = vadd.f32 %v1805, %v1914
      %v1934 = vadd.f32 %v1810, %v1914
      %v1935 = vadd.f32 %v1813, %v1914
      %v1936 = vadd.f32 %v1818, %v1914
      %v1937 = vadd.f32 %v1821, %v1914
      %v1938 = vadd.f32 %v1826, %v1914
      %v1939 = vadd.f32 %v1829, %v1914
      %v1940 = vadd.f32 %v1834, %v1914
      %v1941 = vadd.f32 %v1837, %v1914
      %v1942 = vadd.f32 %v1842, %v1914
      %v1943 = vadd.f32 %v1845, %v1914
      %v1944 = vlaneseq
      %v1945 = vshrl.u32 %v1944, 7
      %v1946 = vsub.s32 4, %v1945
      %v1947 = vrot.slane %v1195, %v1946
      %1949 = vrot.lane.b32.xlu0 %v1947, 64
      %v1950 = vpop.permute.xlu0 %1949
      %v1952 = vadd.f32 %v1738, %v1950
      %v1953 = vadd.f32 %v1741, %v1950
      %v1954 = vadd.f32 %v1746, %v1950
      %v1955 = vadd.f32 %v1749, %v1950
      %v1956 = vadd.f32 %v1754, %v1950
      %v1957 = vadd.f32 %v1757, %v1950
      %v1958 = vadd.f32 %v1762, %v1950
      %v1959 = vadd.f32 %v1765, %v1950
      %v1960 = vadd.f32 %v1770, %v1950
      %v1961 = vadd.f32 %v1773, %v1950
      %v1962 = vadd.f32 %v1778, %v1950
      %v1963 = vadd.f32 %v1781, %v1950
      %v1964 = vadd.f32 %v1786, %v1950
      %v1965 = vadd.f32 %v1789, %v1950
      %v1966 = vadd.f32 %v1794, %v1950
      %v1967 = vadd.f32 %v1797, %v1950
      %v1968 = vadd.f32 %v1802, %v1950
      %v1969 = vadd.f32 %v1805, %v1950
      %v1970 = vadd.f32 %v1810, %v1950
      %v1971 = vadd.f32 %v1813, %v1950
      %v1972 = vadd.f32 %v1818, %v1950
      %v1973 = vadd.f32 %v1821, %v1950
      %v1974 = vadd.f32 %v1826, %v1950
      %v1975 = vadd.f32 %v1829, %v1950
      %v1976 = vadd.f32 %v1834, %v1950
      %v1977 = vadd.f32 %v1837, %v1950
      %v1978 = vadd.f32 %v1842, %v1950
      %v1979 = vadd.f32 %v1845, %v1950
      %v1980 = vld [vmem:[%s426] sm:$0xf]
      %v1981 = vld [vmem:[%s426 + $0x4] sm:$0xf]
      %v1982 = vld [vmem:[%s426 + $0x8] sm:$0xf]
      %v1983 = vld [vmem:[%s426 + $0xc] sm:$0xf]
      %v1984 = vpack.c.bf16 %v1880, %v1880
      %v1985 = vpack.c.bf16 %v1881, %v1881
      %v1986 = vpack.c.bf16 %v1882, %v1882
      %v1987 = vpack.c.bf16 %v1883, %v1883
      %v1988 = vpack.c.bf16 %v1884, %v1884
      %v1989 = vpack.c.bf16 %v1885, %v1885
      %v1990 = vpack.c.bf16 %v1886, %v1886
      %v1991 = vpack.c.bf16 %v1887, %v1887
      %v1992 = vpack.c.bf16 %v1888, %v1888
      %v1993 = vpack.c.bf16 %v1889, %v1889
      %v1994 = vpack.c.bf16 %v1890, %v1890
      %v1995 = vpack.c.bf16 %v1891, %v1891
      %v1996 = vpack.c.bf16 %v1892, %v1892
      %v1997 = vpack.c.bf16 %v1893, %v1893
      %v1998 = vpack.c.bf16 %v1894, %v1894
      %v1999 = vpack.c.bf16 %v1895, %v1895
      %v2000 = vpack.c.bf16 %v1896, %v1896
      %v2001 = vpack.c.bf16 %v1897, %v1897
      %v2002 = vpack.c.bf16 %v1898, %v1898
      %v2003 = vpack.c.bf16 %v1899, %v1899
      %v2004 = vpack.c.bf16 %v1900, %v1900
      %v2005 = vpack.c.bf16 %v1901, %v1901
      %v2006 = vpack.c.bf16 %v1902, %v1902
      %v2007 = vpack.c.bf16 %v1903, %v1903
      %v2008 = vpack.c.bf16 %v1904, %v1904
      %v2009 = vpack.c.bf16 %v1905, %v1905
      %v2010 = vpack.c.bf16 %v1906, %v1906
      %v2011 = vpack.c.bf16 %v1907, %v1907
      %v2012 = vpack.c.bf16 %v1916, %v1916
      %v2013 = vpack.c.bf16 %v1917, %v1917
      %v2014 = vpack.c.bf16 %v1918, %v1918
      %v2015 = vpack.c.bf16 %v1919, %v1919
      %v2016 = vpack.c.bf16 %v1920, %v1920
      %v2017 = vpack.c.bf16 %v1921, %v1921
      %v2018 = vpack.c.bf16 %v1922, %v1922
      %v2019 = vpack.c.bf16 %v1923, %v1923
      %v2020 = vpack.c.bf16 %v1924, %v1924
      %v2021 = vpack.c.bf16 %v1925, %v1925
      %v2022 = vpack.c.bf16 %v1926, %v1926
      %v2023 = vpack.c.bf16 %v1927, %v1927
      %v2024 = vpack.c.bf16 %v1928, %v1928
      %v2025 = vpack.c.bf16 %v1929, %v1929
      %v2026 = vpack.c.bf16 %v1930, %v1930
      %v2027 = vpack.c.bf16 %v1931, %v1931
      %v2028 = vpack.c.bf16 %v1932, %v1932
      %v2029 = vpack.c.bf16 %v1933, %v1933
      %v2030 = vpack.c.bf16 %v1934, %v1934
      %v2031 = vpack.c.bf16 %v1935, %v1935
      %v2032 = vpack.c.bf16 %v1936, %v1936
      %v2033 = vpack.c.bf16 %v1937, %v1937
      %v2034 = vpack.c.bf16 %v1938, %v1938
      %v2035 = vpack.c.bf16 %v1939, %v1939
      %v2036 = vpack.c.bf16 %v1940, %v1940
      %v2037 = vpack.c.bf16 %v1941, %v1941
      %v2038 = vpack.c.bf16 %v1942, %v1942
      %v2039 = vpack.c.bf16 %v1943, %v1943
      %2041 = vrot.lane.b32.xlu0 %v2012, 96
      %v2042 = vpop.permute.xlu0 %2041
      %vm2043 = vcmask 130048
      %v2045 = vsel %vm2043, %v1984, 0
      %v2048 = vsel %vm2043, %v2042, 0
      %2050 = vmatprep.subr.bf16.mxu0 0
      %2051 = vmatpush1.bf16.xpose.msra.mxu0 0
      %2052 = vmatprep.subr.bf16.mxu0 0
      %2053 = vmatpush1.bf16.xpose.msra.mxu0 0
      %2054 = vmatprep.subr.bf16.mxu0 0
      %2055 = vmatpush1.bf16.xpose.msra.mxu0 0
      %2056 = vmatprep.subr.bf16.mxu0 0
      %2057 = vmatpush1.bf16.xpose.msra.mxu0 0
      %2058 = vmatprep.subr.bf16.mxu0 0
      %2059 = vmatpush1.bf16.xpose.msra.mxu0 0
      %2060 = vmatprep.subr.bf16.mxu0 0
      %2061 = vmatpush1.bf16.xpose.msra.mxu0 0
      %2062 = vmatprep.subr.bf16.mxu0 0
      %2063 = vmatpush1.bf16.xpose.msra.mxu0 0
      %2064 = vmatprep.subr.bf16.mxu0 0
      %2065 = vmatpush1.bf16.xpose.msra.mxu0 %v2048
      %2066 = vmatprep.subr.bf16.mxu0 0
      %2067 = vmatpush2.bf16.xpose.msra.mxu0 0
      %2068 = vmatprep.subr.bf16.mxu0 0
      %2069 = vmatpush2.bf16.xpose.msra.mxu0 0
      %2070 = vmatprep.subr.bf16.mxu0 0
      %2071 = vmatpush2.bf16.xpose.msra.mxu0 0
      %2072 = vmatprep.subr.bf16.mxu0 0
      %2073 = vmatpush2.bf16.xpose.msra.mxu0 0
      %2074 = vmatprep.subr.bf16.mxu0 0
      %2075 = vmatpush2.bf16.xpose.msra.mxu0 0
      %2076 = vmatprep.subr.bf16.mxu0 0
      %2077 = vmatpush2.bf16.xpose.msra.mxu0 0
      %2078 = vmatprep.subr.bf16.mxu0 0
      %2079 = vmatpush2.bf16.xpose.msra.mxu0 0
      %2080 = vmatprep.subr.bf16.mxu0 0
      %2081 = vmatpush2.bf16.xpose.msra.mxu0 0
      %2082 = vmatprep.mubr.bf16.mxu0 0
      %2083 = vmatmul.mubr.bf16.gmra.mxu0 %v2045
      %v2084 = vpop.f32.mrf.mxu0
      %v2085 = vadd.f32 %v1200, %v2084
      %v2086 = vpop.f32.mrf.mxu0
      %v2087 = vpop.f32.mrf.mxu0
      %v2088 = vpop.f32.mrf.mxu0
      %2089 = vdwg.mxu0
      %2091 = vrot.lane.b32.xlu0 %v2013, 96
      %v2092 = vpop.permute.xlu0 %2091
      %v2094 = vsel %vm2043, %v1985, 0
      %v2097 = vsel %vm2043, %v2092, 0
      %2099 = vmatprep.subr.bf16.mxu0 0
      %2100 = vmatpush1.bf16.xpose.msra.mxu0 0
      %2101 = vmatprep.subr.bf16.mxu0 0
      %2102 = vmatpush1.bf16.xpose.msra.mxu0 0
      %2103 = vmatprep.subr.bf16.mxu0 0
      %2104 = vmatpush1.bf16.xpose.msra.mxu0 0
      %2105 = vmatprep.subr.bf16.mxu0 0
      %2106 = vmatpush1.bf16.xpose.msra.mxu0 0
      %2107 = vmatprep.subr.bf16.mxu0 0
      %2108 = vmatpush1.bf16.xpose.msra.mxu0 0
      %2109 = vmatprep.subr.bf16.mxu0 0
      %2110 = vmatpush1.bf16.xpose.msra.mxu0 0
      %2111 = vmatprep.subr.bf16.mxu0 0
      %2112 = vmatpush1.bf16.xpose.msra.mxu0 0
      %2113 = vmatprep.subr.bf16.mxu0 0
      %2114 = vmatpush1.bf16.xpose.msra.mxu0 %v2097
      %2115 = vmatprep.subr.bf16.mxu0 0
      %2116 = vmatpush2.bf16.xpose.msra.mxu0 0
      %2117 = vmatprep.subr.bf16.mxu0 0
      %2118 = vmatpush2.bf16.xpose.msra.mxu0 0
      %2119 = vmatprep.subr.bf16.mxu0 0
      %2120 = vmatpush2.bf16.xpose.msra.mxu0 0
      %2121 = vmatprep.subr.bf16.mxu0 0
      %2122 = vmatpush2.bf16.xpose.msra.mxu0 0
      %2123 = vmatprep.subr.bf16.mxu0 0
      %2124 = vmatpush2.bf16.xpose.msra.mxu0 0
      %2125 = vmatprep.subr.bf16.mxu0 0
      %2126 = vmatpush2.bf16.xpose.msra.mxu0 0
      %2127 = vmatprep.subr.bf16.mxu0 0
      %2128 = vmatpush2.bf16.xpose.msra.mxu0 0
      %2129 = vmatprep.subr.bf16.mxu0 0
      %2130 = vmatpush2.bf16.xpose.msra.mxu0 0
      %2131 = vmatprep.mubr.bf16.mxu0 0
      %2132 = vmatmul.mubr.bf16.gmra.mxu0 %v2094
      %v2133 = vpop.f32.mrf.mxu0
      %v2134 = vadd.f32 %v1200, %v2133
      %v2135 = vpop.f32.mrf.mxu0
      %v2136 = vpop.f32.mrf.mxu0
      %v2137 = vpop.f32.mrf.mxu0
      %2138 = vdwg.mxu0
      %2140 = vrot.lane.b32.xlu0 %v2014, 96
      %v2141 = vpop.permute.xlu0 %2140
      %v2143 = vsel %vm2043, %v1986, 0
      %v2146 = vsel %vm2043, %v2141, 0
      %2148 = vmatprep.subr.bf16.mxu0 0
      %2149 = vmatpush1.bf16.xpose.msra.mxu0 0
      %2150 = vmatprep.subr.bf16.mxu0 0
      %2151 = vmatpush1.bf16.xpose.msra.mxu0 0
      %2152 = vmatprep.subr.bf16.mxu0 0
      %2153 = vmatpush1.bf16.xpose.msra.mxu0 0
      %2154 = vmatprep.subr.bf16.mxu0 0
      %2155 = vmatpush1.bf16.xpose.msra.mxu0 0
      %2156 = vmatprep.subr.bf16.mxu0 0
      %2157 = vmatpush1.bf16.xpose.msra.mxu0 0
      %2158 = vmatprep.subr.bf16.mxu0 0
      %2159 = vmatpush1.bf16.xpose.msra.mxu0 0
      %2160 = vmatprep.subr.bf16.mxu0 0
      %2161 = vmatpush1.bf16.xpose.msra.mxu0 0
      %2162 = vmatprep.subr.bf16.mxu0 0
      %2163 = vmatpush1.bf16.xpose.msra.mxu0 %v2146
      %2164 = vmatprep.subr.bf16.mxu0 0
      %2165 = vmatpush2.bf16.xpose.msra.mxu0 0
      %2166 = vmatprep.subr.bf16.mxu0 0
      %2167 = vmatpush2.bf16.xpose.msra.mxu0 0
      %2168 = vmatprep.subr.bf16.mxu0 0
      %2169 = vmatpush2.bf16.xpose.msra.mxu0 0
      %2170 = vmatprep.subr.bf16.mxu0 0
      %2171 = vmatpush2.bf16.xpose.msra.mxu0 0
      %2172 = vmatprep.subr.bf16.mxu0 0
      %2173 = vmatpush2.bf16.xpose.msra.mxu0 0
      %2174 = vmatprep.subr.bf16.mxu0 0
      %2175 = vmatpush2.bf16.xpose.msra.mxu0 0
      %2176 = vmatprep.subr.bf16.mxu0 0
      %2177 = vmatpush2.bf16.xpose.msra.mxu0 0
      %2178 = vmatprep.subr.bf16.mxu0 0
      %2179 = vmatpush2.bf16.xpose.msra.mxu0 0
      %2180 = vmatprep.mubr.bf16.mxu0 0
      %2181 = vmatmul.mubr.bf16.gmra.mxu0 %v2143
      %v2182 = vpop.f32.mrf.mxu0
      %v2183 = vadd.f32 %v1200, %v2182
      %v2184 = vpop.f32.mrf.mxu0
      %v2185 = vpop.f32.mrf.mxu0
      %v2186 = vpop.f32.mrf.mxu0
      %2187 = vdwg.mxu0
      %2189 = vrot.lane.b32.xlu0 %v2015, 96
      %v2190 = vpop.permute.xlu0 %2189
      %v2192 = vsel %vm2043, %v1987, 0
      %v2195 = vsel %vm2043, %v2190, 0
      %2197 = vmatprep.subr.bf16.mxu0 0
      %2198 = vmatpush1.bf16.xpose.msra.mxu0 0
      %2199 = vmatprep.subr.bf16.mxu0 0
      %2200 = vmatpush1.bf16.xpose.msra.mxu0 0
      %2201 = vmatprep.subr.bf16.mxu0 0
      %2202 = vmatpush1.bf16.xpose.msra.mxu0 0
      %2203 = vmatprep.subr.bf16.mxu0 0
      %2204 = vmatpush1.bf16.xpose.msra.mxu0 0
      %2205 = vmatprep.subr.bf16.mxu0 0
      %2206 = vmatpush1.bf16.xpose.msra.mxu0 0
      %2207 = vmatprep.subr.bf16.mxu0 0
      %2208 = vmatpush1.bf16.xpose.msra.mxu0 0
      %2209 = vmatprep.subr.bf16.mxu0 0
      %2210 = vmatpush1.bf16.xpose.msra.mxu0 0
      %2211 = vmatprep.subr.bf16.mxu0 0
      %2212 = vmatpush1.bf16.xpose.msra.mxu0 %v2195
      %2213 = vmatprep.subr.bf16.mxu0 0
      %2214 = vmatpush2.bf16.xpose.msra.mxu0 0
      %2215 = vmatprep.subr.bf16.mxu0 0
      %2216 = vmatpush2.bf16.xpose.msra.mxu0 0
      %2217 = vmatprep.subr.bf16.mxu0 0
      %2218 = vmatpush2.bf16.xpose.msra.mxu0 0
      %2219 = vmatprep.subr.bf16.mxu0 0
      %2220 = vmatpush2.bf16.xpose.msra.mxu0 0
      %2221 = vmatprep.subr.bf16.mxu0 0
      %2222 = vmatpush2.bf16.xpose.msra.mxu0 0
      %2223 = vmatprep.subr.bf16.mxu0 0
      %2224 = vmatpush2.bf16.xpose.msra.mxu0 0
      %2225 = vmatprep.subr.bf16.mxu0 0
      %2226 = vmatpush2.bf16.xpose.msra.mxu0 0
      %2227 = vmatprep.subr.bf16.mxu0 0
      %2228 = vmatpush2.bf16.xpose.msra.mxu0 0
      %2229 = vmatprep.mubr.bf16.mxu0 0
      %2230 = vmatmul.mubr.bf16.gmra.mxu0 %v2192
      %v2231 = vpop.f32.mrf.mxu0
      %v2232 = vadd.f32 %v1200, %v2231
      %v2233 = vpop.f32.mrf.mxu0
      %v2234 = vpop.f32.mrf.mxu0
      %v2235 = vpop.f32.mrf.mxu0
      %2236 = vdwg.mxu0
      %2238 = vrot.lane.b32.xlu0 %v2016, 96
      %v2239 = vpop.permute.xlu0 %2238
      %v2241 = vsel %vm2043, %v1988, 0
      %v2244 = vsel %vm2043, %v2239, 0
      %2246 = vmatprep.subr.bf16.mxu0 0
      %2247 = vmatpush1.bf16.xpose.msra.mxu0 0
      %2248 = vmatprep.subr.bf16.mxu0 0
      %2249 = vmatpush1.bf16.xpose.msra.mxu0 0
      %2250 = vmatprep.subr.bf16.mxu0 0
      %2251 = vmatpush1.bf16.xpose.msra.mxu0 0
      %2252 = vmatprep.subr.bf16.mxu0 0
      %2253 = vmatpush1.bf16.xpose.msra.mxu0 0
      %2254 = vmatprep.subr.bf16.mxu0 0
      %2255 = vmatpush1.bf16.xpose.msra.mxu0 0
      %2256 = vmatprep.subr.bf16.mxu0 0
      %2257 = vmatpush1.bf16.xpose.msra.mxu0 0
      %2258 = vmatprep.subr.bf16.mxu0 0
      %2259 = vmatpush1.bf16.xpose.msra.mxu0 0
      %2260 = vmatprep.subr.bf16.mxu0 0
      %2261 = vmatpush1.bf16.xpose.msra.mxu0 %v2244
      %2262 = vmatprep.subr.bf16.mxu0 0
      %2263 = vmatpush2.bf16.xpose.msra.mxu0 0
      %2264 = vmatprep.subr.bf16.mxu0 0
      %2265 = vmatpush2.bf16.xpose.msra.mxu0 0
      %2266 = vmatprep.subr.bf16.mxu0 0
      %2267 = vmatpush2.bf16.xpose.msra.mxu0 0
      %2268 = vmatprep.subr.bf16.mxu0 0
      %2269 = vmatpush2.bf16.xpose.msra.mxu0 0
      %2270 = vmatprep.subr.bf16.mxu0 0
      %2271 = vmatpush2.bf16.xpose.msra.mxu0 0
      %2272 = vmatprep.subr.bf16.mxu0 0
      %2273 = vmatpush2.bf16.xpose.msra.mxu0 0
      %2274 = vmatprep.subr.bf16.mxu0 0
      %2275 = vmatpush2.bf16.xpose.msra.mxu0 0
      %2276 = vmatprep.subr.bf16.mxu0 0
      %2277 = vmatpush2.bf16.xpose.msra.mxu0 0
      %2278 = vmatprep.mubr.bf16.mxu0 0
      %2279 = vmatmul.mubr.bf16.gmra.mxu0 %v2241
      %v2280 = vpop.f32.mrf.mxu0
      %v2281 = vadd.f32 %v1200, %v2280
      %v2282 = vpop.f32.mrf.mxu0
      %v2283 = vpop.f32.mrf.mxu0
      %v2284 = vpop.f32.mrf.mxu0
      %2285 = vdwg.mxu0
      %2287 = vrot.lane.b32.xlu0 %v2017, 96
      %v2288 = vpop.permute.xlu0 %2287
      %v2290 = vsel %vm2043, %v1989, 0
      %v2293 = vsel %vm2043, %v2288, 0
      %2295 = vmatprep.subr.bf16.mxu0 0
      %2296 = vmatpush1.bf16.xpose.msra.mxu0 0
      %2297 = vmatprep.subr.bf16.mxu0 0
      %2298 = vmatpush1.bf16.xpose.msra.mxu0 0
      %2299 = vmatprep.subr.bf16.mxu0 0
      %2300 = vmatpush1.bf16.xpose.msra.mxu0 0
      %2301 = vmatprep.subr.bf16.mxu0 0
      %2302 = vmatpush1.bf16.xpose.msra.mxu0 0
      %2303 = vmatprep.subr.bf16.mxu0 0
      %2304 = vmatpush1.bf16.xpose.msra.mxu0 0
      %2305 = vmatprep.subr.bf16.mxu0 0
      %2306 = vmatpush1.bf16.xpose.msra.mxu0 0
      %2307 = vmatprep.subr.bf16.mxu0 0
      %2308 = vmatpush1.bf16.xpose.msra.mxu0 0
      %2309 = vmatprep.subr.bf16.mxu0 0
      %2310 = vmatpush1.bf16.xpose.msra.mxu0 %v2293
      %2311 = vmatprep.subr.bf16.mxu0 0
      %2312 = vmatpush2.bf16.xpose.msra.mxu0 0
      %2313 = vmatprep.subr.bf16.mxu0 0
      %2314 = vmatpush2.bf16.xpose.msra.mxu0 0
      %2315 = vmatprep.subr.bf16.mxu0 0
      %2316 = vmatpush2.bf16.xpose.msra.mxu0 0
      %2317 = vmatprep.subr.bf16.mxu0 0
      %2318 = vmatpush2.bf16.xpose.msra.mxu0 0
      %2319 = vmatprep.subr.bf16.mxu0 0
      %2320 = vmatpush2.bf16.xpose.msra.mxu0 0
      %2321 = vmatprep.subr.bf16.mxu0 0
      %2322 = vmatpush2.bf16.xpose.msra.mxu0 0
      %2323 = vmatprep.subr.bf16.mxu0 0
      %2324 = vmatpush2.bf16.xpose.msra.mxu0 0
      %2325 = vmatprep.subr.bf16.mxu0 0
      %2326 = vmatpush2.bf16.xpose.msra.mxu0 0
      %2327 = vmatprep.mubr.bf16.mxu0 0
      %2328 = vmatmul.mubr.bf16.gmra.mxu0 %v2290
      %v2329 = vpop.f32.mrf.mxu0
      %v2330 = vadd.f32 %v1200, %v2329
      %v2331 = vpop.f32.mrf.mxu0
      %v2332 = vpop.f32.mrf.mxu0
      %v2333 = vpop.f32.mrf.mxu0
      %2334 = vdwg.mxu0
      %2336 = vrot.lane.b32.xlu0 %v2018, 96
      %v2337 = vpop.permute.xlu0 %2336
      %v2339 = vsel %vm2043, %v1990, 0
      %v2342 = vsel %vm2043, %v2337, 0
      %2344 = vmatprep.subr.bf16.mxu0 0
      %2345 = vmatpush1.bf16.xpose.msra.mxu0 0
      %2346 = vmatprep.subr.bf16.mxu0 0
      %2347 = vmatpush1.bf16.xpose.msra.mxu0 0
      %2348 = vmatprep.subr.bf16.mxu0 0
      %2349 = vmatpush1.bf16.xpose.msra.mxu0 0
      %2350 = vmatprep.subr.bf16.mxu0 0
      %2351 = vmatpush1.bf16.xpose.msra.mxu0 0
      %2352 = vmatprep.subr.bf16.mxu0 0
      %2353 = vmatpush1.bf16.xpose.msra.mxu0 0
      %2354 = vmatprep.subr.bf16.mxu0 0
      %2355 = vmatpush1.bf16.xpose.msra.mxu0 0
      %2356 = vmatprep.subr.bf16.mxu0 0
      %2357 = vmatpush1.bf16.xpose.msra.mxu0 0
      %2358 = vmatprep.subr.bf16.mxu0 0
      %2359 = vmatpush1.bf16.xpose.msra.mxu0 %v2342
      %2360 = vmatprep.subr.bf16.mxu0 0
      %2361 = vmatpush2.bf16.xpose.msra.mxu0 0
      %2362 = vmatprep.subr.bf16.mxu0 0
      %2363 = vmatpush2.bf16.xpose.msra.mxu0 0
      %2364 = vmatprep.subr.bf16.mxu0 0
      %2365 = vmatpush2.bf16.xpose.msra.mxu0 0
      %2366 = vmatprep.subr.bf16.mxu0 0
      %2367 = vmatpush2.bf16.xpose.msra.mxu0 0
      %2368 = vmatprep.subr.bf16.mxu0 0
      %2369 = vmatpush2.bf16.xpose.msra.mxu0 0
      %2370 = vmatprep.subr.bf16.mxu0 0
      %2371 = vmatpush2.bf16.xpose.msra.mxu0 0
      %2372 = vmatprep.subr.bf16.mxu0 0
      %2373 = vmatpush2.bf16.xpose.msra.mxu0 0
      %2374 = vmatprep.subr.bf16.mxu0 0
      %2375 = vmatpush2.bf16.xpose.msra.mxu0 0
      %2376 = vmatprep.mubr.bf16.mxu0 0
      %2377 = vmatmul.mubr.bf16.gmra.mxu0 %v2339
      %v2378 = vpop.f32.mrf.mxu0
      %v2379 = vadd.f32 %v1200, %v2378
      %v2380 = vpop.f32.mrf.mxu0
      %v2381 = vpop.f32.mrf.mxu0
      %v2382 = vpop.f32.mrf.mxu0
      %2383 = vdwg.mxu0
      %2385 = vrot.lane.b32.xlu0 %v2019, 96
      %v2386 = vpop.permute.xlu0 %2385
      %v2388 = vsel %vm2043, %v1991, 0
      %v2391 = vsel %vm2043, %v2386, 0
      %2393 = vmatprep.subr.bf16.mxu0 0
      %2394 = vmatpush1.bf16.xpose.msra.mxu0 0
      %2395 = vmatprep.subr.bf16.mxu0 0
      %2396 = vmatpush1.bf16.xpose.msra.mxu0 0
      %2397 = vmatprep.subr.bf16.mxu0 0
      %2398 = vmatpush1.bf16.xpose.msra.mxu0 0
      %2399 = vmatprep.subr.bf16.mxu0 0
      %2400 = vmatpush1.bf16.xpose.msra.mxu0 0
      %2401 = vmatprep.subr.bf16.mxu0 0
      %2402 = vmatpush1.bf16.xpose.msra.mxu0 0
      %2403 = vmatprep.subr.bf16.mxu0 0
      %2404 = vmatpush1.bf16.xpose.msra.mxu0 0
      %2405 = vmatprep.subr.bf16.mxu0 0
      %2406 = vmatpush1.bf16.xpose.msra.mxu0 0
      %2407 = vmatprep.subr.bf16.mxu0 0
      %2408 = vmatpush1.bf16.xpose.msra.mxu0 %v2391
      %2409 = vmatprep.subr.bf16.mxu0 0
      %2410 = vmatpush2.bf16.xpose.msra.mxu0 0
      %2411 = vmatprep.subr.bf16.mxu0 0
      %2412 = vmatpush2.bf16.xpose.msra.mxu0 0
      %2413 = vmatprep.subr.bf16.mxu0 0
      %2414 = vmatpush2.bf16.xpose.msra.mxu0 0
      %2415 = vmatprep.subr.bf16.mxu0 0
      %2416 = vmatpush2.bf16.xpose.msra.mxu0 0
      %2417 = vmatprep.subr.bf16.mxu0 0
      %2418 = vmatpush2.bf16.xpose.msra.mxu0 0
      %2419 = vmatprep.subr.bf16.mxu0 0
      %2420 = vmatpush2.bf16.xpose.msra.mxu0 0
      %2421 = vmatprep.subr.bf16.mxu0 0
      %2422 = vmatpush2.bf16.xpose.msra.mxu0 0
      %2423 = vmatprep.subr.bf16.mxu0 0
      %2424 = vmatpush2.bf16.xpose.msra.mxu0 0
      %2425 = vmatprep.mubr.bf16.mxu0 0
      %2426 = vmatmul.mubr.bf16.gmra.mxu0 %v2388
      %v2427 = vpop.f32.mrf.mxu0
      %v2428 = vadd.f32 %v1200, %v2427
      %v2429 = vpop.f32.mrf.mxu0
      %v2430 = vpop.f32.mrf.mxu0
      %v2431 = vpop.f32.mrf.mxu0
      %2432 = vdwg.mxu0
      %2434 = vrot.lane.b32.xlu0 %v2020, 96
      %v2435 = vpop.permute.xlu0 %2434
      %v2437 = vsel %vm2043, %v1992, 0
      %v2440 = vsel %vm2043, %v2435, 0
      %2442 = vmatprep.subr.bf16.mxu0 0
      %2443 = vmatpush1.bf16.xpose.msra.mxu0 0
      %2444 = vmatprep.subr.bf16.mxu0 0
      %2445 = vmatpush1.bf16.xpose.msra.mxu0 0
      %2446 = vmatprep.subr.bf16.mxu0 0
      %2447 = vmatpush1.bf16.xpose.msra.mxu0 0
      %2448 = vmatprep.subr.bf16.mxu0 0
      %2449 = vmatpush1.bf16.xpose.msra.mxu0 0
      %2450 = vmatprep.subr.bf16.mxu0 0
      %2451 = vmatpush1.bf16.xpose.msra.mxu0 0
      %2452 = vmatprep.subr.bf16.mxu0 0
      %2453 = vmatpush1.bf16.xpose.msra.mxu0 0
      %2454 = vmatprep.subr.bf16.mxu0 0
      %2455 = vmatpush1.bf16.xpose.msra.mxu0 0
      %2456 = vmatprep.subr.bf16.mxu0 0
      %2457 = vmatpush1.bf16.xpose.msra.mxu0 %v2440
      %2458 = vmatprep.subr.bf16.mxu0 0
      %2459 = vmatpush2.bf16.xpose.msra.mxu0 0
      %2460 = vmatprep.subr.bf16.mxu0 0
      %2461 = vmatpush2.bf16.xpose.msra.mxu0 0
      %2462 = vmatprep.subr.bf16.mxu0 0
      %2463 = vmatpush2.bf16.xpose.msra.mxu0 0
      %2464 = vmatprep.subr.bf16.mxu0 0
      %2465 = vmatpush2.bf16.xpose.msra.mxu0 0
      %2466 = vmatprep.subr.bf16.mxu0 0
      %2467 = vmatpush2.bf16.xpose.msra.mxu0 0
      %2468 = vmatprep.subr.bf16.mxu0 0
      %2469 = vmatpush2.bf16.xpose.msra.mxu0 0
      %2470 = vmatprep.subr.bf16.mxu0 0
      %2471 = vmatpush2.bf16.xpose.msra.mxu0 0
      %2472 = vmatprep.subr.bf16.mxu0 0
      %2473 = vmatpush2.bf16.xpose.msra.mxu0 0
      %2474 = vmatprep.mubr.bf16.mxu0 0
      %2475 = vmatmul.mubr.bf16.gmra.mxu0 %v2437
      %v2476 = vpop.f32.mrf.mxu0
      %v2477 = vadd.f32 %v1200, %v2476
      %v2478 = vpop.f32.mrf.mxu0
      %v2479 = vpop.f32.mrf.mxu0
      %v2480 = vpop.f32.mrf.mxu0
      %2481 = vdwg.mxu0
      %2483 = vrot.lane.b32.xlu0 %v2021, 96
      %v2484 = vpop.permute.xlu0 %2483
      %v2486 = vsel %vm2043, %v1993, 0
      %v2489 = vsel %vm2043, %v2484, 0
      %2491 = vmatprep.subr.bf16.mxu0 0
      %2492 = vmatpush1.bf16.xpose.msra.mxu0 0
      %2493 = vmatprep.subr.bf16.mxu0 0
      %2494 = vmatpush1.bf16.xpose.msra.mxu0 0
      %2495 = vmatprep.subr.bf16.mxu0 0
      %2496 = vmatpush1.bf16.xpose.msra.mxu0 0
      %2497 = vmatprep.subr.bf16.mxu0 0
      %2498 = vmatpush1.bf16.xpose.msra.mxu0 0
      %2499 = vmatprep.subr.bf16.mxu0 0
      %2500 = vmatpush1.bf16.xpose.msra.mxu0 0
      %2501 = vmatprep.subr.bf16.mxu0 0
      %2502 = vmatpush1.bf16.xpose.msra.mxu0 0
      %2503 = vmatprep.subr.bf16.mxu0 0
      %2504 = vmatpush1.bf16.xpose.msra.mxu0 0
      %2505 = vmatprep.subr.bf16.mxu0 0
      %2506 = vmatpush1.bf16.xpose.msra.mxu0 %v2489
      %2507 = vmatprep.subr.bf16.mxu0 0
      %2508 = vmatpush2.bf16.xpose.msra.mxu0 0
      %2509 = vmatprep.subr.bf16.mxu0 0
      %2510 = vmatpush2.bf16.xpose.msra.mxu0 0
      %2511 = vmatprep.subr.bf16.mxu0 0
      %2512 = vmatpush2.bf16.xpose.msra.mxu0 0
      %2513 = vmatprep.subr.bf16.mxu0 0
      %2514 = vmatpush2.bf16.xpose.msra.mxu0 0
      %2515 = vmatprep.subr.bf16.mxu0 0
      %2516 = vmatpush2.bf16.xpose.msra.mxu0 0
      %2517 = vmatprep.subr.bf16.mxu0 0
      %2518 = vmatpush2.bf16.xpose.msra.mxu0 0
      %2519 = vmatprep.subr.bf16.mxu0 0
      %2520 = vmatpush2.bf16.xpose.msra.mxu0 0
      %2521 = vmatprep.subr.bf16.mxu0 0
      %2522 = vmatpush2.bf16.xpose.msra.mxu0 0
      %2523 = vmatprep.mubr.bf16.mxu0 0
      %2524 = vmatmul.mubr.bf16.gmra.mxu0 %v2486
      %v2525 = vpop.f32.mrf.mxu0
      %v2526 = vadd.f32 %v1200, %v2525
      %v2527 = vpop.f32.mrf.mxu0
      %v2528 = vpop.f32.mrf.mxu0
      %v2529 = vpop.f32.mrf.mxu0
      %2530 = vdwg.mxu0
      %2532 = vrot.lane.b32.xlu0 %v2022, 96
      %v2533 = vpop.permute.xlu0 %2532
      %v2535 = vsel %vm2043, %v1994, 0
      %v2538 = vsel %vm2043, %v2533, 0
      %2540 = vmatprep.subr.bf16.mxu0 0
      %2541 = vmatpush1.bf16.xpose.msra.mxu0 0
      %2542 = vmatprep.subr.bf16.mxu0 0
      %2543 = vmatpush1.bf16.xpose.msra.mxu0 0
      %2544 = vmatprep.subr.bf16.mxu0 0
      %2545 = vmatpush1.bf16.xpose.msra.mxu0 0
      %2546 = vmatprep.subr.bf16.mxu0 0
      %2547 = vmatpush1.bf16.xpose.msra.mxu0 0
      %2548 = vmatprep.subr.bf16.mxu0 0
      %2549 = vmatpush1.bf16.xpose.msra.mxu0 0
      %2550 = vmatprep.subr.bf16.mxu0 0
      %2551 = vmatpush1.bf16.xpose.msra.mxu0 0
      %2552 = vmatprep.subr.bf16.mxu0 0
      %2553 = vmatpush1.bf16.xpose.msra.mxu0 0
      %2554 = vmatprep.subr.bf16.mxu0 0
      %2555 = vmatpush1.bf16.xpose.msra.mxu0 %v2538
      %2556 = vmatprep.subr.bf16.mxu0 0
      %2557 = vmatpush2.bf16.xpose.msra.mxu0 0
      %2558 = vmatprep.subr.bf16.mxu0 0
      %2559 = vmatpush2.bf16.xpose.msra.mxu0 0
      %2560 = vmatprep.subr.bf16.mxu0 0
      %2561 = vmatpush2.bf16.xpose.msra.mxu0 0
      %2562 = vmatprep.subr.bf16.mxu0 0
      %2563 = vmatpush2.bf16.xpose.msra.mxu0 0
      %2564 = vmatprep.subr.bf16.mxu0 0
      %2565 = vmatpush2.bf16.xpose.msra.mxu0 0
      %2566 = vmatprep.subr.bf16.mxu0 0
      %2567 = vmatpush2.bf16.xpose.msra.mxu0 0
      %2568 = vmatprep.subr.bf16.mxu0 0
      %2569 = vmatpush2.bf16.xpose.msra.mxu0 0
      %2570 = vmatprep.subr.bf16.mxu0 0
      %2571 = vmatpush2.bf16.xpose.msra.mxu0 0
      %2572 = vmatprep.mubr.bf16.mxu0 0
      %2573 = vmatmul.mubr.bf16.gmra.mxu0 %v2535
      %v2574 = vpop.f32.mrf.mxu0
      %v2575 = vadd.f32 %v1200, %v2574
      %v2576 = vpop.f32.mrf.mxu0
      %v2577 = vpop.f32.mrf.mxu0
      %v2578 = vpop.f32.mrf.mxu0
      %2579 = vdwg.mxu0
      %2581 = vrot.lane.b32.xlu0 %v2023, 96
      %v2582 = vpop.permute.xlu0 %2581
      %v2584 = vsel %vm2043, %v1995, 0
      %v2587 = vsel %vm2043, %v2582, 0
      %2589 = vmatprep.subr.bf16.mxu0 0
      %2590 = vmatpush1.bf16.xpose.msra.mxu0 0
      %2591 = vmatprep.subr.bf16.mxu0 0
      %2592 = vmatpush1.bf16.xpose.msra.mxu0 0
      %2593 = vmatprep.subr.bf16.mxu0 0
      %2594 = vmatpush1.bf16.xpose.msra.mxu0 0
      %2595 = vmatprep.subr.bf16.mxu0 0
      %2596 = vmatpush1.bf16.xpose.msra.mxu0 0
      %2597 = vmatprep.subr.bf16.mxu0 0
      %2598 = vmatpush1.bf16.xpose.msra.mxu0 0
      %2599 = vmatprep.subr.bf16.mxu0 0
      %2600 = vmatpush1.bf16.xpose.msra.mxu0 0
      %2601 = vmatprep.subr.bf16.mxu0 0
      %2602 = vmatpush1.bf16.xpose.msra.mxu0 0
      %2603 = vmatprep.subr.bf16.mxu0 0
      %2604 = vmatpush1.bf16.xpose.msra.mxu0 %v2587
      %2605 = vmatprep.subr.bf16.mxu0 0
      %2606 = vmatpush2.bf16.xpose.msra.mxu0 0
      %2607 = vmatprep.subr.bf16.mxu0 0
      %2608 = vmatpush2.bf16.xpose.msra.mxu0 0
      %2609 = vmatprep.subr.bf16.mxu0 0
      %2610 = vmatpush2.bf16.xpose.msra.mxu0 0
      %2611 = vmatprep.subr.bf16.mxu0 0
      %2612 = vmatpush2.bf16.xpose.msra.mxu0 0
      %2613 = vmatprep.subr.bf16.mxu0 0
      %2614 = vmatpush2.bf16.xpose.msra.mxu0 0
      %2615 = vmatprep.subr.bf16.mxu0 0
      %2616 = vmatpush2.bf16.xpose.msra.mxu0 0
      %2617 = vmatprep.subr.bf16.mxu0 0
      %2618 = vmatpush2.bf16.xpose.msra.mxu0 0
      %2619 = vmatprep.subr.bf16.mxu0 0
      %2620 = vmatpush2.bf16.xpose.msra.mxu0 0
      %2621 = vmatprep.mubr.bf16.mxu0 0
      %2622 = vmatmul.mubr.bf16.gmra.mxu0 %v2584
      %v2623 = vpop.f32.mrf.mxu0
      %v2624 = vadd.f32 %v1200, %v2623
      %v2625 = vpop.f32.mrf.mxu0
      %v2626 = vpop.f32.mrf.mxu0
      %v2627 = vpop.f32.mrf.mxu0
      %2628 = vdwg.mxu0
      %2630 = vrot.lane.b32.xlu0 %v2024, 96
      %v2631 = vpop.permute.xlu0 %2630
      %v2633 = vsel %vm2043, %v1996, 0
      %v2636 = vsel %vm2043, %v2631, 0
      %2638 = vmatprep.subr.bf16.mxu0 0
      %2639 = vmatpush1.bf16.xpose.msra.mxu0 0
      %2640 = vmatprep.subr.bf16.mxu0 0
      %2641 = vmatpush1.bf16.xpose.msra.mxu0 0
      %2642 = vmatprep.subr.bf16.mxu0 0
      %2643 = vmatpush1.bf16.xpose.msra.mxu0 0
      %2644 = vmatprep.subr.bf16.mxu0 0
      %2645 = vmatpush1.bf16.xpose.msra.mxu0 0
      %2646 = vmatprep.subr.bf16.mxu0 0
      %2647 = vmatpush1.bf16.xpose.msra.mxu0 0
      %2648 = vmatprep.subr.bf16.mxu0 0
      %2649 = vmatpush1.bf16.xpose.msra.mxu0 0
      %2650 = vmatprep.subr.bf16.mxu0 0
      %2651 = vmatpush1.bf16.xpose.msra.mxu0 0
      %2652 = vmatprep.subr.bf16.mxu0 0
      %2653 = vmatpush1.bf16.xpose.msra.mxu0 %v2636
      %2654 = vmatprep.subr.bf16.mxu0 0
      %2655 = vmatpush2.bf16.xpose.msra.mxu0 0
      %2656 = vmatprep.subr.bf16.mxu0 0
      %2657 = vmatpush2.bf16.xpose.msra.mxu0 0
      %2658 = vmatprep.subr.bf16.mxu0 0
      %2659 = vmatpush2.bf16.xpose.msra.mxu0 0
      %2660 = vmatprep.subr.bf16.mxu0 0
      %2661 = vmatpush2.bf16.xpose.msra.mxu0 0
      %2662 = vmatprep.subr.bf16.mxu0 0
      %2663 = vmatpush2.bf16.xpose.msra.mxu0 0
      %2664 = vmatprep.subr.bf16.mxu0 0
      %2665 = vmatpush2.bf16.xpose.msra.mxu0 0
      %2666 = vmatprep.subr.bf16.mxu0 0
      %2667 = vmatpush2.bf16.xpose.msra.mxu0 0
      %2668 = vmatprep.subr.bf16.mxu0 0
      %2669 = vmatpush2.bf16.xpose.msra.mxu0 0
      %2670 = vmatprep.mubr.bf16.mxu0 0
      %2671 = vmatmul.mubr.bf16.gmra.mxu0 %v2633
      %v2672 = vpop.f32.mrf.mxu0
      %v2673 = vadd.f32 %v1200, %v2672
      %v2674 = vpop.f32.mrf.mxu0
      %v2675 = vpop.f32.mrf.mxu0
      %v2676 = vpop.f32.mrf.mxu0
      %2677 = vdwg.mxu0
      %2679 = vrot.lane.b32.xlu0 %v2025, 96
      %v2680 = vpop.permute.xlu0 %2679
      %v2682 = vsel %vm2043, %v1997, 0
      %v2685 = vsel %vm2043, %v2680, 0
      %2687 = vmatprep.subr.bf16.mxu0 0
      %2688 = vmatpush1.bf16.xpose.msra.mxu0 0
      %2689 = vmatprep.subr.bf16.mxu0 0
      %2690 = vmatpush1.bf16.xpose.msra.mxu0 0
      %2691 = vmatprep.subr.bf16.mxu0 0
      %2692 = vmatpush1.bf16.xpose.msra.mxu0 0
      %2693 = vmatprep.subr.bf16.mxu0 0
      %2694 = vmatpush1.bf16.xpose.msra.mxu0 0
      %2695 = vmatprep.subr.bf16.mxu0 0
      %2696 = vmatpush1.bf16.xpose.msra.mxu0 0
      %2697 = vmatprep.subr.bf16.mxu0 0
      %2698 = vmatpush1.bf16.xpose.msra.mxu0 0
      %2699 = vmatprep.subr.bf16.mxu0 0
      %2700 = vmatpush1.bf16.xpose.msra.mxu0 0
      %2701 = vmatprep.subr.bf16.mxu0 0
      %2702 = vmatpush1.bf16.xpose.msra.mxu0 %v2685
      %2703 = vmatprep.subr.bf16.mxu0 0
      %2704 = vmatpush2.bf16.xpose.msra.mxu0 0
      %2705 = vmatprep.subr.bf16.mxu0 0
      %2706 = vmatpush2.bf16.xpose.msra.mxu0 0
      %2707 = vmatprep.subr.bf16.mxu0 0
      %2708 = vmatpush2.bf16.xpose.msra.mxu0 0
      %2709 = vmatprep.subr.bf16.mxu0 0
      %2710 = vmatpush2.bf16.xpose.msra.mxu0 0
      %2711 = vmatprep.subr.bf16.mxu0 0
      %2712 = vmatpush2.bf16.xpose.msra.mxu0 0
      %2713 = vmatprep.subr.bf16.mxu0 0
      %2714 = vmatpush2.bf16.xpose.msra.mxu0 0
      %2715 = vmatprep.subr.bf16.mxu0 0
      %2716 = vmatpush2.bf16.xpose.msra.mxu0 0
      %2717 = vmatprep.subr.bf16.mxu0 0
      %2718 = vmatpush2.bf16.xpose.msra.mxu0 0
      %2719 = vmatprep.mubr.bf16.mxu0 0
      %2720 = vmatmul.mubr.bf16.gmra.mxu0 %v2682
      %v2721 = vpop.f32.mrf.mxu0
      %v2722 = vadd.f32 %v1200, %v2721
      %v2723 = vpop.f32.mrf.mxu0
      %v2724 = vpop.f32.mrf.mxu0
      %v2725 = vpop.f32.mrf.mxu0
      %2726 = vdwg.mxu0
      %2728 = vrot.lane.b32.xlu0 %v2026, 96
      %v2729 = vpop.permute.xlu0 %2728
      %v2731 = vsel %vm2043, %v1998, 0
      %v2734 = vsel %vm2043, %v2729, 0
      %2736 = vmatprep.subr.bf16.mxu0 0
      %2737 = vmatpush1.bf16.xpose.msra.mxu0 0
      %2738 = vmatprep.subr.bf16.mxu0 0
      %2739 = vmatpush1.bf16.xpose.msra.mxu0 0
      %2740 = vmatprep.subr.bf16.mxu0 0
      %2741 = vmatpush1.bf16.xpose.msra.mxu0 0
      %2742 = vmatprep.subr.bf16.mxu0 0
      %2743 = vmatpush1.bf16.xpose.msra.mxu0 0
      %2744 = vmatprep.subr.bf16.mxu0 0
      %2745 = vmatpush1.bf16.xpose.msra.mxu0 0
      %2746 = vmatprep.subr.bf16.mxu0 0
      %2747 = vmatpush1.bf16.xpose.msra.mxu0 0
      %2748 = vmatprep.subr.bf16.mxu0 0
      %2749 = vmatpush1.bf16.xpose.msra.mxu0 0
      %2750 = vmatprep.subr.bf16.mxu0 0
      %2751 = vmatpush1.bf16.xpose.msra.mxu0 %v2734
      %2752 = vmatprep.subr.bf16.mxu0 0
      %2753 = vmatpush2.bf16.xpose.msra.mxu0 0
      %2754 = vmatprep.subr.bf16.mxu0 0
      %2755 = vmatpush2.bf16.xpose.msra.mxu0 0
      %2756 = vmatprep.subr.bf16.mxu0 0
      %2757 = vmatpush2.bf16.xpose.msra.mxu0 0
      %2758 = vmatprep.subr.bf16.mxu0 0
      %2759 = vmatpush2.bf16.xpose.msra.mxu0 0
      %2760 = vmatprep.subr.bf16.mxu0 0
      %2761 = vmatpush2.bf16.xpose.msra.mxu0 0
      %2762 = vmatprep.subr.bf16.mxu0 0
      %2763 = vmatpush2.bf16.xpose.msra.mxu0 0
      %2764 = vmatprep.subr.bf16.mxu0 0
      %2765 = vmatpush2.bf16.xpose.msra.mxu0 0
      %2766 = vmatprep.subr.bf16.mxu0 0
      %2767 = vmatpush2.bf16.xpose.msra.mxu0 0
      %2768 = vmatprep.mubr.bf16.mxu0 0
      %2769 = vmatmul.mubr.bf16.gmra.mxu0 %v2731
      %v2770 = vpop.f32.mrf.mxu0
      %v2771 = vadd.f32 %v1200, %v2770
      %v2772 = vpop.f32.mrf.mxu0
      %v2773 = vpop.f32.mrf.mxu0
      %v2774 = vpop.f32.mrf.mxu0
      %2775 = vdwg.mxu0
      %2777 = vrot.lane.b32.xlu0 %v2027, 96
      %v2778 = vpop.permute.xlu0 %2777
      %v2780 = vsel %vm2043, %v1999, 0
      %v2783 = vsel %vm2043, %v2778, 0
      %2785 = vmatprep.subr.bf16.mxu0 0
      %2786 = vmatpush1.bf16.xpose.msra.mxu0 0
      %2787 = vmatprep.subr.bf16.mxu0 0
      %2788 = vmatpush1.bf16.xpose.msra.mxu0 0
      %2789 = vmatprep.subr.bf16.mxu0 0
      %2790 = vmatpush1.bf16.xpose.msra.mxu0 0
      %2791 = vmatprep.subr.bf16.mxu0 0
      %2792 = vmatpush1.bf16.xpose.msra.mxu0 0
      %2793 = vmatprep.subr.bf16.mxu0 0
      %2794 = vmatpush1.bf16.xpose.msra.mxu0 0
      %2795 = vmatprep.subr.bf16.mxu0 0
      %2796 = vmatpush1.bf16.xpose.msra.mxu0 0
      %2797 = vmatprep.subr.bf16.mxu0 0
      %2798 = vmatpush1.bf16.xpose.msra.mxu0 0
      %2799 = vmatprep.subr.bf16.mxu0 0
      %2800 = vmatpush1.bf16.xpose.msra.mxu0 %v2783
      %2801 = vmatprep.subr.bf16.mxu0 0
      %2802 = vmatpush2.bf16.xpose.msra.mxu0 0
      %2803 = vmatprep.subr.bf16.mxu0 0
      %2804 = vmatpush2.bf16.xpose.msra.mxu0 0
      %2805 = vmatprep.subr.bf16.mxu0 0
      %2806 = vmatpush2.bf16.xpose.msra.mxu0 0
      %2807 = vmatprep.subr.bf16.mxu0 0
      %2808 = vmatpush2.bf16.xpose.msra.mxu0 0
      %2809 = vmatprep.subr.bf16.mxu0 0
      %2810 = vmatpush2.bf16.xpose.msra.mxu0 0
      %2811 = vmatprep.subr.bf16.mxu0 0
      %2812 = vmatpush2.bf16.xpose.msra.mxu0 0
      %2813 = vmatprep.subr.bf16.mxu0 0
      %2814 = vmatpush2.bf16.xpose.msra.mxu0 0
      %2815 = vmatprep.subr.bf16.mxu0 0
      %2816 = vmatpush2.bf16.xpose.msra.mxu0 0
      %2817 = vmatprep.mubr.bf16.mxu0 0
      %2818 = vmatmul.mubr.bf16.gmra.mxu0 %v2780
      %v2819 = vpop.f32.mrf.mxu0
      %v2820 = vadd.f32 %v1200, %v2819
      %v2821 = vpop.f32.mrf.mxu0
      %v2822 = vpop.f32.mrf.mxu0
      %v2823 = vpop.f32.mrf.mxu0
      %2824 = vdwg.mxu0
      %2826 = vrot.lane.b32.xlu0 %v2028, 96
      %v2827 = vpop.permute.xlu0 %2826
      %v2829 = vsel %vm2043, %v2000, 0
      %v2832 = vsel %vm2043, %v2827, 0
      %2834 = vmatprep.subr.bf16.mxu0 0
      %2835 = vmatpush1.bf16.xpose.msra.mxu0 0
      %2836 = vmatprep.subr.bf16.mxu0 0
      %2837 = vmatpush1.bf16.xpose.msra.mxu0 0
      %2838 = vmatprep.subr.bf16.mxu0 0
      %2839 = vmatpush1.bf16.xpose.msra.mxu0 0
      %2840 = vmatprep.subr.bf16.mxu0 0
      %2841 = vmatpush1.bf16.xpose.msra.mxu0 0
      %2842 = vmatprep.subr.bf16.mxu0 0
      %2843 = vmatpush1.bf16.xpose.msra.mxu0 0
      %2844 = vmatprep.subr.bf16.mxu0 0
      %2845 = vmatpush1.bf16.xpose.msra.mxu0 0
      %2846 = vmatprep.subr.bf16.mxu0 0
      %2847 = vmatpush1.bf16.xpose.msra.mxu0 0
      %2848 = vmatprep.subr.bf16.mxu0 0
      %2849 = vmatpush1.bf16.xpose.msra.mxu0 %v2832
      %2850 = vmatprep.subr.bf16.mxu0 0
      %2851 = vmatpush2.bf16.xpose.msra.mxu0 0
      %2852 = vmatprep.subr.bf16.mxu0 0
      %2853 = vmatpush2.bf16.xpose.msra.mxu0 0
      %2854 = vmatprep.subr.bf16.mxu0 0
      %2855 = vmatpush2.bf16.xpose.msra.mxu0 0
      %2856 = vmatprep.subr.bf16.mxu0 0
      %2857 = vmatpush2.bf16.xpose.msra.mxu0 0
      %2858 = vmatprep.subr.bf16.mxu0 0
      %2859 = vmatpush2.bf16.xpose.msra.mxu0 0
      %2860 = vmatprep.subr.bf16.mxu0 0
      %2861 = vmatpush2.bf16.xpose.msra.mxu0 0
      %2862 = vmatprep.subr.bf16.mxu0 0
      %2863 = vmatpush2.bf16.xpose.msra.mxu0 0
      %2864 = vmatprep.subr.bf16.mxu0 0
      %2865 = vmatpush2.bf16.xpose.msra.mxu0 0
      %2866 = vmatprep.mubr.bf16.mxu0 0
      %2867 = vmatmul.mubr.bf16.gmra.mxu0 %v2829
      %v2868 = vpop.f32.mrf.mxu0
      %v2869 = vadd.f32 %v1200, %v2868
      %v2870 = vpop.f32.mrf.mxu0
      %v2871 = vpop.f32.mrf.mxu0
      %v2872 = vpop.f32.mrf.mxu0
      %2873 = vdwg.mxu0
      %2875 = vrot.lane.b32.xlu0 %v2029, 96
      %v2876 = vpop.permute.xlu0 %2875
      %v2878 = vsel %vm2043, %v2001, 0
      %v2881 = vsel %vm2043, %v2876, 0
      %2883 = vmatprep.subr.bf16.mxu0 0
      %2884 = vmatpush1.bf16.xpose.msra.mxu0 0
      %2885 = vmatprep.subr.bf16.mxu0 0
      %2886 = vmatpush1.bf16.xpose.msra.mxu0 0
      %2887 = vmatprep.subr.bf16.mxu0 0
      %2888 = vmatpush1.bf16.xpose.msra.mxu0 0
      %2889 = vmatprep.subr.bf16.mxu0 0
      %2890 = vmatpush1.bf16.xpose.msra.mxu0 0
      %2891 = vmatprep.subr.bf16.mxu0 0
      %2892 = vmatpush1.bf16.xpose.msra.mxu0 0
      %2893 = vmatprep.subr.bf16.mxu0 0
      %2894 = vmatpush1.bf16.xpose.msra.mxu0 0
      %2895 = vmatprep.subr.bf16.mxu0 0
      %2896 = vmatpush1.bf16.xpose.msra.mxu0 0
      %2897 = vmatprep.subr.bf16.mxu0 0
      %2898 = vmatpush1.bf16.xpose.msra.mxu0 %v2881
      %2899 = vmatprep.subr.bf16.mxu0 0
      %2900 = vmatpush2.bf16.xpose.msra.mxu0 0
      %2901 = vmatprep.subr.bf16.mxu0 0
      %2902 = vmatpush2.bf16.xpose.msra.mxu0 0
      %2903 = vmatprep.subr.bf16.mxu0 0
      %2904 = vmatpush2.bf16.xpose.msra.mxu0 0
      %2905 = vmatprep.subr.bf16.mxu0 0
      %2906 = vmatpush2.bf16.xpose.msra.mxu0 0
      %2907 = vmatprep.subr.bf16.mxu0 0
      %2908 = vmatpush2.bf16.xpose.msra.mxu0 0
      %2909 = vmatprep.subr.bf16.mxu0 0
      %2910 = vmatpush2.bf16.xpose.msra.mxu0 0
      %2911 = vmatprep.subr.bf16.mxu0 0
      %2912 = vmatpush2.bf16.xpose.msra.mxu0 0
      %2913 = vmatprep.subr.bf16.mxu0 0
      %2914 = vmatpush2.bf16.xpose.msra.mxu0 0
      %2915 = vmatprep.mubr.bf16.mxu0 0
      %2916 = vmatmul.mubr.bf16.gmra.mxu0 %v2878
      %v2917 = vpop.f32.mrf.mxu0
      %v2918 = vadd.f32 %v1200, %v2917
      %v2919 = vpop.f32.mrf.mxu0
      %v2920 = vpop.f32.mrf.mxu0
      %v2921 = vpop.f32.mrf.mxu0
      %2922 = vdwg.mxu0
      %2924 = vrot.lane.b32.xlu0 %v2030, 96
      %v2925 = vpop.permute.xlu0 %2924
      %v2927 = vsel %vm2043, %v2002, 0
      %v2930 = vsel %vm2043, %v2925, 0
      %2932 = vmatprep.subr.bf16.mxu0 0
      %2933 = vmatpush1.bf16.xpose.msra.mxu0 0
      %2934 = vmatprep.subr.bf16.mxu0 0
      %2935 = vmatpush1.bf16.xpose.msra.mxu0 0
      %2936 = vmatprep.subr.bf16.mxu0 0
      %2937 = vmatpush1.bf16.xpose.msra.mxu0 0
      %2938 = vmatprep.subr.bf16.mxu0 0
      %2939 = vmatpush1.bf16.xpose.msra.mxu0 0
      %2940 = vmatprep.subr.bf16.mxu0 0
      %2941 = vmatpush1.bf16.xpose.msra.mxu0 0
      %2942 = vmatprep.subr.bf16.mxu0 0
      %2943 = vmatpush1.bf16.xpose.msra.mxu0 0
      %2944 = vmatprep.subr.bf16.mxu0 0
      %2945 = vmatpush1.bf16.xpose.msra.mxu0 0
      %2946 = vmatprep.subr.bf16.mxu0 0
      %2947 = vmatpush1.bf16.xpose.msra.mxu0 %v2930
      %2948 = vmatprep.subr.bf16.mxu0 0
      %2949 = vmatpush2.bf16.xpose.msra.mxu0 0
      %2950 = vmatprep.subr.bf16.mxu0 0
      %2951 = vmatpush2.bf16.xpose.msra.mxu0 0
      %2952 = vmatprep.subr.bf16.mxu0 0
      %2953 = vmatpush2.bf16.xpose.msra.mxu0 0
      %2954 = vmatprep.subr.bf16.mxu0 0
      %2955 = vmatpush2.bf16.xpose.msra.mxu0 0
      %2956 = vmatprep.subr.bf16.mxu0 0
      %2957 = vmatpush2.bf16.xpose.msra.mxu0 0
      %2958 = vmatprep.subr.bf16.mxu0 0
      %2959 = vmatpush2.bf16.xpose.msra.mxu0 0
      %2960 = vmatprep.subr.bf16.mxu0 0
      %2961 = vmatpush2.bf16.xpose.msra.mxu0 0
      %2962 = vmatprep.subr.bf16.mxu0 0
      %2963 = vmatpush2.bf16.xpose.msra.mxu0 0
      %2964 = vmatprep.mubr.bf16.mxu0 0
      %2965 = vmatmul.mubr.bf16.gmra.mxu0 %v2927
      %v2966 = vpop.f32.mrf.mxu0
      %v2967 = vadd.f32 %v1200, %v2966
      %v2968 = vpop.f32.mrf.mxu0
      %v2969 = vpop.f32.mrf.mxu0
      %v2970 = vpop.f32.mrf.mxu0
      %2971 = vdwg.mxu0
      %2973 = vrot.lane.b32.xlu0 %v2031, 96
      %v2974 = vpop.permute.xlu0 %2973
      %v2976 = vsel %vm2043, %v2003, 0
      %v2979 = vsel %vm2043, %v2974, 0
      %2981 = vmatprep.subr.bf16.mxu0 0
      %2982 = vmatpush1.bf16.xpose.msra.mxu0 0
      %2983 = vmatprep.subr.bf16.mxu0 0
      %2984 = vmatpush1.bf16.xpose.msra.mxu0 0
      %2985 = vmatprep.subr.bf16.mxu0 0
      %2986 = vmatpush1.bf16.xpose.msra.mxu0 0
      %2987 = vmatprep.subr.bf16.mxu0 0
      %2988 = vmatpush1.bf16.xpose.msra.mxu0 0
      %2989 = vmatprep.subr.bf16.mxu0 0
      %2990 = vmatpush1.bf16.xpose.msra.mxu0 0
      %2991 = vmatprep.subr.bf16.mxu0 0
      %2992 = vmatpush1.bf16.xpose.msra.mxu0 0
      %2993 = vmatprep.subr.bf16.mxu0 0
      %2994 = vmatpush1.bf16.xpose.msra.mxu0 0
      %2995 = vmatprep.subr.bf16.mxu0 0
      %2996 = vmatpush1.bf16.xpose.msra.mxu0 %v2979
      %2997 = vmatprep.subr.bf16.mxu0 0
      %2998 = vmatpush2.bf16.xpose.msra.mxu0 0
      %2999 = vmatprep.subr.bf16.mxu0 0
      %3000 = vmatpush2.bf16.xpose.msra.mxu0 0
      %3001 = vmatprep.subr.bf16.mxu0 0
      %3002 = vmatpush2.bf16.xpose.msra.mxu0 0
      %3003 = vmatprep.subr.bf16.mxu0 0
      %3004 = vmatpush2.bf16.xpose.msra.mxu0 0
      %3005 = vmatprep.subr.bf16.mxu0 0
      %3006 = vmatpush2.bf16.xpose.msra.mxu0 0
      %3007 = vmatprep.subr.bf16.mxu0 0
      %3008 = vmatpush2.bf16.xpose.msra.mxu0 0
      %3009 = vmatprep.subr.bf16.mxu0 0
      %3010 = vmatpush2.bf16.xpose.msra.mxu0 0
      %3011 = vmatprep.subr.bf16.mxu0 0
      %3012 = vmatpush2.bf16.xpose.msra.mxu0 0
      %3013 = vmatprep.mubr.bf16.mxu0 0
      %3014 = vmatmul.mubr.bf16.gmra.mxu0 %v2976
      %v3015 = vpop.f32.mrf.mxu0
      %v3016 = vadd.f32 %v1200, %v3015
      %v3017 = vpop.f32.mrf.mxu0
      %v3018 = vpop.f32.mrf.mxu0
      %v3019 = vpop.f32.mrf.mxu0
      %3020 = vdwg.mxu0
      %3022 = vrot.lane.b32.xlu0 %v2032, 96
      %v3023 = vpop.permute.xlu0 %3022
      %v3025 = vsel %vm2043, %v2004, 0
      %v3028 = vsel %vm2043, %v3023, 0
      %3030 = vmatprep.subr.bf16.mxu0 0
      %3031 = vmatpush1.bf16.xpose.msra.mxu0 0
      %3032 = vmatprep.subr.bf16.mxu0 0
      %3033 = vmatpush1.bf16.xpose.msra.mxu0 0
      %3034 = vmatprep.subr.bf16.mxu0 0
      %3035 = vmatpush1.bf16.xpose.msra.mxu0 0
      %3036 = vmatprep.subr.bf16.mxu0 0
      %3037 = vmatpush1.bf16.xpose.msra.mxu0 0
      %3038 = vmatprep.subr.bf16.mxu0 0
      %3039 = vmatpush1.bf16.xpose.msra.mxu0 0
      %3040 = vmatprep.subr.bf16.mxu0 0
      %3041 = vmatpush1.bf16.xpose.msra.mxu0 0
      %3042 = vmatprep.subr.bf16.mxu0 0
      %3043 = vmatpush1.bf16.xpose.msra.mxu0 0
      %3044 = vmatprep.subr.bf16.mxu0 0
      %3045 = vmatpush1.bf16.xpose.msra.mxu0 %v3028
      %3046 = vmatprep.subr.bf16.mxu0 0
      %3047 = vmatpush2.bf16.xpose.msra.mxu0 0
      %3048 = vmatprep.subr.bf16.mxu0 0
      %3049 = vmatpush2.bf16.xpose.msra.mxu0 0
      %3050 = vmatprep.subr.bf16.mxu0 0
      %3051 = vmatpush2.bf16.xpose.msra.mxu0 0
      %3052 = vmatprep.subr.bf16.mxu0 0
      %3053 = vmatpush2.bf16.xpose.msra.mxu0 0
      %3054 = vmatprep.subr.bf16.mxu0 0
      %3055 = vmatpush2.bf16.xpose.msra.mxu0 0
      %3056 = vmatprep.subr.bf16.mxu0 0
      %3057 = vmatpush2.bf16.xpose.msra.mxu0 0
      %3058 = vmatprep.subr.bf16.mxu0 0
      %3059 = vmatpush2.bf16.xpose.msra.mxu0 0
      %3060 = vmatprep.subr.bf16.mxu0 0
      %3061 = vmatpush2.bf16.xpose.msra.mxu0 0
      %3062 = vmatprep.mubr.bf16.mxu0 0
      %3063 = vmatmul.mubr.bf16.gmra.mxu0 %v3025
      %v3064 = vpop.f32.mrf.mxu0
      %v3065 = vadd.f32 %v1200, %v3064
      %v3066 = vpop.f32.mrf.mxu0
      %v3067 = vpop.f32.mrf.mxu0
      %v3068 = vpop.f32.mrf.mxu0
      %3069 = vdwg.mxu0
      %3071 = vrot.lane.b32.xlu0 %v2033, 96
      %v3072 = vpop.permute.xlu0 %3071
      %v3074 = vsel %vm2043, %v2005, 0
      %v3077 = vsel %vm2043, %v3072, 0
      %3079 = vmatprep.subr.bf16.mxu0 0
      %3080 = vmatpush1.bf16.xpose.msra.mxu0 0
      %3081 = vmatprep.subr.bf16.mxu0 0
      %3082 = vmatpush1.bf16.xpose.msra.mxu0 0
      %3083 = vmatprep.subr.bf16.mxu0 0
      %3084 = vmatpush1.bf16.xpose.msra.mxu0 0
      %3085 = vmatprep.subr.bf16.mxu0 0
      %3086 = vmatpush1.bf16.xpose.msra.mxu0 0
      %3087 = vmatprep.subr.bf16.mxu0 0
      %3088 = vmatpush1.bf16.xpose.msra.mxu0 0
      %3089 = vmatprep.subr.bf16.mxu0 0
      %3090 = vmatpush1.bf16.xpose.msra.mxu0 0
      %3091 = vmatprep.subr.bf16.mxu0 0
      %3092 = vmatpush1.bf16.xpose.msra.mxu0 0
      %3093 = vmatprep.subr.bf16.mxu0 0
      %3094 = vmatpush1.bf16.xpose.msra.mxu0 %v3077
      %3095 = vmatprep.subr.bf16.mxu0 0
      %3096 = vmatpush2.bf16.xpose.msra.mxu0 0
      %3097 = vmatprep.subr.bf16.mxu0 0
      %3098 = vmatpush2.bf16.xpose.msra.mxu0 0
      %3099 = vmatprep.subr.bf16.mxu0 0
      %3100 = vmatpush2.bf16.xpose.msra.mxu0 0
      %3101 = vmatprep.subr.bf16.mxu0 0
      %3102 = vmatpush2.bf16.xpose.msra.mxu0 0
      %3103 = vmatprep.subr.bf16.mxu0 0
      %3104 = vmatpush2.bf16.xpose.msra.mxu0 0
      %3105 = vmatprep.subr.bf16.mxu0 0
      %3106 = vmatpush2.bf16.xpose.msra.mxu0 0
      %3107 = vmatprep.subr.bf16.mxu0 0
      %3108 = vmatpush2.bf16.xpose.msra.mxu0 0
      %3109 = vmatprep.subr.bf16.mxu0 0
      %3110 = vmatpush2.bf16.xpose.msra.mxu0 0
      %3111 = vmatprep.mubr.bf16.mxu0 0
      %3112 = vmatmul.mubr.bf16.gmra.mxu0 %v3074
      %v3113 = vpop.f32.mrf.mxu0
      %v3114 = vadd.f32 %v1200, %v3113
      %v3115 = vpop.f32.mrf.mxu0
      %v3116 = vpop.f32.mrf.mxu0
      %v3117 = vpop.f32.mrf.mxu0
      %3118 = vdwg.mxu0
      %3120 = vrot.lane.b32.xlu0 %v2034, 96
      %v3121 = vpop.permute.xlu0 %3120
      %v3123 = vsel %vm2043, %v2006, 0
      %v3126 = vsel %vm2043, %v3121, 0
      %3128 = vmatprep.subr.bf16.mxu0 0
      %3129 = vmatpush1.bf16.xpose.msra.mxu0 0
      %3130 = vmatprep.subr.bf16.mxu0 0
      %3131 = vmatpush1.bf16.xpose.msra.mxu0 0
      %3132 = vmatprep.subr.bf16.mxu0 0
      %3133 = vmatpush1.bf16.xpose.msra.mxu0 0
      %3134 = vmatprep.subr.bf16.mxu0 0
      %3135 = vmatpush1.bf16.xpose.msra.mxu0 0
      %3136 = vmatprep.subr.bf16.mxu0 0
      %3137 = vmatpush1.bf16.xpose.msra.mxu0 0
      %3138 = vmatprep.subr.bf16.mxu0 0
      %3139 = vmatpush1.bf16.xpose.msra.mxu0 0
      %3140 = vmatprep.subr.bf16.mxu0 0
      %3141 = vmatpush1.bf16.xpose.msra.mxu0 0
      %3142 = vmatprep.subr.bf16.mxu0 0
      %3143 = vmatpush1.bf16.xpose.msra.mxu0 %v3126
      %3144 = vmatprep.subr.bf16.mxu0 0
      %3145 = vmatpush2.bf16.xpose.msra.mxu0 0
      %3146 = vmatprep.subr.bf16.mxu0 0
      %3147 = vmatpush2.bf16.xpose.msra.mxu0 0
      %3148 = vmatprep.subr.bf16.mxu0 0
      %3149 = vmatpush2.bf16.xpose.msra.mxu0 0
      %3150 = vmatprep.subr.bf16.mxu0 0
      %3151 = vmatpush2.bf16.xpose.msra.mxu0 0
      %3152 = vmatprep.subr.bf16.mxu0 0
      %3153 = vmatpush2.bf16.xpose.msra.mxu0 0
      %3154 = vmatprep.subr.bf16.mxu0 0
      %3155 = vmatpush2.bf16.xpose.msra.mxu0 0
      %3156 = vmatprep.subr.bf16.mxu0 0
      %3157 = vmatpush2.bf16.xpose.msra.mxu0 0
      %3158 = vmatprep.subr.bf16.mxu0 0
      %3159 = vmatpush2.bf16.xpose.msra.mxu0 0
      %3160 = vmatprep.mubr.bf16.mxu0 0
      %3161 = vmatmul.mubr.bf16.gmra.mxu0 %v3123
      %v3162 = vpop.f32.mrf.mxu0
      %v3163 = vadd.f32 %v1200, %v3162
      %v3164 = vpop.f32.mrf.mxu0
      %v3165 = vpop.f32.mrf.mxu0
      %v3166 = vpop.f32.mrf.mxu0
      %3167 = vdwg.mxu0
      %3169 = vrot.lane.b32.xlu0 %v2035, 96
      %v3170 = vpop.permute.xlu0 %3169
      %v3172 = vsel %vm2043, %v2007, 0
      %v3175 = vsel %vm2043, %v3170, 0
      %3177 = vmatprep.subr.bf16.mxu0 0
      %3178 = vmatpush1.bf16.xpose.msra.mxu0 0
      %3179 = vmatprep.subr.bf16.mxu0 0
      %3180 = vmatpush1.bf16.xpose.msra.mxu0 0
      %3181 = vmatprep.subr.bf16.mxu0 0
      %3182 = vmatpush1.bf16.xpose.msra.mxu0 0
      %3183 = vmatprep.subr.bf16.mxu0 0
      %3184 = vmatpush1.bf16.xpose.msra.mxu0 0
      %3185 = vmatprep.subr.bf16.mxu0 0
      %3186 = vmatpush1.bf16.xpose.msra.mxu0 0
      %3187 = vmatprep.subr.bf16.mxu0 0
      %3188 = vmatpush1.bf16.xpose.msra.mxu0 0
      %3189 = vmatprep.subr.bf16.mxu0 0
      %3190 = vmatpush1.bf16.xpose.msra.mxu0 0
      %3191 = vmatprep.subr.bf16.mxu0 0
      %3192 = vmatpush1.bf16.xpose.msra.mxu0 %v3175
      %3193 = vmatprep.subr.bf16.mxu0 0
      %3194 = vmatpush2.bf16.xpose.msra.mxu0 0
      %3195 = vmatprep.subr.bf16.mxu0 0
      %3196 = vmatpush2.bf16.xpose.msra.mxu0 0
      %3197 = vmatprep.subr.bf16.mxu0 0
      %3198 = vmatpush2.bf16.xpose.msra.mxu0 0
      %3199 = vmatprep.subr.bf16.mxu0 0
      %3200 = vmatpush2.bf16.xpose.msra.mxu0 0
      %3201 = vmatprep.subr.bf16.mxu0 0
      %3202 = vmatpush2.bf16.xpose.msra.mxu0 0
      %3203 = vmatprep.subr.bf16.mxu0 0
      %3204 = vmatpush2.bf16.xpose.msra.mxu0 0
      %3205 = vmatprep.subr.bf16.mxu0 0
      %3206 = vmatpush2.bf16.xpose.msra.mxu0 0
      %3207 = vmatprep.subr.bf16.mxu0 0
      %3208 = vmatpush2.bf16.xpose.msra.mxu0 0
      %3209 = vmatprep.mubr.bf16.mxu0 0
      %3210 = vmatmul.mubr.bf16.gmra.mxu0 %v3172
      %v3211 = vpop.f32.mrf.mxu0
      %v3212 = vadd.f32 %v1200, %v3211
      %v3213 = vpop.f32.mrf.mxu0
      %v3214 = vpop.f32.mrf.mxu0
      %v3215 = vpop.f32.mrf.mxu0
      %3216 = vdwg.mxu0
      %3218 = vrot.lane.b32.xlu0 %v2036, 96
      %v3219 = vpop.permute.xlu0 %3218
      %v3221 = vsel %vm2043, %v2008, 0
      %v3224 = vsel %vm2043, %v3219, 0
      %3226 = vmatprep.subr.bf16.mxu0 0
      %3227 = vmatpush1.bf16.xpose.msra.mxu0 0
      %3228 = vmatprep.subr.bf16.mxu0 0
      %3229 = vmatpush1.bf16.xpose.msra.mxu0 0
      %3230 = vmatprep.subr.bf16.mxu0 0
      %3231 = vmatpush1.bf16.xpose.msra.mxu0 0
      %3232 = vmatprep.subr.bf16.mxu0 0
      %3233 = vmatpush1.bf16.xpose.msra.mxu0 0
      %3234 = vmatprep.subr.bf16.mxu0 0
      %3235 = vmatpush1.bf16.xpose.msra.mxu0 0
      %3236 = vmatprep.subr.bf16.mxu0 0
      %3237 = vmatpush1.bf16.xpose.msra.mxu0 0
      %3238 = vmatprep.subr.bf16.mxu0 0
      %3239 = vmatpush1.bf16.xpose.msra.mxu0 0
      %3240 = vmatprep.subr.bf16.mxu0 0
      %3241 = vmatpush1.bf16.xpose.msra.mxu0 %v3224
      %3242 = vmatprep.subr.bf16.mxu0 0
      %3243 = vmatpush2.bf16.xpose.msra.mxu0 0
      %3244 = vmatprep.subr.bf16.mxu0 0
      %3245 = vmatpush2.bf16.xpose.msra.mxu0 0
      %3246 = vmatprep.subr.bf16.mxu0 0
      %3247 = vmatpush2.bf16.xpose.msra.mxu0 0
      %3248 = vmatprep.subr.bf16.mxu0 0
      %3249 = vmatpush2.bf16.xpose.msra.mxu0 0
      %3250 = vmatprep.subr.bf16.mxu0 0
      %3251 = vmatpush2.bf16.xpose.msra.mxu0 0
      %3252 = vmatprep.subr.bf16.mxu0 0
      %3253 = vmatpush2.bf16.xpose.msra.mxu0 0
      %3254 = vmatprep.subr.bf16.mxu0 0
      %3255 = vmatpush2.bf16.xpose.msra.mxu0 0
      %3256 = vmatprep.subr.bf16.mxu0 0
      %3257 = vmatpush2.bf16.xpose.msra.mxu0 0
      %3258 = vmatprep.mubr.bf16.mxu0 0
      %3259 = vmatmul.mubr.bf16.gmra.mxu0 %v3221
      %v3260 = vpop.f32.mrf.mxu0
      %v3261 = vadd.f32 %v1200, %v3260
      %v3262 = vpop.f32.mrf.mxu0
      %v3263 = vpop.f32.mrf.mxu0
      %v3264 = vpop.f32.mrf.mxu0
      %3265 = vdwg.mxu0
      %3267 = vrot.lane.b32.xlu0 %v2037, 96
      %v3268 = vpop.permute.xlu0 %3267
      %v3270 = vsel %vm2043, %v2009, 0
      %v3273 = vsel %vm2043, %v3268, 0
      %3275 = vmatprep.subr.bf16.mxu0 0
      %3276 = vmatpush1.bf16.xpose.msra.mxu0 0
      %3277 = vmatprep.subr.bf16.mxu0 0
      %3278 = vmatpush1.bf16.xpose.msra.mxu0 0
      %3279 = vmatprep.subr.bf16.mxu0 0
      %3280 = vmatpush1.bf16.xpose.msra.mxu0 0
      %3281 = vmatprep.subr.bf16.mxu0 0
      %3282 = vmatpush1.bf16.xpose.msra.mxu0 0
      %3283 = vmatprep.subr.bf16.mxu0 0
      %3284 = vmatpush1.bf16.xpose.msra.mxu0 0
      %3285 = vmatprep.subr.bf16.mxu0 0
      %3286 = vmatpush1.bf16.xpose.msra.mxu0 0
      %3287 = vmatprep.subr.bf16.mxu0 0
      %3288 = vmatpush1.bf16.xpose.msra.mxu0 0
      %3289 = vmatprep.subr.bf16.mxu0 0
      %3290 = vmatpush1.bf16.xpose.msra.mxu0 %v3273
      %3291 = vmatprep.subr.bf16.mxu0 0
      %3292 = vmatpush2.bf16.xpose.msra.mxu0 0
      %3293 = vmatprep.subr.bf16.mxu0 0
      %3294 = vmatpush2.bf16.xpose.msra.mxu0 0
      %3295 = vmatprep.subr.bf16.mxu0 0
      %3296 = vmatpush2.bf16.xpose.msra.mxu0 0
      %3297 = vmatprep.subr.bf16.mxu0 0
      %3298 = vmatpush2.bf16.xpose.msra.mxu0 0
      %3299 = vmatprep.subr.bf16.mxu0 0
      %3300 = vmatpush2.bf16.xpose.msra.mxu0 0
      %3301 = vmatprep.subr.bf16.mxu0 0
      %3302 = vmatpush2.bf16.xpose.msra.mxu0 0
      %3303 = vmatprep.subr.bf16.mxu0 0
      %3304 = vmatpush2.bf16.xpose.msra.mxu0 0
      %3305 = vmatprep.subr.bf16.mxu0 0
      %3306 = vmatpush2.bf16.xpose.msra.mxu0 0
      %3307 = vmatprep.mubr.bf16.mxu0 0
      %3308 = vmatmul.mubr.bf16.gmra.mxu0 %v3270
      %v3309 = vpop.f32.mrf.mxu0
      %v3310 = vadd.f32 %v1200, %v3309
      %v3311 = vpop.f32.mrf.mxu0
      %v3312 = vpop.f32.mrf.mxu0
      %v3313 = vpop.f32.mrf.mxu0
      %3314 = vdwg.mxu0
      %3316 = vrot.lane.b32.xlu0 %v2038, 96
      %v3317 = vpop.permute.xlu0 %3316
      %v3319 = vsel %vm2043, %v2010, 0
      %v3322 = vsel %vm2043, %v3317, 0
      %3324 = vmatprep.subr.bf16.mxu0 0
      %3325 = vmatpush1.bf16.xpose.msra.mxu0 0
      %3326 = vmatprep.subr.bf16.mxu0 0
      %3327 = vmatpush1.bf16.xpose.msra.mxu0 0
      %3328 = vmatprep.subr.bf16.mxu0 0
      %3329 = vmatpush1.bf16.xpose.msra.mxu0 0
      %3330 = vmatprep.subr.bf16.mxu0 0
      %3331 = vmatpush1.bf16.xpose.msra.mxu0 0
      %3332 = vmatprep.subr.bf16.mxu0 0
      %3333 = vmatpush1.bf16.xpose.msra.mxu0 0
      %3334 = vmatprep.subr.bf16.mxu0 0
      %3335 = vmatpush1.bf16.xpose.msra.mxu0 0
      %3336 = vmatprep.subr.bf16.mxu0 0
      %3337 = vmatpush1.bf16.xpose.msra.mxu0 0
      %3338 = vmatprep.subr.bf16.mxu0 0
      %3339 = vmatpush1.bf16.xpose.msra.mxu0 %v3322
      %3340 = vmatprep.subr.bf16.mxu0 0
      %3341 = vmatpush2.bf16.xpose.msra.mxu0 0
      %3342 = vmatprep.subr.bf16.mxu0 0
      %3343 = vmatpush2.bf16.xpose.msra.mxu0 0
      %3344 = vmatprep.subr.bf16.mxu0 0
      %3345 = vmatpush2.bf16.xpose.msra.mxu0 0
      %3346 = vmatprep.subr.bf16.mxu0 0
      %3347 = vmatpush2.bf16.xpose.msra.mxu0 0
      %3348 = vmatprep.subr.bf16.mxu0 0
      %3349 = vmatpush2.bf16.xpose.msra.mxu0 0
      %3350 = vmatprep.subr.bf16.mxu0 0
      %3351 = vmatpush2.bf16.xpose.msra.mxu0 0
      %3352 = vmatprep.subr.bf16.mxu0 0
      %3353 = vmatpush2.bf16.xpose.msra.mxu0 0
      %3354 = vmatprep.subr.bf16.mxu0 0
      %3355 = vmatpush2.bf16.xpose.msra.mxu0 0
      %3356 = vmatprep.mubr.bf16.mxu0 0
      %3357 = vmatmul.mubr.bf16.gmra.mxu0 %v3319
      %v3358 = vpop.f32.mrf.mxu0
      %v3359 = vadd.f32 %v1200, %v3358
      %v3360 = vpop.f32.mrf.mxu0
      %v3361 = vpop.f32.mrf.mxu0
      %v3362 = vpop.f32.mrf.mxu0
      %3363 = vdwg.mxu0
      %3365 = vrot.lane.b32.xlu0 %v2039, 96
      %v3366 = vpop.permute.xlu0 %3365
      %v3368 = vsel %vm2043, %v2011, 0
      %v3371 = vsel %vm2043, %v3366, 0
      %3373 = vmatprep.subr.bf16.mxu0 0
      %3374 = vmatpush1.bf16.xpose.msra.mxu0 0
      %3375 = vmatprep.subr.bf16.mxu0 0
      %3376 = vmatpush1.bf16.xpose.msra.mxu0 0
      %3377 = vmatprep.subr.bf16.mxu0 0
      %3378 = vmatpush1.bf16.xpose.msra.mxu0 0
      %3379 = vmatprep.subr.bf16.mxu0 0
      %3380 = vmatpush1.bf16.xpose.msra.mxu0 0
      %3381 = vmatprep.subr.bf16.mxu0 0
      %3382 = vmatpush1.bf16.xpose.msra.mxu0 0
      %3383 = vmatprep.subr.bf16.mxu0 0
      %3384 = vmatpush1.bf16.xpose.msra.mxu0 0
      %3385 = vmatprep.subr.bf16.mxu0 0
      %3386 = vmatpush1.bf16.xpose.msra.mxu0 0
      %3387 = vmatprep.subr.bf16.mxu0 0
      %3388 = vmatpush1.bf16.xpose.msra.mxu0 %v3371
      %3389 = vmatprep.subr.bf16.mxu0 0
      %3390 = vmatpush2.bf16.xpose.msra.mxu0 0
      %3391 = vmatprep.subr.bf16.mxu0 0
      %3392 = vmatpush2.bf16.xpose.msra.mxu0 0
      %3393 = vmatprep.subr.bf16.mxu0 0
      %3394 = vmatpush2.bf16.xpose.msra.mxu0 0
      %3395 = vmatprep.subr.bf16.mxu0 0
      %3396 = vmatpush2.bf16.xpose.msra.mxu0 0
      %3397 = vmatprep.subr.bf16.mxu0 0
      %3398 = vmatpush2.bf16.xpose.msra.mxu0 0
      %3399 = vmatprep.subr.bf16.mxu0 0
      %3400 = vmatpush2.bf16.xpose.msra.mxu0 0
      %3401 = vmatprep.subr.bf16.mxu0 0
      %3402 = vmatpush2.bf16.xpose.msra.mxu0 0
      %3403 = vmatprep.subr.bf16.mxu0 0
      %3404 = vmatpush2.bf16.xpose.msra.mxu0 0
      %3405 = vmatprep.mubr.bf16.mxu0 0
      %3406 = vmatmul.mubr.bf16.gmra.mxu0 %v3368
      %v3407 = vpop.f32.mrf.mxu0
      %v3408 = vadd.f32 %v1200, %v3407
      %v3409 = vpop.f32.mrf.mxu0
      %v3410 = vpop.f32.mrf.mxu0
      %v3411 = vpop.f32.mrf.mxu0
      %3412 = vdwg.mxu0
      %vm3413 = vcmask 64512
      %v3414 = vsel %vm3413, %v2085, -inf
      %3415 = vmax.xlane.f32.xlu0 %v3414
      %v3416 = vpop.xlane.xlu0 %3415
      %v3417 = vsel %vm3413, %v2134, -inf
      %3418 = vmax.xlane.f32.xlu0 %v3417
      %v3419 = vpop.xlane.xlu0 %3418
      %v3420 = vsel %vm3413, %v2183, -inf
      %3421 = vmax.xlane.f32.xlu0 %v3420
      %v3422 = vpop.xlane.xlu0 %3421
      %v3423 = vsel %vm3413, %v2232, -inf
      %3424 = vmax.xlane.f32.xlu0 %v3423
      %v3425 = vpop.xlane.xlu0 %3424
      %v3426 = vsel %vm3413, %v2281, -inf
      %3427 = vmax.xlane.f32.xlu0 %v3426
      %v3428 = vpop.xlane.xlu0 %3427
      %v3429 = vsel %vm3413, %v2330, -inf
      %3430 = vmax.xlane.f32.xlu0 %v3429
      %v3431 = vpop.xlane.xlu0 %3430
      %v3432 = vsel %vm3413, %v2379, -inf
      %3433 = vmax.xlane.f32.xlu0 %v3432
      %v3434 = vpop.xlane.xlu0 %3433
      %v3435 = vsel %vm3413, %v2428, -inf
      %3436 = vmax.xlane.f32.xlu0 %v3435
      %v3437 = vpop.xlane.xlu0 %3436
      %v3438 = vsel %vm3413, %v2477, -inf
      %3439 = vmax.xlane.f32.xlu0 %v3438
      %v3440 = vpop.xlane.xlu0 %3439
      %v3441 = vsel %vm3413, %v2526, -inf
      %3442 = vmax.xlane.f32.xlu0 %v3441
      %v3443 = vpop.xlane.xlu0 %3442
      %v3444 = vsel %vm3413, %v2575, -inf
      %3445 = vmax.xlane.f32.xlu0 %v3444
      %v3446 = vpop.xlane.xlu0 %3445
      %v3447 = vsel %vm3413, %v2624, -inf
      %3448 = vmax.xlane.f32.xlu0 %v3447
      %v3449 = vpop.xlane.xlu0 %3448
      %v3450 = vsel %vm3413, %v2673, -inf
      %3451 = vmax.xlane.f32.xlu0 %v3450
      %v3452 = vpop.xlane.xlu0 %3451
      %v3453 = vsel %vm3413, %v2722, -inf
      %3454 = vmax.xlane.f32.xlu0 %v3453
      %v3455 = vpop.xlane.xlu0 %3454
      %v3456 = vsel %vm3413, %v2771, -inf
      %3457 = vmax.xlane.f32.xlu0 %v3456
      %v3458 = vpop.xlane.xlu0 %3457
      %v3459 = vsel %vm3413, %v2820, -inf
      %3460 = vmax.xlane.f32.xlu0 %v3459
      %v3461 = vpop.xlane.xlu0 %3460
      %v3462 = vsel %vm3413, %v2869, -inf
      %3463 = vmax.xlane.f32.xlu0 %v3462
      %v3464 = vpop.xlane.xlu0 %3463
      %v3465 = vsel %vm3413, %v2918, -inf
      %3466 = vmax.xlane.f32.xlu0 %v3465
      %v3467 = vpop.xlane.xlu0 %3466
      %v3468 = vsel %vm3413, %v2967, -inf
      %3469 = vmax.xlane.f32.xlu0 %v3468
      %v3470 = vpop.xlane.xlu0 %3469
      %v3471 = vsel %vm3413, %v3016, -inf
      %3472 = vmax.xlane.f32.xlu0 %v3471
      %v3473 = vpop.xlane.xlu0 %3472
      %v3474 = vsel %vm3413, %v3065, -inf
      %3475 = vmax.xlane.f32.xlu0 %v3474
      %v3476 = vpop.xlane.xlu0 %3475
      %v3477 = vsel %vm3413, %v3114, -inf
      %3478 = vmax.xlane.f32.xlu0 %v3477
      %v3479 = vpop.xlane.xlu0 %3478
      %v3480 = vsel %vm3413, %v3163, -inf
      %3481 = vmax.xlane.f32.xlu0 %v3480
      %v3482 = vpop.xlane.xlu0 %3481
      %v3483 = vsel %vm3413, %v3212, -inf
      %3484 = vmax.xlane.f32.xlu0 %v3483
      %v3485 = vpop.xlane.xlu0 %3484
      %v3486 = vsel %vm3413, %v3261, -inf
      %3487 = vmax.xlane.f32.xlu0 %v3486
      %v3488 = vpop.xlane.xlu0 %3487
      %v3489 = vsel %vm3413, %v3310, -inf
      %3490 = vmax.xlane.f32.xlu0 %v3489
      %v3491 = vpop.xlane.xlu0 %3490
      %v3492 = vsel %vm3413, %v3359, -inf
      %3493 = vmax.xlane.f32.xlu0 %v3492
      %v3494 = vpop.xlane.xlu0 %3493
      %v3495 = vsel %vm3413, %v3408, -inf
      %3496 = vmax.xlane.f32.xlu0 %v3495
      %v3497 = vpop.xlane.xlu0 %3496
      %v3498 = vsub.f32 %v2085, %v3416
      %v3499 = vsub.f32 %v2134, %v3419
      %v3500 = vsub.f32 %v2183, %v3422
      %v3501 = vsub.f32 %v2232, %v3425
      %v3502 = vsub.f32 %v2281, %v3428
      %v3503 = vsub.f32 %v2330, %v3431
      %v3504 = vsub.f32 %v2379, %v3434
      %v3505 = vsub.f32 %v2428, %v3437
      %v3506 = vsub.f32 %v2477, %v3440
      %v3507 = vsub.f32 %v2526, %v3443
      %v3508 = vsub.f32 %v2575, %v3446
      %v3509 = vsub.f32 %v2624, %v3449
      %v3510 = vsub.f32 %v2673, %v3452
      %v3511 = vsub.f32 %v2722, %v3455
      %v3512 = vsub.f32 %v2771, %v3458
      %v3513 = vsub.f32 %v2820, %v3461
      %v3514 = vsub.f32 %v2869, %v3464
      %v3515 = vsub.f32 %v2918, %v3467
      %v3516 = vsub.f32 %v2967, %v3470
      %v3517 = vsub.f32 %v3016, %v3473
      %v3518 = vsub.f32 %v3065, %v3476
      %v3519 = vsub.f32 %v3114, %v3479
      %v3520 = vsub.f32 %v3163, %v3482
      %v3521 = vsub.f32 %v3212, %v3485
      %v3522 = vsub.f32 %v3261, %v3488
      %v3523 = vsub.f32 %v3310, %v3491
      %v3524 = vsub.f32 %v3359, %v3494
      %v3525 = vsub.f32 %v3408, %v3497
      %v3526 = vmul.f32 %v3498, 1.442695
      %v3527 = vpow.pop %v3526
      %v3528 = vmul.f32 %v3499, 1.442695
      %v3529 = vpow.pop %v3528
      %v3530 = vmul.f32 %v3500, 1.442695
      %v3531 = vpow.pop %v3530
      %v3532 = vmul.f32 %v3501, 1.442695
      %v3533 = vpow.pop %v3532
      %v3534 = vmul.f32 %v3502, 1.442695
      %v3535 = vpow.pop %v3534
      %v3536 = vmul.f32 %v3503, 1.442695
      %v3537 = vpow.pop %v3536
      %v3538 = vmul.f32 %v3504, 1.442695
      %v3539 = vpow.pop %v3538
      %v3540 = vmul.f32 %v3505, 1.442695
      %v3541 = vpow.pop %v3540
      %v3542 = vmul.f32 %v3506, 1.442695
      %v3543 = vpow.pop %v3542
      %v3544 = vmul.f32 %v3507, 1.442695
      %v3545 = vpow.pop %v3544
      %v3546 = vmul.f32 %v3508, 1.442695
      %v3547 = vpow.pop %v3546
      %v3548 = vmul.f32 %v3509, 1.442695
      %v3549 = vpow.pop %v3548
      %v3550 = vmul.f32 %v3510, 1.442695
      %v3551 = vpow.pop %v3550
      %v3552 = vmul.f32 %v3511, 1.442695
      %v3553 = vpow.pop %v3552
      %v3554 = vmul.f32 %v3512, 1.442695
      %v3555 = vpow.pop %v3554
      %v3556 = vmul.f32 %v3513, 1.442695
      %v3557 = vpow.pop %v3556
      %v3558 = vmul.f32 %v3514, 1.442695
      %v3559 = vpow.pop %v3558
      %v3560 = vmul.f32 %v3515, 1.442695
      %v3561 = vpow.pop %v3560
      %v3562 = vmul.f32 %v3516, 1.442695
      %v3563 = vpow.pop %v3562
      %v3564 = vmul.f32 %v3517, 1.442695
      %v3565 = vpow.pop %v3564
      %v3566 = vmul.f32 %v3518, 1.442695
      %v3567 = vpow.pop %v3566
      %v3568 = vmul.f32 %v3519, 1.442695
      %v3569 = vpow.pop %v3568
      %v3570 = vmul.f32 %v3520, 1.442695
      %v3571 = vpow.pop %v3570
      %v3572 = vmul.f32 %v3521, 1.442695
      %v3573 = vpow.pop %v3572
      %v3574 = vmul.f32 %v3522, 1.442695
      %v3575 = vpow.pop %v3574
      %v3576 = vmul.f32 %v3523, 1.442695
      %v3577 = vpow.pop %v3576
      %v3578 = vmul.f32 %v3524, 1.442695
      %v3579 = vpow.pop %v3578
      %v3580 = vmul.f32 %v3525, 1.442695
      %v3581 = vpow.pop %v3580
      %v3582 = vsel %vm3413, %v3527, 0.0
      %3583 = vadd.xlane.f32.xlu0 %v3582
      %v3584 = vpop.xlane.xlu0 %3583
      %v3585 = vsel %vm3413, %v3529, 0.0
      %3586 = vadd.xlane.f32.xlu0 %v3585
      %v3587 = vpop.xlane.xlu0 %3586
      %v3588 = vsel %vm3413, %v3531, 0.0
      %3589 = vadd.xlane.f32.xlu0 %v3588
      %v3590 = vpop.xlane.xlu0 %3589
      %v3591 = vsel %vm3413, %v3533, 0.0
      %3592 = vadd.xlane.f32.xlu0 %v3591
      %v3593 = vpop.xlane.xlu0 %3592
      %v3594 = vsel %vm3413, %v3535, 0.0
      %3595 = vadd.xlane.f32.xlu0 %v3594
      %v3596 = vpop.xlane.xlu0 %3595
      %v3597 = vsel %vm3413, %v3537, 0.0
      %3598 = vadd.xlane.f32.xlu0 %v3597
      %v3599 = vpop.xlane.xlu0 %3598
      %v3600 = vsel %vm3413, %v3539, 0.0
      %3601 = vadd.xlane.f32.xlu0 %v3600
      %v3602 = vpop.xlane.xlu0 %3601
      %v3603 = vsel %vm3413, %v3541, 0.0
      %3604 = vadd.xlane.f32.xlu0 %v3603
      %v3605 = vpop.xlane.xlu0 %3604
      %v3606 = vsel %vm3413, %v3543, 0.0
      %3607 = vadd.xlane.f32.xlu0 %v3606
      %v3608 = vpop.xlane.xlu0 %3607
      %v3609 = vsel %vm3413, %v3545, 0.0
      %3610 = vadd.xlane.f32.xlu0 %v3609
      %v3611 = vpop.xlane.xlu0 %3610
      %v3612 = vsel %vm3413, %v3547, 0.0
      %3613 = vadd.xlane.f32.xlu0 %v3612
      %v3614 = vpop.xlane.xlu0 %3613
      %v3615 = vsel %vm3413, %v3549, 0.0
      %3616 = vadd.xlane.f32.xlu0 %v3615
      %v3617 = vpop.xlane.xlu0 %3616
      %v3618 = vsel %vm3413, %v3551, 0.0
      %3619 = vadd.xlane.f32.xlu0 %v3618
      %v3620 = vpop.xlane.xlu0 %3619
      %v3621 = vsel %vm3413, %v3553, 0.0
      %3622 = vadd.xlane.f32.xlu0 %v3621
      %v3623 = vpop.xlane.xlu0 %3622
      %v3624 = vsel %vm3413, %v3555, 0.0
      %3625 = vadd.xlane.f32.xlu0 %v3624
      %v3626 = vpop.xlane.xlu0 %3625
      %v3627 = vsel %vm3413, %v3557, 0.0
      %3628 = vadd.xlane.f32.xlu0 %v3627
      %v3629 = vpop.xlane.xlu0 %3628
      %v3630 = vsel %vm3413, %v3559, 0.0
      %3631 = vadd.xlane.f32.xlu0 %v3630
      %v3632 = vpop.xlane.xlu0 %3631
      %v3633 = vsel %vm3413, %v3561, 0.0
      %3634 = vadd.xlane.f32.xlu0 %v3633
      %v3635 = vpop.xlane.xlu0 %3634
      %v3636 = vsel %vm3413, %v3563, 0.0
      %3637 = vadd.xlane.f32.xlu0 %v3636
      %v3638 = vpop.xlane.xlu0 %3637
      %v3639 = vsel %vm3413, %v3565, 0.0
      %3640 = vadd.xlane.f32.xlu0 %v3639
      %v3641 = vpop.xlane.xlu0 %3640
      %v3642 = vsel %vm3413, %v3567, 0.0
      %3643 = vadd.xlane.f32.xlu0 %v3642
      %v3644 = vpop.xlane.xlu0 %3643
      %v3645 = vsel %vm3413, %v3569, 0.0
      %3646 = vadd.xlane.f32.xlu0 %v3645
      %v3647 = vpop.xlane.xlu0 %3646
      %v3648 = vsel %vm3413, %v3571, 0.0
      %3649 = vadd.xlane.f32.xlu0 %v3648
      %v3650 = vpop.xlane.xlu0 %3649
      %v3651 = vsel %vm3413, %v3573, 0.0
      %3652 = vadd.xlane.f32.xlu0 %v3651
      %v3653 = vpop.xlane.xlu0 %3652
      %v3654 = vsel %vm3413, %v3575, 0.0
      %3655 = vadd.xlane.f32.xlu0 %v3654
      %v3656 = vpop.xlane.xlu0 %3655
      %v3657 = vsel %vm3413, %v3577, 0.0
      %3658 = vadd.xlane.f32.xlu0 %v3657
      %v3659 = vpop.xlane.xlu0 %3658
      %v3660 = vsel %vm3413, %v3579, 0.0
      %3661 = vadd.xlane.f32.xlu0 %v3660
      %v3662 = vpop.xlane.xlu0 %3661
      %v3663 = vsel %vm3413, %v3581, 0.0
      %3664 = vadd.xlane.f32.xlu0 %v3663
      %v3665 = vpop.xlane.xlu0 %3664
      %v3666 = vrcp.pop %v3584
      %v3667 = vmul.f32 %v3527, %v3666
      %v3668 = vrcp.pop %v3587
      %v3669 = vmul.f32 %v3529, %v3668
      %v3670 = vrcp.pop %v3590
      %v3671 = vmul.f32 %v3531, %v3670
      %v3672 = vrcp.pop %v3593
      %v3673 = vmul.f32 %v3533, %v3672
      %v3674 = vrcp.pop %v3596
      %v3675 = vmul.f32 %v3535, %v3674
      %v3676 = vrcp.pop %v3599
      %v3677 = vmul.f32 %v3537, %v3676
      %v3678 = vrcp.pop %v3602
      %v3679 = vmul.f32 %v3539, %v3678
      %v3680 = vrcp.pop %v3605
      %v3681 = vmul.f32 %v3541, %v3680
      %v3682 = vrcp.pop %v3608
      %v3683 = vmul.f32 %v3543, %v3682
      %v3684 = vrcp.pop %v3611
      %v3685 = vmul.f32 %v3545, %v3684
      %v3686 = vrcp.pop %v3614
      %v3687 = vmul.f32 %v3547, %v3686
      %v3688 = vrcp.pop %v3617
      %v3689 = vmul.f32 %v3549, %v3688
      %v3690 = vrcp.pop %v3620
      %v3691 = vmul.f32 %v3551, %v3690
      %v3692 = vrcp.pop %v3623
      %v3693 = vmul.f32 %v3553, %v3692
      %v3694 = vrcp.pop %v3626
      %v3695 = vmul.f32 %v3555, %v3694
      %v3696 = vrcp.pop %v3629
      %v3697 = vmul.f32 %v3557, %v3696
      %v3698 = vrcp.pop %v3632
      %v3699 = vmul.f32 %v3559, %v3698
      %v3700 = vrcp.pop %v3635
      %v3701 = vmul.f32 %v3561, %v3700
      %v3702 = vrcp.pop %v3638
      %v3703 = vmul.f32 %v3563, %v3702
      %v3704 = vrcp.pop %v3641
      %v3705 = vmul.f32 %v3565, %v3704
      %v3706 = vrcp.pop %v3644
      %v3707 = vmul.f32 %v3567, %v3706
      %v3708 = vrcp.pop %v3647
      %v3709 = vmul.f32 %v3569, %v3708
      %v3710 = vrcp.pop %v3650
      %v3711 = vmul.f32 %v3571, %v3710
      %v3712 = vrcp.pop %v3653
      %v3713 = vmul.f32 %v3573, %v3712
      %v3714 = vrcp.pop %v3656
      %v3715 = vmul.f32 %v3575, %v3714
      %v3716 = vrcp.pop %v3659
      %v3717 = vmul.f32 %v3577, %v3716
      %v3718 = vrcp.pop %v3662
      %v3719 = vmul.f32 %v3579, %v3718
      %v3720 = vrcp.pop %v3665
      %v3721 = vmul.f32 %v3581, %v3720
      %v3722 = vpack.c.bf16 %v3667, %v3667
      %v3723 = vpack.c.bf16 %v3669, %v3669
      %v3724 = vpack.c.bf16 %v3671, %v3671
      %v3725 = vpack.c.bf16 %v3673, %v3673
      %v3726 = vpack.c.bf16 %v3675, %v3675
      %v3727 = vpack.c.bf16 %v3677, %v3677
      %v3728 = vpack.c.bf16 %v3679, %v3679
      %v3729 = vpack.c.bf16 %v3681, %v3681
      %v3730 = vpack.c.bf16 %v3683, %v3683
      %v3731 = vpack.c.bf16 %v3685, %v3685
      %v3732 = vpack.c.bf16 %v3687, %v3687
      %v3733 = vpack.c.bf16 %v3689, %v3689
      %v3734 = vpack.c.bf16 %v3691, %v3691
      %v3735 = vpack.c.bf16 %v3693, %v3693
      %v3736 = vpack.c.bf16 %v3695, %v3695
      %v3737 = vpack.c.bf16 %v3697, %v3697
      %v3738 = vpack.c.bf16 %v3699, %v3699
      %v3739 = vpack.c.bf16 %v3701, %v3701
      %v3740 = vpack.c.bf16 %v3703, %v3703
      %v3741 = vpack.c.bf16 %v3705, %v3705
      %v3742 = vpack.c.bf16 %v3707, %v3707
      %v3743 = vpack.c.bf16 %v3709, %v3709
      %v3744 = vpack.c.bf16 %v3711, %v3711
      %v3745 = vpack.c.bf16 %v3713, %v3713
      %v3746 = vpack.c.bf16 %v3715, %v3715
      %v3747 = vpack.c.bf16 %v3717, %v3717
      %v3748 = vpack.c.bf16 %v3719, %v3719
      %v3749 = vpack.c.bf16 %v3721, %v3721
      %v3750 = vpack.c.bf16 %v1952, %v1952
      %v3751 = vpack.c.bf16 %v1953, %v1953
      %v3752 = vpack.c.bf16 %v1954, %v1954
      %v3753 = vpack.c.bf16 %v1955, %v1955
      %v3754 = vpack.c.bf16 %v1956, %v1956
      %v3755 = vpack.c.bf16 %v1957, %v1957
      %v3756 = vpack.c.bf16 %v1958, %v1958
      %v3757 = vpack.c.bf16 %v1959, %v1959
      %v3758 = vpack.c.bf16 %v1960, %v1960
      %v3759 = vpack.c.bf16 %v1961, %v1961
      %v3760 = vpack.c.bf16 %v1962, %v1962
      %v3761 = vpack.c.bf16 %v1963, %v1963
      %v3762 = vpack.c.bf16 %v1964, %v1964
      %v3763 = vpack.c.bf16 %v1965, %v1965
      %v3764 = vpack.c.bf16 %v1966, %v1966
      %v3765 = vpack.c.bf16 %v1967, %v1967
      %v3766 = vpack.c.bf16 %v1968, %v1968
      %v3767 = vpack.c.bf16 %v1969, %v1969
      %v3768 = vpack.c.bf16 %v1970, %v1970
      %v3769 = vpack.c.bf16 %v1971, %v1971
      %v3770 = vpack.c.bf16 %v1972, %v1972
      %v3771 = vpack.c.bf16 %v1973, %v1973
      %v3772 = vpack.c.bf16 %v1974, %v1974
      %v3773 = vpack.c.bf16 %v1975, %v1975
      %v3774 = vpack.c.bf16 %v1976, %v1976
      %v3775 = vpack.c.bf16 %v1977, %v1977
      %v3776 = vpack.c.bf16 %v1978, %v1978
      %v3777 = vpack.c.bf16 %v1979, %v1979
      %3779 = vrot.lane.b32.xlu0 %v3750, 64
      %v3780 = vpop.permute.xlu0 %3779
      %v3782 = vsel %vm3413, %v3722, 0
      %vm3784 = vcmask 1043456
      %v3786 = vsel %vm3784, %v3780, 0
      %3788 = vmatprep.subr.bf16.mxu0 0
      %3789 = vmatpush1.bf16.msra.mxu0 0
      %3790 = vmatprep.subr.bf16.mxu0 0
      %3791 = vmatpush1.bf16.msra.mxu0 0
      %3792 = vmatprep.subr.bf16.mxu0 0
      %3793 = vmatpush1.bf16.msra.mxu0 0
      %3794 = vmatprep.subr.bf16.mxu0 0
      %3795 = vmatpush1.bf16.msra.mxu0 0
      %3796 = vmatprep.subr.bf16.mxu0 0
      %3797 = vmatpush1.bf16.msra.mxu0 0
      %3798 = vmatprep.subr.bf16.mxu0 0
      %3799 = vmatpush1.bf16.msra.mxu0 0
      %3800 = vmatprep.subr.bf16.mxu0 0
      %3801 = vmatpush1.bf16.msra.mxu0 0
      %3802 = vmatprep.subr.bf16.mxu0 0
      %3803 = vmatpush1.bf16.msra.mxu0 %v3786
      %3804 = vmatprep.subr.bf16.mxu0 0
      %3805 = vmatpush2.bf16.msra.mxu0 0
      %3806 = vmatprep.subr.bf16.mxu0 0
      %3807 = vmatpush2.bf16.msra.mxu0 0
      %3808 = vmatprep.subr.bf16.mxu0 0
      %3809 = vmatpush2.bf16.msra.mxu0 0
      %3810 = vmatprep.subr.bf16.mxu0 0
      %3811 = vmatpush2.bf16.msra.mxu0 0
      %3812 = vmatprep.subr.bf16.mxu0 0
      %3813 = vmatpush2.bf16.msra.mxu0 0
      %3814 = vmatprep.subr.bf16.mxu0 0
      %3815 = vmatpush2.bf16.msra.mxu0 0
      %3816 = vmatprep.subr.bf16.mxu0 0
      %3817 = vmatpush2.bf16.msra.mxu0 0
      %3818 = vmatprep.subr.bf16.mxu0 0
      %3819 = vmatpush2.bf16.msra.mxu0 0
      %3820 = vmatprep.mubr.bf16.mxu0 0
      %3821 = vmatmul.mubr.bf16.gmra.mxu0 %v3782
      %v3822 = vpop.f32.mrf.mxu0
      %v3823 = vadd.f32 0.0, %v3822
      %v3824 = vpop.f32.mrf.mxu0
      %v3825 = vpop.f32.mrf.mxu0
      %v3826 = vpop.f32.mrf.mxu0
      %3827 = vdwg.mxu0
      %3829 = vrot.lane.b32.xlu0 %v3751, 64
      %v3830 = vpop.permute.xlu0 %3829
      %v3832 = vsel %vm3413, %v3723, 0
      %v3835 = vsel %vm3784, %v3830, 0
      %3837 = vmatprep.subr.bf16.mxu0 0
      %3838 = vmatpush1.bf16.msra.mxu0 0
      %3839 = vmatprep.subr.bf16.mxu0 0
      %3840 = vmatpush1.bf16.msra.mxu0 0
      %3841 = vmatprep.subr.bf16.mxu0 0
      %3842 = vmatpush1.bf16.msra.mxu0 0
      %3843 = vmatprep.subr.bf16.mxu0 0
      %3844 = vmatpush1.bf16.msra.mxu0 0
      %3845 = vmatprep.subr.bf16.mxu0 0
      %3846 = vmatpush1.bf16.msra.mxu0 0
      %3847 = vmatprep.subr.bf16.mxu0 0
      %3848 = vmatpush1.bf16.msra.mxu0 0
      %3849 = vmatprep.subr.bf16.mxu0 0
      %3850 = vmatpush1.bf16.msra.mxu0 0
      %3851 = vmatprep.subr.bf16.mxu0 0
      %3852 = vmatpush1.bf16.msra.mxu0 %v3835
      %3853 = vmatprep.subr.bf16.mxu0 0
      %3854 = vmatpush2.bf16.msra.mxu0 0
      %3855 = vmatprep.subr.bf16.mxu0 0
      %3856 = vmatpush2.bf16.msra.mxu0 0
      %3857 = vmatprep.subr.bf16.mxu0 0
      %3858 = vmatpush2.bf16.msra.mxu0 0
      %3859 = vmatprep.subr.bf16.mxu0 0
      %3860 = vmatpush2.bf16.msra.mxu0 0
      %3861 = vmatprep.subr.bf16.mxu0 0
      %3862 = vmatpush2.bf16.msra.mxu0 0
      %3863 = vmatprep.subr.bf16.mxu0 0
      %3864 = vmatpush2.bf16.msra.mxu0 0
      %3865 = vmatprep.subr.bf16.mxu0 0
      %3866 = vmatpush2.bf16.msra.mxu0 0
      %3867 = vmatprep.subr.bf16.mxu0 0
      %3868 = vmatpush2.bf16.msra.mxu0 0
      %3869 = vmatprep.mubr.bf16.mxu0 0
      %3870 = vmatmul.mubr.bf16.gmra.mxu0 %v3832
      %v3871 = vpop.f32.mrf.mxu0
      %v3872 = vadd.f32 0.0, %v3871
      %v3873 = vpop.f32.mrf.mxu0
      %v3874 = vpop.f32.mrf.mxu0
      %v3875 = vpop.f32.mrf.mxu0
      %3876 = vdwg.mxu0
      %3878 = vrot.lane.b32.xlu0 %v3752, 64
      %v3879 = vpop.permute.xlu0 %3878
      %v3881 = vsel %vm3413, %v3724, 0
      %v3884 = vsel %vm3784, %v3879, 0
      %3886 = vmatprep.subr.bf16.mxu0 0
      %3887 = vmatpush1.bf16.msra.mxu0 0
      %3888 = vmatprep.subr.bf16.mxu0 0
      %3889 = vmatpush1.bf16.msra.mxu0 0
      %3890 = vmatprep.subr.bf16.mxu0 0
      %3891 = vmatpush1.bf16.msra.mxu0 0
      %3892 = vmatprep.subr.bf16.mxu0 0
      %3893 = vmatpush1.bf16.msra.mxu0 0
      %3894 = vmatprep.subr.bf16.mxu0 0
      %3895 = vmatpush1.bf16.msra.mxu0 0
      %3896 = vmatprep.subr.bf16.mxu0 0
      %3897 = vmatpush1.bf16.msra.mxu0 0
      %3898 = vmatprep.subr.bf16.mxu0 0
      %3899 = vmatpush1.bf16.msra.mxu0 0
      %3900 = vmatprep.subr.bf16.mxu0 0
      %3901 = vmatpush1.bf16.msra.mxu0 %v3884
      %3902 = vmatprep.subr.bf16.mxu0 0
      %3903 = vmatpush2.bf16.msra.mxu0 0
      %3904 = vmatprep.subr.bf16.mxu0 0
      %3905 = vmatpush2.bf16.msra.mxu0 0
      %3906 = vmatprep.subr.bf16.mxu0 0
      %3907 = vmatpush2.bf16.msra.mxu0 0
      %3908 = vmatprep.subr.bf16.mxu0 0
      %3909 = vmatpush2.bf16.msra.mxu0 0
      %3910 = vmatprep.subr.bf16.mxu0 0
      %3911 = vmatpush2.bf16.msra.mxu0 0
      %3912 = vmatprep.subr.bf16.mxu0 0
      %3913 = vmatpush2.bf16.msra.mxu0 0
      %3914 = vmatprep.subr.bf16.mxu0 0
      %3915 = vmatpush2.bf16.msra.mxu0 0
      %3916 = vmatprep.subr.bf16.mxu0 0
      %3917 = vmatpush2.bf16.msra.mxu0 0
      %3918 = vmatprep.mubr.bf16.mxu0 0
      %3919 = vmatmul.mubr.bf16.gmra.mxu0 %v3881
      %v3920 = vpop.f32.mrf.mxu0
      %v3921 = vadd.f32 0.0, %v3920
      %v3922 = vpop.f32.mrf.mxu0
      %v3923 = vpop.f32.mrf.mxu0
      %v3924 = vpop.f32.mrf.mxu0
      %3925 = vdwg.mxu0
      %3927 = vrot.lane.b32.xlu0 %v3753, 64
      %v3928 = vpop.permute.xlu0 %3927
      %v3930 = vsel %vm3413, %v3725, 0
      %v3933 = vsel %vm3784, %v3928, 0
      %3935 = vmatprep.subr.bf16.mxu0 0
      %3936 = vmatpush1.bf16.msra.mxu0 0
      %3937 = vmatprep.subr.bf16.mxu0 0
      %3938 = vmatpush1.bf16.msra.mxu0 0
      %3939 = vmatprep.subr.bf16.mxu0 0
      %3940 = vmatpush1.bf16.msra.mxu0 0
      %3941 = vmatprep.subr.bf16.mxu0 0
      %3942 = vmatpush1.bf16.msra.mxu0 0
      %3943 = vmatprep.subr.bf16.mxu0 0
      %3944 = vmatpush1.bf16.msra.mxu0 0
      %3945 = vmatprep.subr.bf16.mxu0 0
      %3946 = vmatpush1.bf16.msra.mxu0 0
      %3947 = vmatprep.subr.bf16.mxu0 0
      %3948 = vmatpush1.bf16.msra.mxu0 0
      %3949 = vmatprep.subr.bf16.mxu0 0
      %3950 = vmatpush1.bf16.msra.mxu0 %v3933
      %3951 = vmatprep.subr.bf16.mxu0 0
      %3952 = vmatpush2.bf16.msra.mxu0 0
      %3953 = vmatprep.subr.bf16.mxu0 0
      %3954 = vmatpush2.bf16.msra.mxu0 0
      %3955 = vmatprep.subr.bf16.mxu0 0
      %3956 = vmatpush2.bf16.msra.mxu0 0
      %3957 = vmatprep.subr.bf16.mxu0 0
      %3958 = vmatpush2.bf16.msra.mxu0 0
      %3959 = vmatprep.subr.bf16.mxu0 0
      %3960 = vmatpush2.bf16.msra.mxu0 0
      %3961 = vmatprep.subr.bf16.mxu0 0
      %3962 = vmatpush2.bf16.msra.mxu0 0
      %3963 = vmatprep.subr.bf16.mxu0 0
      %3964 = vmatpush2.bf16.msra.mxu0 0
      %3965 = vmatprep.subr.bf16.mxu0 0
      %3966 = vmatpush2.bf16.msra.mxu0 0
      %3967 = vmatprep.mubr.bf16.mxu0 0
      %3968 = vmatmul.mubr.bf16.gmra.mxu0 %v3930
      %v3969 = vpop.f32.mrf.mxu0
      %v3970 = vadd.f32 0.0, %v3969
      %v3971 = vpop.f32.mrf.mxu0
      %v3972 = vpop.f32.mrf.mxu0
      %v3973 = vpop.f32.mrf.mxu0
      %3974 = vdwg.mxu0
      %3976 = vrot.lane.b32.xlu0 %v3754, 64
      %v3977 = vpop.permute.xlu0 %3976
      %v3979 = vsel %vm3413, %v3726, 0
      %v3982 = vsel %vm3784, %v3977, 0
      %3984 = vmatprep.subr.bf16.mxu0 0
      %3985 = vmatpush1.bf16.msra.mxu0 0
      %3986 = vmatprep.subr.bf16.mxu0 0
      %3987 = vmatpush1.bf16.msra.mxu0 0
      %3988 = vmatprep.subr.bf16.mxu0 0
      %3989 = vmatpush1.bf16.msra.mxu0 0
      %3990 = vmatprep.subr.bf16.mxu0 0
      %3991 = vmatpush1.bf16.msra.mxu0 0
      %3992 = vmatprep.subr.bf16.mxu0 0
      %3993 = vmatpush1.bf16.msra.mxu0 0
      %3994 = vmatprep.subr.bf16.mxu0 0
      %3995 = vmatpush1.bf16.msra.mxu0 0
      %3996 = vmatprep.subr.bf16.mxu0 0
      %3997 = vmatpush1.bf16.msra.mxu0 0
      %3998 = vmatprep.subr.bf16.mxu0 0
      %3999 = vmatpush1.bf16.msra.mxu0 %v3982
      %4000 = vmatprep.subr.bf16.mxu0 0
      %4001 = vmatpush2.bf16.msra.mxu0 0
      %4002 = vmatprep.subr.bf16.mxu0 0
      %4003 = vmatpush2.bf16.msra.mxu0 0
      %4004 = vmatprep.subr.bf16.mxu0 0
      %4005 = vmatpush2.bf16.msra.mxu0 0
      %4006 = vmatprep.subr.bf16.mxu0 0
      %4007 = vmatpush2.bf16.msra.mxu0 0
      %4008 = vmatprep.subr.bf16.mxu0 0
      %4009 = vmatpush2.bf16.msra.mxu0 0
      %4010 = vmatprep.subr.bf16.mxu0 0
      %4011 = vmatpush2.bf16.msra.mxu0 0
      %4012 = vmatprep.subr.bf16.mxu0 0
      %4013 = vmatpush2.bf16.msra.mxu0 0
      %4014 = vmatprep.subr.bf16.mxu0 0
      %4015 = vmatpush2.bf16.msra.mxu0 0
      %4016 = vmatprep.mubr.bf16.mxu0 0
      %4017 = vmatmul.mubr.bf16.gmra.mxu0 %v3979
      %v4018 = vpop.f32.mrf.mxu0
      %v4019 = vadd.f32 0.0, %v4018
      %v4020 = vpop.f32.mrf.mxu0
      %v4021 = vpop.f32.mrf.mxu0
      %v4022 = vpop.f32.mrf.mxu0
      %4023 = vdwg.mxu0
      %4025 = vrot.lane.b32.xlu0 %v3755, 64
      %v4026 = vpop.permute.xlu0 %4025
      %v4028 = vsel %vm3413, %v3727, 0
      %v4031 = vsel %vm3784, %v4026, 0
      %4033 = vmatprep.subr.bf16.mxu0 0
      %4034 = vmatpush1.bf16.msra.mxu0 0
      %4035 = vmatprep.subr.bf16.mxu0 0
      %4036 = vmatpush1.bf16.msra.mxu0 0
      %4037 = vmatprep.subr.bf16.mxu0 0
      %4038 = vmatpush1.bf16.msra.mxu0 0
      %4039 = vmatprep.subr.bf16.mxu0 0
      %4040 = vmatpush1.bf16.msra.mxu0 0
      %4041 = vmatprep.subr.bf16.mxu0 0
      %4042 = vmatpush1.bf16.msra.mxu0 0
      %4043 = vmatprep.subr.bf16.mxu0 0
      %4044 = vmatpush1.bf16.msra.mxu0 0
      %4045 = vmatprep.subr.bf16.mxu0 0
      %4046 = vmatpush1.bf16.msra.mxu0 0
      %4047 = vmatprep.subr.bf16.mxu0 0
      %4048 = vmatpush1.bf16.msra.mxu0 %v4031
      %4049 = vmatprep.subr.bf16.mxu0 0
      %4050 = vmatpush2.bf16.msra.mxu0 0
      %4051 = vmatprep.subr.bf16.mxu0 0
      %4052 = vmatpush2.bf16.msra.mxu0 0
      %4053 = vmatprep.subr.bf16.mxu0 0
      %4054 = vmatpush2.bf16.msra.mxu0 0
      %4055 = vmatprep.subr.bf16.mxu0 0
      %4056 = vmatpush2.bf16.msra.mxu0 0
      %4057 = vmatprep.subr.bf16.mxu0 0
      %4058 = vmatpush2.bf16.msra.mxu0 0
      %4059 = vmatprep.subr.bf16.mxu0 0
      %4060 = vmatpush2.bf16.msra.mxu0 0
      %4061 = vmatprep.subr.bf16.mxu0 0
      %4062 = vmatpush2.bf16.msra.mxu0 0
      %4063 = vmatprep.subr.bf16.mxu0 0
      %4064 = vmatpush2.bf16.msra.mxu0 0
      %4065 = vmatprep.mubr.bf16.mxu0 0
      %4066 = vmatmul.mubr.bf16.gmra.mxu0 %v4028
      %v4067 = vpop.f32.mrf.mxu0
      %v4068 = vadd.f32 0.0, %v4067
      %v4069 = vpop.f32.mrf.mxu0
      %v4070 = vpop.f32.mrf.mxu0
      %v4071 = vpop.f32.mrf.mxu0
      %4072 = vdwg.mxu0
      %4074 = vrot.lane.b32.xlu0 %v3756, 64
      %v4075 = vpop.permute.xlu0 %4074
      %v4077 = vsel %vm3413, %v3728, 0
      %v4080 = vsel %vm3784, %v4075, 0
      %4082 = vmatprep.subr.bf16.mxu0 0
      %4083 = vmatpush1.bf16.msra.mxu0 0
      %4084 = vmatprep.subr.bf16.mxu0 0
      %4085 = vmatpush1.bf16.msra.mxu0 0
      %4086 = vmatprep.subr.bf16.mxu0 0
      %4087 = vmatpush1.bf16.msra.mxu0 0
      %4088 = vmatprep.subr.bf16.mxu0 0
      %4089 = vmatpush1.bf16.msra.mxu0 0
      %4090 = vmatprep.subr.bf16.mxu0 0
      %4091 = vmatpush1.bf16.msra.mxu0 0
      %4092 = vmatprep.subr.bf16.mxu0 0
      %4093 = vmatpush1.bf16.msra.mxu0 0
      %4094 = vmatprep.subr.bf16.mxu0 0
      %4095 = vmatpush1.bf16.msra.mxu0 0
      %4096 = vmatprep.subr.bf16.mxu0 0
      %4097 = vmatpush1.bf16.msra.mxu0 %v4080
      %4098 = vmatprep.subr.bf16.mxu0 0
      %4099 = vmatpush2.bf16.msra.mxu0 0
      %4100 = vmatprep.subr.bf16.mxu0 0
      %4101 = vmatpush2.bf16.msra.mxu0 0
      %4102 = vmatprep.subr.bf16.mxu0 0
      %4103 = vmatpush2.bf16.msra.mxu0 0
      %4104 = vmatprep.subr.bf16.mxu0 0
      %4105 = vmatpush2.bf16.msra.mxu0 0
      %4106 = vmatprep.subr.bf16.mxu0 0
      %4107 = vmatpush2.bf16.msra.mxu0 0
      %4108 = vmatprep.subr.bf16.mxu0 0
      %4109 = vmatpush2.bf16.msra.mxu0 0
      %4110 = vmatprep.subr.bf16.mxu0 0
      %4111 = vmatpush2.bf16.msra.mxu0 0
      %4112 = vmatprep.subr.bf16.mxu0 0
      %4113 = vmatpush2.bf16.msra.mxu0 0
      %4114 = vmatprep.mubr.bf16.mxu0 0
      %4115 = vmatmul.mubr.bf16.gmra.mxu0 %v4077
      %v4116 = vpop.f32.mrf.mxu0
      %v4117 = vadd.f32 0.0, %v4116
      %v4118 = vpop.f32.mrf.mxu0
      %v4119 = vpop.f32.mrf.mxu0
      %v4120 = vpop.f32.mrf.mxu0
      %4121 = vdwg.mxu0
      %4123 = vrot.lane.b32.xlu0 %v3757, 64
      %v4124 = vpop.permute.xlu0 %4123
      %v4126 = vsel %vm3413, %v3729, 0
      %v4129 = vsel %vm3784, %v4124, 0
      %4131 = vmatprep.subr.bf16.mxu0 0
      %4132 = vmatpush1.bf16.msra.mxu0 0
      %4133 = vmatprep.subr.bf16.mxu0 0
      %4134 = vmatpush1.bf16.msra.mxu0 0
      %4135 = vmatprep.subr.bf16.mxu0 0
      %4136 = vmatpush1.bf16.msra.mxu0 0
      %4137 = vmatprep.subr.bf16.mxu0 0
      %4138 = vmatpush1.bf16.msra.mxu0 0
      %4139 = vmatprep.subr.bf16.mxu0 0
      %4140 = vmatpush1.bf16.msra.mxu0 0
      %4141 = vmatprep.subr.bf16.mxu0 0
      %4142 = vmatpush1.bf16.msra.mxu0 0
      %4143 = vmatprep.subr.bf16.mxu0 0
      %4144 = vmatpush1.bf16.msra.mxu0 0
      %4145 = vmatprep.subr.bf16.mxu0 0
      %4146 = vmatpush1.bf16.msra.mxu0 %v4129
      %4147 = vmatprep.subr.bf16.mxu0 0
      %4148 = vmatpush2.bf16.msra.mxu0 0
      %4149 = vmatprep.subr.bf16.mxu0 0
      %4150 = vmatpush2.bf16.msra.mxu0 0
      %4151 = vmatprep.subr.bf16.mxu0 0
      %4152 = vmatpush2.bf16.msra.mxu0 0
      %4153 = vmatprep.subr.bf16.mxu0 0
      %4154 = vmatpush2.bf16.msra.mxu0 0
      %4155 = vmatprep.subr.bf16.mxu0 0
      %4156 = vmatpush2.bf16.msra.mxu0 0
      %4157 = vmatprep.subr.bf16.mxu0 0
      %4158 = vmatpush2.bf16.msra.mxu0 0
      %4159 = vmatprep.subr.bf16.mxu0 0
      %4160 = vmatpush2.bf16.msra.mxu0 0
      %4161 = vmatprep.subr.bf16.mxu0 0
      %4162 = vmatpush2.bf16.msra.mxu0 0
      %4163 = vmatprep.mubr.bf16.mxu0 0
      %4164 = vmatmul.mubr.bf16.gmra.mxu0 %v4126
      %v4165 = vpop.f32.mrf.mxu0
      %v4166 = vadd.f32 0.0, %v4165
      %v4167 = vpop.f32.mrf.mxu0
      %v4168 = vpop.f32.mrf.mxu0
      %v4169 = vpop.f32.mrf.mxu0
      %4170 = vdwg.mxu0
      %4172 = vrot.lane.b32.xlu0 %v3758, 64
      %v4173 = vpop.permute.xlu0 %4172
      %v4175 = vsel %vm3413, %v3730, 0
      %v4178 = vsel %vm3784, %v4173, 0
      %4180 = vmatprep.subr.bf16.mxu0 0
      %4181 = vmatpush1.bf16.msra.mxu0 0
      %4182 = vmatprep.subr.bf16.mxu0 0
      %4183 = vmatpush1.bf16.msra.mxu0 0
      %4184 = vmatprep.subr.bf16.mxu0 0
      %4185 = vmatpush1.bf16.msra.mxu0 0
      %4186 = vmatprep.subr.bf16.mxu0 0
      %4187 = vmatpush1.bf16.msra.mxu0 0
      %4188 = vmatprep.subr.bf16.mxu0 0
      %4189 = vmatpush1.bf16.msra.mxu0 0
      %4190 = vmatprep.subr.bf16.mxu0 0
      %4191 = vmatpush1.bf16.msra.mxu0 0
      %4192 = vmatprep.subr.bf16.mxu0 0
      %4193 = vmatpush1.bf16.msra.mxu0 0
      %4194 = vmatprep.subr.bf16.mxu0 0
      %4195 = vmatpush1.bf16.msra.mxu0 %v4178
      %4196 = vmatprep.subr.bf16.mxu0 0
      %4197 = vmatpush2.bf16.msra.mxu0 0
      %4198 = vmatprep.subr.bf16.mxu0 0
      %4199 = vmatpush2.bf16.msra.mxu0 0
      %4200 = vmatprep.subr.bf16.mxu0 0
      %4201 = vmatpush2.bf16.msra.mxu0 0
      %4202 = vmatprep.subr.bf16.mxu0 0
      %4203 = vmatpush2.bf16.msra.mxu0 0
      %4204 = vmatprep.subr.bf16.mxu0 0
      %4205 = vmatpush2.bf16.msra.mxu0 0
      %4206 = vmatprep.subr.bf16.mxu0 0
      %4207 = vmatpush2.bf16.msra.mxu0 0
      %4208 = vmatprep.subr.bf16.mxu0 0
      %4209 = vmatpush2.bf16.msra.mxu0 0
      %4210 = vmatprep.subr.bf16.mxu0 0
      %4211 = vmatpush2.bf16.msra.mxu0 0
      %4212 = vmatprep.mubr.bf16.mxu0 0
      %4213 = vmatmul.mubr.bf16.gmra.mxu0 %v4175
      %v4214 = vpop.f32.mrf.mxu0
      %v4215 = vadd.f32 0.0, %v4214
      %v4216 = vpop.f32.mrf.mxu0
      %v4217 = vpop.f32.mrf.mxu0
      %v4218 = vpop.f32.mrf.mxu0
      %4219 = vdwg.mxu0
      %4221 = vrot.lane.b32.xlu0 %v3759, 64
      %v4222 = vpop.permute.xlu0 %4221
      %v4224 = vsel %vm3413, %v3731, 0
      %v4227 = vsel %vm3784, %v4222, 0
      %4229 = vmatprep.subr.bf16.mxu0 0
      %4230 = vmatpush1.bf16.msra.mxu0 0
      %4231 = vmatprep.subr.bf16.mxu0 0
      %4232 = vmatpush1.bf16.msra.mxu0 0
      %4233 = vmatprep.subr.bf16.mxu0 0
      %4234 = vmatpush1.bf16.msra.mxu0 0
      %4235 = vmatprep.subr.bf16.mxu0 0
      %4236 = vmatpush1.bf16.msra.mxu0 0
      %4237 = vmatprep.subr.bf16.mxu0 0
      %4238 = vmatpush1.bf16.msra.mxu0 0
      %4239 = vmatprep.subr.bf16.mxu0 0
      %4240 = vmatpush1.bf16.msra.mxu0 0
      %4241 = vmatprep.subr.bf16.mxu0 0
      %4242 = vmatpush1.bf16.msra.mxu0 0
      %4243 = vmatprep.subr.bf16.mxu0 0
      %4244 = vmatpush1.bf16.msra.mxu0 %v4227
      %4245 = vmatprep.subr.bf16.mxu0 0
      %4246 = vmatpush2.bf16.msra.mxu0 0
      %4247 = vmatprep.subr.bf16.mxu0 0
      %4248 = vmatpush2.bf16.msra.mxu0 0
      %4249 = vmatprep.subr.bf16.mxu0 0
      %4250 = vmatpush2.bf16.msra.mxu0 0
      %4251 = vmatprep.subr.bf16.mxu0 0
      %4252 = vmatpush2.bf16.msra.mxu0 0
      %4253 = vmatprep.subr.bf16.mxu0 0
      %4254 = vmatpush2.bf16.msra.mxu0 0
      %4255 = vmatprep.subr.bf16.mxu0 0
      %4256 = vmatpush2.bf16.msra.mxu0 0
      %4257 = vmatprep.subr.bf16.mxu0 0
      %4258 = vmatpush2.bf16.msra.mxu0 0
      %4259 = vmatprep.subr.bf16.mxu0 0
      %4260 = vmatpush2.bf16.msra.mxu0 0
      %4261 = vmatprep.mubr.bf16.mxu0 0
      %4262 = vmatmul.mubr.bf16.gmra.mxu0 %v4224
      %v4263 = vpop.f32.mrf.mxu0
      %v4264 = vadd.f32 0.0, %v4263
      %v4265 = vpop.f32.mrf.mxu0
      %v4266 = vpop.f32.mrf.mxu0
      %v4267 = vpop.f32.mrf.mxu0
      %4268 = vdwg.mxu0
      %4270 = vrot.lane.b32.xlu0 %v3760, 64
      %v4271 = vpop.permute.xlu0 %4270
      %v4273 = vsel %vm3413, %v3732, 0
      %v4276 = vsel %vm3784, %v4271, 0
      %4278 = vmatprep.subr.bf16.mxu0 0
      %4279 = vmatpush1.bf16.msra.mxu0 0
      %4280 = vmatprep.subr.bf16.mxu0 0
      %4281 = vmatpush1.bf16.msra.mxu0 0
      %4282 = vmatprep.subr.bf16.mxu0 0
      %4283 = vmatpush1.bf16.msra.mxu0 0
      %4284 = vmatprep.subr.bf16.mxu0 0
      %4285 = vmatpush1.bf16.msra.mxu0 0
      %4286 = vmatprep.subr.bf16.mxu0 0
      %4287 = vmatpush1.bf16.msra.mxu0 0
      %4288 = vmatprep.subr.bf16.mxu0 0
      %4289 = vmatpush1.bf16.msra.mxu0 0
      %4290 = vmatprep.subr.bf16.mxu0 0
      %4291 = vmatpush1.bf16.msra.mxu0 0
      %4292 = vmatprep.subr.bf16.mxu0 0
      %4293 = vmatpush1.bf16.msra.mxu0 %v4276
      %4294 = vmatprep.subr.bf16.mxu0 0
      %4295 = vmatpush2.bf16.msra.mxu0 0
      %4296 = vmatprep.subr.bf16.mxu0 0
      %4297 = vmatpush2.bf16.msra.mxu0 0
      %4298 = vmatprep.subr.bf16.mxu0 0
      %4299 = vmatpush2.bf16.msra.mxu0 0
      %4300 = vmatprep.subr.bf16.mxu0 0
      %4301 = vmatpush2.bf16.msra.mxu0 0
      %4302 = vmatprep.subr.bf16.mxu0 0
      %4303 = vmatpush2.bf16.msra.mxu0 0
      %4304 = vmatprep.subr.bf16.mxu0 0
      %4305 = vmatpush2.bf16.msra.mxu0 0
      %4306 = vmatprep.subr.bf16.mxu0 0
      %4307 = vmatpush2.bf16.msra.mxu0 0
      %4308 = vmatprep.subr.bf16.mxu0 0
      %4309 = vmatpush2.bf16.msra.mxu0 0
      %4310 = vmatprep.mubr.bf16.mxu0 0
      %4311 = vmatmul.mubr.bf16.gmra.mxu0 %v4273
      %v4312 = vpop.f32.mrf.mxu0
      %v4313 = vadd.f32 0.0, %v4312
      %v4314 = vpop.f32.mrf.mxu0
      %v4315 = vpop.f32.mrf.mxu0
      %v4316 = vpop.f32.mrf.mxu0
      %4317 = vdwg.mxu0
      %4319 = vrot.lane.b32.xlu0 %v3761, 64
      %v4320 = vpop.permute.xlu0 %4319
      %v4322 = vsel %vm3413, %v3733, 0
      %v4325 = vsel %vm3784, %v4320, 0
      %4327 = vmatprep.subr.bf16.mxu0 0
      %4328 = vmatpush1.bf16.msra.mxu0 0
      %4329 = vmatprep.subr.bf16.mxu0 0
      %4330 = vmatpush1.bf16.msra.mxu0 0
      %4331 = vmatprep.subr.bf16.mxu0 0
      %4332 = vmatpush1.bf16.msra.mxu0 0
      %4333 = vmatprep.subr.bf16.mxu0 0
      %4334 = vmatpush1.bf16.msra.mxu0 0
      %4335 = vmatprep.subr.bf16.mxu0 0
      %4336 = vmatpush1.bf16.msra.mxu0 0
      %4337 = vmatprep.subr.bf16.mxu0 0
      %4338 = vmatpush1.bf16.msra.mxu0 0
      %4339 = vmatprep.subr.bf16.mxu0 0
      %4340 = vmatpush1.bf16.msra.mxu0 0
      %4341 = vmatprep.subr.bf16.mxu0 0
      %4342 = vmatpush1.bf16.msra.mxu0 %v4325
      %4343 = vmatprep.subr.bf16.mxu0 0
      %4344 = vmatpush2.bf16.msra.mxu0 0
      %4345 = vmatprep.subr.bf16.mxu0 0
      %4346 = vmatpush2.bf16.msra.mxu0 0
      %4347 = vmatprep.subr.bf16.mxu0 0
      %4348 = vmatpush2.bf16.msra.mxu0 0
      %4349 = vmatprep.subr.bf16.mxu0 0
      %4350 = vmatpush2.bf16.msra.mxu0 0
      %4351 = vmatprep.subr.bf16.mxu0 0
      %4352 = vmatpush2.bf16.msra.mxu0 0
      %4353 = vmatprep.subr.bf16.mxu0 0
      %4354 = vmatpush2.bf16.msra.mxu0 0
      %4355 = vmatprep.subr.bf16.mxu0 0
      %4356 = vmatpush2.bf16.msra.mxu0 0
      %4357 = vmatprep.subr.bf16.mxu0 0
      %4358 = vmatpush2.bf16.msra.mxu0 0
      %4359 = vmatprep.mubr.bf16.mxu0 0
      %4360 = vmatmul.mubr.bf16.gmra.mxu0 %v4322
      %v4361 = vpop.f32.mrf.mxu0
      %v4362 = vadd.f32 0.0, %v4361
      %v4363 = vpop.f32.mrf.mxu0
      %v4364 = vpop.f32.mrf.mxu0
      %v4365 = vpop.f32.mrf.mxu0
      %4366 = vdwg.mxu0
      %4368 = vrot.lane.b32.xlu0 %v3762, 64
      %v4369 = vpop.permute.xlu0 %4368
      %v4371 = vsel %vm3413, %v3734, 0
      %v4374 = vsel %vm3784, %v4369, 0
      %4376 = vmatprep.subr.bf16.mxu0 0
      %4377 = vmatpush1.bf16.msra.mxu0 0
      %4378 = vmatprep.subr.bf16.mxu0 0
      %4379 = vmatpush1.bf16.msra.mxu0 0
      %4380 = vmatprep.subr.bf16.mxu0 0
      %4381 = vmatpush1.bf16.msra.mxu0 0
      %4382 = vmatprep.subr.bf16.mxu0 0
      %4383 = vmatpush1.bf16.msra.mxu0 0
      %4384 = vmatprep.subr.bf16.mxu0 0
      %4385 = vmatpush1.bf16.msra.mxu0 0
      %4386 = vmatprep.subr.bf16.mxu0 0
      %4387 = vmatpush1.bf16.msra.mxu0 0
      %4388 = vmatprep.subr.bf16.mxu0 0
      %4389 = vmatpush1.bf16.msra.mxu0 0
      %4390 = vmatprep.subr.bf16.mxu0 0
      %4391 = vmatpush1.bf16.msra.mxu0 %v4374
      %4392 = vmatprep.subr.bf16.mxu0 0
      %4393 = vmatpush2.bf16.msra.mxu0 0
      %4394 = vmatprep.subr.bf16.mxu0 0
      %4395 = vmatpush2.bf16.msra.mxu0 0
      %4396 = vmatprep.subr.bf16.mxu0 0
      %4397 = vmatpush2.bf16.msra.mxu0 0
      %4398 = vmatprep.subr.bf16.mxu0 0
      %4399 = vmatpush2.bf16.msra.mxu0 0
      %4400 = vmatprep.subr.bf16.mxu0 0
      %4401 = vmatpush2.bf16.msra.mxu0 0
      %4402 = vmatprep.subr.bf16.mxu0 0
      %4403 = vmatpush2.bf16.msra.mxu0 0
      %4404 = vmatprep.subr.bf16.mxu0 0
      %4405 = vmatpush2.bf16.msra.mxu0 0
      %4406 = vmatprep.subr.bf16.mxu0 0
      %4407 = vmatpush2.bf16.msra.mxu0 0
      %4408 = vmatprep.mubr.bf16.mxu0 0
      %4409 = vmatmul.mubr.bf16.gmra.mxu0 %v4371
      %v4410 = vpop.f32.mrf.mxu0
      %v4411 = vadd.f32 0.0, %v4410
      %v4412 = vpop.f32.mrf.mxu0
      %v4413 = vpop.f32.mrf.mxu0
      %v4414 = vpop.f32.mrf.mxu0
      %4415 = vdwg.mxu0
      %4417 = vrot.lane.b32.xlu0 %v3763, 64
      %v4418 = vpop.permute.xlu0 %4417
      %v4420 = vsel %vm3413, %v3735, 0
      %v4423 = vsel %vm3784, %v4418, 0
      %4425 = vmatprep.subr.bf16.mxu0 0
      %4426 = vmatpush1.bf16.msra.mxu0 0
      %4427 = vmatprep.subr.bf16.mxu0 0
      %4428 = vmatpush1.bf16.msra.mxu0 0
      %4429 = vmatprep.subr.bf16.mxu0 0
      %4430 = vmatpush1.bf16.msra.mxu0 0
      %4431 = vmatprep.subr.bf16.mxu0 0
      %4432 = vmatpush1.bf16.msra.mxu0 0
      %4433 = vmatprep.subr.bf16.mxu0 0
      %4434 = vmatpush1.bf16.msra.mxu0 0
      %4435 = vmatprep.subr.bf16.mxu0 0
      %4436 = vmatpush1.bf16.msra.mxu0 0
      %4437 = vmatprep.subr.bf16.mxu0 0
      %4438 = vmatpush1.bf16.msra.mxu0 0
      %4439 = vmatprep.subr.bf16.mxu0 0
      %4440 = vmatpush1.bf16.msra.mxu0 %v4423
      %4441 = vmatprep.subr.bf16.mxu0 0
      %4442 = vmatpush2.bf16.msra.mxu0 0
      %4443 = vmatprep.subr.bf16.mxu0 0
      %4444 = vmatpush2.bf16.msra.mxu0 0
      %4445 = vmatprep.subr.bf16.mxu0 0
      %4446 = vmatpush2.bf16.msra.mxu0 0
      %4447 = vmatprep.subr.bf16.mxu0 0
      %4448 = vmatpush2.bf16.msra.mxu0 0
      %4449 = vmatprep.subr.bf16.mxu0 0
      %4450 = vmatpush2.bf16.msra.mxu0 0
      %4451 = vmatprep.subr.bf16.mxu0 0
      %4452 = vmatpush2.bf16.msra.mxu0 0
      %4453 = vmatprep.subr.bf16.mxu0 0
      %4454 = vmatpush2.bf16.msra.mxu0 0
      %4455 = vmatprep.subr.bf16.mxu0 0
      %4456 = vmatpush2.bf16.msra.mxu0 0
      %4457 = vmatprep.mubr.bf16.mxu0 0
      %4458 = vmatmul.mubr.bf16.gmra.mxu0 %v4420
      %v4459 = vpop.f32.mrf.mxu0
      %v4460 = vadd.f32 0.0, %v4459
      %v4461 = vpop.f32.mrf.mxu0
      %v4462 = vpop.f32.mrf.mxu0
      %v4463 = vpop.f32.mrf.mxu0
      %4464 = vdwg.mxu0
      %4466 = vrot.lane.b32.xlu0 %v3764, 64
      %v4467 = vpop.permute.xlu0 %4466
      %v4469 = vsel %vm3413, %v3736, 0
      %v4472 = vsel %vm3784, %v4467, 0
      %4474 = vmatprep.subr.bf16.mxu0 0
      %4475 = vmatpush1.bf16.msra.mxu0 0
      %4476 = vmatprep.subr.bf16.mxu0 0
      %4477 = vmatpush1.bf16.msra.mxu0 0
      %4478 = vmatprep.subr.bf16.mxu0 0
      %4479 = vmatpush1.bf16.msra.mxu0 0
      %4480 = vmatprep.subr.bf16.mxu0 0
      %4481 = vmatpush1.bf16.msra.mxu0 0
      %4482 = vmatprep.subr.bf16.mxu0 0
      %4483 = vmatpush1.bf16.msra.mxu0 0
      %4484 = vmatprep.subr.bf16.mxu0 0
      %4485 = vmatpush1.bf16.msra.mxu0 0
      %4486 = vmatprep.subr.bf16.mxu0 0
      %4487 = vmatpush1.bf16.msra.mxu0 0
      %4488 = vmatprep.subr.bf16.mxu0 0
      %4489 = vmatpush1.bf16.msra.mxu0 %v4472
      %4490 = vmatprep.subr.bf16.mxu0 0
      %4491 = vmatpush2.bf16.msra.mxu0 0
      %4492 = vmatprep.subr.bf16.mxu0 0
      %4493 = vmatpush2.bf16.msra.mxu0 0
      %4494 = vmatprep.subr.bf16.mxu0 0
      %4495 = vmatpush2.bf16.msra.mxu0 0
      %4496 = vmatprep.subr.bf16.mxu0 0
      %4497 = vmatpush2.bf16.msra.mxu0 0
      %4498 = vmatprep.subr.bf16.mxu0 0
      %4499 = vmatpush2.bf16.msra.mxu0 0
      %4500 = vmatprep.subr.bf16.mxu0 0
      %4501 = vmatpush2.bf16.msra.mxu0 0
      %4502 = vmatprep.subr.bf16.mxu0 0
      %4503 = vmatpush2.bf16.msra.mxu0 0
      %4504 = vmatprep.subr.bf16.mxu0 0
      %4505 = vmatpush2.bf16.msra.mxu0 0
      %4506 = vmatprep.mubr.bf16.mxu0 0
      %4507 = vmatmul.mubr.bf16.gmra.mxu0 %v4469
      %v4508 = vpop.f32.mrf.mxu0
      %v4509 = vadd.f32 0.0, %v4508
      %v4510 = vpop.f32.mrf.mxu0
      %v4511 = vpop.f32.mrf.mxu0
      %v4512 = vpop.f32.mrf.mxu0
      %4513 = vdwg.mxu0
      %4515 = vrot.lane.b32.xlu0 %v3765, 64
      %v4516 = vpop.permute.xlu0 %4515
      %v4518 = vsel %vm3413, %v3737, 0
      %v4521 = vsel %vm3784, %v4516, 0
      %4523 = vmatprep.subr.bf16.mxu0 0
      %4524 = vmatpush1.bf16.msra.mxu0 0
      %4525 = vmatprep.subr.bf16.mxu0 0
      %4526 = vmatpush1.bf16.msra.mxu0 0
      %4527 = vmatprep.subr.bf16.mxu0 0
      %4528 = vmatpush1.bf16.msra.mxu0 0
      %4529 = vmatprep.subr.bf16.mxu0 0
      %4530 = vmatpush1.bf16.msra.mxu0 0
      %4531 = vmatprep.subr.bf16.mxu0 0
      %4532 = vmatpush1.bf16.msra.mxu0 0
      %4533 = vmatprep.subr.bf16.mxu0 0
      %4534 = vmatpush1.bf16.msra.mxu0 0
      %4535 = vmatprep.subr.bf16.mxu0 0
      %4536 = vmatpush1.bf16.msra.mxu0 0
      %4537 = vmatprep.subr.bf16.mxu0 0
      %4538 = vmatpush1.bf16.msra.mxu0 %v4521
      %4539 = vmatprep.subr.bf16.mxu0 0
      %4540 = vmatpush2.bf16.msra.mxu0 0
      %4541 = vmatprep.subr.bf16.mxu0 0
      %4542 = vmatpush2.bf16.msra.mxu0 0
      %4543 = vmatprep.subr.bf16.mxu0 0
      %4544 = vmatpush2.bf16.msra.mxu0 0
      %4545 = vmatprep.subr.bf16.mxu0 0
      %4546 = vmatpush2.bf16.msra.mxu0 0
      %4547 = vmatprep.subr.bf16.mxu0 0
      %4548 = vmatpush2.bf16.msra.mxu0 0
      %4549 = vmatprep.subr.bf16.mxu0 0
      %4550 = vmatpush2.bf16.msra.mxu0 0
      %4551 = vmatprep.subr.bf16.mxu0 0
      %4552 = vmatpush2.bf16.msra.mxu0 0
      %4553 = vmatprep.subr.bf16.mxu0 0
      %4554 = vmatpush2.bf16.msra.mxu0 0
      %4555 = vmatprep.mubr.bf16.mxu0 0
      %4556 = vmatmul.mubr.bf16.gmra.mxu0 %v4518
      %v4557 = vpop.f32.mrf.mxu0
      %v4558 = vadd.f32 0.0, %v4557
      %v4559 = vpop.f32.mrf.mxu0
      %v4560 = vpop.f32.mrf.mxu0
      %v4561 = vpop.f32.mrf.mxu0
      %4562 = vdwg.mxu0
      %4564 = vrot.lane.b32.xlu0 %v3766, 64
      %v4565 = vpop.permute.xlu0 %4564
      %v4567 = vsel %vm3413, %v3738, 0
      %v4570 = vsel %vm3784, %v4565, 0
      %4572 = vmatprep.subr.bf16.mxu0 0
      %4573 = vmatpush1.bf16.msra.mxu0 0
      %4574 = vmatprep.subr.bf16.mxu0 0
      %4575 = vmatpush1.bf16.msra.mxu0 0
      %4576 = vmatprep.subr.bf16.mxu0 0
      %4577 = vmatpush1.bf16.msra.mxu0 0
      %4578 = vmatprep.subr.bf16.mxu0 0
      %4579 = vmatpush1.bf16.msra.mxu0 0
      %4580 = vmatprep.subr.bf16.mxu0 0
      %4581 = vmatpush1.bf16.msra.mxu0 0
      %4582 = vmatprep.subr.bf16.mxu0 0
      %4583 = vmatpush1.bf16.msra.mxu0 0
      %4584 = vmatprep.subr.bf16.mxu0 0
      %4585 = vmatpush1.bf16.msra.mxu0 0
      %4586 = vmatprep.subr.bf16.mxu0 0
      %4587 = vmatpush1.bf16.msra.mxu0 %v4570
      %4588 = vmatprep.subr.bf16.mxu0 0
      %4589 = vmatpush2.bf16.msra.mxu0 0
      %4590 = vmatprep.subr.bf16.mxu0 0
      %4591 = vmatpush2.bf16.msra.mxu0 0
      %4592 = vmatprep.subr.bf16.mxu0 0
      %4593 = vmatpush2.bf16.msra.mxu0 0
      %4594 = vmatprep.subr.bf16.mxu0 0
      %4595 = vmatpush2.bf16.msra.mxu0 0
      %4596 = vmatprep.subr.bf16.mxu0 0
      %4597 = vmatpush2.bf16.msra.mxu0 0
      %4598 = vmatprep.subr.bf16.mxu0 0
      %4599 = vmatpush2.bf16.msra.mxu0 0
      %4600 = vmatprep.subr.bf16.mxu0 0
      %4601 = vmatpush2.bf16.msra.mxu0 0
      %4602 = vmatprep.subr.bf16.mxu0 0
      %4603 = vmatpush2.bf16.msra.mxu0 0
      %4604 = vmatprep.mubr.bf16.mxu0 0
      %4605 = vmatmul.mubr.bf16.gmra.mxu0 %v4567
      %v4606 = vpop.f32.mrf.mxu0
      %v4607 = vadd.f32 0.0, %v4606
      %v4608 = vpop.f32.mrf.mxu0
      %v4609 = vpop.f32.mrf.mxu0
      %v4610 = vpop.f32.mrf.mxu0
      %4611 = vdwg.mxu0
      %4613 = vrot.lane.b32.xlu0 %v3767, 64
      %v4614 = vpop.permute.xlu0 %4613
      %v4616 = vsel %vm3413, %v3739, 0
      %v4619 = vsel %vm3784, %v4614, 0
      %4621 = vmatprep.subr.bf16.mxu0 0
      %4622 = vmatpush1.bf16.msra.mxu0 0
      %4623 = vmatprep.subr.bf16.mxu0 0
      %4624 = vmatpush1.bf16.msra.mxu0 0
      %4625 = vmatprep.subr.bf16.mxu0 0
      %4626 = vmatpush1.bf16.msra.mxu0 0
      %4627 = vmatprep.subr.bf16.mxu0 0
      %4628 = vmatpush1.bf16.msra.mxu0 0
      %4629 = vmatprep.subr.bf16.mxu0 0
      %4630 = vmatpush1.bf16.msra.mxu0 0
      %4631 = vmatprep.subr.bf16.mxu0 0
      %4632 = vmatpush1.bf16.msra.mxu0 0
      %4633 = vmatprep.subr.bf16.mxu0 0
      %4634 = vmatpush1.bf16.msra.mxu0 0
      %4635 = vmatprep.subr.bf16.mxu0 0
      %4636 = vmatpush1.bf16.msra.mxu0 %v4619
      %4637 = vmatprep.subr.bf16.mxu0 0
      %4638 = vmatpush2.bf16.msra.mxu0 0
      %4639 = vmatprep.subr.bf16.mxu0 0
      %4640 = vmatpush2.bf16.msra.mxu0 0
      %4641 = vmatprep.subr.bf16.mxu0 0
      %4642 = vmatpush2.bf16.msra.mxu0 0
      %4643 = vmatprep.subr.bf16.mxu0 0
      %4644 = vmatpush2.bf16.msra.mxu0 0
      %4645 = vmatprep.subr.bf16.mxu0 0
      %4646 = vmatpush2.bf16.msra.mxu0 0
      %4647 = vmatprep.subr.bf16.mxu0 0
      %4648 = vmatpush2.bf16.msra.mxu0 0
      %4649 = vmatprep.subr.bf16.mxu0 0
      %4650 = vmatpush2.bf16.msra.mxu0 0
      %4651 = vmatprep.subr.bf16.mxu0 0
      %4652 = vmatpush2.bf16.msra.mxu0 0
      %4653 = vmatprep.mubr.bf16.mxu0 0
      %4654 = vmatmul.mubr.bf16.gmra.mxu0 %v4616
      %v4655 = vpop.f32.mrf.mxu0
      %v4656 = vadd.f32 0.0, %v4655
      %v4657 = vpop.f32.mrf.mxu0
      %v4658 = vpop.f32.mrf.mxu0
      %v4659 = vpop.f32.mrf.mxu0
      %4660 = vdwg.mxu0
      %4662 = vrot.lane.b32.xlu0 %v3768, 64
      %v4663 = vpop.permute.xlu0 %4662
      %v4665 = vsel %vm3413, %v3740, 0
      %v4668 = vsel %vm3784, %v4663, 0
      %4670 = vmatprep.subr.bf16.mxu0 0
      %4671 = vmatpush1.bf16.msra.mxu0 0
      %4672 = vmatprep.subr.bf16.mxu0 0
      %4673 = vmatpush1.bf16.msra.mxu0 0
      %4674 = vmatprep.subr.bf16.mxu0 0
      %4675 = vmatpush1.bf16.msra.mxu0 0
      %4676 = vmatprep.subr.bf16.mxu0 0
      %4677 = vmatpush1.bf16.msra.mxu0 0
      %4678 = vmatprep.subr.bf16.mxu0 0
      %4679 = vmatpush1.bf16.msra.mxu0 0
      %4680 = vmatprep.subr.bf16.mxu0 0
      %4681 = vmatpush1.bf16.msra.mxu0 0
      %4682 = vmatprep.subr.bf16.mxu0 0
      %4683 = vmatpush1.bf16.msra.mxu0 0
      %4684 = vmatprep.subr.bf16.mxu0 0
      %4685 = vmatpush1.bf16.msra.mxu0 %v4668
      %4686 = vmatprep.subr.bf16.mxu0 0
      %4687 = vmatpush2.bf16.msra.mxu0 0
      %4688 = vmatprep.subr.bf16.mxu0 0
      %4689 = vmatpush2.bf16.msra.mxu0 0
      %4690 = vmatprep.subr.bf16.mxu0 0
      %4691 = vmatpush2.bf16.msra.mxu0 0
      %4692 = vmatprep.subr.bf16.mxu0 0
      %4693 = vmatpush2.bf16.msra.mxu0 0
      %4694 = vmatprep.subr.bf16.mxu0 0
      %4695 = vmatpush2.bf16.msra.mxu0 0
      %4696 = vmatprep.subr.bf16.mxu0 0
      %4697 = vmatpush2.bf16.msra.mxu0 0
      %4698 = vmatprep.subr.bf16.mxu0 0
      %4699 = vmatpush2.bf16.msra.mxu0 0
      %4700 = vmatprep.subr.bf16.mxu0 0
      %4701 = vmatpush2.bf16.msra.mxu0 0
      %4702 = vmatprep.mubr.bf16.mxu0 0
      %4703 = vmatmul.mubr.bf16.gmra.mxu0 %v4665
      %v4704 = vpop.f32.mrf.mxu0
      %v4705 = vadd.f32 0.0, %v4704
      %v4706 = vpop.f32.mrf.mxu0
      %v4707 = vpop.f32.mrf.mxu0
      %v4708 = vpop.f32.mrf.mxu0
      %4709 = vdwg.mxu0
      %4711 = vrot.lane.b32.xlu0 %v3769, 64
      %v4712 = vpop.permute.xlu0 %4711
      %v4714 = vsel %vm3413, %v3741, 0
      %v4717 = vsel %vm3784, %v4712, 0
      %4719 = vmatprep.subr.bf16.mxu0 0
      %4720 = vmatpush1.bf16.msra.mxu0 0
      %4721 = vmatprep.subr.bf16.mxu0 0
      %4722 = vmatpush1.bf16.msra.mxu0 0
      %4723 = vmatprep.subr.bf16.mxu0 0
      %4724 = vmatpush1.bf16.msra.mxu0 0
      %4725 = vmatprep.subr.bf16.mxu0 0
      %4726 = vmatpush1.bf16.msra.mxu0 0
      %4727 = vmatprep.subr.bf16.mxu0 0
      %4728 = vmatpush1.bf16.msra.mxu0 0
      %4729 = vmatprep.subr.bf16.mxu0 0
      %4730 = vmatpush1.bf16.msra.mxu0 0
      %4731 = vmatprep.subr.bf16.mxu0 0
      %4732 = vmatpush1.bf16.msra.mxu0 0
      %4733 = vmatprep.subr.bf16.mxu0 0
      %4734 = vmatpush1.bf16.msra.mxu0 %v4717
      %4735 = vmatprep.subr.bf16.mxu0 0
      %4736 = vmatpush2.bf16.msra.mxu0 0
      %4737 = vmatprep.subr.bf16.mxu0 0
      %4738 = vmatpush2.bf16.msra.mxu0 0
      %4739 = vmatprep.subr.bf16.mxu0 0
      %4740 = vmatpush2.bf16.msra.mxu0 0
      %4741 = vmatprep.subr.bf16.mxu0 0
      %4742 = vmatpush2.bf16.msra.mxu0 0
      %4743 = vmatprep.subr.bf16.mxu0 0
      %4744 = vmatpush2.bf16.msra.mxu0 0
      %4745 = vmatprep.subr.bf16.mxu0 0
      %4746 = vmatpush2.bf16.msra.mxu0 0
      %4747 = vmatprep.subr.bf16.mxu0 0
      %4748 = vmatpush2.bf16.msra.mxu0 0
      %4749 = vmatprep.subr.bf16.mxu0 0
      %4750 = vmatpush2.bf16.msra.mxu0 0
      %4751 = vmatprep.mubr.bf16.mxu0 0
      %4752 = vmatmul.mubr.bf16.gmra.mxu0 %v4714
      %v4753 = vpop.f32.mrf.mxu0
      %v4754 = vadd.f32 0.0, %v4753
      %v4755 = vpop.f32.mrf.mxu0
      %v4756 = vpop.f32.mrf.mxu0
      %v4757 = vpop.f32.mrf.mxu0
      %4758 = vdwg.mxu0
      %4760 = vrot.lane.b32.xlu0 %v3770, 64
      %v4761 = vpop.permute.xlu0 %4760
      %v4763 = vsel %vm3413, %v3742, 0
      %v4766 = vsel %vm3784, %v4761, 0
      %4768 = vmatprep.subr.bf16.mxu0 0
      %4769 = vmatpush1.bf16.msra.mxu0 0
      %4770 = vmatprep.subr.bf16.mxu0 0
      %4771 = vmatpush1.bf16.msra.mxu0 0
      %4772 = vmatprep.subr.bf16.mxu0 0
      %4773 = vmatpush1.bf16.msra.mxu0 0
      %4774 = vmatprep.subr.bf16.mxu0 0
      %4775 = vmatpush1.bf16.msra.mxu0 0
      %4776 = vmatprep.subr.bf16.mxu0 0
      %4777 = vmatpush1.bf16.msra.mxu0 0
      %4778 = vmatprep.subr.bf16.mxu0 0
      %4779 = vmatpush1.bf16.msra.mxu0 0
      %4780 = vmatprep.subr.bf16.mxu0 0
      %4781 = vmatpush1.bf16.msra.mxu0 0
      %4782 = vmatprep.subr.bf16.mxu0 0
      %4783 = vmatpush1.bf16.msra.mxu0 %v4766
      %4784 = vmatprep.subr.bf16.mxu0 0
      %4785 = vmatpush2.bf16.msra.mxu0 0
      %4786 = vmatprep.subr.bf16.mxu0 0
      %4787 = vmatpush2.bf16.msra.mxu0 0
      %4788 = vmatprep.subr.bf16.mxu0 0
      %4789 = vmatpush2.bf16.msra.mxu0 0
      %4790 = vmatprep.subr.bf16.mxu0 0
      %4791 = vmatpush2.bf16.msra.mxu0 0
      %4792 = vmatprep.subr.bf16.mxu0 0
      %4793 = vmatpush2.bf16.msra.mxu0 0
      %4794 = vmatprep.subr.bf16.mxu0 0
      %4795 = vmatpush2.bf16.msra.mxu0 0
      %4796 = vmatprep.subr.bf16.mxu0 0
      %4797 = vmatpush2.bf16.msra.mxu0 0
      %4798 = vmatprep.subr.bf16.mxu0 0
      %4799 = vmatpush2.bf16.msra.mxu0 0
      %4800 = vmatprep.mubr.bf16.mxu0 0
      %4801 = vmatmul.mubr.bf16.gmra.mxu0 %v4763
      %v4802 = vpop.f32.mrf.mxu0
      %v4803 = vadd.f32 0.0, %v4802
      %v4804 = vpop.f32.mrf.mxu0
      %v4805 = vpop.f32.mrf.mxu0
      %v4806 = vpop.f32.mrf.mxu0
      %4807 = vdwg.mxu0
      %4809 = vrot.lane.b32.xlu0 %v3771, 64
      %v4810 = vpop.permute.xlu0 %4809
      %v4812 = vsel %vm3413, %v3743, 0
      %v4815 = vsel %vm3784, %v4810, 0
      %4817 = vmatprep.subr.bf16.mxu0 0
      %4818 = vmatpush1.bf16.msra.mxu0 0
      %4819 = vmatprep.subr.bf16.mxu0 0
      %4820 = vmatpush1.bf16.msra.mxu0 0
      %4821 = vmatprep.subr.bf16.mxu0 0
      %4822 = vmatpush1.bf16.msra.mxu0 0
      %4823 = vmatprep.subr.bf16.mxu0 0
      %4824 = vmatpush1.bf16.msra.mxu0 0
      %4825 = vmatprep.subr.bf16.mxu0 0
      %4826 = vmatpush1.bf16.msra.mxu0 0
      %4827 = vmatprep.subr.bf16.mxu0 0
      %4828 = vmatpush1.bf16.msra.mxu0 0
      %4829 = vmatprep.subr.bf16.mxu0 0
      %4830 = vmatpush1.bf16.msra.mxu0 0
      %4831 = vmatprep.subr.bf16.mxu0 0
      %4832 = vmatpush1.bf16.msra.mxu0 %v4815
      %4833 = vmatprep.subr.bf16.mxu0 0
      %4834 = vmatpush2.bf16.msra.mxu0 0
      %4835 = vmatprep.subr.bf16.mxu0 0
      %4836 = vmatpush2.bf16.msra.mxu0 0
      %4837 = vmatprep.subr.bf16.mxu0 0
      %4838 = vmatpush2.bf16.msra.mxu0 0
      %4839 = vmatprep.subr.bf16.mxu0 0
      %4840 = vmatpush2.bf16.msra.mxu0 0
      %4841 = vmatprep.subr.bf16.mxu0 0
      %4842 = vmatpush2.bf16.msra.mxu0 0
      %4843 = vmatprep.subr.bf16.mxu0 0
      %4844 = vmatpush2.bf16.msra.mxu0 0
      %4845 = vmatprep.subr.bf16.mxu0 0
      %4846 = vmatpush2.bf16.msra.mxu0 0
      %4847 = vmatprep.subr.bf16.mxu0 0
      %4848 = vmatpush2.bf16.msra.mxu0 0
      %4849 = vmatprep.mubr.bf16.mxu0 0
      %4850 = vmatmul.mubr.bf16.gmra.mxu0 %v4812
      %v4851 = vpop.f32.mrf.mxu0
      %v4852 = vadd.f32 0.0, %v4851
      %v4853 = vpop.f32.mrf.mxu0
      %v4854 = vpop.f32.mrf.mxu0
      %v4855 = vpop.f32.mrf.mxu0
      %4856 = vdwg.mxu0
      %4858 = vrot.lane.b32.xlu0 %v3772, 64
      %v4859 = vpop.permute.xlu0 %4858
      %v4861 = vsel %vm3413, %v3744, 0
      %v4864 = vsel %vm3784, %v4859, 0
      %4866 = vmatprep.subr.bf16.mxu0 0
      %4867 = vmatpush1.bf16.msra.mxu0 0
      %4868 = vmatprep.subr.bf16.mxu0 0
      %4869 = vmatpush1.bf16.msra.mxu0 0
      %4870 = vmatprep.subr.bf16.mxu0 0
      %4871 = vmatpush1.bf16.msra.mxu0 0
      %4872 = vmatprep.subr.bf16.mxu0 0
      %4873 = vmatpush1.bf16.msra.mxu0 0
      %4874 = vmatprep.subr.bf16.mxu0 0
      %4875 = vmatpush1.bf16.msra.mxu0 0
      %4876 = vmatprep.subr.bf16.mxu0 0
      %4877 = vmatpush1.bf16.msra.mxu0 0
      %4878 = vmatprep.subr.bf16.mxu0 0
      %4879 = vmatpush1.bf16.msra.mxu0 0
      %4880 = vmatprep.subr.bf16.mxu0 0
      %4881 = vmatpush1.bf16.msra.mxu0 %v4864
      %4882 = vmatprep.subr.bf16.mxu0 0
      %4883 = vmatpush2.bf16.msra.mxu0 0
      %4884 = vmatprep.subr.bf16.mxu0 0
      %4885 = vmatpush2.bf16.msra.mxu0 0
      %4886 = vmatprep.subr.bf16.mxu0 0
      %4887 = vmatpush2.bf16.msra.mxu0 0
      %4888 = vmatprep.subr.bf16.mxu0 0
      %4889 = vmatpush2.bf16.msra.mxu0 0
      %4890 = vmatprep.subr.bf16.mxu0 0
      %4891 = vmatpush2.bf16.msra.mxu0 0
      %4892 = vmatprep.subr.bf16.mxu0 0
      %4893 = vmatpush2.bf16.msra.mxu0 0
      %4894 = vmatprep.subr.bf16.mxu0 0
      %4895 = vmatpush2.bf16.msra.mxu0 0
      %4896 = vmatprep.subr.bf16.mxu0 0
      %4897 = vmatpush2.bf16.msra.mxu0 0
      %4898 = vmatprep.mubr.bf16.mxu0 0
      %4899 = vmatmul.mubr.bf16.gmra.mxu0 %v4861
      %v4900 = vpop.f32.mrf.mxu0
      %v4901 = vadd.f32 0.0, %v4900
      %v4902 = vpop.f32.mrf.mxu0
      %v4903 = vpop.f32.mrf.mxu0
      %v4904 = vpop.f32.mrf.mxu0
      %4905 = vdwg.mxu0
      %4907 = vrot.lane.b32.xlu0 %v3773, 64
      %v4908 = vpop.permute.xlu0 %4907
      %v4910 = vsel %vm3413, %v3745, 0
      %v4913 = vsel %vm3784, %v4908, 0
      %4915 = vmatprep.subr.bf16.mxu0 0
      %4916 = vmatpush1.bf16.msra.mxu0 0
      %4917 = vmatprep.subr.bf16.mxu0 0
      %4918 = vmatpush1.bf16.msra.mxu0 0
      %4919 = vmatprep.subr.bf16.mxu0 0
      %4920 = vmatpush1.bf16.msra.mxu0 0
      %4921 = vmatprep.subr.bf16.mxu0 0
      %4922 = vmatpush1.bf16.msra.mxu0 0
      %4923 = vmatprep.subr.bf16.mxu0 0
      %4924 = vmatpush1.bf16.msra.mxu0 0
      %4925 = vmatprep.subr.bf16.mxu0 0
      %4926 = vmatpush1.bf16.msra.mxu0 0
      %4927 = vmatprep.subr.bf16.mxu0 0
      %4928 = vmatpush1.bf16.msra.mxu0 0
      %4929 = vmatprep.subr.bf16.mxu0 0
      %4930 = vmatpush1.bf16.msra.mxu0 %v4913
      %4931 = vmatprep.subr.bf16.mxu0 0
      %4932 = vmatpush2.bf16.msra.mxu0 0
      %4933 = vmatprep.subr.bf16.mxu0 0
      %4934 = vmatpush2.bf16.msra.mxu0 0
      %4935 = vmatprep.subr.bf16.mxu0 0
      %4936 = vmatpush2.bf16.msra.mxu0 0
      %4937 = vmatprep.subr.bf16.mxu0 0
      %4938 = vmatpush2.bf16.msra.mxu0 0
      %4939 = vmatprep.subr.bf16.mxu0 0
      %4940 = vmatpush2.bf16.msra.mxu0 0
      %4941 = vmatprep.subr.bf16.mxu0 0
      %4942 = vmatpush2.bf16.msra.mxu0 0
      %4943 = vmatprep.subr.bf16.mxu0 0
      %4944 = vmatpush2.bf16.msra.mxu0 0
      %4945 = vmatprep.subr.bf16.mxu0 0
      %4946 = vmatpush2.bf16.msra.mxu0 0
      %4947 = vmatprep.mubr.bf16.mxu0 0
      %4948 = vmatmul.mubr.bf16.gmra.mxu0 %v4910
      %v4949 = vpop.f32.mrf.mxu0
      %v4950 = vadd.f32 0.0, %v4949
      %v4951 = vpop.f32.mrf.mxu0
      %v4952 = vpop.f32.mrf.mxu0
      %v4953 = vpop.f32.mrf.mxu0
      %4954 = vdwg.mxu0
      %4956 = vrot.lane.b32.xlu0 %v3774, 64
      %v4957 = vpop.permute.xlu0 %4956
      %v4959 = vsel %vm3413, %v3746, 0
      %v4962 = vsel %vm3784, %v4957, 0
      %4964 = vmatprep.subr.bf16.mxu0 0
      %4965 = vmatpush1.bf16.msra.mxu0 0
      %4966 = vmatprep.subr.bf16.mxu0 0
      %4967 = vmatpush1.bf16.msra.mxu0 0
      %4968 = vmatprep.subr.bf16.mxu0 0
      %4969 = vmatpush1.bf16.msra.mxu0 0
      %4970 = vmatprep.subr.bf16.mxu0 0
      %4971 = vmatpush1.bf16.msra.mxu0 0
      %4972 = vmatprep.subr.bf16.mxu0 0
      %4973 = vmatpush1.bf16.msra.mxu0 0
      %4974 = vmatprep.subr.bf16.mxu0 0
      %4975 = vmatpush1.bf16.msra.mxu0 0
      %4976 = vmatprep.subr.bf16.mxu0 0
      %4977 = vmatpush1.bf16.msra.mxu0 0
      %4978 = vmatprep.subr.bf16.mxu0 0
      %4979 = vmatpush1.bf16.msra.mxu0 %v4962
      %4980 = vmatprep.subr.bf16.mxu0 0
      %4981 = vmatpush2.bf16.msra.mxu0 0
      %4982 = vmatprep.subr.bf16.mxu0 0
      %4983 = vmatpush2.bf16.msra.mxu0 0
      %4984 = vmatprep.subr.bf16.mxu0 0
      %4985 = vmatpush2.bf16.msra.mxu0 0
      %4986 = vmatprep.subr.bf16.mxu0 0
      %4987 = vmatpush2.bf16.msra.mxu0 0
      %4988 = vmatprep.subr.bf16.mxu0 0
      %4989 = vmatpush2.bf16.msra.mxu0 0
      %4990 = vmatprep.subr.bf16.mxu0 0
      %4991 = vmatpush2.bf16.msra.mxu0 0
      %4992 = vmatprep.subr.bf16.mxu0 0
      %4993 = vmatpush2.bf16.msra.mxu0 0
      %4994 = vmatprep.subr.bf16.mxu0 0
      %4995 = vmatpush2.bf16.msra.mxu0 0
      %4996 = vmatprep.mubr.bf16.mxu0 0
      %4997 = vmatmul.mubr.bf16.gmra.mxu0 %v4959
      %v4998 = vpop.f32.mrf.mxu0
      %v4999 = vadd.f32 0.0, %v4998
      %v5000 = vpop.f32.mrf.mxu0
      %v5001 = vpop.f32.mrf.mxu0
      %v5002 = vpop.f32.mrf.mxu0
      %5003 = vdwg.mxu0
      %5005 = vrot.lane.b32.xlu0 %v3775, 64
      %v5006 = vpop.permute.xlu0 %5005
      %v5008 = vsel %vm3413, %v3747, 0
      %v5011 = vsel %vm3784, %v5006, 0
      %5013 = vmatprep.subr.bf16.mxu0 0
      %5014 = vmatpush1.bf16.msra.mxu0 0
      %5015 = vmatprep.subr.bf16.mxu0 0
      %5016 = vmatpush1.bf16.msra.mxu0 0
      %5017 = vmatprep.subr.bf16.mxu0 0
      %5018 = vmatpush1.bf16.msra.mxu0 0
      %5019 = vmatprep.subr.bf16.mxu0 0
      %5020 = vmatpush1.bf16.msra.mxu0 0
      %5021 = vmatprep.subr.bf16.mxu0 0
      %5022 = vmatpush1.bf16.msra.mxu0 0
      %5023 = vmatprep.subr.bf16.mxu0 0
      %5024 = vmatpush1.bf16.msra.mxu0 0
      %5025 = vmatprep.subr.bf16.mxu0 0
      %5026 = vmatpush1.bf16.msra.mxu0 0
      %5027 = vmatprep.subr.bf16.mxu0 0
      %5028 = vmatpush1.bf16.msra.mxu0 %v5011
      %5029 = vmatprep.subr.bf16.mxu0 0
      %5030 = vmatpush2.bf16.msra.mxu0 0
      %5031 = vmatprep.subr.bf16.mxu0 0
      %5032 = vmatpush2.bf16.msra.mxu0 0
      %5033 = vmatprep.subr.bf16.mxu0 0
      %5034 = vmatpush2.bf16.msra.mxu0 0
      %5035 = vmatprep.subr.bf16.mxu0 0
      %5036 = vmatpush2.bf16.msra.mxu0 0
      %5037 = vmatprep.subr.bf16.mxu0 0
      %5038 = vmatpush2.bf16.msra.mxu0 0
      %5039 = vmatprep.subr.bf16.mxu0 0
      %5040 = vmatpush2.bf16.msra.mxu0 0
      %5041 = vmatprep.subr.bf16.mxu0 0
      %5042 = vmatpush2.bf16.msra.mxu0 0
      %5043 = vmatprep.subr.bf16.mxu0 0
      %5044 = vmatpush2.bf16.msra.mxu0 0
      %5045 = vmatprep.mubr.bf16.mxu0 0
      %5046 = vmatmul.mubr.bf16.gmra.mxu0 %v5008
      %v5047 = vpop.f32.mrf.mxu0
      %v5048 = vadd.f32 0.0, %v5047
      %v5049 = vpop.f32.mrf.mxu0
      %v5050 = vpop.f32.mrf.mxu0
      %v5051 = vpop.f32.mrf.mxu0
      %5052 = vdwg.mxu0
      %5054 = vrot.lane.b32.xlu0 %v3776, 64
      %v5055 = vpop.permute.xlu0 %5054
      %v5057 = vsel %vm3413, %v3748, 0
      %v5060 = vsel %vm3784, %v5055, 0
      %5062 = vmatprep.subr.bf16.mxu0 0
      %5063 = vmatpush1.bf16.msra.mxu0 0
      %5064 = vmatprep.subr.bf16.mxu0 0
      %5065 = vmatpush1.bf16.msra.mxu0 0
      %5066 = vmatprep.subr.bf16.mxu0 0
      %5067 = vmatpush1.bf16.msra.mxu0 0
      %5068 = vmatprep.subr.bf16.mxu0 0
      %5069 = vmatpush1.bf16.msra.mxu0 0
      %5070 = vmatprep.subr.bf16.mxu0 0
      %5071 = vmatpush1.bf16.msra.mxu0 0
      %5072 = vmatprep.subr.bf16.mxu0 0
      %5073 = vmatpush1.bf16.msra.mxu0 0
      %5074 = vmatprep.subr.bf16.mxu0 0
      %5075 = vmatpush1.bf16.msra.mxu0 0
      %5076 = vmatprep.subr.bf16.mxu0 0
      %5077 = vmatpush1.bf16.msra.mxu0 %v5060
      %5078 = vmatprep.subr.bf16.mxu0 0
      %5079 = vmatpush2.bf16.msra.mxu0 0
      %5080 = vmatprep.subr.bf16.mxu0 0
      %5081 = vmatpush2.bf16.msra.mxu0 0
      %5082 = vmatprep.subr.bf16.mxu0 0
      %5083 = vmatpush2.bf16.msra.mxu0 0
      %5084 = vmatprep.subr.bf16.mxu0 0
      %5085 = vmatpush2.bf16.msra.mxu0 0
      %5086 = vmatprep.subr.bf16.mxu0 0
      %5087 = vmatpush2.bf16.msra.mxu0 0
      %5088 = vmatprep.subr.bf16.mxu0 0
      %5089 = vmatpush2.bf16.msra.mxu0 0
      %5090 = vmatprep.subr.bf16.mxu0 0
      %5091 = vmatpush2.bf16.msra.mxu0 0
      %5092 = vmatprep.subr.bf16.mxu0 0
      %5093 = vmatpush2.bf16.msra.mxu0 0
      %5094 = vmatprep.mubr.bf16.mxu0 0
      %5095 = vmatmul.mubr.bf16.gmra.mxu0 %v5057
      %v5096 = vpop.f32.mrf.mxu0
      %v5097 = vadd.f32 0.0, %v5096
      %v5098 = vpop.f32.mrf.mxu0
      %v5099 = vpop.f32.mrf.mxu0
      %v5100 = vpop.f32.mrf.mxu0
      %5101 = vdwg.mxu0
      %5103 = vrot.lane.b32.xlu0 %v3777, 64
      %v5104 = vpop.permute.xlu0 %5103
      %v5106 = vsel %vm3413, %v3749, 0
      %v5109 = vsel %vm3784, %v5104, 0
      %5111 = vmatprep.subr.bf16.mxu0 0
      %5112 = vmatpush1.bf16.msra.mxu0 0
      %5113 = vmatprep.subr.bf16.mxu0 0
      %5114 = vmatpush1.bf16.msra.mxu0 0
      %5115 = vmatprep.subr.bf16.mxu0 0
      %5116 = vmatpush1.bf16.msra.mxu0 0
      %5117 = vmatprep.subr.bf16.mxu0 0
      %5118 = vmatpush1.bf16.msra.mxu0 0
      %5119 = vmatprep.subr.bf16.mxu0 0
      %5120 = vmatpush1.bf16.msra.mxu0 0
      %5121 = vmatprep.subr.bf16.mxu0 0
      %5122 = vmatpush1.bf16.msra.mxu0 0
      %5123 = vmatprep.subr.bf16.mxu0 0
      %5124 = vmatpush1.bf16.msra.mxu0 0
      %5125 = vmatprep.subr.bf16.mxu0 0
      %5126 = vmatpush1.bf16.msra.mxu0 %v5109
      %5127 = vmatprep.subr.bf16.mxu0 0
      %5128 = vmatpush2.bf16.msra.mxu0 0
      %5129 = vmatprep.subr.bf16.mxu0 0
      %5130 = vmatpush2.bf16.msra.mxu0 0
      %5131 = vmatprep.subr.bf16.mxu0 0
      %5132 = vmatpush2.bf16.msra.mxu0 0
      %5133 = vmatprep.subr.bf16.mxu0 0
      %5134 = vmatpush2.bf16.msra.mxu0 0
      %5135 = vmatprep.subr.bf16.mxu0 0
      %5136 = vmatpush2.bf16.msra.mxu0 0
      %5137 = vmatprep.subr.bf16.mxu0 0
      %5138 = vmatpush2.bf16.msra.mxu0 0
      %5139 = vmatprep.subr.bf16.mxu0 0
      %5140 = vmatpush2.bf16.msra.mxu0 0
      %5141 = vmatprep.subr.bf16.mxu0 0
      %5142 = vmatpush2.bf16.msra.mxu0 0
      %5143 = vmatprep.mubr.bf16.mxu0 0
      %5144 = vmatmul.mubr.bf16.gmra.mxu0 %v5106
      %v5145 = vpop.f32.mrf.mxu0
      %v5146 = vadd.f32 0.0, %v5145
      %v5147 = vpop.f32.mrf.mxu0
      %v5148 = vpop.f32.mrf.mxu0
      %v5149 = vpop.f32.mrf.mxu0
      %5150 = vdwg.mxu0
      %v5151 = vpack.c.bf16 %v3872, %v3823
      %v5152 = vpack.c.bf16 %v3970, %v3921
      %v5153 = vpack.c.bf16 %v4068, %v4019
      %v5154 = vpack.c.bf16 %v4166, %v4117
      %v5155 = vpack.c.bf16 %v4264, %v4215
      %v5156 = vpack.c.bf16 %v4362, %v4313
      %v5157 = vpack.c.bf16 %v4460, %v4411
      %v5158 = vpack.c.bf16 %v4558, %v4509
      %v5159 = vpack.c.bf16 %v4656, %v4607
      %v5160 = vpack.c.bf16 %v4754, %v4705
      %v5161 = vpack.c.bf16 %v4852, %v4803
      %v5162 = vpack.c.bf16 %v4950, %v4901
      %v5163 = vpack.c.bf16 %v5048, %v4999
      %v5164 = vpack.c.bf16 %v5146, %v5097
      %5166 = vrot.lane.b32.xlu0 %v1984, 112
      %v5167 = vpop.permute.xlu0 %5166
      %5168 = vrot.lane.b32.xlu0 %v2012, 80
      %v5169 = vpop.permute.xlu0 %5168
      %v5171 = vsel %vm2043, %v5167, 0
      %v5174 = vsel %vm2043, %v5169, 0
      %5176 = vmatprep.subr.bf16.mxu0 0
      %5177 = vmatpush1.bf16.xpose.msra.mxu0 0
      %5178 = vmatprep.subr.bf16.mxu0 0
      %5179 = vmatpush1.bf16.xpose.msra.mxu0 0
      %5180 = vmatprep.subr.bf16.mxu0 0
      %5181 = vmatpush1.bf16.xpose.msra.mxu0 0
      %5182 = vmatprep.subr.bf16.mxu0 0
      %5183 = vmatpush1.bf16.xpose.msra.mxu0 0
      %5184 = vmatprep.subr.bf16.mxu0 0
      %5185 = vmatpush1.bf16.xpose.msra.mxu0 0
      %5186 = vmatprep.subr.bf16.mxu0 0
      %5187 = vmatpush1.bf16.xpose.msra.mxu0 0
      %5188 = vmatprep.subr.bf16.mxu0 0
      %5189 = vmatpush1.bf16.xpose.msra.mxu0 0
      %5190 = vmatprep.subr.bf16.mxu0 0
      %5191 = vmatpush1.bf16.xpose.msra.mxu0 %v5174
      %5192 = vmatprep.subr.bf16.mxu0 0
      %5193 = vmatpush2.bf16.xpose.msra.mxu0 0
      %5194 = vmatprep.subr.bf16.mxu0 0
      %5195 = vmatpush2.bf16.xpose.msra.mxu0 0
      %5196 = vmatprep.subr.bf16.mxu0 0
      %5197 = vmatpush2.bf16.xpose.msra.mxu0 0
      %5198 = vmatprep.subr.bf16.mxu0 0
      %5199 = vmatpush2.bf16.xpose.msra.mxu0 0
      %5200 = vmatprep.subr.bf16.mxu0 0
      %5201 = vmatpush2.bf16.xpose.msra.mxu0 0
      %5202 = vmatprep.subr.bf16.mxu0 0
      %5203 = vmatpush2.bf16.xpose.msra.mxu0 0
      %5204 = vmatprep.subr.bf16.mxu0 0
      %5205 = vmatpush2.bf16.xpose.msra.mxu0 0
      %5206 = vmatprep.subr.bf16.mxu0 0
      %5207 = vmatpush2.bf16.xpose.msra.mxu0 0
      %5208 = vmatprep.mubr.bf16.mxu0 0
      %5209 = vmatmul.mubr.bf16.gmra.mxu0 %v5171
      %v5210 = vpop.f32.mrf.mxu0
      %v5211 = vadd.f32 %v1200, %v5210
      %v5212 = vpop.f32.mrf.mxu0
      %v5213 = vpop.f32.mrf.mxu0
      %v5214 = vpop.f32.mrf.mxu0
      %5215 = vdwg.mxu0
      %5217 = vrot.lane.b32.xlu0 %v1985, 112
      %v5218 = vpop.permute.xlu0 %5217
      %5219 = vrot.lane.b32.xlu0 %v2013, 80
      %v5220 = vpop.permute.xlu0 %5219
      %v5222 = vsel %vm2043, %v5218, 0
      %v5225 = vsel %vm2043, %v5220, 0
      %5227 = vmatprep.subr.bf16.mxu0 0
      %5228 = vmatpush1.bf16.xpose.msra.mxu0 0
      %5229 = vmatprep.subr.bf16.mxu0 0
      %5230 = vmatpush1.bf16.xpose.msra.mxu0 0
      %5231 = vmatprep.subr.bf16.mxu0 0
      %5232 = vmatpush1.bf16.xpose.msra.mxu0 0
      %5233 = vmatprep.subr.bf16.mxu0 0
      %5234 = vmatpush1.bf16.xpose.msra.mxu0 0
      %5235 = vmatprep.subr.bf16.mxu0 0
      %5236 = vmatpush1.bf16.xpose.msra.mxu0 0
      %5237 = vmatprep.subr.bf16.mxu0 0
      %5238 = vmatpush1.bf16.xpose.msra.mxu0 0
      %5239 = vmatprep.subr.bf16.mxu0 0
      %5240 = vmatpush1.bf16.xpose.msra.mxu0 0
      %5241 = vmatprep.subr.bf16.mxu0 0
      %5242 = vmatpush1.bf16.xpose.msra.mxu0 %v5225
      %5243 = vmatprep.subr.bf16.mxu0 0
      %5244 = vmatpush2.bf16.xpose.msra.mxu0 0
      %5245 = vmatprep.subr.bf16.mxu0 0
      %5246 = vmatpush2.bf16.xpose.msra.mxu0 0
      %5247 = vmatprep.subr.bf16.mxu0 0
      %5248 = vmatpush2.bf16.xpose.msra.mxu0 0
      %5249 = vmatprep.subr.bf16.mxu0 0
      %5250 = vmatpush2.bf16.xpose.msra.mxu0 0
      %5251 = vmatprep.subr.bf16.mxu0 0
      %5252 = vmatpush2.bf16.xpose.msra.mxu0 0
      %5253 = vmatprep.subr.bf16.mxu0 0
      %5254 = vmatpush2.bf16.xpose.msra.mxu0 0
      %5255 = vmatprep.subr.bf16.mxu0 0
      %5256 = vmatpush2.bf16.xpose.msra.mxu0 0
      %5257 = vmatprep.subr.bf16.mxu0 0
      %5258 = vmatpush2.bf16.xpose.msra.mxu0 0
      %5259 = vmatprep.mubr.bf16.mxu0 0
      %5260 = vmatmul.mubr.bf16.gmra.mxu0 %v5222
      %v5261 = vpop.f32.mrf.mxu0
      %v5262 = vadd.f32 %v1200, %v5261
      %v5263 = vpop.f32.mrf.mxu0
      %v5264 = vpop.f32.mrf.mxu0
      %v5265 = vpop.f32.mrf.mxu0
      %5266 = vdwg.mxu0
      %5268 = vrot.lane.b32.xlu0 %v1986, 112
      %v5269 = vpop.permute.xlu0 %5268
      %5270 = vrot.lane.b32.xlu0 %v2014, 80
      %v5271 = vpop.permute.xlu0 %5270
      %v5273 = vsel %vm2043, %v5269, 0
      %v5276 = vsel %vm2043, %v5271, 0
      %5278 = vmatprep.subr.bf16.mxu0 0
      %5279 = vmatpush1.bf16.xpose.msra.mxu0 0
      %5280 = vmatprep.subr.bf16.mxu0 0
      %5281 = vmatpush1.bf16.xpose.msra.mxu0 0
      %5282 = vmatprep.subr.bf16.mxu0 0
      %5283 = vmatpush1.bf16.xpose.msra.mxu0 0
      %5284 = vmatprep.subr.bf16.mxu0 0
      %5285 = vmatpush1.bf16.xpose.msra.mxu0 0
      %5286 = vmatprep.subr.bf16.mxu0 0
      %5287 = vmatpush1.bf16.xpose.msra.mxu0 0
      %5288 = vmatprep.subr.bf16.mxu0 0
      %5289 = vmatpush1.bf16.xpose.msra.mxu0 0
      %5290 = vmatprep.subr.bf16.mxu0 0
      %5291 = vmatpush1.bf16.xpose.msra.mxu0 0
      %5292 = vmatprep.subr.bf16.mxu0 0
      %5293 = vmatpush1.bf16.xpose.msra.mxu0 %v5276
      %5294 = vmatprep.subr.bf16.mxu0 0
      %5295 = vmatpush2.bf16.xpose.msra.mxu0 0
      %5296 = vmatprep.subr.bf16.mxu0 0
      %5297 = vmatpush2.bf16.xpose.msra.mxu0 0
      %5298 = vmatprep.subr.bf16.mxu0 0
      %5299 = vmatpush2.bf16.xpose.msra.mxu0 0
      %5300 = vmatprep.subr.bf16.mxu0 0
      %5301 = vmatpush2.bf16.xpose.msra.mxu0 0
      %5302 = vmatprep.subr.bf16.mxu0 0
      %5303 = vmatpush2.bf16.xpose.msra.mxu0 0
      %5304 = vmatprep.subr.bf16.mxu0 0
      %5305 = vmatpush2.bf16.xpose.msra.mxu0 0
      %5306 = vmatprep.subr.bf16.mxu0 0
      %5307 = vmatpush2.bf16.xpose.msra.mxu0 0
      %5308 = vmatprep.subr.bf16.mxu0 0
      %5309 = vmatpush2.bf16.xpose.msra.mxu0 0
      %5310 = vmatprep.mubr.bf16.mxu0 0
      %5311 = vmatmul.mubr.bf16.gmra.mxu0 %v5273
      %v5312 = vpop.f32.mrf.mxu0
      %v5313 = vadd.f32 %v1200, %v5312
      %v5314 = vpop.f32.mrf.mxu0
      %v5315 = vpop.f32.mrf.mxu0
      %v5316 = vpop.f32.mrf.mxu0
      %5317 = vdwg.mxu0
      %5319 = vrot.lane.b32.xlu0 %v1987, 112
      %v5320 = vpop.permute.xlu0 %5319
      %5321 = vrot.lane.b32.xlu0 %v2015, 80
      %v5322 = vpop.permute.xlu0 %5321
      %v5324 = vsel %vm2043, %v5320, 0
      %v5327 = vsel %vm2043, %v5322, 0
      %5329 = vmatprep.subr.bf16.mxu0 0
      %5330 = vmatpush1.bf16.xpose.msra.mxu0 0
      %5331 = vmatprep.subr.bf16.mxu0 0
      %5332 = vmatpush1.bf16.xpose.msra.mxu0 0
      %5333 = vmatprep.subr.bf16.mxu0 0
      %5334 = vmatpush1.bf16.xpose.msra.mxu0 0
      %5335 = vmatprep.subr.bf16.mxu0 0
      %5336 = vmatpush1.bf16.xpose.msra.mxu0 0
      %5337 = vmatprep.subr.bf16.mxu0 0
      %5338 = vmatpush1.bf16.xpose.msra.mxu0 0
      %5339 = vmatprep.subr.bf16.mxu0 0
      %5340 = vmatpush1.bf16.xpose.msra.mxu0 0
      %5341 = vmatprep.subr.bf16.mxu0 0
      %5342 = vmatpush1.bf16.xpose.msra.mxu0 0
      %5343 = vmatprep.subr.bf16.mxu0 0
      %5344 = vmatpush1.bf16.xpose.msra.mxu0 %v5327
      %5345 = vmatprep.subr.bf16.mxu0 0
      %5346 = vmatpush2.bf16.xpose.msra.mxu0 0
      %5347 = vmatprep.subr.bf16.mxu0 0
      %5348 = vmatpush2.bf16.xpose.msra.mxu0 0
      %5349 = vmatprep.subr.bf16.mxu0 0
      %5350 = vmatpush2.bf16.xpose.msra.mxu0 0
      %5351 = vmatprep.subr.bf16.mxu0 0
      %5352 = vmatpush2.bf16.xpose.msra.mxu0 0
      %5353 = vmatprep.subr.bf16.mxu0 0
      %5354 = vmatpush2.bf16.xpose.msra.mxu0 0
      %5355 = vmatprep.subr.bf16.mxu0 0
      %5356 = vmatpush2.bf16.xpose.msra.mxu0 0
      %5357 = vmatprep.subr.bf16.mxu0 0
      %5358 = vmatpush2.bf16.xpose.msra.mxu0 0
      %5359 = vmatprep.subr.bf16.mxu0 0
      %5360 = vmatpush2.bf16.xpose.msra.mxu0 0
      %5361 = vmatprep.mubr.bf16.mxu0 0
      %5362 = vmatmul.mubr.bf16.gmra.mxu0 %v5324
      %v5363 = vpop.f32.mrf.mxu0
      %v5364 = vadd.f32 %v1200, %v5363
      %v5365 = vpop.f32.mrf.mxu0
      %v5366 = vpop.f32.mrf.mxu0
      %v5367 = vpop.f32.mrf.mxu0
      %5368 = vdwg.mxu0
      %5370 = vrot.lane.b32.xlu0 %v1988, 112
      %v5371 = vpop.permute.xlu0 %5370
      %5372 = vrot.lane.b32.xlu0 %v2016, 80
      %v5373 = vpop.permute.xlu0 %5372
      %v5375 = vsel %vm2043, %v5371, 0
      %v5378 = vsel %vm2043, %v5373, 0
      %5380 = vmatprep.subr.bf16.mxu0 0
      %5381 = vmatpush1.bf16.xpose.msra.mxu0 0
      %5382 = vmatprep.subr.bf16.mxu0 0
      %5383 = vmatpush1.bf16.xpose.msra.mxu0 0
      %5384 = vmatprep.subr.bf16.mxu0 0
      %5385 = vmatpush1.bf16.xpose.msra.mxu0 0
      %5386 = vmatprep.subr.bf16.mxu0 0
      %5387 = vmatpush1.bf16.xpose.msra.mxu0 0
      %5388 = vmatprep.subr.bf16.mxu0 0
      %5389 = vmatpush1.bf16.xpose.msra.mxu0 0
      %5390 = vmatprep.subr.bf16.mxu0 0
      %5391 = vmatpush1.bf16.xpose.msra.mxu0 0
      %5392 = vmatprep.subr.bf16.mxu0 0
      %5393 = vmatpush1.bf16.xpose.msra.mxu0 0
      %5394 = vmatprep.subr.bf16.mxu0 0
      %5395 = vmatpush1.bf16.xpose.msra.mxu0 %v5378
      %5396 = vmatprep.subr.bf16.mxu0 0
      %5397 = vmatpush2.bf16.xpose.msra.mxu0 0
      %5398 = vmatprep.subr.bf16.mxu0 0
      %5399 = vmatpush2.bf16.xpose.msra.mxu0 0
      %5400 = vmatprep.subr.bf16.mxu0 0
      %5401 = vmatpush2.bf16.xpose.msra.mxu0 0
      %5402 = vmatprep.subr.bf16.mxu0 0
      %5403 = vmatpush2.bf16.xpose.msra.mxu0 0
      %5404 = vmatprep.subr.bf16.mxu0 0
      %5405 = vmatpush2.bf16.xpose.msra.mxu0 0
      %5406 = vmatprep.subr.bf16.mxu0 0
      %5407 = vmatpush2.bf16.xpose.msra.mxu0 0
      %5408 = vmatprep.subr.bf16.mxu0 0
      %5409 = vmatpush2.bf16.xpose.msra.mxu0 0
      %5410 = vmatprep.subr.bf16.mxu0 0
      %5411 = vmatpush2.bf16.xpose.msra.mxu0 0
      %5412 = vmatprep.mubr.bf16.mxu0 0
      %5413 = vmatmul.mubr.bf16.gmra.mxu0 %v5375
      %v5414 = vpop.f32.mrf.mxu0
      %v5415 = vadd.f32 %v1200, %v5414
      %v5416 = vpop.f32.mrf.mxu0
      %v5417 = vpop.f32.mrf.mxu0
      %v5418 = vpop.f32.mrf.mxu0
      %5419 = vdwg.mxu0
      %5421 = vrot.lane.b32.xlu0 %v1989, 112
      %v5422 = vpop.permute.xlu0 %5421
      %5423 = vrot.lane.b32.xlu0 %v2017, 80
      %v5424 = vpop.permute.xlu0 %5423
      %v5426 = vsel %vm2043, %v5422, 0
      %v5429 = vsel %vm2043, %v5424, 0
      %5431 = vmatprep.subr.bf16.mxu0 0
      %5432 = vmatpush1.bf16.xpose.msra.mxu0 0
      %5433 = vmatprep.subr.bf16.mxu0 0
      %5434 = vmatpush1.bf16.xpose.msra.mxu0 0
      %5435 = vmatprep.subr.bf16.mxu0 0
      %5436 = vmatpush1.bf16.xpose.msra.mxu0 0
      %5437 = vmatprep.subr.bf16.mxu0 0
      %5438 = vmatpush1.bf16.xpose.msra.mxu0 0
      %5439 = vmatprep.subr.bf16.mxu0 0
      %5440 = vmatpush1.bf16.xpose.msra.mxu0 0
      %5441 = vmatprep.subr.bf16.mxu0 0
      %5442 = vmatpush1.bf16.xpose.msra.mxu0 0
      %5443 = vmatprep.subr.bf16.mxu0 0
      %5444 = vmatpush1.bf16.xpose.msra.mxu0 0
      %5445 = vmatprep.subr.bf16.mxu0 0
      %5446 = vmatpush1.bf16.xpose.msra.mxu0 %v5429
      %5447 = vmatprep.subr.bf16.mxu0 0
      %5448 = vmatpush2.bf16.xpose.msra.mxu0 0
      %5449 = vmatprep.subr.bf16.mxu0 0
      %5450 = vmatpush2.bf16.xpose.msra.mxu0 0
      %5451 = vmatprep.subr.bf16.mxu0 0
      %5452 = vmatpush2.bf16.xpose.msra.mxu0 0
      %5453 = vmatprep.subr.bf16.mxu0 0
      %5454 = vmatpush2.bf16.xpose.msra.mxu0 0
      %5455 = vmatprep.subr.bf16.mxu0 0
      %5456 = vmatpush2.bf16.xpose.msra.mxu0 0
      %5457 = vmatprep.subr.bf16.mxu0 0
      %5458 = vmatpush2.bf16.xpose.msra.mxu0 0
      %5459 = vmatprep.subr.bf16.mxu0 0
      %5460 = vmatpush2.bf16.xpose.msra.mxu0 0
      %5461 = vmatprep.subr.bf16.mxu0 0
      %5462 = vmatpush2.bf16.xpose.msra.mxu0 0
      %5463 = vmatprep.mubr.bf16.mxu0 0
      %5464 = vmatmul.mubr.bf16.gmra.mxu0 %v5426
      %v5465 = vpop.f32.mrf.mxu0
      %v5466 = vadd.f32 %v1200, %v5465
      %v5467 = vpop.f32.mrf.mxu0
      %v5468 = vpop.f32.mrf.mxu0
      %v5469 = vpop.f32.mrf.mxu0
      %5470 = vdwg.mxu0
      %5472 = vrot.lane.b32.xlu0 %v1990, 112
      %v5473 = vpop.permute.xlu0 %5472
      %5474 = vrot.lane.b32.xlu0 %v2018, 80
      %v5475 = vpop.permute.xlu0 %5474
      %v5477 = vsel %vm2043, %v5473, 0
      %v5480 = vsel %vm2043, %v5475, 0
      %5482 = vmatprep.subr.bf16.mxu0 0
      %5483 = vmatpush1.bf16.xpose.msra.mxu0 0
      %5484 = vmatprep.subr.bf16.mxu0 0
      %5485 = vmatpush1.bf16.xpose.msra.mxu0 0
      %5486 = vmatprep.subr.bf16.mxu0 0
      %5487 = vmatpush1.bf16.xpose.msra.mxu0 0
      %5488 = vmatprep.subr.bf16.mxu0 0
      %5489 = vmatpush1.bf16.xpose.msra.mxu0 0
      %5490 = vmatprep.subr.bf16.mxu0 0
      %5491 = vmatpush1.bf16.xpose.msra.mxu0 0
      %5492 = vmatprep.subr.bf16.mxu0 0
      %5493 = vmatpush1.bf16.xpose.msra.mxu0 0
      %5494 = vmatprep.subr.bf16.mxu0 0
      %5495 = vmatpush1.bf16.xpose.msra.mxu0 0
      %5496 = vmatprep.subr.bf16.mxu0 0
      %5497 = vmatpush1.bf16.xpose.msra.mxu0 %v5480
      %5498 = vmatprep.subr.bf16.mxu0 0
      %5499 = vmatpush2.bf16.xpose.msra.mxu0 0
      %5500 = vmatprep.subr.bf16.mxu0 0
      %5501 = vmatpush2.bf16.xpose.msra.mxu0 0
      %5502 = vmatprep.subr.bf16.mxu0 0
      %5503 = vmatpush2.bf16.xpose.msra.mxu0 0
      %5504 = vmatprep.subr.bf16.mxu0 0
      %5505 = vmatpush2.bf16.xpose.msra.mxu0 0
      %5506 = vmatprep.subr.bf16.mxu0 0
      %5507 = vmatpush2.bf16.xpose.msra.mxu0 0
      %5508 = vmatprep.subr.bf16.mxu0 0
      %5509 = vmatpush2.bf16.xpose.msra.mxu0 0
      %5510 = vmatprep.subr.bf16.mxu0 0
      %5511 = vmatpush2.bf16.xpose.msra.mxu0 0
      %5512 = vmatprep.subr.bf16.mxu0 0
      %5513 = vmatpush2.bf16.xpose.msra.mxu0 0
      %5514 = vmatprep.mubr.bf16.mxu0 0
      %5515 = vmatmul.mubr.bf16.gmra.mxu0 %v5477
      %v5516 = vpop.f32.mrf.mxu0
      %v5517 = vadd.f32 %v1200, %v5516
      %v5518 = vpop.f32.mrf.mxu0
      %v5519 = vpop.f32.mrf.mxu0
      %v5520 = vpop.f32.mrf.mxu0
      %5521 = vdwg.mxu0
      %5523 = vrot.lane.b32.xlu0 %v1991, 112
      %v5524 = vpop.permute.xlu0 %5523
      %5525 = vrot.lane.b32.xlu0 %v2019, 80
      %v5526 = vpop.permute.xlu0 %5525
      %v5528 = vsel %vm2043, %v5524, 0
      %v5531 = vsel %vm2043, %v5526, 0
      %5533 = vmatprep.subr.bf16.mxu0 0
      %5534 = vmatpush1.bf16.xpose.msra.mxu0 0
      %5535 = vmatprep.subr.bf16.mxu0 0
      %5536 = vmatpush1.bf16.xpose.msra.mxu0 0
      %5537 = vmatprep.subr.bf16.mxu0 0
      %5538 = vmatpush1.bf16.xpose.msra.mxu0 0
      %5539 = vmatprep.subr.bf16.mxu0 0
      %5540 = vmatpush1.bf16.xpose.msra.mxu0 0
      %5541 = vmatprep.subr.bf16.mxu0 0
      %5542 = vmatpush1.bf16.xpose.msra.mxu0 0
      %5543 = vmatprep.subr.bf16.mxu0 0
      %5544 = vmatpush1.bf16.xpose.msra.mxu0 0
      %5545 = vmatprep.subr.bf16.mxu0 0
      %5546 = vmatpush1.bf16.xpose.msra.mxu0 0
      %5547 = vmatprep.subr.bf16.mxu0 0
      %5548 = vmatpush1.bf16.xpose.msra.mxu0 %v5531
      %5549 = vmatprep.subr.bf16.mxu0 0
      %5550 = vmatpush2.bf16.xpose.msra.mxu0 0
      %5551 = vmatprep.subr.bf16.mxu0 0
      %5552 = vmatpush2.bf16.xpose.msra.mxu0 0
      %5553 = vmatprep.subr.bf16.mxu0 0
      %5554 = vmatpush2.bf16.xpose.msra.mxu0 0
      %5555 = vmatprep.subr.bf16.mxu0 0
      %5556 = vmatpush2.bf16.xpose.msra.mxu0 0
      %5557 = vmatprep.subr.bf16.mxu0 0
      %5558 = vmatpush2.bf16.xpose.msra.mxu0 0
      %5559 = vmatprep.subr.bf16.mxu0 0
      %5560 = vmatpush2.bf16.xpose.msra.mxu0 0
      %5561 = vmatprep.subr.bf16.mxu0 0
      %5562 = vmatpush2.bf16.xpose.msra.mxu0 0
      %5563 = vmatprep.subr.bf16.mxu0 0
      %5564 = vmatpush2.bf16.xpose.msra.mxu0 0
      %5565 = vmatprep.mubr.bf16.mxu0 0
      %5566 = vmatmul.mubr.bf16.gmra.mxu0 %v5528
      %v5567 = vpop.f32.mrf.mxu0
      %v5568 = vadd.f32 %v1200, %v5567
      %v5569 = vpop.f32.mrf.mxu0
      %v5570 = vpop.f32.mrf.mxu0
      %v5571 = vpop.f32.mrf.mxu0
      %5572 = vdwg.mxu0
      %5574 = vrot.lane.b32.xlu0 %v1992, 112
      %v5575 = vpop.permute.xlu0 %5574
      %5576 = vrot.lane.b32.xlu0 %v2020, 80
      %v5577 = vpop.permute.xlu0 %5576
      %v5579 = vsel %vm2043, %v5575, 0
      %v5582 = vsel %vm2043, %v5577, 0
      %5584 = vmatprep.subr.bf16.mxu0 0
      %5585 = vmatpush1.bf16.xpose.msra.mxu0 0
      %5586 = vmatprep.subr.bf16.mxu0 0
      %5587 = vmatpush1.bf16.xpose.msra.mxu0 0
      %5588 = vmatprep.subr.bf16.mxu0 0
      %5589 = vmatpush1.bf16.xpose.msra.mxu0 0
      %5590 = vmatprep.subr.bf16.mxu0 0
      %5591 = vmatpush1.bf16.xpose.msra.mxu0 0
      %5592 = vmatprep.subr.bf16.mxu0 0
      %5593 = vmatpush1.bf16.xpose.msra.mxu0 0
      %5594 = vmatprep.subr.bf16.mxu0 0
      %5595 = vmatpush1.bf16.xpose.msra.mxu0 0
      %5596 = vmatprep.subr.bf16.mxu0 0
      %5597 = vmatpush1.bf16.xpose.msra.mxu0 0
      %5598 = vmatprep.subr.bf16.mxu0 0
      %5599 = vmatpush1.bf16.xpose.msra.mxu0 %v5582
      %5600 = vmatprep.subr.bf16.mxu0 0
      %5601 = vmatpush2.bf16.xpose.msra.mxu0 0
      %5602 = vmatprep.subr.bf16.mxu0 0
      %5603 = vmatpush2.bf16.xpose.msra.mxu0 0
      %5604 = vmatprep.subr.bf16.mxu0 0
      %5605 = vmatpush2.bf16.xpose.msra.mxu0 0
      %5606 = vmatprep.subr.bf16.mxu0 0
      %5607 = vmatpush2.bf16.xpose.msra.mxu0 0
      %5608 = vmatprep.subr.bf16.mxu0 0
      %5609 = vmatpush2.bf16.xpose.msra.mxu0 0
      %5610 = vmatprep.subr.bf16.mxu0 0
      %5611 = vmatpush2.bf16.xpose.msra.mxu0 0
      %5612 = vmatprep.subr.bf16.mxu0 0
      %5613 = vmatpush2.bf16.xpose.msra.mxu0 0
      %5614 = vmatprep.subr.bf16.mxu0 0
      %5615 = vmatpush2.bf16.xpose.msra.mxu0 0
      %5616 = vmatprep.mubr.bf16.mxu0 0
      %5617 = vmatmul.mubr.bf16.gmra.mxu0 %v5579
      %v5618 = vpop.f32.mrf.mxu0
      %v5619 = vadd.f32 %v1200, %v5618
      %v5620 = vpop.f32.mrf.mxu0
      %v5621 = vpop.f32.mrf.mxu0
      %v5622 = vpop.f32.mrf.mxu0
      %5623 = vdwg.mxu0
      %5625 = vrot.lane.b32.xlu0 %v1993, 112
      %v5626 = vpop.permute.xlu0 %5625
      %5627 = vrot.lane.b32.xlu0 %v2021, 80
      %v5628 = vpop.permute.xlu0 %5627
      %v5630 = vsel %vm2043, %v5626, 0
      %v5633 = vsel %vm2043, %v5628, 0
      %5635 = vmatprep.subr.bf16.mxu0 0
      %5636 = vmatpush1.bf16.xpose.msra.mxu0 0
      %5637 = vmatprep.subr.bf16.mxu0 0
      %5638 = vmatpush1.bf16.xpose.msra.mxu0 0
      %5639 = vmatprep.subr.bf16.mxu0 0
      %5640 = vmatpush1.bf16.xpose.msra.mxu0 0
      %5641 = vmatprep.subr.bf16.mxu0 0
      %5642 = vmatpush1.bf16.xpose.msra.mxu0 0
      %5643 = vmatprep.subr.bf16.mxu0 0
      %5644 = vmatpush1.bf16.xpose.msra.mxu0 0
      %5645 = vmatprep.subr.bf16.mxu0 0
      %5646 = vmatpush1.bf16.xpose.msra.mxu0 0
      %5647 = vmatprep.subr.bf16.mxu0 0
      %5648 = vmatpush1.bf16.xpose.msra.mxu0 0
      %5649 = vmatprep.subr.bf16.mxu0 0
      %5650 = vmatpush1.bf16.xpose.msra.mxu0 %v5633
      %5651 = vmatprep.subr.bf16.mxu0 0
      %5652 = vmatpush2.bf16.xpose.msra.mxu0 0
      %5653 = vmatprep.subr.bf16.mxu0 0
      %5654 = vmatpush2.bf16.xpose.msra.mxu0 0
      %5655 = vmatprep.subr.bf16.mxu0 0
      %5656 = vmatpush2.bf16.xpose.msra.mxu0 0
      %5657 = vmatprep.subr.bf16.mxu0 0
      %5658 = vmatpush2.bf16.xpose.msra.mxu0 0
      %5659 = vmatprep.subr.bf16.mxu0 0
      %5660 = vmatpush2.bf16.xpose.msra.mxu0 0
      %5661 = vmatprep.subr.bf16.mxu0 0
      %5662 = vmatpush2.bf16.xpose.msra.mxu0 0
      %5663 = vmatprep.subr.bf16.mxu0 0
      %5664 = vmatpush2.bf16.xpose.msra.mxu0 0
      %5665 = vmatprep.subr.bf16.mxu0 0
      %5666 = vmatpush2.bf16.xpose.msra.mxu0 0
      %5667 = vmatprep.mubr.bf16.mxu0 0
      %5668 = vmatmul.mubr.bf16.gmra.mxu0 %v5630
      %v5669 = vpop.f32.mrf.mxu0
      %v5670 = vadd.f32 %v1200, %v5669
      %v5671 = vpop.f32.mrf.mxu0
      %v5672 = vpop.f32.mrf.mxu0
      %v5673 = vpop.f32.mrf.mxu0
      %5674 = vdwg.mxu0
      %5676 = vrot.lane.b32.xlu0 %v1994, 112
      %v5677 = vpop.permute.xlu0 %5676
      %5678 = vrot.lane.b32.xlu0 %v2022, 80
      %v5679 = vpop.permute.xlu0 %5678
      %v5681 = vsel %vm2043, %v5677, 0
      %v5684 = vsel %vm2043, %v5679, 0
      %5686 = vmatprep.subr.bf16.mxu0 0
      %5687 = vmatpush1.bf16.xpose.msra.mxu0 0
      %5688 = vmatprep.subr.bf16.mxu0 0
      %5689 = vmatpush1.bf16.xpose.msra.mxu0 0
      %5690 = vmatprep.subr.bf16.mxu0 0
      %5691 = vmatpush1.bf16.xpose.msra.mxu0 0
      %5692 = vmatprep.subr.bf16.mxu0 0
      %5693 = vmatpush1.bf16.xpose.msra.mxu0 0
      %5694 = vmatprep.subr.bf16.mxu0 0
      %5695 = vmatpush1.bf16.xpose.msra.mxu0 0
      %5696 = vmatprep.subr.bf16.mxu0 0
      %5697 = vmatpush1.bf16.xpose.msra.mxu0 0
      %5698 = vmatprep.subr.bf16.mxu0 0
      %5699 = vmatpush1.bf16.xpose.msra.mxu0 0
      %5700 = vmatprep.subr.bf16.mxu0 0
      %5701 = vmatpush1.bf16.xpose.msra.mxu0 %v5684
      %5702 = vmatprep.subr.bf16.mxu0 0
      %5703 = vmatpush2.bf16.xpose.msra.mxu0 0
      %5704 = vmatprep.subr.bf16.mxu0 0
      %5705 = vmatpush2.bf16.xpose.msra.mxu0 0
      %5706 = vmatprep.subr.bf16.mxu0 0
      %5707 = vmatpush2.bf16.xpose.msra.mxu0 0
      %5708 = vmatprep.subr.bf16.mxu0 0
      %5709 = vmatpush2.bf16.xpose.msra.mxu0 0
      %5710 = vmatprep.subr.bf16.mxu0 0
      %5711 = vmatpush2.bf16.xpose.msra.mxu0 0
      %5712 = vmatprep.subr.bf16.mxu0 0
      %5713 = vmatpush2.bf16.xpose.msra.mxu0 0
      %5714 = vmatprep.subr.bf16.mxu0 0
      %5715 = vmatpush2.bf16.xpose.msra.mxu0 0
      %5716 = vmatprep.subr.bf16.mxu0 0
      %5717 = vmatpush2.bf16.xpose.msra.mxu0 0
      %5718 = vmatprep.mubr.bf16.mxu0 0
      %5719 = vmatmul.mubr.bf16.gmra.mxu0 %v5681
      %v5720 = vpop.f32.mrf.mxu0
      %v5721 = vadd.f32 %v1200, %v5720
      %v5722 = vpop.f32.mrf.mxu0
      %v5723 = vpop.f32.mrf.mxu0
      %v5724 = vpop.f32.mrf.mxu0
      %5725 = vdwg.mxu0
      %5727 = vrot.lane.b32.xlu0 %v1995, 112
      %v5728 = vpop.permute.xlu0 %5727
      %5729 = vrot.lane.b32.xlu0 %v2023, 80
      %v5730 = vpop.permute.xlu0 %5729
      %v5732 = vsel %vm2043, %v5728, 0
      %v5735 = vsel %vm2043, %v5730, 0
      %5737 = vmatprep.subr.bf16.mxu0 0
      %5738 = vmatpush1.bf16.xpose.msra.mxu0 0
      %5739 = vmatprep.subr.bf16.mxu0 0
      %5740 = vmatpush1.bf16.xpose.msra.mxu0 0
      %5741 = vmatprep.subr.bf16.mxu0 0
      %5742 = vmatpush1.bf16.xpose.msra.mxu0 0
      %5743 = vmatprep.subr.bf16.mxu0 0
      %5744 = vmatpush1.bf16.xpose.msra.mxu0 0
      %5745 = vmatprep.subr.bf16.mxu0 0
      %5746 = vmatpush1.bf16.xpose.msra.mxu0 0
      %5747 = vmatprep.subr.bf16.mxu0 0
      %5748 = vmatpush1.bf16.xpose.msra.mxu0 0
      %5749 = vmatprep.subr.bf16.mxu0 0
      %5750 = vmatpush1.bf16.xpose.msra.mxu0 0
      %5751 = vmatprep.subr.bf16.mxu0 0
      %5752 = vmatpush1.bf16.xpose.msra.mxu0 %v5735
      %5753 = vmatprep.subr.bf16.mxu0 0
      %5754 = vmatpush2.bf16.xpose.msra.mxu0 0
      %5755 = vmatprep.subr.bf16.mxu0 0
      %5756 = vmatpush2.bf16.xpose.msra.mxu0 0
      %5757 = vmatprep.subr.bf16.mxu0 0
      %5758 = vmatpush2.bf16.xpose.msra.mxu0 0
      %5759 = vmatprep.subr.bf16.mxu0 0
      %5760 = vmatpush2.bf16.xpose.msra.mxu0 0
      %5761 = vmatprep.subr.bf16.mxu0 0
      %5762 = vmatpush2.bf16.xpose.msra.mxu0 0
      %5763 = vmatprep.subr.bf16.mxu0 0
      %5764 = vmatpush2.bf16.xpose.msra.mxu0 0
      %5765 = vmatprep.subr.bf16.mxu0 0
      %5766 = vmatpush2.bf16.xpose.msra.mxu0 0
      %5767 = vmatprep.subr.bf16.mxu0 0
      %5768 = vmatpush2.bf16.xpose.msra.mxu0 0
      %5769 = vmatprep.mubr.bf16.mxu0 0
      %5770 = vmatmul.mubr.bf16.gmra.mxu0 %v5732
      %v5771 = vpop.f32.mrf.mxu0
      %v5772 = vadd.f32 %v1200, %v5771
      %v5773 = vpop.f32.mrf.mxu0
      %v5774 = vpop.f32.mrf.mxu0
      %v5775 = vpop.f32.mrf.mxu0
      %5776 = vdwg.mxu0
      %5778 = vrot.lane.b32.xlu0 %v1996, 112
      %v5779 = vpop.permute.xlu0 %5778
      %5780 = vrot.lane.b32.xlu0 %v2024, 80
      %v5781 = vpop.permute.xlu0 %5780
      %v5783 = vsel %vm2043, %v5779, 0
      %v5786 = vsel %vm2043, %v5781, 0
      %5788 = vmatprep.subr.bf16.mxu0 0
      %5789 = vmatpush1.bf16.xpose.msra.mxu0 0
      %5790 = vmatprep.subr.bf16.mxu0 0
      %5791 = vmatpush1.bf16.xpose.msra.mxu0 0
      %5792 = vmatprep.subr.bf16.mxu0 0
      %5793 = vmatpush1.bf16.xpose.msra.mxu0 0
      %5794 = vmatprep.subr.bf16.mxu0 0
      %5795 = vmatpush1.bf16.xpose.msra.mxu0 0
      %5796 = vmatprep.subr.bf16.mxu0 0
      %5797 = vmatpush1.bf16.xpose.msra.mxu0 0
      %5798 = vmatprep.subr.bf16.mxu0 0
      %5799 = vmatpush1.bf16.xpose.msra.mxu0 0
      %5800 = vmatprep.subr.bf16.mxu0 0
      %5801 = vmatpush1.bf16.xpose.msra.mxu0 0
      %5802 = vmatprep.subr.bf16.mxu0 0
      %5803 = vmatpush1.bf16.xpose.msra.mxu0 %v5786
      %5804 = vmatprep.subr.bf16.mxu0 0
      %5805 = vmatpush2.bf16.xpose.msra.mxu0 0
      %5806 = vmatprep.subr.bf16.mxu0 0
      %5807 = vmatpush2.bf16.xpose.msra.mxu0 0
      %5808 = vmatprep.subr.bf16.mxu0 0
      %5809 = vmatpush2.bf16.xpose.msra.mxu0 0
      %5810 = vmatprep.subr.bf16.mxu0 0
      %5811 = vmatpush2.bf16.xpose.msra.mxu0 0
      %5812 = vmatprep.subr.bf16.mxu0 0
      %5813 = vmatpush2.bf16.xpose.msra.mxu0 0
      %5814 = vmatprep.subr.bf16.mxu0 0
      %5815 = vmatpush2.bf16.xpose.msra.mxu0 0
      %5816 = vmatprep.subr.bf16.mxu0 0
      %5817 = vmatpush2.bf16.xpose.msra.mxu0 0
      %5818 = vmatprep.subr.bf16.mxu0 0
      %5819 = vmatpush2.bf16.xpose.msra.mxu0 0
      %5820 = vmatprep.mubr.bf16.mxu0 0
      %5821 = vmatmul.mubr.bf16.gmra.mxu0 %v5783
      %v5822 = vpop.f32.mrf.mxu0
      %v5823 = vadd.f32 %v1200, %v5822
      %v5824 = vpop.f32.mrf.mxu0
      %v5825 = vpop.f32.mrf.mxu0
      %v5826 = vpop.f32.mrf.mxu0
      %5827 = vdwg.mxu0
      %5829 = vrot.lane.b32.xlu0 %v1997, 112
      %v5830 = vpop.permute.xlu0 %5829
      %5831 = vrot.lane.b32.xlu0 %v2025, 80
      %v5832 = vpop.permute.xlu0 %5831
      %v5834 = vsel %vm2043, %v5830, 0
      %v5837 = vsel %vm2043, %v5832, 0
      %5839 = vmatprep.subr.bf16.mxu0 0
      %5840 = vmatpush1.bf16.xpose.msra.mxu0 0
      %5841 = vmatprep.subr.bf16.mxu0 0
      %5842 = vmatpush1.bf16.xpose.msra.mxu0 0
      %5843 = vmatprep.subr.bf16.mxu0 0
      %5844 = vmatpush1.bf16.xpose.msra.mxu0 0
      %5845 = vmatprep.subr.bf16.mxu0 0
      %5846 = vmatpush1.bf16.xpose.msra.mxu0 0
      %5847 = vmatprep.subr.bf16.mxu0 0
      %5848 = vmatpush1.bf16.xpose.msra.mxu0 0
      %5849 = vmatprep.subr.bf16.mxu0 0
      %5850 = vmatpush1.bf16.xpose.msra.mxu0 0
      %5851 = vmatprep.subr.bf16.mxu0 0
      %5852 = vmatpush1.bf16.xpose.msra.mxu0 0
      %5853 = vmatprep.subr.bf16.mxu0 0
      %5854 = vmatpush1.bf16.xpose.msra.mxu0 %v5837
      %5855 = vmatprep.subr.bf16.mxu0 0
      %5856 = vmatpush2.bf16.xpose.msra.mxu0 0
      %5857 = vmatprep.subr.bf16.mxu0 0
      %5858 = vmatpush2.bf16.xpose.msra.mxu0 0
      %5859 = vmatprep.subr.bf16.mxu0 0
      %5860 = vmatpush2.bf16.xpose.msra.mxu0 0
      %5861 = vmatprep.subr.bf16.mxu0 0
      %5862 = vmatpush2.bf16.xpose.msra.mxu0 0
      %5863 = vmatprep.subr.bf16.mxu0 0
      %5864 = vmatpush2.bf16.xpose.msra.mxu0 0
      %5865 = vmatprep.subr.bf16.mxu0 0
      %5866 = vmatpush2.bf16.xpose.msra.mxu0 0
      %5867 = vmatprep.subr.bf16.mxu0 0
      %5868 = vmatpush2.bf16.xpose.msra.mxu0 0
      %5869 = vmatprep.subr.bf16.mxu0 0
      %5870 = vmatpush2.bf16.xpose.msra.mxu0 0
      %5871 = vmatprep.mubr.bf16.mxu0 0
      %5872 = vmatmul.mubr.bf16.gmra.mxu0 %v5834
      %v5873 = vpop.f32.mrf.mxu0
      %v5874 = vadd.f32 %v1200, %v5873
      %v5875 = vpop.f32.mrf.mxu0
      %v5876 = vpop.f32.mrf.mxu0
      %v5877 = vpop.f32.mrf.mxu0
      %5878 = vdwg.mxu0
      %5880 = vrot.lane.b32.xlu0 %v1998, 112
      %v5881 = vpop.permute.xlu0 %5880
      %5882 = vrot.lane.b32.xlu0 %v2026, 80
      %v5883 = vpop.permute.xlu0 %5882
      %v5885 = vsel %vm2043, %v5881, 0
      %v5888 = vsel %vm2043, %v5883, 0
      %5890 = vmatprep.subr.bf16.mxu0 0
      %5891 = vmatpush1.bf16.xpose.msra.mxu0 0
      %5892 = vmatprep.subr.bf16.mxu0 0
      %5893 = vmatpush1.bf16.xpose.msra.mxu0 0
      %5894 = vmatprep.subr.bf16.mxu0 0
      %5895 = vmatpush1.bf16.xpose.msra.mxu0 0
      %5896 = vmatprep.subr.bf16.mxu0 0
      %5897 = vmatpush1.bf16.xpose.msra.mxu0 0
      %5898 = vmatprep.subr.bf16.mxu0 0
      %5899 = vmatpush1.bf16.xpose.msra.mxu0 0
      %5900 = vmatprep.subr.bf16.mxu0 0
      %5901 = vmatpush1.bf16.xpose.msra.mxu0 0
      %5902 = vmatprep.subr.bf16.mxu0 0
      %5903 = vmatpush1.bf16.xpose.msra.mxu0 0
      %5904 = vmatprep.subr.bf16.mxu0 0
      %5905 = vmatpush1.bf16.xpose.msra.mxu0 %v5888
      %5906 = vmatprep.subr.bf16.mxu0 0
      %5907 = vmatpush2.bf16.xpose.msra.mxu0 0
      %5908 = vmatprep.subr.bf16.mxu0 0
      %5909 = vmatpush2.bf16.xpose.msra.mxu0 0
      %5910 = vmatprep.subr.bf16.mxu0 0
      %5911 = vmatpush2.bf16.xpose.msra.mxu0 0
      %5912 = vmatprep.subr.bf16.mxu0 0
      %5913 = vmatpush2.bf16.xpose.msra.mxu0 0
      %5914 = vmatprep.subr.bf16.mxu0 0
      %5915 = vmatpush2.bf16.xpose.msra.mxu0 0
      %5916 = vmatprep.subr.bf16.mxu0 0
      %5917 = vmatpush2.bf16.xpose.msra.mxu0 0
      %5918 = vmatprep.subr.bf16.mxu0 0
      %5919 = vmatpush2.bf16.xpose.msra.mxu0 0
      %5920 = vmatprep.subr.bf16.mxu0 0
      %5921 = vmatpush2.bf16.xpose.msra.mxu0 0
      %5922 = vmatprep.mubr.bf16.mxu0 0
      %5923 = vmatmul.mubr.bf16.gmra.mxu0 %v5885
      %v5924 = vpop.f32.mrf.mxu0
      %v5925 = vadd.f32 %v1200, %v5924
      %v5926 = vpop.f32.mrf.mxu0
      %v5927 = vpop.f32.mrf.mxu0
      %v5928 = vpop.f32.mrf.mxu0
      %5929 = vdwg.mxu0
      %5931 = vrot.lane.b32.xlu0 %v1999, 112
      %v5932 = vpop.permute.xlu0 %5931
      %5933 = vrot.lane.b32.xlu0 %v2027, 80
      %v5934 = vpop.permute.xlu0 %5933
      %v5936 = vsel %vm2043, %v5932, 0
      %v5939 = vsel %vm2043, %v5934, 0
      %5941 = vmatprep.subr.bf16.mxu0 0
      %5942 = vmatpush1.bf16.xpose.msra.mxu0 0
      %5943 = vmatprep.subr.bf16.mxu0 0
      %5944 = vmatpush1.bf16.xpose.msra.mxu0 0
      %5945 = vmatprep.subr.bf16.mxu0 0
      %5946 = vmatpush1.bf16.xpose.msra.mxu0 0
      %5947 = vmatprep.subr.bf16.mxu0 0
      %5948 = vmatpush1.bf16.xpose.msra.mxu0 0
      %5949 = vmatprep.subr.bf16.mxu0 0
      %5950 = vmatpush1.bf16.xpose.msra.mxu0 0
      %5951 = vmatprep.subr.bf16.mxu0 0
      %5952 = vmatpush1.bf16.xpose.msra.mxu0 0
      %5953 = vmatprep.subr.bf16.mxu0 0
      %5954 = vmatpush1.bf16.xpose.msra.mxu0 0
      %5955 = vmatprep.subr.bf16.mxu0 0
      %5956 = vmatpush1.bf16.xpose.msra.mxu0 %v5939
      %5957 = vmatprep.subr.bf16.mxu0 0
      %5958 = vmatpush2.bf16.xpose.msra.mxu0 0
      %5959 = vmatprep.subr.bf16.mxu0 0
      %5960 = vmatpush2.bf16.xpose.msra.mxu0 0
      %5961 = vmatprep.subr.bf16.mxu0 0
      %5962 = vmatpush2.bf16.xpose.msra.mxu0 0
      %5963 = vmatprep.subr.bf16.mxu0 0
      %5964 = vmatpush2.bf16.xpose.msra.mxu0 0
      %5965 = vmatprep.subr.bf16.mxu0 0
      %5966 = vmatpush2.bf16.xpose.msra.mxu0 0
      %5967 = vmatprep.subr.bf16.mxu0 0
      %5968 = vmatpush2.bf16.xpose.msra.mxu0 0
      %5969 = vmatprep.subr.bf16.mxu0 0
      %5970 = vmatpush2.bf16.xpose.msra.mxu0 0
      %5971 = vmatprep.subr.bf16.mxu0 0
      %5972 = vmatpush2.bf16.xpose.msra.mxu0 0
      %5973 = vmatprep.mubr.bf16.mxu0 0
      %5974 = vmatmul.mubr.bf16.gmra.mxu0 %v5936
      %v5975 = vpop.f32.mrf.mxu0
      %v5976 = vadd.f32 %v1200, %v5975
      %v5977 = vpop.f32.mrf.mxu0
      %v5978 = vpop.f32.mrf.mxu0
      %v5979 = vpop.f32.mrf.mxu0
      %5980 = vdwg.mxu0
      %5982 = vrot.lane.b32.xlu0 %v2000, 112
      %v5983 = vpop.permute.xlu0 %5982
      %5984 = vrot.lane.b32.xlu0 %v2028, 80
      %v5985 = vpop.permute.xlu0 %5984
      %v5987 = vsel %vm2043, %v5983, 0
      %v5990 = vsel %vm2043, %v5985, 0
      %5992 = vmatprep.subr.bf16.mxu0 0
      %5993 = vmatpush1.bf16.xpose.msra.mxu0 0
      %5994 = vmatprep.subr.bf16.mxu0 0
      %5995 = vmatpush1.bf16.xpose.msra.mxu0 0
      %5996 = vmatprep.subr.bf16.mxu0 0
      %5997 = vmatpush1.bf16.xpose.msra.mxu0 0
      %5998 = vmatprep.subr.bf16.mxu0 0
      %5999 = vmatpush1.bf16.xpose.msra.mxu0 0
      %6000 = vmatprep.subr.bf16.mxu0 0
      %6001 = vmatpush1.bf16.xpose.msra.mxu0 0
      %6002 = vmatprep.subr.bf16.mxu0 0
      %6003 = vmatpush1.bf16.xpose.msra.mxu0 0
      %6004 = vmatprep.subr.bf16.mxu0 0
      %6005 = vmatpush1.bf16.xpose.msra.mxu0 0
      %6006 = vmatprep.subr.bf16.mxu0 0
      %6007 = vmatpush1.bf16.xpose.msra.mxu0 %v5990
      %6008 = vmatprep.subr.bf16.mxu0 0
      %6009 = vmatpush2.bf16.xpose.msra.mxu0 0
      %6010 = vmatprep.subr.bf16.mxu0 0
      %6011 = vmatpush2.bf16.xpose.msra.mxu0 0
      %6012 = vmatprep.subr.bf16.mxu0 0
      %6013 = vmatpush2.bf16.xpose.msra.mxu0 0
      %6014 = vmatprep.subr.bf16.mxu0 0
      %6015 = vmatpush2.bf16.xpose.msra.mxu0 0
      %6016 = vmatprep.subr.bf16.mxu0 0
      %6017 = vmatpush2.bf16.xpose.msra.mxu0 0
      %6018 = vmatprep.subr.bf16.mxu0 0
      %6019 = vmatpush2.bf16.xpose.msra.mxu0 0
      %6020 = vmatprep.subr.bf16.mxu0 0
      %6021 = vmatpush2.bf16.xpose.msra.mxu0 0
      %6022 = vmatprep.subr.bf16.mxu0 0
      %6023 = vmatpush2.bf16.xpose.msra.mxu0 0
      %6024 = vmatprep.mubr.bf16.mxu0 0
      %6025 = vmatmul.mubr.bf16.gmra.mxu0 %v5987
      %v6026 = vpop.f32.mrf.mxu0
      %v6027 = vadd.f32 %v1200, %v6026
      %v6028 = vpop.f32.mrf.mxu0
      %v6029 = vpop.f32.mrf.mxu0
      %v6030 = vpop.f32.mrf.mxu0
      %6031 = vdwg.mxu0
      %6033 = vrot.lane.b32.xlu0 %v2001, 112
      %v6034 = vpop.permute.xlu0 %6033
      %6035 = vrot.lane.b32.xlu0 %v2029, 80
      %v6036 = vpop.permute.xlu0 %6035
      %v6038 = vsel %vm2043, %v6034, 0
      %v6041 = vsel %vm2043, %v6036, 0
      %6043 = vmatprep.subr.bf16.mxu0 0
      %6044 = vmatpush1.bf16.xpose.msra.mxu0 0
      %6045 = vmatprep.subr.bf16.mxu0 0
      %6046 = vmatpush1.bf16.xpose.msra.mxu0 0
      %6047 = vmatprep.subr.bf16.mxu0 0
      %6048 = vmatpush1.bf16.xpose.msra.mxu0 0
      %6049 = vmatprep.subr.bf16.mxu0 0
      %6050 = vmatpush1.bf16.xpose.msra.mxu0 0
      %6051 = vmatprep.subr.bf16.mxu0 0
      %6052 = vmatpush1.bf16.xpose.msra.mxu0 0
      %6053 = vmatprep.subr.bf16.mxu0 0
      %6054 = vmatpush1.bf16.xpose.msra.mxu0 0
      %6055 = vmatprep.subr.bf16.mxu0 0
      %6056 = vmatpush1.bf16.xpose.msra.mxu0 0
      %6057 = vmatprep.subr.bf16.mxu0 0
      %6058 = vmatpush1.bf16.xpose.msra.mxu0 %v6041
      %6059 = vmatprep.subr.bf16.mxu0 0
      %6060 = vmatpush2.bf16.xpose.msra.mxu0 0
      %6061 = vmatprep.subr.bf16.mxu0 0
      %6062 = vmatpush2.bf16.xpose.msra.mxu0 0
      %6063 = vmatprep.subr.bf16.mxu0 0
      %6064 = vmatpush2.bf16.xpose.msra.mxu0 0
      %6065 = vmatprep.subr.bf16.mxu0 0
      %6066 = vmatpush2.bf16.xpose.msra.mxu0 0
      %6067 = vmatprep.subr.bf16.mxu0 0
      %6068 = vmatpush2.bf16.xpose.msra.mxu0 0
      %6069 = vmatprep.subr.bf16.mxu0 0
      %6070 = vmatpush2.bf16.xpose.msra.mxu0 0
      %6071 = vmatprep.subr.bf16.mxu0 0
      %6072 = vmatpush2.bf16.xpose.msra.mxu0 0
      %6073 = vmatprep.subr.bf16.mxu0 0
      %6074 = vmatpush2.bf16.xpose.msra.mxu0 0
      %6075 = vmatprep.mubr.bf16.mxu0 0
      %6076 = vmatmul.mubr.bf16.gmra.mxu0 %v6038
      %v6077 = vpop.f32.mrf.mxu0
      %v6078 = vadd.f32 %v1200, %v6077
      %v6079 = vpop.f32.mrf.mxu0
      %v6080 = vpop.f32.mrf.mxu0
      %v6081 = vpop.f32.mrf.mxu0
      %6082 = vdwg.mxu0
      %6084 = vrot.lane.b32.xlu0 %v2002, 112
      %v6085 = vpop.permute.xlu0 %6084
      %6086 = vrot.lane.b32.xlu0 %v2030, 80
      %v6087 = vpop.permute.xlu0 %6086
      %v6089 = vsel %vm2043, %v6085, 0
      %v6092 = vsel %vm2043, %v6087, 0
      %6094 = vmatprep.subr.bf16.mxu0 0
      %6095 = vmatpush1.bf16.xpose.msra.mxu0 0
      %6096 = vmatprep.subr.bf16.mxu0 0
      %6097 = vmatpush1.bf16.xpose.msra.mxu0 0
      %6098 = vmatprep.subr.bf16.mxu0 0
      %6099 = vmatpush1.bf16.xpose.msra.mxu0 0
      %6100 = vmatprep.subr.bf16.mxu0 0
      %6101 = vmatpush1.bf16.xpose.msra.mxu0 0
      %6102 = vmatprep.subr.bf16.mxu0 0
      %6103 = vmatpush1.bf16.xpose.msra.mxu0 0
      %6104 = vmatprep.subr.bf16.mxu0 0
      %6105 = vmatpush1.bf16.xpose.msra.mxu0 0
      %6106 = vmatprep.subr.bf16.mxu0 0
      %6107 = vmatpush1.bf16.xpose.msra.mxu0 0
      %6108 = vmatprep.subr.bf16.mxu0 0
      %6109 = vmatpush1.bf16.xpose.msra.mxu0 %v6092
      %6110 = vmatprep.subr.bf16.mxu0 0
      %6111 = vmatpush2.bf16.xpose.msra.mxu0 0
      %6112 = vmatprep.subr.bf16.mxu0 0
      %6113 = vmatpush2.bf16.xpose.msra.mxu0 0
      %6114 = vmatprep.subr.bf16.mxu0 0
      %6115 = vmatpush2.bf16.xpose.msra.mxu0 0
      %6116 = vmatprep.subr.bf16.mxu0 0
      %6117 = vmatpush2.bf16.xpose.msra.mxu0 0
      %6118 = vmatprep.subr.bf16.mxu0 0
      %6119 = vmatpush2.bf16.xpose.msra.mxu0 0
      %6120 = vmatprep.subr.bf16.mxu0 0
      %6121 = vmatpush2.bf16.xpose.msra.mxu0 0
      %6122 = vmatprep.subr.bf16.mxu0 0
      %6123 = vmatpush2.bf16.xpose.msra.mxu0 0
      %6124 = vmatprep.subr.bf16.mxu0 0
      %6125 = vmatpush2.bf16.xpose.msra.mxu0 0
      %6126 = vmatprep.mubr.bf16.mxu0 0
      %6127 = vmatmul.mubr.bf16.gmra.mxu0 %v6089
      %v6128 = vpop.f32.mrf.mxu0
      %v6129 = vadd.f32 %v1200, %v6128
      %v6130 = vpop.f32.mrf.mxu0
      %v6131 = vpop.f32.mrf.mxu0
      %v6132 = vpop.f32.mrf.mxu0
      %6133 = vdwg.mxu0
      %6135 = vrot.lane.b32.xlu0 %v2003, 112
      %v6136 = vpop.permute.xlu0 %6135
      %6137 = vrot.lane.b32.xlu0 %v2031, 80
      %v6138 = vpop.permute.xlu0 %6137
      %v6140 = vsel %vm2043, %v6136, 0
      %v6143 = vsel %vm2043, %v6138, 0
      %6145 = vmatprep.subr.bf16.mxu0 0
      %6146 = vmatpush1.bf16.xpose.msra.mxu0 0
      %6147 = vmatprep.subr.bf16.mxu0 0
      %6148 = vmatpush1.bf16.xpose.msra.mxu0 0
      %6149 = vmatprep.subr.bf16.mxu0 0
      %6150 = vmatpush1.bf16.xpose.msra.mxu0 0
      %6151 = vmatprep.subr.bf16.mxu0 0
      %6152 = vmatpush1.bf16.xpose.msra.mxu0 0
      %6153 = vmatprep.subr.bf16.mxu0 0
      %6154 = vmatpush1.bf16.xpose.msra.mxu0 0
      %6155 = vmatprep.subr.bf16.mxu0 0
      %6156 = vmatpush1.bf16.xpose.msra.mxu0 0
      %6157 = vmatprep.subr.bf16.mxu0 0
      %6158 = vmatpush1.bf16.xpose.msra.mxu0 0
      %6159 = vmatprep.subr.bf16.mxu0 0
      %6160 = vmatpush1.bf16.xpose.msra.mxu0 %v6143
      %6161 = vmatprep.subr.bf16.mxu0 0
      %6162 = vmatpush2.bf16.xpose.msra.mxu0 0
      %6163 = vmatprep.subr.bf16.mxu0 0
      %6164 = vmatpush2.bf16.xpose.msra.mxu0 0
      %6165 = vmatprep.subr.bf16.mxu0 0
      %6166 = vmatpush2.bf16.xpose.msra.mxu0 0
      %6167 = vmatprep.subr.bf16.mxu0 0
      %6168 = vmatpush2.bf16.xpose.msra.mxu0 0
      %6169 = vmatprep.subr.bf16.mxu0 0
      %6170 = vmatpush2.bf16.xpose.msra.mxu0 0
      %6171 = vmatprep.subr.bf16.mxu0 0
      %6172 = vmatpush2.bf16.xpose.msra.mxu0 0
      %6173 = vmatprep.subr.bf16.mxu0 0
      %6174 = vmatpush2.bf16.xpose.msra.mxu0 0
      %6175 = vmatprep.subr.bf16.mxu0 0
      %6176 = vmatpush2.bf16.xpose.msra.mxu0 0
      %6177 = vmatprep.mubr.bf16.mxu0 0
      %6178 = vmatmul.mubr.bf16.gmra.mxu0 %v6140
      %v6179 = vpop.f32.mrf.mxu0
      %v6180 = vadd.f32 %v1200, %v6179
      %v6181 = vpop.f32.mrf.mxu0
      %v6182 = vpop.f32.mrf.mxu0
      %v6183 = vpop.f32.mrf.mxu0
      %6184 = vdwg.mxu0
      %6186 = vrot.lane.b32.xlu0 %v2004, 112
      %v6187 = vpop.permute.xlu0 %6186
      %6188 = vrot.lane.b32.xlu0 %v2032, 80
      %v6189 = vpop.permute.xlu0 %6188
      %v6191 = vsel %vm2043, %v6187, 0
      %v6194 = vsel %vm2043, %v6189, 0
      %6196 = vmatprep.subr.bf16.mxu0 0
      %6197 = vmatpush1.bf16.xpose.msra.mxu0 0
      %6198 = vmatprep.subr.bf16.mxu0 0
      %6199 = vmatpush1.bf16.xpose.msra.mxu0 0
      %6200 = vmatprep.subr.bf16.mxu0 0
      %6201 = vmatpush1.bf16.xpose.msra.mxu0 0
      %6202 = vmatprep.subr.bf16.mxu0 0
      %6203 = vmatpush1.bf16.xpose.msra.mxu0 0
      %6204 = vmatprep.subr.bf16.mxu0 0
      %6205 = vmatpush1.bf16.xpose.msra.mxu0 0
      %6206 = vmatprep.subr.bf16.mxu0 0
      %6207 = vmatpush1.bf16.xpose.msra.mxu0 0
      %6208 = vmatprep.subr.bf16.mxu0 0
      %6209 = vmatpush1.bf16.xpose.msra.mxu0 0
      %6210 = vmatprep.subr.bf16.mxu0 0
      %6211 = vmatpush1.bf16.xpose.msra.mxu0 %v6194
      %6212 = vmatprep.subr.bf16.mxu0 0
      %6213 = vmatpush2.bf16.xpose.msra.mxu0 0
      %6214 = vmatprep.subr.bf16.mxu0 0
      %6215 = vmatpush2.bf16.xpose.msra.mxu0 0
      %6216 = vmatprep.subr.bf16.mxu0 0
      %6217 = vmatpush2.bf16.xpose.msra.mxu0 0
      %6218 = vmatprep.subr.bf16.mxu0 0
      %6219 = vmatpush2.bf16.xpose.msra.mxu0 0
      %6220 = vmatprep.subr.bf16.mxu0 0
      %6221 = vmatpush2.bf16.xpose.msra.mxu0 0
      %6222 = vmatprep.subr.bf16.mxu0 0
      %6223 = vmatpush2.bf16.xpose.msra.mxu0 0
      %6224 = vmatprep.subr.bf16.mxu0 0
      %6225 = vmatpush2.bf16.xpose.msra.mxu0 0
      %6226 = vmatprep.subr.bf16.mxu0 0
      %6227 = vmatpush2.bf16.xpose.msra.mxu0 0
      %6228 = vmatprep.mubr.bf16.mxu0 0
      %6229 = vmatmul.mubr.bf16.gmra.mxu0 %v6191
      %v6230 = vpop.f32.mrf.mxu0
      %v6231 = vadd.f32 %v1200, %v6230
      %v6232 = vpop.f32.mrf.mxu0
      %v6233 = vpop.f32.mrf.mxu0
      %v6234 = vpop.f32.mrf.mxu0
      %6235 = vdwg.mxu0
      %6237 = vrot.lane.b32.xlu0 %v2005, 112
      %v6238 = vpop.permute.xlu0 %6237
      %6239 = vrot.lane.b32.xlu0 %v2033, 80
      %v6240 = vpop.permute.xlu0 %6239
      %v6242 = vsel %vm2043, %v6238, 0
      %v6245 = vsel %vm2043, %v6240, 0
      %6247 = vmatprep.subr.bf16.mxu0 0
      %6248 = vmatpush1.bf16.xpose.msra.mxu0 0
      %6249 = vmatprep.subr.bf16.mxu0 0
      %6250 = vmatpush1.bf16.xpose.msra.mxu0 0
      %6251 = vmatprep.subr.bf16.mxu0 0
      %6252 = vmatpush1.bf16.xpose.msra.mxu0 0
      %6253 = vmatprep.subr.bf16.mxu0 0
      %6254 = vmatpush1.bf16.xpose.msra.mxu0 0
      %6255 = vmatprep.subr.bf16.mxu0 0
      %6256 = vmatpush1.bf16.xpose.msra.mxu0 0
      %6257 = vmatprep.subr.bf16.mxu0 0
      %6258 = vmatpush1.bf16.xpose.msra.mxu0 0
      %6259 = vmatprep.subr.bf16.mxu0 0
      %6260 = vmatpush1.bf16.xpose.msra.mxu0 0
      %6261 = vmatprep.subr.bf16.mxu0 0
      %6262 = vmatpush1.bf16.xpose.msra.mxu0 %v6245
      %6263 = vmatprep.subr.bf16.mxu0 0
      %6264 = vmatpush2.bf16.xpose.msra.mxu0 0
      %6265 = vmatprep.subr.bf16.mxu0 0
      %6266 = vmatpush2.bf16.xpose.msra.mxu0 0
      %6267 = vmatprep.subr.bf16.mxu0 0
      %6268 = vmatpush2.bf16.xpose.msra.mxu0 0
      %6269 = vmatprep.subr.bf16.mxu0 0
      %6270 = vmatpush2.bf16.xpose.msra.mxu0 0
      %6271 = vmatprep.subr.bf16.mxu0 0
      %6272 = vmatpush2.bf16.xpose.msra.mxu0 0
      %6273 = vmatprep.subr.bf16.mxu0 0
      %6274 = vmatpush2.bf16.xpose.msra.mxu0 0
      %6275 = vmatprep.subr.bf16.mxu0 0
      %6276 = vmatpush2.bf16.xpose.msra.mxu0 0
      %6277 = vmatprep.subr.bf16.mxu0 0
      %6278 = vmatpush2.bf16.xpose.msra.mxu0 0
      %6279 = vmatprep.mubr.bf16.mxu0 0
      %6280 = vmatmul.mubr.bf16.gmra.mxu0 %v6242
      %v6281 = vpop.f32.mrf.mxu0
      %v6282 = vadd.f32 %v1200, %v6281
      %v6283 = vpop.f32.mrf.mxu0
      %v6284 = vpop.f32.mrf.mxu0
      %v6285 = vpop.f32.mrf.mxu0
      %6286 = vdwg.mxu0
      %6288 = vrot.lane.b32.xlu0 %v2006, 112
      %v6289 = vpop.permute.xlu0 %6288
      %6290 = vrot.lane.b32.xlu0 %v2034, 80
      %v6291 = vpop.permute.xlu0 %6290
      %v6293 = vsel %vm2043, %v6289, 0
      %v6296 = vsel %vm2043, %v6291, 0
      %6298 = vmatprep.subr.bf16.mxu0 0
      %6299 = vmatpush1.bf16.xpose.msra.mxu0 0
      %6300 = vmatprep.subr.bf16.mxu0 0
      %6301 = vmatpush1.bf16.xpose.msra.mxu0 0
      %6302 = vmatprep.subr.bf16.mxu0 0
      %6303 = vmatpush1.bf16.xpose.msra.mxu0 0
      %6304 = vmatprep.subr.bf16.mxu0 0
      %6305 = vmatpush1.bf16.xpose.msra.mxu0 0
      %6306 = vmatprep.subr.bf16.mxu0 0
      %6307 = vmatpush1.bf16.xpose.msra.mxu0 0
      %6308 = vmatprep.subr.bf16.mxu0 0
      %6309 = vmatpush1.bf16.xpose.msra.mxu0 0
      %6310 = vmatprep.subr.bf16.mxu0 0
      %6311 = vmatpush1.bf16.xpose.msra.mxu0 0
      %6312 = vmatprep.subr.bf16.mxu0 0
      %6313 = vmatpush1.bf16.xpose.msra.mxu0 %v6296
      %6314 = vmatprep.subr.bf16.mxu0 0
      %6315 = vmatpush2.bf16.xpose.msra.mxu0 0
      %6316 = vmatprep.subr.bf16.mxu0 0
      %6317 = vmatpush2.bf16.xpose.msra.mxu0 0
      %6318 = vmatprep.subr.bf16.mxu0 0
      %6319 = vmatpush2.bf16.xpose.msra.mxu0 0
      %6320 = vmatprep.subr.bf16.mxu0 0
      %6321 = vmatpush2.bf16.xpose.msra.mxu0 0
      %6322 = vmatprep.subr.bf16.mxu0 0
      %6323 = vmatpush2.bf16.xpose.msra.mxu0 0
      %6324 = vmatprep.subr.bf16.mxu0 0
      %6325 = vmatpush2.bf16.xpose.msra.mxu0 0
      %6326 = vmatprep.subr.bf16.mxu0 0
      %6327 = vmatpush2.bf16.xpose.msra.mxu0 0
      %6328 = vmatprep.subr.bf16.mxu0 0
      %6329 = vmatpush2.bf16.xpose.msra.mxu0 0
      %6330 = vmatprep.mubr.bf16.mxu0 0
      %6331 = vmatmul.mubr.bf16.gmra.mxu0 %v6293
      %v6332 = vpop.f32.mrf.mxu0
      %v6333 = vadd.f32 %v1200, %v6332
      %v6334 = vpop.f32.mrf.mxu0
      %v6335 = vpop.f32.mrf.mxu0
      %v6336 = vpop.f32.mrf.mxu0
      %6337 = vdwg.mxu0
      %6339 = vrot.lane.b32.xlu0 %v2007, 112
      %v6340 = vpop.permute.xlu0 %6339
      %6341 = vrot.lane.b32.xlu0 %v2035, 80
      %v6342 = vpop.permute.xlu0 %6341
      %v6344 = vsel %vm2043, %v6340, 0
      %v6347 = vsel %vm2043, %v6342, 0
      %6349 = vmatprep.subr.bf16.mxu0 0
      %6350 = vmatpush1.bf16.xpose.msra.mxu0 0
      %6351 = vmatprep.subr.bf16.mxu0 0
      %6352 = vmatpush1.bf16.xpose.msra.mxu0 0
      %6353 = vmatprep.subr.bf16.mxu0 0
      %6354 = vmatpush1.bf16.xpose.msra.mxu0 0
      %6355 = vmatprep.subr.bf16.mxu0 0
      %6356 = vmatpush1.bf16.xpose.msra.mxu0 0
      %6357 = vmatprep.subr.bf16.mxu0 0
      %6358 = vmatpush1.bf16.xpose.msra.mxu0 0
      %6359 = vmatprep.subr.bf16.mxu0 0
      %6360 = vmatpush1.bf16.xpose.msra.mxu0 0
      %6361 = vmatprep.subr.bf16.mxu0 0
      %6362 = vmatpush1.bf16.xpose.msra.mxu0 0
      %6363 = vmatprep.subr.bf16.mxu0 0
      %6364 = vmatpush1.bf16.xpose.msra.mxu0 %v6347
      %6365 = vmatprep.subr.bf16.mxu0 0
      %6366 = vmatpush2.bf16.xpose.msra.mxu0 0
      %6367 = vmatprep.subr.bf16.mxu0 0
      %6368 = vmatpush2.bf16.xpose.msra.mxu0 0
      %6369 = vmatprep.subr.bf16.mxu0 0
      %6370 = vmatpush2.bf16.xpose.msra.mxu0 0
      %6371 = vmatprep.subr.bf16.mxu0 0
      %6372 = vmatpush2.bf16.xpose.msra.mxu0 0
      %6373 = vmatprep.subr.bf16.mxu0 0
      %6374 = vmatpush2.bf16.xpose.msra.mxu0 0
      %6375 = vmatprep.subr.bf16.mxu0 0
      %6376 = vmatpush2.bf16.xpose.msra.mxu0 0
      %6377 = vmatprep.subr.bf16.mxu0 0
      %6378 = vmatpush2.bf16.xpose.msra.mxu0 0
      %6379 = vmatprep.subr.bf16.mxu0 0
      %6380 = vmatpush2.bf16.xpose.msra.mxu0 0
      %6381 = vmatprep.mubr.bf16.mxu0 0
      %6382 = vmatmul.mubr.bf16.gmra.mxu0 %v6344
      %v6383 = vpop.f32.mrf.mxu0
      %v6384 = vadd.f32 %v1200, %v6383
      %v6385 = vpop.f32.mrf.mxu0
      %v6386 = vpop.f32.mrf.mxu0
      %v6387 = vpop.f32.mrf.mxu0
      %6388 = vdwg.mxu0
      %6390 = vrot.lane.b32.xlu0 %v2008, 112
      %v6391 = vpop.permute.xlu0 %6390
      %6392 = vrot.lane.b32.xlu0 %v2036, 80
      %v6393 = vpop.permute.xlu0 %6392
      %v6395 = vsel %vm2043, %v6391, 0
      %v6398 = vsel %vm2043, %v6393, 0
      %6400 = vmatprep.subr.bf16.mxu0 0
      %6401 = vmatpush1.bf16.xpose.msra.mxu0 0
      %6402 = vmatprep.subr.bf16.mxu0 0
      %6403 = vmatpush1.bf16.xpose.msra.mxu0 0
      %6404 = vmatprep.subr.bf16.mxu0 0
      %6405 = vmatpush1.bf16.xpose.msra.mxu0 0
      %6406 = vmatprep.subr.bf16.mxu0 0
      %6407 = vmatpush1.bf16.xpose.msra.mxu0 0
      %6408 = vmatprep.subr.bf16.mxu0 0
      %6409 = vmatpush1.bf16.xpose.msra.mxu0 0
      %6410 = vmatprep.subr.bf16.mxu0 0
      %6411 = vmatpush1.bf16.xpose.msra.mxu0 0
      %6412 = vmatprep.subr.bf16.mxu0 0
      %6413 = vmatpush1.bf16.xpose.msra.mxu0 0
      %6414 = vmatprep.subr.bf16.mxu0 0
      %6415 = vmatpush1.bf16.xpose.msra.mxu0 %v6398
      %6416 = vmatprep.subr.bf16.mxu0 0
      %6417 = vmatpush2.bf16.xpose.msra.mxu0 0
      %6418 = vmatprep.subr.bf16.mxu0 0
      %6419 = vmatpush2.bf16.xpose.msra.mxu0 0
      %6420 = vmatprep.subr.bf16.mxu0 0
      %6421 = vmatpush2.bf16.xpose.msra.mxu0 0
      %6422 = vmatprep.subr.bf16.mxu0 0
      %6423 = vmatpush2.bf16.xpose.msra.mxu0 0
      %6424 = vmatprep.subr.bf16.mxu0 0
      %6425 = vmatpush2.bf16.xpose.msra.mxu0 0
      %6426 = vmatprep.subr.bf16.mxu0 0
      %6427 = vmatpush2.bf16.xpose.msra.mxu0 0
      %6428 = vmatprep.subr.bf16.mxu0 0
      %6429 = vmatpush2.bf16.xpose.msra.mxu0 0
      %6430 = vmatprep.subr.bf16.mxu0 0
      %6431 = vmatpush2.bf16.xpose.msra.mxu0 0
      %6432 = vmatprep.mubr.bf16.mxu0 0
      %6433 = vmatmul.mubr.bf16.gmra.mxu0 %v6395
      %v6434 = vpop.f32.mrf.mxu0
      %v6435 = vadd.f32 %v1200, %v6434
      %v6436 = vpop.f32.mrf.mxu0
      %v6437 = vpop.f32.mrf.mxu0
      %v6438 = vpop.f32.mrf.mxu0
      %6439 = vdwg.mxu0
      %6441 = vrot.lane.b32.xlu0 %v2009, 112
      %v6442 = vpop.permute.xlu0 %6441
      %6443 = vrot.lane.b32.xlu0 %v2037, 80
      %v6444 = vpop.permute.xlu0 %6443
      %v6446 = vsel %vm2043, %v6442, 0
      %v6449 = vsel %vm2043, %v6444, 0
      %6451 = vmatprep.subr.bf16.mxu0 0
      %6452 = vmatpush1.bf16.xpose.msra.mxu0 0
      %6453 = vmatprep.subr.bf16.mxu0 0
      %6454 = vmatpush1.bf16.xpose.msra.mxu0 0
      %6455 = vmatprep.subr.bf16.mxu0 0
      %6456 = vmatpush1.bf16.xpose.msra.mxu0 0
      %6457 = vmatprep.subr.bf16.mxu0 0
      %6458 = vmatpush1.bf16.xpose.msra.mxu0 0
      %6459 = vmatprep.subr.bf16.mxu0 0
      %6460 = vmatpush1.bf16.xpose.msra.mxu0 0
      %6461 = vmatprep.subr.bf16.mxu0 0
      %6462 = vmatpush1.bf16.xpose.msra.mxu0 0
      %6463 = vmatprep.subr.bf16.mxu0 0
      %6464 = vmatpush1.bf16.xpose.msra.mxu0 0
      %6465 = vmatprep.subr.bf16.mxu0 0
      %6466 = vmatpush1.bf16.xpose.msra.mxu0 %v6449
      %6467 = vmatprep.subr.bf16.mxu0 0
      %6468 = vmatpush2.bf16.xpose.msra.mxu0 0
      %6469 = vmatprep.subr.bf16.mxu0 0
      %6470 = vmatpush2.bf16.xpose.msra.mxu0 0
      %6471 = vmatprep.subr.bf16.mxu0 0
      %6472 = vmatpush2.bf16.xpose.msra.mxu0 0
      %6473 = vmatprep.subr.bf16.mxu0 0
      %6474 = vmatpush2.bf16.xpose.msra.mxu0 0
      %6475 = vmatprep.subr.bf16.mxu0 0
      %6476 = vmatpush2.bf16.xpose.msra.mxu0 0
      %6477 = vmatprep.subr.bf16.mxu0 0
      %6478 = vmatpush2.bf16.xpose.msra.mxu0 0
      %6479 = vmatprep.subr.bf16.mxu0 0
      %6480 = vmatpush2.bf16.xpose.msra.mxu0 0
      %6481 = vmatprep.subr.bf16.mxu0 0
      %6482 = vmatpush2.bf16.xpose.msra.mxu0 0
      %6483 = vmatprep.mubr.bf16.mxu0 0
      %6484 = vmatmul.mubr.bf16.gmra.mxu0 %v6446
      %v6485 = vpop.f32.mrf.mxu0
      %v6486 = vadd.f32 %v1200, %v6485
      %v6487 = vpop.f32.mrf.mxu0
      %v6488 = vpop.f32.mrf.mxu0
      %v6489 = vpop.f32.mrf.mxu0
      %6490 = vdwg.mxu0
      %6492 = vrot.lane.b32.xlu0 %v2010, 112
      %v6493 = vpop.permute.xlu0 %6492
      %6494 = vrot.lane.b32.xlu0 %v2038, 80
      %v6495 = vpop.permute.xlu0 %6494
      %v6497 = vsel %vm2043, %v6493, 0
      %v6500 = vsel %vm2043, %v6495, 0
      %6502 = vmatprep.subr.bf16.mxu0 0
      %6503 = vmatpush1.bf16.xpose.msra.mxu0 0
      %6504 = vmatprep.subr.bf16.mxu0 0
      %6505 = vmatpush1.bf16.xpose.msra.mxu0 0
      %6506 = vmatprep.subr.bf16.mxu0 0
      %6507 = vmatpush1.bf16.xpose.msra.mxu0 0
      %6508 = vmatprep.subr.bf16.mxu0 0
      %6509 = vmatpush1.bf16.xpose.msra.mxu0 0
      %6510 = vmatprep.subr.bf16.mxu0 0
      %6511 = vmatpush1.bf16.xpose.msra.mxu0 0
      %6512 = vmatprep.subr.bf16.mxu0 0
      %6513 = vmatpush1.bf16.xpose.msra.mxu0 0
      %6514 = vmatprep.subr.bf16.mxu0 0
      %6515 = vmatpush1.bf16.xpose.msra.mxu0 0
      %6516 = vmatprep.subr.bf16.mxu0 0
      %6517 = vmatpush1.bf16.xpose.msra.mxu0 %v6500
      %6518 = vmatprep.subr.bf16.mxu0 0
      %6519 = vmatpush2.bf16.xpose.msra.mxu0 0
      %6520 = vmatprep.subr.bf16.mxu0 0
      %6521 = vmatpush2.bf16.xpose.msra.mxu0 0
      %6522 = vmatprep.subr.bf16.mxu0 0
      %6523 = vmatpush2.bf16.xpose.msra.mxu0 0
      %6524 = vmatprep.subr.bf16.mxu0 0
      %6525 = vmatpush2.bf16.xpose.msra.mxu0 0
      %6526 = vmatprep.subr.bf16.mxu0 0
      %6527 = vmatpush2.bf16.xpose.msra.mxu0 0
      %6528 = vmatprep.subr.bf16.mxu0 0
      %6529 = vmatpush2.bf16.xpose.msra.mxu0 0
      %6530 = vmatprep.subr.bf16.mxu0 0
      %6531 = vmatpush2.bf16.xpose.msra.mxu0 0
      %6532 = vmatprep.subr.bf16.mxu0 0
      %6533 = vmatpush2.bf16.xpose.msra.mxu0 0
      %6534 = vmatprep.mubr.bf16.mxu0 0
      %6535 = vmatmul.mubr.bf16.gmra.mxu0 %v6497
      %v6536 = vpop.f32.mrf.mxu0
      %v6537 = vadd.f32 %v1200, %v6536
      %v6538 = vpop.f32.mrf.mxu0
      %v6539 = vpop.f32.mrf.mxu0
      %v6540 = vpop.f32.mrf.mxu0
      %6541 = vdwg.mxu0
      %6543 = vrot.lane.b32.xlu0 %v2011, 112
      %v6544 = vpop.permute.xlu0 %6543
      %6545 = vrot.lane.b32.xlu0 %v2039, 80
      %v6546 = vpop.permute.xlu0 %6545
      %v6548 = vsel %vm2043, %v6544, 0
      %v6551 = vsel %vm2043, %v6546, 0
      %6553 = vmatprep.subr.bf16.mxu0 0
      %6554 = vmatpush1.bf16.xpose.msra.mxu0 0
      %6555 = vmatprep.subr.bf16.mxu0 0
      %6556 = vmatpush1.bf16.xpose.msra.mxu0 0
      %6557 = vmatprep.subr.bf16.mxu0 0
      %6558 = vmatpush1.bf16.xpose.msra.mxu0 0
      %6559 = vmatprep.subr.bf16.mxu0 0
      %6560 = vmatpush1.bf16.xpose.msra.mxu0 0
      %6561 = vmatprep.subr.bf16.mxu0 0
      %6562 = vmatpush1.bf16.xpose.msra.mxu0 0
      %6563 = vmatprep.subr.bf16.mxu0 0
      %6564 = vmatpush1.bf16.xpose.msra.mxu0 0
      %6565 = vmatprep.subr.bf16.mxu0 0
      %6566 = vmatpush1.bf16.xpose.msra.mxu0 0
      %6567 = vmatprep.subr.bf16.mxu0 0
      %6568 = vmatpush1.bf16.xpose.msra.mxu0 %v6551
      %6569 = vmatprep.subr.bf16.mxu0 0
      %6570 = vmatpush2.bf16.xpose.msra.mxu0 0
      %6571 = vmatprep.subr.bf16.mxu0 0
      %6572 = vmatpush2.bf16.xpose.msra.mxu0 0
      %6573 = vmatprep.subr.bf16.mxu0 0
      %6574 = vmatpush2.bf16.xpose.msra.mxu0 0
      %6575 = vmatprep.subr.bf16.mxu0 0
      %6576 = vmatpush2.bf16.xpose.msra.mxu0 0
      %6577 = vmatprep.subr.bf16.mxu0 0
      %6578 = vmatpush2.bf16.xpose.msra.mxu0 0
      %6579 = vmatprep.subr.bf16.mxu0 0
      %6580 = vmatpush2.bf16.xpose.msra.mxu0 0
      %6581 = vmatprep.subr.bf16.mxu0 0
      %6582 = vmatpush2.bf16.xpose.msra.mxu0 0
      %6583 = vmatprep.subr.bf16.mxu0 0
      %6584 = vmatpush2.bf16.xpose.msra.mxu0 0
      %6585 = vmatprep.mubr.bf16.mxu0 0
      %6586 = vmatmul.mubr.bf16.gmra.mxu0 %v6548
      %v6587 = vpop.f32.mrf.mxu0
      %v6588 = vadd.f32 %v1200, %v6587
      %v6589 = vpop.f32.mrf.mxu0
      %v6590 = vpop.f32.mrf.mxu0
      %v6591 = vpop.f32.mrf.mxu0
      %6592 = vdwg.mxu0
      %v6593 = vsel %vm3413, %v5211, -inf
      %6594 = vmax.xlane.f32.xlu0 %v6593
      %v6595 = vpop.xlane.xlu0 %6594
      %v6596 = vsel %vm3413, %v5262, -inf
      %6597 = vmax.xlane.f32.xlu0 %v6596
      %v6598 = vpop.xlane.xlu0 %6597
      %v6599 = vsel %vm3413, %v5313, -inf
      %6600 = vmax.xlane.f32.xlu0 %v6599
      %v6601 = vpop.xlane.xlu0 %6600
      %v6602 = vsel %vm3413, %v5364, -inf
      %6603 = vmax.xlane.f32.xlu0 %v6602
      %v6604 = vpop.xlane.xlu0 %6603
      %v6605 = vsel %vm3413, %v5415, -inf
      %6606 = vmax.xlane.f32.xlu0 %v6605
      %v6607 = vpop.xlane.xlu0 %6606
      %v6608 = vsel %vm3413, %v5466, -inf
      %6609 = vmax.xlane.f32.xlu0 %v6608
      %v6610 = vpop.xlane.xlu0 %6609
      %v6611 = vsel %vm3413, %v5517, -inf
      %6612 = vmax.xlane.f32.xlu0 %v6611
      %v6613 = vpop.xlane.xlu0 %6612
      %v6614 = vsel %vm3413, %v5568, -inf
      %6615 = vmax.xlane.f32.xlu0 %v6614
      %v6616 = vpop.xlane.xlu0 %6615
      %v6617 = vsel %vm3413, %v5619, -inf
      %6618 = vmax.xlane.f32.xlu0 %v6617
      %v6619 = vpop.xlane.xlu0 %6618
      %v6620 = vsel %vm3413, %v5670, -inf
      %6621 = vmax.xlane.f32.xlu0 %v6620
      %v6622 = vpop.xlane.xlu0 %6621
      %v6623 = vsel %vm3413, %v5721, -inf
      %6624 = vmax.xlane.f32.xlu0 %v6623
      %v6625 = vpop.xlane.xlu0 %6624
      %v6626 = vsel %vm3413, %v5772, -inf
      %6627 = vmax.xlane.f32.xlu0 %v6626
      %v6628 = vpop.xlane.xlu0 %6627
      %v6629 = vsel %vm3413, %v5823, -inf
      %6630 = vmax.xlane.f32.xlu0 %v6629
      %v6631 = vpop.xlane.xlu0 %6630
      %v6632 = vsel %vm3413, %v5874, -inf
      %6633 = vmax.xlane.f32.xlu0 %v6632
      %v6634 = vpop.xlane.xlu0 %6633
      %v6635 = vsel %vm3413, %v5925, -inf
      %6636 = vmax.xlane.f32.xlu0 %v6635
      %v6637 = vpop.xlane.xlu0 %6636
      %v6638 = vsel %vm3413, %v5976, -inf
      %6639 = vmax.xlane.f32.xlu0 %v6638
      %v6640 = vpop.xlane.xlu0 %6639
      %v6641 = vsel %vm3413, %v6027, -inf
      %6642 = vmax.xlane.f32.xlu0 %v6641
      %v6643 = vpop.xlane.xlu0 %6642
      %v6644 = vsel %vm3413, %v6078, -inf
      %6645 = vmax.xlane.f32.xlu0 %v6644
      %v6646 = vpop.xlane.xlu0 %6645
      %v6647 = vsel %vm3413, %v6129, -inf
      %6648 = vmax.xlane.f32.xlu0 %v6647
      %v6649 = vpop.xlane.xlu0 %6648
      %v6650 = vsel %vm3413, %v6180, -inf
      %6651 = vmax.xlane.f32.xlu0 %v6650
      %v6652 = vpop.xlane.xlu0 %6651
      %v6653 = vsel %vm3413, %v6231, -inf
      %6654 = vmax.xlane.f32.xlu0 %v6653
      %v6655 = vpop.xlane.xlu0 %6654
      %v6656 = vsel %vm3413, %v6282, -inf
      %6657 = vmax.xlane.f32.xlu0 %v6656
      %v6658 = vpop.xlane.xlu0 %6657
      %v6659 = vsel %vm3413, %v6333, -inf
      %6660 = vmax.xlane.f32.xlu0 %v6659
      %v6661 = vpop.xlane.xlu0 %6660
      %v6662 = vsel %vm3413, %v6384, -inf
      %6663 = vmax.xlane.f32.xlu0 %v6662
      %v6664 = vpop.xlane.xlu0 %6663
      %v6665 = vsel %vm3413, %v6435, -inf
      %6666 = vmax.xlane.f32.xlu0 %v6665
      %v6667 = vpop.xlane.xlu0 %6666
      %v6668 = vsel %vm3413, %v6486, -inf
      %6669 = vmax.xlane.f32.xlu0 %v6668
      %v6670 = vpop.xlane.xlu0 %6669
      %v6671 = vsel %vm3413, %v6537, -inf
      %6672 = vmax.xlane.f32.xlu0 %v6671
      %v6673 = vpop.xlane.xlu0 %6672
      %v6674 = vsel %vm3413, %v6588, -inf
      %6675 = vmax.xlane.f32.xlu0 %v6674
      %v6676 = vpop.xlane.xlu0 %6675
      %v6677 = vsub.f32 %v5211, %v6595
      %v6678 = vsub.f32 %v5262, %v6598
      %v6679 = vsub.f32 %v5313, %v6601
      %v6680 = vsub.f32 %v5364, %v6604
      %v6681 = vsub.f32 %v5415, %v6607
      %v6682 = vsub.f32 %v5466, %v6610
      %v6683 = vsub.f32 %v5517, %v6613
      %v6684 = vsub.f32 %v5568, %v6616
      %v6685 = vsub.f32 %v5619, %v6619
      %v6686 = vsub.f32 %v5670, %v6622
      %v6687 = vsub.f32 %v5721, %v6625
      %v6688 = vsub.f32 %v5772, %v6628
      %v6689 = vsub.f32 %v5823, %v6631
      %v6690 = vsub.f32 %v5874, %v6634
      %v6691 = vsub.f32 %v5925, %v6637
      %v6692 = vsub.f32 %v5976, %v6640
      %v6693 = vsub.f32 %v6027, %v6643
      %v6694 = vsub.f32 %v6078, %v6646
      %v6695 = vsub.f32 %v6129, %v6649
      %v6696 = vsub.f32 %v6180, %v6652
      %v6697 = vsub.f32 %v6231, %v6655
      %v6698 = vsub.f32 %v6282, %v6658
      %v6699 = vsub.f32 %v6333, %v6661
      %v6700 = vsub.f32 %v6384, %v6664
      %v6701 = vsub.f32 %v6435, %v6667
      %v6702 = vsub.f32 %v6486, %v6670
      %v6703 = vsub.f32 %v6537, %v6673
      %v6704 = vsub.f32 %v6588, %v6676
      %v6705 = vmul.f32 %v6677, 1.442695
      %v6706 = vpow.pop %v6705
      %v6707 = vmul.f32 %v6678, 1.442695
      %v6708 = vpow.pop %v6707
      %v6709 = vmul.f32 %v6679, 1.442695
      %v6710 = vpow.pop %v6709
      %v6711 = vmul.f32 %v6680, 1.442695
      %v6712 = vpow.pop %v6711
      %v6713 = vmul.f32 %v6681, 1.442695
      %v6714 = vpow.pop %v6713
      %v6715 = vmul.f32 %v6682, 1.442695
      %v6716 = vpow.pop %v6715
      %v6717 = vmul.f32 %v6683, 1.442695
      %v6718 = vpow.pop %v6717
      %v6719 = vmul.f32 %v6684, 1.442695
      %v6720 = vpow.pop %v6719
      %v6721 = vmul.f32 %v6685, 1.442695
      %v6722 = vpow.pop %v6721
      %v6723 = vmul.f32 %v6686, 1.442695
      %v6724 = vpow.pop %v6723
      %v6725 = vmul.f32 %v6687, 1.442695
      %v6726 = vpow.pop %v6725
      %v6727 = vmul.f32 %v6688, 1.442695
      %v6728 = vpow.pop %v6727
      %v6729 = vmul.f32 %v6689, 1.442695
      %v6730 = vpow.pop %v6729
      %v6731 = vmul.f32 %v6690, 1.442695
      %v6732 = vpow.pop %v6731
      %v6733 = vmul.f32 %v6691, 1.442695
      %v6734 = vpow.pop %v6733
      %v6735 = vmul.f32 %v6692, 1.442695
      %v6736 = vpow.pop %v6735
      %v6737 = vmul.f32 %v6693, 1.442695
      %v6738 = vpow.pop %v6737
      %v6739 = vmul.f32 %v6694, 1.442695
      %v6740 = vpow.pop %v6739
      %v6741 = vmul.f32 %v6695, 1.442695
      %v6742 = vpow.pop %v6741
      %v6743 = vmul.f32 %v6696, 1.442695
      %v6744 = vpow.pop %v6743
      %v6745 = vmul.f32 %v6697, 1.442695
      %v6746 = vpow.pop %v6745
      %v6747 = vmul.f32 %v6698, 1.442695
      %v6748 = vpow.pop %v6747
      %v6749 = vmul.f32 %v6699, 1.442695
      %v6750 = vpow.pop %v6749
      %v6751 = vmul.f32 %v6700, 1.442695
      %v6752 = vpow.pop %v6751
      %v6753 = vmul.f32 %v6701, 1.442695
      %v6754 = vpow.pop %v6753
      %v6755 = vmul.f32 %v6702, 1.442695
      %v6756 = vpow.pop %v6755
      %v6757 = vmul.f32 %v6703, 1.442695
      %v6758 = vpow.pop %v6757
      %v6759 = vmul.f32 %v6704, 1.442695
      %v6760 = vpow.pop %v6759
      %v6761 = vsel %vm3413, %v6706, 0.0
      %6762 = vadd.xlane.f32.xlu0 %v6761
      %v6763 = vpop.xlane.xlu0 %6762
      %v6764 = vsel %vm3413, %v6708, 0.0
      %6765 = vadd.xlane.f32.xlu0 %v6764
      %v6766 = vpop.xlane.xlu0 %6765
      %v6767 = vsel %vm3413, %v6710, 0.0
      %6768 = vadd.xlane.f32.xlu0 %v6767
      %v6769 = vpop.xlane.xlu0 %6768
      %v6770 = vsel %vm3413, %v6712, 0.0
      %6771 = vadd.xlane.f32.xlu0 %v6770
      %v6772 = vpop.xlane.xlu0 %6771
      %v6773 = vsel %vm3413, %v6714, 0.0
      %6774 = vadd.xlane.f32.xlu0 %v6773
      %v6775 = vpop.xlane.xlu0 %6774
      %v6776 = vsel %vm3413, %v6716, 0.0
      %6777 = vadd.xlane.f32.xlu0 %v6776
      %v6778 = vpop.xlane.xlu0 %6777
      %v6779 = vsel %vm3413, %v6718, 0.0
      %6780 = vadd.xlane.f32.xlu0 %v6779
      %v6781 = vpop.xlane.xlu0 %6780
      %v6782 = vsel %vm3413, %v6720, 0.0
      %6783 = vadd.xlane.f32.xlu0 %v6782
      %v6784 = vpop.xlane.xlu0 %6783
      %v6785 = vsel %vm3413, %v6722, 0.0
      %6786 = vadd.xlane.f32.xlu0 %v6785
      %v6787 = vpop.xlane.xlu0 %6786
      %v6788 = vsel %vm3413, %v6724, 0.0
      %6789 = vadd.xlane.f32.xlu0 %v6788
      %v6790 = vpop.xlane.xlu0 %6789
      %v6791 = vsel %vm3413, %v6726, 0.0
      %6792 = vadd.xlane.f32.xlu0 %v6791
      %v6793 = vpop.xlane.xlu0 %6792
      %v6794 = vsel %vm3413, %v6728, 0.0
      %6795 = vadd.xlane.f32.xlu0 %v6794
      %v6796 = vpop.xlane.xlu0 %6795
      %v6797 = vsel %vm3413, %v6730, 0.0
      %6798 = vadd.xlane.f32.xlu0 %v6797
      %v6799 = vpop.xlane.xlu0 %6798
      %v6800 = vsel %vm3413, %v6732, 0.0
      %6801 = vadd.xlane.f32.xlu0 %v6800
      %v6802 = vpop.xlane.xlu0 %6801
      %v6803 = vsel %vm3413, %v6734, 0.0
      %6804 = vadd.xlane.f32.xlu0 %v6803
      %v6805 = vpop.xlane.xlu0 %6804
      %v6806 = vsel %vm3413, %v6736, 0.0
      %6807 = vadd.xlane.f32.xlu0 %v6806
      %v6808 = vpop.xlane.xlu0 %6807
      %v6809 = vsel %vm3413, %v6738, 0.0
      %6810 = vadd.xlane.f32.xlu0 %v6809
      %v6811 = vpop.xlane.xlu0 %6810
      %v6812 = vsel %vm3413, %v6740, 0.0
      %6813 = vadd.xlane.f32.xlu0 %v6812
      %v6814 = vpop.xlane.xlu0 %6813
      %v6815 = vsel %vm3413, %v6742, 0.0
      %6816 = vadd.xlane.f32.xlu0 %v6815
      %v6817 = vpop.xlane.xlu0 %6816
      %v6818 = vsel %vm3413, %v6744, 0.0
      %6819 = vadd.xlane.f32.xlu0 %v6818
      %v6820 = vpop.xlane.xlu0 %6819
      %v6821 = vsel %vm3413, %v6746, 0.0
      %6822 = vadd.xlane.f32.xlu0 %v6821
      %v6823 = vpop.xlane.xlu0 %6822
      %v6824 = vsel %vm3413, %v6748, 0.0
      %6825 = vadd.xlane.f32.xlu0 %v6824
      %v6826 = vpop.xlane.xlu0 %6825
      %v6827 = vsel %vm3413, %v6750, 0.0
      %6828 = vadd.xlane.f32.xlu0 %v6827
      %v6829 = vpop.xlane.xlu0 %6828
      %v6830 = vsel %vm3413, %v6752, 0.0
      %6831 = vadd.xlane.f32.xlu0 %v6830
      %v6832 = vpop.xlane.xlu0 %6831
      %v6833 = vsel %vm3413, %v6754, 0.0
      %6834 = vadd.xlane.f32.xlu0 %v6833
      %v6835 = vpop.xlane.xlu0 %6834
      %v6836 = vsel %vm3413, %v6756, 0.0
      %6837 = vadd.xlane.f32.xlu0 %v6836
      %v6838 = vpop.xlane.xlu0 %6837
      %v6839 = vsel %vm3413, %v6758, 0.0
      %6840 = vadd.xlane.f32.xlu0 %v6839
      %v6841 = vpop.xlane.xlu0 %6840
      %v6842 = vsel %vm3413, %v6760, 0.0
      %6843 = vadd.xlane.f32.xlu0 %v6842
      %v6844 = vpop.xlane.xlu0 %6843
      %v6845 = vrcp.pop %v6763
      %v6846 = vmul.f32 %v6706, %v6845
      %v6847 = vrcp.pop %v6766
      %v6848 = vmul.f32 %v6708, %v6847
      %v6849 = vrcp.pop %v6769
      %v6850 = vmul.f32 %v6710, %v6849
      %v6851 = vrcp.pop %v6772
      %v6852 = vmul.f32 %v6712, %v6851
      %v6853 = vrcp.pop %v6775
      %v6854 = vmul.f32 %v6714, %v6853
      %v6855 = vrcp.pop %v6778
      %v6856 = vmul.f32 %v6716, %v6855
      %v6857 = vrcp.pop %v6781
      %v6858 = vmul.f32 %v6718, %v6857
      %v6859 = vrcp.pop %v6784
      %v6860 = vmul.f32 %v6720, %v6859
      %v6861 = vrcp.pop %v6787
      %v6862 = vmul.f32 %v6722, %v6861
      %v6863 = vrcp.pop %v6790
      %v6864 = vmul.f32 %v6724, %v6863
      %v6865 = vrcp.pop %v6793
      %v6866 = vmul.f32 %v6726, %v6865
      %v6867 = vrcp.pop %v6796
      %v6868 = vmul.f32 %v6728, %v6867
      %v6869 = vrcp.pop %v6799
      %v6870 = vmul.f32 %v6730, %v6869
      %v6871 = vrcp.pop %v6802
      %v6872 = vmul.f32 %v6732, %v6871
      %v6873 = vrcp.pop %v6805
      %v6874 = vmul.f32 %v6734, %v6873
      %v6875 = vrcp.pop %v6808
      %v6876 = vmul.f32 %v6736, %v6875
      %v6877 = vrcp.pop %v6811
      %v6878 = vmul.f32 %v6738, %v6877
      %v6879 = vrcp.pop %v6814
      %v6880 = vmul.f32 %v6740, %v6879
      %v6881 = vrcp.pop %v6817
      %v6882 = vmul.f32 %v6742, %v6881
      %v6883 = vrcp.pop %v6820
      %v6884 = vmul.f32 %v6744, %v6883
      %v6885 = vrcp.pop %v6823
      %v6886 = vmul.f32 %v6746, %v6885
      %v6887 = vrcp.pop %v6826
      %v6888 = vmul.f32 %v6748, %v6887
      %v6889 = vrcp.pop %v6829
      %v6890 = vmul.f32 %v6750, %v6889
      %v6891 = vrcp.pop %v6832
      %v6892 = vmul.f32 %v6752, %v6891
      %v6893 = vrcp.pop %v6835
      %v6894 = vmul.f32 %v6754, %v6893
      %v6895 = vrcp.pop %v6838
      %v6896 = vmul.f32 %v6756, %v6895
      %v6897 = vrcp.pop %v6841
      %v6898 = vmul.f32 %v6758, %v6897
      %v6899 = vrcp.pop %v6844
      %v6900 = vmul.f32 %v6760, %v6899
      %v6901 = vpack.c.bf16 %v6846, %v6846
      %v6902 = vpack.c.bf16 %v6848, %v6848
      %v6903 = vpack.c.bf16 %v6850, %v6850
      %v6904 = vpack.c.bf16 %v6852, %v6852
      %v6905 = vpack.c.bf16 %v6854, %v6854
      %v6906 = vpack.c.bf16 %v6856, %v6856
      %v6907 = vpack.c.bf16 %v6858, %v6858
      %v6908 = vpack.c.bf16 %v6860, %v6860
      %v6909 = vpack.c.bf16 %v6862, %v6862
      %v6910 = vpack.c.bf16 %v6864, %v6864
      %v6911 = vpack.c.bf16 %v6866, %v6866
      %v6912 = vpack.c.bf16 %v6868, %v6868
      %v6913 = vpack.c.bf16 %v6870, %v6870
      %v6914 = vpack.c.bf16 %v6872, %v6872
      %v6915 = vpack.c.bf16 %v6874, %v6874
      %v6916 = vpack.c.bf16 %v6876, %v6876
      %v6917 = vpack.c.bf16 %v6878, %v6878
      %v6918 = vpack.c.bf16 %v6880, %v6880
      %v6919 = vpack.c.bf16 %v6882, %v6882
      %v6920 = vpack.c.bf16 %v6884, %v6884
      %v6921 = vpack.c.bf16 %v6886, %v6886
      %v6922 = vpack.c.bf16 %v6888, %v6888
      %v6923 = vpack.c.bf16 %v6890, %v6890
      %v6924 = vpack.c.bf16 %v6892, %v6892
      %v6925 = vpack.c.bf16 %v6894, %v6894
      %v6926 = vpack.c.bf16 %v6896, %v6896
      %v6927 = vpack.c.bf16 %v6898, %v6898
      %v6928 = vpack.c.bf16 %v6900, %v6900
      %6929 = vrot.lane.b32.xlu0 %v3750, 48
      %v6930 = vpop.permute.xlu0 %6929
      %v6932 = vsel %vm3413, %v6901, 0
      %v6935 = vsel %vm3784, %v6930, 0
      %6937 = vmatprep.subr.bf16.mxu0 0
      %6938 = vmatpush1.bf16.msra.mxu0 0
      %6939 = vmatprep.subr.bf16.mxu0 0
      %6940 = vmatpush1.bf16.msra.mxu0 0
      %6941 = vmatprep.subr.bf16.mxu0 0
      %6942 = vmatpush1.bf16.msra.mxu0 0
      %6943 = vmatprep.subr.bf16.mxu0 0
      %6944 = vmatpush1.bf16.msra.mxu0 0
      %6945 = vmatprep.subr.bf16.mxu0 0
      %6946 = vmatpush1.bf16.msra.mxu0 0
      %6947 = vmatprep.subr.bf16.mxu0 0
      %6948 = vmatpush1.bf16.msra.mxu0 0
      %6949 = vmatprep.subr.bf16.mxu0 0
      %6950 = vmatpush1.bf16.msra.mxu0 0
      %6951 = vmatprep.subr.bf16.mxu0 0
      %6952 = vmatpush1.bf16.msra.mxu0 %v6935
      %6953 = vmatprep.subr.bf16.mxu0 0
      %6954 = vmatpush2.bf16.msra.mxu0 0
      %6955 = vmatprep.subr.bf16.mxu0 0
      %6956 = vmatpush2.bf16.msra.mxu0 0
      %6957 = vmatprep.subr.bf16.mxu0 0
      %6958 = vmatpush2.bf16.msra.mxu0 0
      %6959 = vmatprep.subr.bf16.mxu0 0
      %6960 = vmatpush2.bf16.msra.mxu0 0
      %6961 = vmatprep.subr.bf16.mxu0 0
      %6962 = vmatpush2.bf16.msra.mxu0 0
      %6963 = vmatprep.subr.bf16.mxu0 0
      %6964 = vmatpush2.bf16.msra.mxu0 0
      %6965 = vmatprep.subr.bf16.mxu0 0
      %6966 = vmatpush2.bf16.msra.mxu0 0
      %6967 = vmatprep.subr.bf16.mxu0 0
      %6968 = vmatpush2.bf16.msra.mxu0 0
      %6969 = vmatprep.mubr.bf16.mxu0 0
      %6970 = vmatmul.mubr.bf16.gmra.mxu0 %v6932
      %v6971 = vpop.f32.mrf.mxu0
      %v6972 = vadd.f32 0.0, %v6971
      %v6973 = vpop.f32.mrf.mxu0
      %v6974 = vpop.f32.mrf.mxu0
      %v6975 = vpop.f32.mrf.mxu0
      %6976 = vdwg.mxu0
      %6977 = vrot.lane.b32.xlu0 %v3751, 48
      %v6978 = vpop.permute.xlu0 %6977
      %v6980 = vsel %vm3413, %v6902, 0
      %v6983 = vsel %vm3784, %v6978, 0
      %6985 = vmatprep.subr.bf16.mxu0 0
      %6986 = vmatpush1.bf16.msra.mxu0 0
      %6987 = vmatprep.subr.bf16.mxu0 0
      %6988 = vmatpush1.bf16.msra.mxu0 0
      %6989 = vmatprep.subr.bf16.mxu0 0
      %6990 = vmatpush1.bf16.msra.mxu0 0
      %6991 = vmatprep.subr.bf16.mxu0 0
      %6992 = vmatpush1.bf16.msra.mxu0 0
      %6993 = vmatprep.subr.bf16.mxu0 0
      %6994 = vmatpush1.bf16.msra.mxu0 0
      %6995 = vmatprep.subr.bf16.mxu0 0
      %6996 = vmatpush1.bf16.msra.mxu0 0
      %6997 = vmatprep.subr.bf16.mxu0 0
      %6998 = vmatpush1.bf16.msra.mxu0 0
      %6999 = vmatprep.subr.bf16.mxu0 0
      %7000 = vmatpush1.bf16.msra.mxu0 %v6983
      %7001 = vmatprep.subr.bf16.mxu0 0
      %7002 = vmatpush2.bf16.msra.mxu0 0
      %7003 = vmatprep.subr.bf16.mxu0 0
      %7004 = vmatpush2.bf16.msra.mxu0 0
      %7005 = vmatprep.subr.bf16.mxu0 0
      %7006 = vmatpush2.bf16.msra.mxu0 0
      %7007 = vmatprep.subr.bf16.mxu0 0
      %7008 = vmatpush2.bf16.msra.mxu0 0
      %7009 = vmatprep.subr.bf16.mxu0 0
      %7010 = vmatpush2.bf16.msra.mxu0 0
      %7011 = vmatprep.subr.bf16.mxu0 0
      %7012 = vmatpush2.bf16.msra.mxu0 0
      %7013 = vmatprep.subr.bf16.mxu0 0
      %7014 = vmatpush2.bf16.msra.mxu0 0
      %7015 = vmatprep.subr.bf16.mxu0 0
      %7016 = vmatpush2.bf16.msra.mxu0 0
      %7017 = vmatprep.mubr.bf16.mxu0 0
      %7018 = vmatmul.mubr.bf16.gmra.mxu0 %v6980
      %v7019 = vpop.f32.mrf.mxu0
      %v7020 = vadd.f32 0.0, %v7019
      %v7021 = vpop.f32.mrf.mxu0
      %v7022 = vpop.f32.mrf.mxu0
      %v7023 = vpop.f32.mrf.mxu0
      %7024 = vdwg.mxu0
      %7025 = vrot.lane.b32.xlu0 %v3752, 48
      %v7026 = vpop.permute.xlu0 %7025
      %v7028 = vsel %vm3413, %v6903, 0
      %v7031 = vsel %vm3784, %v7026, 0
      %7033 = vmatprep.subr.bf16.mxu0 0
      %7034 = vmatpush1.bf16.msra.mxu0 0
      %7035 = vmatprep.subr.bf16.mxu0 0
      %7036 = vmatpush1.bf16.msra.mxu0 0
      %7037 = vmatprep.subr.bf16.mxu0 0
      %7038 = vmatpush1.bf16.msra.mxu0 0
      %7039 = vmatprep.subr.bf16.mxu0 0
      %7040 = vmatpush1.bf16.msra.mxu0 0
      %7041 = vmatprep.subr.bf16.mxu0 0
      %7042 = vmatpush1.bf16.msra.mxu0 0
      %7043 = vmatprep.subr.bf16.mxu0 0
      %7044 = vmatpush1.bf16.msra.mxu0 0
      %7045 = vmatprep.subr.bf16.mxu0 0
      %7046 = vmatpush1.bf16.msra.mxu0 0
      %7047 = vmatprep.subr.bf16.mxu0 0
      %7048 = vmatpush1.bf16.msra.mxu0 %v7031
      %7049 = vmatprep.subr.bf16.mxu0 0
      %7050 = vmatpush2.bf16.msra.mxu0 0
      %7051 = vmatprep.subr.bf16.mxu0 0
      %7052 = vmatpush2.bf16.msra.mxu0 0
      %7053 = vmatprep.subr.bf16.mxu0 0
      %7054 = vmatpush2.bf16.msra.mxu0 0
      %7055 = vmatprep.subr.bf16.mxu0 0
      %7056 = vmatpush2.bf16.msra.mxu0 0
      %7057 = vmatprep.subr.bf16.mxu0 0
      %7058 = vmatpush2.bf16.msra.mxu0 0
      %7059 = vmatprep.subr.bf16.mxu0 0
      %7060 = vmatpush2.bf16.msra.mxu0 0
      %7061 = vmatprep.subr.bf16.mxu0 0
      %7062 = vmatpush2.bf16.msra.mxu0 0
      %7063 = vmatprep.subr.bf16.mxu0 0
      %7064 = vmatpush2.bf16.msra.mxu0 0
      %7065 = vmatprep.mubr.bf16.mxu0 0
      %7066 = vmatmul.mubr.bf16.gmra.mxu0 %v7028
      %v7067 = vpop.f32.mrf.mxu0
      %v7068 = vadd.f32 0.0, %v7067
      %v7069 = vpop.f32.mrf.mxu0
      %v7070 = vpop.f32.mrf.mxu0
      %v7071 = vpop.f32.mrf.mxu0
      %7072 = vdwg.mxu0
      %7073 = vrot.lane.b32.xlu0 %v3753, 48
      %v7074 = vpop.permute.xlu0 %7073
      %v7076 = vsel %vm3413, %v6904, 0
      %v7079 = vsel %vm3784, %v7074, 0
      %7081 = vmatprep.subr.bf16.mxu0 0
      %7082 = vmatpush1.bf16.msra.mxu0 0
      %7083 = vmatprep.subr.bf16.mxu0 0
      %7084 = vmatpush1.bf16.msra.mxu0 0
      %7085 = vmatprep.subr.bf16.mxu0 0
      %7086 = vmatpush1.bf16.msra.mxu0 0
      %7087 = vmatprep.subr.bf16.mxu0 0
      %7088 = vmatpush1.bf16.msra.mxu0 0
      %7089 = vmatprep.subr.bf16.mxu0 0
      %7090 = vmatpush1.bf16.msra.mxu0 0
      %7091 = vmatprep.subr.bf16.mxu0 0
      %7092 = vmatpush1.bf16.msra.mxu0 0
      %7093 = vmatprep.subr.bf16.mxu0 0
      %7094 = vmatpush1.bf16.msra.mxu0 0
      %7095 = vmatprep.subr.bf16.mxu0 0
      %7096 = vmatpush1.bf16.msra.mxu0 %v7079
      %7097 = vmatprep.subr.bf16.mxu0 0
      %7098 = vmatpush2.bf16.msra.mxu0 0
      %7099 = vmatprep.subr.bf16.mxu0 0
      %7100 = vmatpush2.bf16.msra.mxu0 0
      %7101 = vmatprep.subr.bf16.mxu0 0
      %7102 = vmatpush2.bf16.msra.mxu0 0
      %7103 = vmatprep.subr.bf16.mxu0 0
      %7104 = vmatpush2.bf16.msra.mxu0 0
      %7105 = vmatprep.subr.bf16.mxu0 0
      %7106 = vmatpush2.bf16.msra.mxu0 0
      %7107 = vmatprep.subr.bf16.mxu0 0
      %7108 = vmatpush2.bf16.msra.mxu0 0
      %7109 = vmatprep.subr.bf16.mxu0 0
      %7110 = vmatpush2.bf16.msra.mxu0 0
      %7111 = vmatprep.subr.bf16.mxu0 0
      %7112 = vmatpush2.bf16.msra.mxu0 0
      %7113 = vmatprep.mubr.bf16.mxu0 0
      %7114 = vmatmul.mubr.bf16.gmra.mxu0 %v7076
      %v7115 = vpop.f32.mrf.mxu0
      %v7116 = vadd.f32 0.0, %v7115
      %v7117 = vpop.f32.mrf.mxu0
      %v7118 = vpop.f32.mrf.mxu0
      %v7119 = vpop.f32.mrf.mxu0
      %7120 = vdwg.mxu0
      %7121 = vrot.lane.b32.xlu0 %v3754, 48
      %v7122 = vpop.permute.xlu0 %7121
      %v7124 = vsel %vm3413, %v6905, 0
      %v7127 = vsel %vm3784, %v7122, 0
      %7129 = vmatprep.subr.bf16.mxu0 0
      %7130 = vmatpush1.bf16.msra.mxu0 0
      %7131 = vmatprep.subr.bf16.mxu0 0
      %7132 = vmatpush1.bf16.msra.mxu0 0
      %7133 = vmatprep.subr.bf16.mxu0 0
      %7134 = vmatpush1.bf16.msra.mxu0 0
      %7135 = vmatprep.subr.bf16.mxu0 0
      %7136 = vmatpush1.bf16.msra.mxu0 0
      %7137 = vmatprep.subr.bf16.mxu0 0
      %7138 = vmatpush1.bf16.msra.mxu0 0
      %7139 = vmatprep.subr.bf16.mxu0 0
      %7140 = vmatpush1.bf16.msra.mxu0 0
      %7141 = vmatprep.subr.bf16.mxu0 0
      %7142 = vmatpush1.bf16.msra.mxu0 0
      %7143 = vmatprep.subr.bf16.mxu0 0
      %7144 = vmatpush1.bf16.msra.mxu0 %v7127
      %7145 = vmatprep.subr.bf16.mxu0 0
      %7146 = vmatpush2.bf16.msra.mxu0 0
      %7147 = vmatprep.subr.bf16.mxu0 0
      %7148 = vmatpush2.bf16.msra.mxu0 0
      %7149 = vmatprep.subr.bf16.mxu0 0
      %7150 = vmatpush2.bf16.msra.mxu0 0
      %7151 = vmatprep.subr.bf16.mxu0 0
      %7152 = vmatpush2.bf16.msra.mxu0 0
      %7153 = vmatprep.subr.bf16.mxu0 0
      %7154 = vmatpush2.bf16.msra.mxu0 0
      %7155 = vmatprep.subr.bf16.mxu0 0
      %7156 = vmatpush2.bf16.msra.mxu0 0
      %7157 = vmatprep.subr.bf16.mxu0 0
      %7158 = vmatpush2.bf16.msra.mxu0 0
      %7159 = vmatprep.subr.bf16.mxu0 0
      %7160 = vmatpush2.bf16.msra.mxu0 0
      %7161 = vmatprep.mubr.bf16.mxu0 0
      %7162 = vmatmul.mubr.bf16.gmra.mxu0 %v7124
      %v7163 = vpop.f32.mrf.mxu0
      %v7164 = vadd.f32 0.0, %v7163
      %v7165 = vpop.f32.mrf.mxu0
      %v7166 = vpop.f32.mrf.mxu0
      %v7167 = vpop.f32.mrf.mxu0
      %7168 = vdwg.mxu0
      %7169 = vrot.lane.b32.xlu0 %v3755, 48
      %v7170 = vpop.permute.xlu0 %7169
      %v7172 = vsel %vm3413, %v6906, 0
      %v7175 = vsel %vm3784, %v7170, 0
      %7177 = vmatprep.subr.bf16.mxu0 0
      %7178 = vmatpush1.bf16.msra.mxu0 0
      %7179 = vmatprep.subr.bf16.mxu0 0
      %7180 = vmatpush1.bf16.msra.mxu0 0
      %7181 = vmatprep.subr.bf16.mxu0 0
      %7182 = vmatpush1.bf16.msra.mxu0 0
      %7183 = vmatprep.subr.bf16.mxu0 0
      %7184 = vmatpush1.bf16.msra.mxu0 0
      %7185 = vmatprep.subr.bf16.mxu0 0
      %7186 = vmatpush1.bf16.msra.mxu0 0
      %7187 = vmatprep.subr.bf16.mxu0 0
      %7188 = vmatpush1.bf16.msra.mxu0 0
      %7189 = vmatprep.subr.bf16.mxu0 0
      %7190 = vmatpush1.bf16.msra.mxu0 0
      %7191 = vmatprep.subr.bf16.mxu0 0
      %7192 = vmatpush1.bf16.msra.mxu0 %v7175
      %7193 = vmatprep.subr.bf16.mxu0 0
      %7194 = vmatpush2.bf16.msra.mxu0 0
      %7195 = vmatprep.subr.bf16.mxu0 0
      %7196 = vmatpush2.bf16.msra.mxu0 0
      %7197 = vmatprep.subr.bf16.mxu0 0
      %7198 = vmatpush2.bf16.msra.mxu0 0
      %7199 = vmatprep.subr.bf16.mxu0 0
      %7200 = vmatpush2.bf16.msra.mxu0 0
      %7201 = vmatprep.subr.bf16.mxu0 0
      %7202 = vmatpush2.bf16.msra.mxu0 0
      %7203 = vmatprep.subr.bf16.mxu0 0
      %7204 = vmatpush2.bf16.msra.mxu0 0
      %7205 = vmatprep.subr.bf16.mxu0 0
      %7206 = vmatpush2.bf16.msra.mxu0 0
      %7207 = vmatprep.subr.bf16.mxu0 0
      %7208 = vmatpush2.bf16.msra.mxu0 0
      %7209 = vmatprep.mubr.bf16.mxu0 0
      %7210 = vmatmul.mubr.bf16.gmra.mxu0 %v7172
      %v7211 = vpop.f32.mrf.mxu0
      %v7212 = vadd.f32 0.0, %v7211
      %v7213 = vpop.f32.mrf.mxu0
      %v7214 = vpop.f32.mrf.mxu0
      %v7215 = vpop.f32.mrf.mxu0
      %7216 = vdwg.mxu0
      %7217 = vrot.lane.b32.xlu0 %v3756, 48
      %v7218 = vpop.permute.xlu0 %7217
      %v7220 = vsel %vm3413, %v6907, 0
      %v7223 = vsel %vm3784, %v7218, 0
      %7225 = vmatprep.subr.bf16.mxu0 0
      %7226 = vmatpush1.bf16.msra.mxu0 0
      %7227 = vmatprep.subr.bf16.mxu0 0
      %7228 = vmatpush1.bf16.msra.mxu0 0
      %7229 = vmatprep.subr.bf16.mxu0 0
      %7230 = vmatpush1.bf16.msra.mxu0 0
      %7231 = vmatprep.subr.bf16.mxu0 0
      %7232 = vmatpush1.bf16.msra.mxu0 0
      %7233 = vmatprep.subr.bf16.mxu0 0
      %7234 = vmatpush1.bf16.msra.mxu0 0
      %7235 = vmatprep.subr.bf16.mxu0 0
      %7236 = vmatpush1.bf16.msra.mxu0 0
      %7237 = vmatprep.subr.bf16.mxu0 0
      %7238 = vmatpush1.bf16.msra.mxu0 0
      %7239 = vmatprep.subr.bf16.mxu0 0
      %7240 = vmatpush1.bf16.msra.mxu0 %v7223
      %7241 = vmatprep.subr.bf16.mxu0 0
      %7242 = vmatpush2.bf16.msra.mxu0 0
      %7243 = vmatprep.subr.bf16.mxu0 0
      %7244 = vmatpush2.bf16.msra.mxu0 0
      %7245 = vmatprep.subr.bf16.mxu0 0
      %7246 = vmatpush2.bf16.msra.mxu0 0
      %7247 = vmatprep.subr.bf16.mxu0 0
      %7248 = vmatpush2.bf16.msra.mxu0 0
      %7249 = vmatprep.subr.bf16.mxu0 0
      %7250 = vmatpush2.bf16.msra.mxu0 0
      %7251 = vmatprep.subr.bf16.mxu0 0
      %7252 = vmatpush2.bf16.msra.mxu0 0
      %7253 = vmatprep.subr.bf16.mxu0 0
      %7254 = vmatpush2.bf16.msra.mxu0 0
      %7255 = vmatprep.subr.bf16.mxu0 0
      %7256 = vmatpush2.bf16.msra.mxu0 0
      %7257 = vmatprep.mubr.bf16.mxu0 0
      %7258 = vmatmul.mubr.bf16.gmra.mxu0 %v7220
      %v7259 = vpop.f32.mrf.mxu0
      %v7260 = vadd.f32 0.0, %v7259
      %v7261 = vpop.f32.mrf.mxu0
      %v7262 = vpop.f32.mrf.mxu0
      %v7263 = vpop.f32.mrf.mxu0
      %7264 = vdwg.mxu0
      %7265 = vrot.lane.b32.xlu0 %v3757, 48
      %v7266 = vpop.permute.xlu0 %7265
      %v7268 = vsel %vm3413, %v6908, 0
      %v7271 = vsel %vm3784, %v7266, 0
      %7273 = vmatprep.subr.bf16.mxu0 0
      %7274 = vmatpush1.bf16.msra.mxu0 0
      %7275 = vmatprep.subr.bf16.mxu0 0
      %7276 = vmatpush1.bf16.msra.mxu0 0
      %7277 = vmatprep.subr.bf16.mxu0 0
      %7278 = vmatpush1.bf16.msra.mxu0 0
      %7279 = vmatprep.subr.bf16.mxu0 0
      %7280 = vmatpush1.bf16.msra.mxu0 0
      %7281 = vmatprep.subr.bf16.mxu0 0
      %7282 = vmatpush1.bf16.msra.mxu0 0
      %7283 = vmatprep.subr.bf16.mxu0 0
      %7284 = vmatpush1.bf16.msra.mxu0 0
      %7285 = vmatprep.subr.bf16.mxu0 0
      %7286 = vmatpush1.bf16.msra.mxu0 0
      %7287 = vmatprep.subr.bf16.mxu0 0
      %7288 = vmatpush1.bf16.msra.mxu0 %v7271
      %7289 = vmatprep.subr.bf16.mxu0 0
      %7290 = vmatpush2.bf16.msra.mxu0 0
      %7291 = vmatprep.subr.bf16.mxu0 0
      %7292 = vmatpush2.bf16.msra.mxu0 0
      %7293 = vmatprep.subr.bf16.mxu0 0
      %7294 = vmatpush2.bf16.msra.mxu0 0
      %7295 = vmatprep.subr.bf16.mxu0 0
      %7296 = vmatpush2.bf16.msra.mxu0 0
      %7297 = vmatprep.subr.bf16.mxu0 0
      %7298 = vmatpush2.bf16.msra.mxu0 0
      %7299 = vmatprep.subr.bf16.mxu0 0
      %7300 = vmatpush2.bf16.msra.mxu0 0
      %7301 = vmatprep.subr.bf16.mxu0 0
      %7302 = vmatpush2.bf16.msra.mxu0 0
      %7303 = vmatprep.subr.bf16.mxu0 0
      %7304 = vmatpush2.bf16.msra.mxu0 0
      %7305 = vmatprep.mubr.bf16.mxu0 0
      %7306 = vmatmul.mubr.bf16.gmra.mxu0 %v7268
      %v7307 = vpop.f32.mrf.mxu0
      %v7308 = vadd.f32 0.0, %v7307
      %v7309 = vpop.f32.mrf.mxu0
      %v7310 = vpop.f32.mrf.mxu0
      %v7311 = vpop.f32.mrf.mxu0
      %7312 = vdwg.mxu0
      %7313 = vrot.lane.b32.xlu0 %v3758, 48
      %v7314 = vpop.permute.xlu0 %7313
      %v7316 = vsel %vm3413, %v6909, 0
      %v7319 = vsel %vm3784, %v7314, 0
      %7321 = vmatprep.subr.bf16.mxu0 0
      %7322 = vmatpush1.bf16.msra.mxu0 0
      %7323 = vmatprep.subr.bf16.mxu0 0
      %7324 = vmatpush1.bf16.msra.mxu0 0
      %7325 = vmatprep.subr.bf16.mxu0 0
      %7326 = vmatpush1.bf16.msra.mxu0 0
      %7327 = vmatprep.subr.bf16.mxu0 0
      %7328 = vmatpush1.bf16.msra.mxu0 0
      %7329 = vmatprep.subr.bf16.mxu0 0
      %7330 = vmatpush1.bf16.msra.mxu0 0
      %7331 = vmatprep.subr.bf16.mxu0 0
      %7332 = vmatpush1.bf16.msra.mxu0 0
      %7333 = vmatprep.subr.bf16.mxu0 0
      %7334 = vmatpush1.bf16.msra.mxu0 0
      %7335 = vmatprep.subr.bf16.mxu0 0
      %7336 = vmatpush1.bf16.msra.mxu0 %v7319
      %7337 = vmatprep.subr.bf16.mxu0 0
      %7338 = vmatpush2.bf16.msra.mxu0 0
      %7339 = vmatprep.subr.bf16.mxu0 0
      %7340 = vmatpush2.bf16.msra.mxu0 0
      %7341 = vmatprep.subr.bf16.mxu0 0
      %7342 = vmatpush2.bf16.msra.mxu0 0
      %7343 = vmatprep.subr.bf16.mxu0 0
      %7344 = vmatpush2.bf16.msra.mxu0 0
      %7345 = vmatprep.subr.bf16.mxu0 0
      %7346 = vmatpush2.bf16.msra.mxu0 0
      %7347 = vmatprep.subr.bf16.mxu0 0
      %7348 = vmatpush2.bf16.msra.mxu0 0
      %7349 = vmatprep.subr.bf16.mxu0 0
      %7350 = vmatpush2.bf16.msra.mxu0 0
      %7351 = vmatprep.subr.bf16.mxu0 0
      %7352 = vmatpush2.bf16.msra.mxu0 0
      %7353 = vmatprep.mubr.bf16.mxu0 0
      %7354 = vmatmul.mubr.bf16.gmra.mxu0 %v7316
      %v7355 = vpop.f32.mrf.mxu0
      %v7356 = vadd.f32 0.0, %v7355
      %v7357 = vpop.f32.mrf.mxu0
      %v7358 = vpop.f32.mrf.mxu0
      %v7359 = vpop.f32.mrf.mxu0
      %7360 = vdwg.mxu0
      %7361 = vrot.lane.b32.xlu0 %v3759, 48
      %v7362 = vpop.permute.xlu0 %7361
      %v7364 = vsel %vm3413, %v6910, 0
      %v7367 = vsel %vm3784, %v7362, 0
      %7369 = vmatprep.subr.bf16.mxu0 0
      %7370 = vmatpush1.bf16.msra.mxu0 0
      %7371 = vmatprep.subr.bf16.mxu0 0
      %7372 = vmatpush1.bf16.msra.mxu0 0
      %7373 = vmatprep.subr.bf16.mxu0 0
      %7374 = vmatpush1.bf16.msra.mxu0 0
      %7375 = vmatprep.subr.bf16.mxu0 0
      %7376 = vmatpush1.bf16.msra.mxu0 0
      %7377 = vmatprep.subr.bf16.mxu0 0
      %7378 = vmatpush1.bf16.msra.mxu0 0
      %7379 = vmatprep.subr.bf16.mxu0 0
      %7380 = vmatpush1.bf16.msra.mxu0 0
      %7381 = vmatprep.subr.bf16.mxu0 0
      %7382 = vmatpush1.bf16.msra.mxu0 0
      %7383 = vmatprep.subr.bf16.mxu0 0
      %7384 = vmatpush1.bf16.msra.mxu0 %v7367
      %7385 = vmatprep.subr.bf16.mxu0 0
      %7386 = vmatpush2.bf16.msra.mxu0 0
      %7387 = vmatprep.subr.bf16.mxu0 0
      %7388 = vmatpush2.bf16.msra.mxu0 0
      %7389 = vmatprep.subr.bf16.mxu0 0
      %7390 = vmatpush2.bf16.msra.mxu0 0
      %7391 = vmatprep.subr.bf16.mxu0 0
      %7392 = vmatpush2.bf16.msra.mxu0 0
      %7393 = vmatprep.subr.bf16.mxu0 0
      %7394 = vmatpush2.bf16.msra.mxu0 0
      %7395 = vmatprep.subr.bf16.mxu0 0
      %7396 = vmatpush2.bf16.msra.mxu0 0
      %7397 = vmatprep.subr.bf16.mxu0 0
      %7398 = vmatpush2.bf16.msra.mxu0 0
      %7399 = vmatprep.subr.bf16.mxu0 0
      %7400 = vmatpush2.bf16.msra.mxu0 0
      %7401 = vmatprep.mubr.bf16.mxu0 0
      %7402 = vmatmul.mubr.bf16.gmra.mxu0 %v7364
      %v7403 = vpop.f32.mrf.mxu0
      %v7404 = vadd.f32 0.0, %v7403
      %v7405 = vpop.f32.mrf.mxu0
      %v7406 = vpop.f32.mrf.mxu0
      %v7407 = vpop.f32.mrf.mxu0
      %7408 = vdwg.mxu0
      %7409 = vrot.lane.b32.xlu0 %v3760, 48
      %v7410 = vpop.permute.xlu0 %7409
      %v7412 = vsel %vm3413, %v6911, 0
      %v7415 = vsel %vm3784, %v7410, 0
      %7417 = vmatprep.subr.bf16.mxu0 0
      %7418 = vmatpush1.bf16.msra.mxu0 0
      %7419 = vmatprep.subr.bf16.mxu0 0
      %7420 = vmatpush1.bf16.msra.mxu0 0
      %7421 = vmatprep.subr.bf16.mxu0 0
      %7422 = vmatpush1.bf16.msra.mxu0 0
      %7423 = vmatprep.subr.bf16.mxu0 0
      %7424 = vmatpush1.bf16.msra.mxu0 0
      %7425 = vmatprep.subr.bf16.mxu0 0
      %7426 = vmatpush1.bf16.msra.mxu0 0
      %7427 = vmatprep.subr.bf16.mxu0 0
      %7428 = vmatpush1.bf16.msra.mxu0 0
      %7429 = vmatprep.subr.bf16.mxu0 0
      %7430 = vmatpush1.bf16.msra.mxu0 0
      %7431 = vmatprep.subr.bf16.mxu0 0
      %7432 = vmatpush1.bf16.msra.mxu0 %v7415
      %7433 = vmatprep.subr.bf16.mxu0 0
      %7434 = vmatpush2.bf16.msra.mxu0 0
      %7435 = vmatprep.subr.bf16.mxu0 0
      %7436 = vmatpush2.bf16.msra.mxu0 0
      %7437 = vmatprep.subr.bf16.mxu0 0
      %7438 = vmatpush2.bf16.msra.mxu0 0
      %7439 = vmatprep.subr.bf16.mxu0 0
      %7440 = vmatpush2.bf16.msra.mxu0 0
      %7441 = vmatprep.subr.bf16.mxu0 0
      %7442 = vmatpush2.bf16.msra.mxu0 0
      %7443 = vmatprep.subr.bf16.mxu0 0
      %7444 = vmatpush2.bf16.msra.mxu0 0
      %7445 = vmatprep.subr.bf16.mxu0 0
      %7446 = vmatpush2.bf16.msra.mxu0 0
      %7447 = vmatprep.subr.bf16.mxu0 0
      %7448 = vmatpush2.bf16.msra.mxu0 0
      %7449 = vmatprep.mubr.bf16.mxu0 0
      %7450 = vmatmul.mubr.bf16.gmra.mxu0 %v7412
      %v7451 = vpop.f32.mrf.mxu0
      %v7452 = vadd.f32 0.0, %v7451
      %v7453 = vpop.f32.mrf.mxu0
      %v7454 = vpop.f32.mrf.mxu0
      %v7455 = vpop.f32.mrf.mxu0
      %7456 = vdwg.mxu0
      %7457 = vrot.lane.b32.xlu0 %v3761, 48
      %v7458 = vpop.permute.xlu0 %7457
      %v7460 = vsel %vm3413, %v6912, 0
      %v7463 = vsel %vm3784, %v7458, 0
      %7465 = vmatprep.subr.bf16.mxu0 0
      %7466 = vmatpush1.bf16.msra.mxu0 0
      %7467 = vmatprep.subr.bf16.mxu0 0
      %7468 = vmatpush1.bf16.msra.mxu0 0
      %7469 = vmatprep.subr.bf16.mxu0 0
      %7470 = vmatpush1.bf16.msra.mxu0 0
      %7471 = vmatprep.subr.bf16.mxu0 0
      %7472 = vmatpush1.bf16.msra.mxu0 0
      %7473 = vmatprep.subr.bf16.mxu0 0
      %7474 = vmatpush1.bf16.msra.mxu0 0
      %7475 = vmatprep.subr.bf16.mxu0 0
      %7476 = vmatpush1.bf16.msra.mxu0 0
      %7477 = vmatprep.subr.bf16.mxu0 0
      %7478 = vmatpush1.bf16.msra.mxu0 0
      %7479 = vmatprep.subr.bf16.mxu0 0
      %7480 = vmatpush1.bf16.msra.mxu0 %v7463
      %7481 = vmatprep.subr.bf16.mxu0 0
      %7482 = vmatpush2.bf16.msra.mxu0 0
      %7483 = vmatprep.subr.bf16.mxu0 0
      %7484 = vmatpush2.bf16.msra.mxu0 0
      %7485 = vmatprep.subr.bf16.mxu0 0
      %7486 = vmatpush2.bf16.msra.mxu0 0
      %7487 = vmatprep.subr.bf16.mxu0 0
      %7488 = vmatpush2.bf16.msra.mxu0 0
      %7489 = vmatprep.subr.bf16.mxu0 0
      %7490 = vmatpush2.bf16.msra.mxu0 0
      %7491 = vmatprep.subr.bf16.mxu0 0
      %7492 = vmatpush2.bf16.msra.mxu0 0
      %7493 = vmatprep.subr.bf16.mxu0 0
      %7494 = vmatpush2.bf16.msra.mxu0 0
      %7495 = vmatprep.subr.bf16.mxu0 0
      %7496 = vmatpush2.bf16.msra.mxu0 0
      %7497 = vmatprep.mubr.bf16.mxu0 0
      %7498 = vmatmul.mubr.bf16.gmra.mxu0 %v7460
      %v7499 = vpop.f32.mrf.mxu0
      %v7500 = vadd.f32 0.0, %v7499
      %v7501 = vpop.f32.mrf.mxu0
      %v7502 = vpop.f32.mrf.mxu0
      %v7503 = vpop.f32.mrf.mxu0
      %7504 = vdwg.mxu0
      %7505 = vrot.lane.b32.xlu0 %v3762, 48
      %v7506 = vpop.permute.xlu0 %7505
      %v7508 = vsel %vm3413, %v6913, 0
      %v7511 = vsel %vm3784, %v7506, 0
      %7513 = vmatprep.subr.bf16.mxu0 0
      %7514 = vmatpush1.bf16.msra.mxu0 0
      %7515 = vmatprep.subr.bf16.mxu0 0
      %7516 = vmatpush1.bf16.msra.mxu0 0
      %7517 = vmatprep.subr.bf16.mxu0 0
      %7518 = vmatpush1.bf16.msra.mxu0 0
      %7519 = vmatprep.subr.bf16.mxu0 0
      %7520 = vmatpush1.bf16.msra.mxu0 0
      %7521 = vmatprep.subr.bf16.mxu0 0
      %7522 = vmatpush1.bf16.msra.mxu0 0
      %7523 = vmatprep.subr.bf16.mxu0 0
      %7524 = vmatpush1.bf16.msra.mxu0 0
      %7525 = vmatprep.subr.bf16.mxu0 0
      %7526 = vmatpush1.bf16.msra.mxu0 0
      %7527 = vmatprep.subr.bf16.mxu0 0
      %7528 = vmatpush1.bf16.msra.mxu0 %v7511
      %7529 = vmatprep.subr.bf16.mxu0 0
      %7530 = vmatpush2.bf16.msra.mxu0 0
      %7531 = vmatprep.subr.bf16.mxu0 0
      %7532 = vmatpush2.bf16.msra.mxu0 0
      %7533 = vmatprep.subr.bf16.mxu0 0
      %7534 = vmatpush2.bf16.msra.mxu0 0
      %7535 = vmatprep.subr.bf16.mxu0 0
      %7536 = vmatpush2.bf16.msra.mxu0 0
      %7537 = vmatprep.subr.bf16.mxu0 0
      %7538 = vmatpush2.bf16.msra.mxu0 0
      %7539 = vmatprep.subr.bf16.mxu0 0
      %7540 = vmatpush2.bf16.msra.mxu0 0
      %7541 = vmatprep.subr.bf16.mxu0 0
      %7542 = vmatpush2.bf16.msra.mxu0 0
      %7543 = vmatprep.subr.bf16.mxu0 0
      %7544 = vmatpush2.bf16.msra.mxu0 0
      %7545 = vmatprep.mubr.bf16.mxu0 0
      %7546 = vmatmul.mubr.bf16.gmra.mxu0 %v7508
      %v7547 = vpop.f32.mrf.mxu0
      %v7548 = vadd.f32 0.0, %v7547
      %v7549 = vpop.f32.mrf.mxu0
      %v7550 = vpop.f32.mrf.mxu0
      %v7551 = vpop.f32.mrf.mxu0
      %7552 = vdwg.mxu0
      %7553 = vrot.lane.b32.xlu0 %v3763, 48
      %v7554 = vpop.permute.xlu0 %7553
      %v7556 = vsel %vm3413, %v6914, 0
      %v7559 = vsel %vm3784, %v7554, 0
      %7561 = vmatprep.subr.bf16.mxu0 0
      %7562 = vmatpush1.bf16.msra.mxu0 0
      %7563 = vmatprep.subr.bf16.mxu0 0
      %7564 = vmatpush1.bf16.msra.mxu0 0
      %7565 = vmatprep.subr.bf16.mxu0 0
      %7566 = vmatpush1.bf16.msra.mxu0 0
      %7567 = vmatprep.subr.bf16.mxu0 0
      %7568 = vmatpush1.bf16.msra.mxu0 0
      %7569 = vmatprep.subr.bf16.mxu0 0
      %7570 = vmatpush1.bf16.msra.mxu0 0
      %7571 = vmatprep.subr.bf16.mxu0 0
      %7572 = vmatpush1.bf16.msra.mxu0 0
      %7573 = vmatprep.subr.bf16.mxu0 0
      %7574 = vmatpush1.bf16.msra.mxu0 0
      %7575 = vmatprep.subr.bf16.mxu0 0
      %7576 = vmatpush1.bf16.msra.mxu0 %v7559
      %7577 = vmatprep.subr.bf16.mxu0 0
      %7578 = vmatpush2.bf16.msra.mxu0 0
      %7579 = vmatprep.subr.bf16.mxu0 0
      %7580 = vmatpush2.bf16.msra.mxu0 0
      %7581 = vmatprep.subr.bf16.mxu0 0
      %7582 = vmatpush2.bf16.msra.mxu0 0
      %7583 = vmatprep.subr.bf16.mxu0 0
      %7584 = vmatpush2.bf16.msra.mxu0 0
      %7585 = vmatprep.subr.bf16.mxu0 0
      %7586 = vmatpush2.bf16.msra.mxu0 0
      %7587 = vmatprep.subr.bf16.mxu0 0
      %7588 = vmatpush2.bf16.msra.mxu0 0
      %7589 = vmatprep.subr.bf16.mxu0 0
      %7590 = vmatpush2.bf16.msra.mxu0 0
      %7591 = vmatprep.subr.bf16.mxu0 0
      %7592 = vmatpush2.bf16.msra.mxu0 0
      %7593 = vmatprep.mubr.bf16.mxu0 0
      %7594 = vmatmul.mubr.bf16.gmra.mxu0 %v7556
      %v7595 = vpop.f32.mrf.mxu0
      %v7596 = vadd.f32 0.0, %v7595
      %v7597 = vpop.f32.mrf.mxu0
      %v7598 = vpop.f32.mrf.mxu0
      %v7599 = vpop.f32.mrf.mxu0
      %7600 = vdwg.mxu0
      %7601 = vrot.lane.b32.xlu0 %v3764, 48
      %v7602 = vpop.permute.xlu0 %7601
      %v7604 = vsel %vm3413, %v6915, 0
      %v7607 = vsel %vm3784, %v7602, 0
      %7609 = vmatprep.subr.bf16.mxu0 0
      %7610 = vmatpush1.bf16.msra.mxu0 0
      %7611 = vmatprep.subr.bf16.mxu0 0
      %7612 = vmatpush1.bf16.msra.mxu0 0
      %7613 = vmatprep.subr.bf16.mxu0 0
      %7614 = vmatpush1.bf16.msra.mxu0 0
      %7615 = vmatprep.subr.bf16.mxu0 0
      %7616 = vmatpush1.bf16.msra.mxu0 0
      %7617 = vmatprep.subr.bf16.mxu0 0
      %7618 = vmatpush1.bf16.msra.mxu0 0
      %7619 = vmatprep.subr.bf16.mxu0 0
      %7620 = vmatpush1.bf16.msra.mxu0 0
      %7621 = vmatprep.subr.bf16.mxu0 0
      %7622 = vmatpush1.bf16.msra.mxu0 0
      %7623 = vmatprep.subr.bf16.mxu0 0
      %7624 = vmatpush1.bf16.msra.mxu0 %v7607
      %7625 = vmatprep.subr.bf16.mxu0 0
      %7626 = vmatpush2.bf16.msra.mxu0 0
      %7627 = vmatprep.subr.bf16.mxu0 0
      %7628 = vmatpush2.bf16.msra.mxu0 0
      %7629 = vmatprep.subr.bf16.mxu0 0
      %7630 = vmatpush2.bf16.msra.mxu0 0
      %7631 = vmatprep.subr.bf16.mxu0 0
      %7632 = vmatpush2.bf16.msra.mxu0 0
      %7633 = vmatprep.subr.bf16.mxu0 0
      %7634 = vmatpush2.bf16.msra.mxu0 0
      %7635 = vmatprep.subr.bf16.mxu0 0
      %7636 = vmatpush2.bf16.msra.mxu0 0
      %7637 = vmatprep.subr.bf16.mxu0 0
      %7638 = vmatpush2.bf16.msra.mxu0 0
      %7639 = vmatprep.subr.bf16.mxu0 0
      %7640 = vmatpush2.bf16.msra.mxu0 0
      %7641 = vmatprep.mubr.bf16.mxu0 0
      %7642 = vmatmul.mubr.bf16.gmra.mxu0 %v7604
      %v7643 = vpop.f32.mrf.mxu0
      %v7644 = vadd.f32 0.0, %v7643
      %v7645 = vpop.f32.mrf.mxu0
      %v7646 = vpop.f32.mrf.mxu0
      %v7647 = vpop.f32.mrf.mxu0
      %7648 = vdwg.mxu0
      %7649 = vrot.lane.b32.xlu0 %v3765, 48
      %v7650 = vpop.permute.xlu0 %7649
      %v7652 = vsel %vm3413, %v6916, 0
      %v7655 = vsel %vm3784, %v7650, 0
      %7657 = vmatprep.subr.bf16.mxu0 0
      %7658 = vmatpush1.bf16.msra.mxu0 0
      %7659 = vmatprep.subr.bf16.mxu0 0
      %7660 = vmatpush1.bf16.msra.mxu0 0
      %7661 = vmatprep.subr.bf16.mxu0 0
      %7662 = vmatpush1.bf16.msra.mxu0 0
      %7663 = vmatprep.subr.bf16.mxu0 0
      %7664 = vmatpush1.bf16.msra.mxu0 0
      %7665 = vmatprep.subr.bf16.mxu0 0
      %7666 = vmatpush1.bf16.msra.mxu0 0
      %7667 = vmatprep.subr.bf16.mxu0 0
      %7668 = vmatpush1.bf16.msra.mxu0 0
      %7669 = vmatprep.subr.bf16.mxu0 0
      %7670 = vmatpush1.bf16.msra.mxu0 0
      %7671 = vmatprep.subr.bf16.mxu0 0
      %7672 = vmatpush1.bf16.msra.mxu0 %v7655
      %7673 = vmatprep.subr.bf16.mxu0 0
      %7674 = vmatpush2.bf16.msra.mxu0 0
      %7675 = vmatprep.subr.bf16.mxu0 0
      %7676 = vmatpush2.bf16.msra.mxu0 0
      %7677 = vmatprep.subr.bf16.mxu0 0
      %7678 = vmatpush2.bf16.msra.mxu0 0
      %7679 = vmatprep.subr.bf16.mxu0 0
      %7680 = vmatpush2.bf16.msra.mxu0 0
      %7681 = vmatprep.subr.bf16.mxu0 0
      %7682 = vmatpush2.bf16.msra.mxu0 0
      %7683 = vmatprep.subr.bf16.mxu0 0
      %7684 = vmatpush2.bf16.msra.mxu0 0
      %7685 = vmatprep.subr.bf16.mxu0 0
      %7686 = vmatpush2.bf16.msra.mxu0 0
      %7687 = vmatprep.subr.bf16.mxu0 0
      %7688 = vmatpush2.bf16.msra.mxu0 0
      %7689 = vmatprep.mubr.bf16.mxu0 0
      %7690 = vmatmul.mubr.bf16.gmra.mxu0 %v7652
      %v7691 = vpop.f32.mrf.mxu0
      %v7692 = vadd.f32 0.0, %v7691
      %v7693 = vpop.f32.mrf.mxu0
      %v7694 = vpop.f32.mrf.mxu0
      %v7695 = vpop.f32.mrf.mxu0
      %7696 = vdwg.mxu0
      %7697 = vrot.lane.b32.xlu0 %v3766, 48
      %v7698 = vpop.permute.xlu0 %7697
      %v7700 = vsel %vm3413, %v6917, 0
      %v7703 = vsel %vm3784, %v7698, 0
      %7705 = vmatprep.subr.bf16.mxu0 0
      %7706 = vmatpush1.bf16.msra.mxu0 0
      %7707 = vmatprep.subr.bf16.mxu0 0
      %7708 = vmatpush1.bf16.msra.mxu0 0
      %7709 = vmatprep.subr.bf16.mxu0 0
      %7710 = vmatpush1.bf16.msra.mxu0 0
      %7711 = vmatprep.subr.bf16.mxu0 0
      %7712 = vmatpush1.bf16.msra.mxu0 0
      %7713 = vmatprep.subr.bf16.mxu0 0
      %7714 = vmatpush1.bf16.msra.mxu0 0
      %7715 = vmatprep.subr.bf16.mxu0 0
      %7716 = vmatpush1.bf16.msra.mxu0 0
      %7717 = vmatprep.subr.bf16.mxu0 0
      %7718 = vmatpush1.bf16.msra.mxu0 0
      %7719 = vmatprep.subr.bf16.mxu0 0
      %7720 = vmatpush1.bf16.msra.mxu0 %v7703
      %7721 = vmatprep.subr.bf16.mxu0 0
      %7722 = vmatpush2.bf16.msra.mxu0 0
      %7723 = vmatprep.subr.bf16.mxu0 0
      %7724 = vmatpush2.bf16.msra.mxu0 0
      %7725 = vmatprep.subr.bf16.mxu0 0
      %7726 = vmatpush2.bf16.msra.mxu0 0
      %7727 = vmatprep.subr.bf16.mxu0 0
      %7728 = vmatpush2.bf16.msra.mxu0 0
      %7729 = vmatprep.subr.bf16.mxu0 0
      %7730 = vmatpush2.bf16.msra.mxu0 0
      %7731 = vmatprep.subr.bf16.mxu0 0
      %7732 = vmatpush2.bf16.msra.mxu0 0
      %7733 = vmatprep.subr.bf16.mxu0 0
      %7734 = vmatpush2.bf16.msra.mxu0 0
      %7735 = vmatprep.subr.bf16.mxu0 0
      %7736 = vmatpush2.bf16.msra.mxu0 0
      %7737 = vmatprep.mubr.bf16.mxu0 0
      %7738 = vmatmul.mubr.bf16.gmra.mxu0 %v7700
      %v7739 = vpop.f32.mrf.mxu0
      %v7740 = vadd.f32 0.0, %v7739
      %v7741 = vpop.f32.mrf.mxu0
      %v7742 = vpop.f32.mrf.mxu0
      %v7743 = vpop.f32.mrf.mxu0
      %7744 = vdwg.mxu0
      %7745 = vrot.lane.b32.xlu0 %v3767, 48
      %v7746 = vpop.permute.xlu0 %7745
      %v7748 = vsel %vm3413, %v6918, 0
      %v7751 = vsel %vm3784, %v7746, 0
      %7753 = vmatprep.subr.bf16.mxu0 0
      %7754 = vmatpush1.bf16.msra.mxu0 0
      %7755 = vmatprep.subr.bf16.mxu0 0
      %7756 = vmatpush1.bf16.msra.mxu0 0
      %7757 = vmatprep.subr.bf16.mxu0 0
      %7758 = vmatpush1.bf16.msra.mxu0 0
      %7759 = vmatprep.subr.bf16.mxu0 0
      %7760 = vmatpush1.bf16.msra.mxu0 0
      %7761 = vmatprep.subr.bf16.mxu0 0
      %7762 = vmatpush1.bf16.msra.mxu0 0
      %7763 = vmatprep.subr.bf16.mxu0 0
      %7764 = vmatpush1.bf16.msra.mxu0 0
      %7765 = vmatprep.subr.bf16.mxu0 0
      %7766 = vmatpush1.bf16.msra.mxu0 0
      %7767 = vmatprep.subr.bf16.mxu0 0
      %7768 = vmatpush1.bf16.msra.mxu0 %v7751
      %7769 = vmatprep.subr.bf16.mxu0 0
      %7770 = vmatpush2.bf16.msra.mxu0 0
      %7771 = vmatprep.subr.bf16.mxu0 0
      %7772 = vmatpush2.bf16.msra.mxu0 0
      %7773 = vmatprep.subr.bf16.mxu0 0
      %7774 = vmatpush2.bf16.msra.mxu0 0
      %7775 = vmatprep.subr.bf16.mxu0 0
      %7776 = vmatpush2.bf16.msra.mxu0 0
      %7777 = vmatprep.subr.bf16.mxu0 0
      %7778 = vmatpush2.bf16.msra.mxu0 0
      %7779 = vmatprep.subr.bf16.mxu0 0
      %7780 = vmatpush2.bf16.msra.mxu0 0
      %7781 = vmatprep.subr.bf16.mxu0 0
      %7782 = vmatpush2.bf16.msra.mxu0 0
      %7783 = vmatprep.subr.bf16.mxu0 0
      %7784 = vmatpush2.bf16.msra.mxu0 0
      %7785 = vmatprep.mubr.bf16.mxu0 0
      %7786 = vmatmul.mubr.bf16.gmra.mxu0 %v7748
      %v7787 = vpop.f32.mrf.mxu0
      %v7788 = vadd.f32 0.0, %v7787
      %v7789 = vpop.f32.mrf.mxu0
      %v7790 = vpop.f32.mrf.mxu0
      %v7791 = vpop.f32.mrf.mxu0
      %7792 = vdwg.mxu0
      %7793 = vrot.lane.b32.xlu0 %v3768, 48
      %v7794 = vpop.permute.xlu0 %7793
      %v7796 = vsel %vm3413, %v6919, 0
      %v7799 = vsel %vm3784, %v7794, 0
      %7801 = vmatprep.subr.bf16.mxu0 0
      %7802 = vmatpush1.bf16.msra.mxu0 0
      %7803 = vmatprep.subr.bf16.mxu0 0
      %7804 = vmatpush1.bf16.msra.mxu0 0
      %7805 = vmatprep.subr.bf16.mxu0 0
      %7806 = vmatpush1.bf16.msra.mxu0 0
      %7807 = vmatprep.subr.bf16.mxu0 0
      %7808 = vmatpush1.bf16.msra.mxu0 0
      %7809 = vmatprep.subr.bf16.mxu0 0
      %7810 = vmatpush1.bf16.msra.mxu0 0
      %7811 = vmatprep.subr.bf16.mxu0 0
      %7812 = vmatpush1.bf16.msra.mxu0 0
      %7813 = vmatprep.subr.bf16.mxu0 0
      %7814 = vmatpush1.bf16.msra.mxu0 0
      %7815 = vmatprep.subr.bf16.mxu0 0
      %7816 = vmatpush1.bf16.msra.mxu0 %v7799
      %7817 = vmatprep.subr.bf16.mxu0 0
      %7818 = vmatpush2.bf16.msra.mxu0 0
      %7819 = vmatprep.subr.bf16.mxu0 0
      %7820 = vmatpush2.bf16.msra.mxu0 0
      %7821 = vmatprep.subr.bf16.mxu0 0
      %7822 = vmatpush2.bf16.msra.mxu0 0
      %7823 = vmatprep.subr.bf16.mxu0 0
      %7824 = vmatpush2.bf16.msra.mxu0 0
      %7825 = vmatprep.subr.bf16.mxu0 0
      %7826 = vmatpush2.bf16.msra.mxu0 0
      %7827 = vmatprep.subr.bf16.mxu0 0
      %7828 = vmatpush2.bf16.msra.mxu0 0
      %7829 = vmatprep.subr.bf16.mxu0 0
      %7830 = vmatpush2.bf16.msra.mxu0 0
      %7831 = vmatprep.subr.bf16.mxu0 0
      %7832 = vmatpush2.bf16.msra.mxu0 0
      %7833 = vmatprep.mubr.bf16.mxu0 0
      %7834 = vmatmul.mubr.bf16.gmra.mxu0 %v7796
      %v7835 = vpop.f32.mrf.mxu0
      %v7836 = vadd.f32 0.0, %v7835
      %v7837 = vpop.f32.mrf.mxu0
      %v7838 = vpop.f32.mrf.mxu0
      %v7839 = vpop.f32.mrf.mxu0
      %7840 = vdwg.mxu0
      %7841 = vrot.lane.b32.xlu0 %v3769, 48
      %v7842 = vpop.permute.xlu0 %7841
      %v7844 = vsel %vm3413, %v6920, 0
      %v7847 = vsel %vm3784, %v7842, 0
      %7849 = vmatprep.subr.bf16.mxu0 0
      %7850 = vmatpush1.bf16.msra.mxu0 0
      %7851 = vmatprep.subr.bf16.mxu0 0
      %7852 = vmatpush1.bf16.msra.mxu0 0
      %7853 = vmatprep.subr.bf16.mxu0 0
      %7854 = vmatpush1.bf16.msra.mxu0 0
      %7855 = vmatprep.subr.bf16.mxu0 0
      %7856 = vmatpush1.bf16.msra.mxu0 0
      %7857 = vmatprep.subr.bf16.mxu0 0
      %7858 = vmatpush1.bf16.msra.mxu0 0
      %7859 = vmatprep.subr.bf16.mxu0 0
      %7860 = vmatpush1.bf16.msra.mxu0 0
      %7861 = vmatprep.subr.bf16.mxu0 0
      %7862 = vmatpush1.bf16.msra.mxu0 0
      %7863 = vmatprep.subr.bf16.mxu0 0
      %7864 = vmatpush1.bf16.msra.mxu0 %v7847
      %7865 = vmatprep.subr.bf16.mxu0 0
      %7866 = vmatpush2.bf16.msra.mxu0 0
      %7867 = vmatprep.subr.bf16.mxu0 0
      %7868 = vmatpush2.bf16.msra.mxu0 0
      %7869 = vmatprep.subr.bf16.mxu0 0
      %7870 = vmatpush2.bf16.msra.mxu0 0
      %7871 = vmatprep.subr.bf16.mxu0 0
      %7872 = vmatpush2.bf16.msra.mxu0 0
      %7873 = vmatprep.subr.bf16.mxu0 0
      %7874 = vmatpush2.bf16.msra.mxu0 0
      %7875 = vmatprep.subr.bf16.mxu0 0
      %7876 = vmatpush2.bf16.msra.mxu0 0
      %7877 = vmatprep.subr.bf16.mxu0 0
      %7878 = vmatpush2.bf16.msra.mxu0 0
      %7879 = vmatprep.subr.bf16.mxu0 0
      %7880 = vmatpush2.bf16.msra.mxu0 0
      %7881 = vmatprep.mubr.bf16.mxu0 0
      %7882 = vmatmul.mubr.bf16.gmra.mxu0 %v7844
      %v7883 = vpop.f32.mrf.mxu0
      %v7884 = vadd.f32 0.0, %v7883
      %v7885 = vpop.f32.mrf.mxu0
      %v7886 = vpop.f32.mrf.mxu0
      %v7887 = vpop.f32.mrf.mxu0
      %7888 = vdwg.mxu0
      %7889 = vrot.lane.b32.xlu0 %v3770, 48
      %v7890 = vpop.permute.xlu0 %7889
      %v7892 = vsel %vm3413, %v6921, 0
      %v7895 = vsel %vm3784, %v7890, 0
      %7897 = vmatprep.subr.bf16.mxu0 0
      %7898 = vmatpush1.bf16.msra.mxu0 0
      %7899 = vmatprep.subr.bf16.mxu0 0
      %7900 = vmatpush1.bf16.msra.mxu0 0
      %7901 = vmatprep.subr.bf16.mxu0 0
      %7902 = vmatpush1.bf16.msra.mxu0 0
      %7903 = vmatprep.subr.bf16.mxu0 0
      %7904 = vmatpush1.bf16.msra.mxu0 0
      %7905 = vmatprep.subr.bf16.mxu0 0
      %7906 = vmatpush1.bf16.msra.mxu0 0
      %7907 = vmatprep.subr.bf16.mxu0 0
      %7908 = vmatpush1.bf16.msra.mxu0 0
      %7909 = vmatprep.subr.bf16.mxu0 0
      %7910 = vmatpush1.bf16.msra.mxu0 0
      %7911 = vmatprep.subr.bf16.mxu0 0
      %7912 = vmatpush1.bf16.msra.mxu0 %v7895
      %7913 = vmatprep.subr.bf16.mxu0 0
      %7914 = vmatpush2.bf16.msra.mxu0 0
      %7915 = vmatprep.subr.bf16.mxu0 0
      %7916 = vmatpush2.bf16.msra.mxu0 0
      %7917 = vmatprep.subr.bf16.mxu0 0
      %7918 = vmatpush2.bf16.msra.mxu0 0
      %7919 = vmatprep.subr.bf16.mxu0 0
      %7920 = vmatpush2.bf16.msra.mxu0 0
      %7921 = vmatprep.subr.bf16.mxu0 0
      %7922 = vmatpush2.bf16.msra.mxu0 0
      %7923 = vmatprep.subr.bf16.mxu0 0
      %7924 = vmatpush2.bf16.msra.mxu0 0
      %7925 = vmatprep.subr.bf16.mxu0 0
      %7926 = vmatpush2.bf16.msra.mxu0 0
      %7927 = vmatprep.subr.bf16.mxu0 0
      %7928 = vmatpush2.bf16.msra.mxu0 0
      %7929 = vmatprep.mubr.bf16.mxu0 0
      %7930 = vmatmul.mubr.bf16.gmra.mxu0 %v7892
      %v7931 = vpop.f32.mrf.mxu0
      %v7932 = vadd.f32 0.0, %v7931
      %v7933 = vpop.f32.mrf.mxu0
      %v7934 = vpop.f32.mrf.mxu0
      %v7935 = vpop.f32.mrf.mxu0
      %7936 = vdwg.mxu0
      %7937 = vrot.lane.b32.xlu0 %v3771, 48
      %v7938 = vpop.permute.xlu0 %7937
      %v7940 = vsel %vm3413, %v6922, 0
      %v7943 = vsel %vm3784, %v7938, 0
      %7945 = vmatprep.subr.bf16.mxu0 0
      %7946 = vmatpush1.bf16.msra.mxu0 0
      %7947 = vmatprep.subr.bf16.mxu0 0
      %7948 = vmatpush1.bf16.msra.mxu0 0
      %7949 = vmatprep.subr.bf16.mxu0 0
      %7950 = vmatpush1.bf16.msra.mxu0 0
      %7951 = vmatprep.subr.bf16.mxu0 0
      %7952 = vmatpush1.bf16.msra.mxu0 0
      %7953 = vmatprep.subr.bf16.mxu0 0
      %7954 = vmatpush1.bf16.msra.mxu0 0
      %7955 = vmatprep.subr.bf16.mxu0 0
      %7956 = vmatpush1.bf16.msra.mxu0 0
      %7957 = vmatprep.subr.bf16.mxu0 0
      %7958 = vmatpush1.bf16.msra.mxu0 0
      %7959 = vmatprep.subr.bf16.mxu0 0
      %7960 = vmatpush1.bf16.msra.mxu0 %v7943
      %7961 = vmatprep.subr.bf16.mxu0 0
      %7962 = vmatpush2.bf16.msra.mxu0 0
      %7963 = vmatprep.subr.bf16.mxu0 0
      %7964 = vmatpush2.bf16.msra.mxu0 0
      %7965 = vmatprep.subr.bf16.mxu0 0
      %7966 = vmatpush2.bf16.msra.mxu0 0
      %7967 = vmatprep.subr.bf16.mxu0 0
      %7968 = vmatpush2.bf16.msra.mxu0 0
      %7969 = vmatprep.subr.bf16.mxu0 0
      %7970 = vmatpush2.bf16.msra.mxu0 0
      %7971 = vmatprep.subr.bf16.mxu0 0
      %7972 = vmatpush2.bf16.msra.mxu0 0
      %7973 = vmatprep.subr.bf16.mxu0 0
      %7974 = vmatpush2.bf16.msra.mxu0 0
      %7975 = vmatprep.subr.bf16.mxu0 0
      %7976 = vmatpush2.bf16.msra.mxu0 0
      %7977 = vmatprep.mubr.bf16.mxu0 0
      %7978 = vmatmul.mubr.bf16.gmra.mxu0 %v7940
      %v7979 = vpop.f32.mrf.mxu0
      %v7980 = vadd.f32 0.0, %v7979
      %v7981 = vpop.f32.mrf.mxu0
      %v7982 = vpop.f32.mrf.mxu0
      %v7983 = vpop.f32.mrf.mxu0
      %7984 = vdwg.mxu0
      %7985 = vrot.lane.b32.xlu0 %v3772, 48
      %v7986 = vpop.permute.xlu0 %7985
      %v7988 = vsel %vm3413, %v6923, 0
      %v7991 = vsel %vm3784, %v7986, 0
      %7993 = vmatprep.subr.bf16.mxu0 0
      %7994 = vmatpush1.bf16.msra.mxu0 0
      %7995 = vmatprep.subr.bf16.mxu0 0
      %7996 = vmatpush1.bf16.msra.mxu0 0
      %7997 = vmatprep.subr.bf16.mxu0 0
      %7998 = vmatpush1.bf16.msra.mxu0 0
      %7999 = vmatprep.subr.bf16.mxu0 0
      %8000 = vmatpush1.bf16.msra.mxu0 0
      %8001 = vmatprep.subr.bf16.mxu0 0
      %8002 = vmatpush1.bf16.msra.mxu0 0
      %8003 = vmatprep.subr.bf16.mxu0 0
      %8004 = vmatpush1.bf16.msra.mxu0 0
      %8005 = vmatprep.subr.bf16.mxu0 0
      %8006 = vmatpush1.bf16.msra.mxu0 0
      %8007 = vmatprep.subr.bf16.mxu0 0
      %8008 = vmatpush1.bf16.msra.mxu0 %v7991
      %8009 = vmatprep.subr.bf16.mxu0 0
      %8010 = vmatpush2.bf16.msra.mxu0 0
      %8011 = vmatprep.subr.bf16.mxu0 0
      %8012 = vmatpush2.bf16.msra.mxu0 0
      %8013 = vmatprep.subr.bf16.mxu0 0
      %8014 = vmatpush2.bf16.msra.mxu0 0
      %8015 = vmatprep.subr.bf16.mxu0 0
      %8016 = vmatpush2.bf16.msra.mxu0 0
      %8017 = vmatprep.subr.bf16.mxu0 0
      %8018 = vmatpush2.bf16.msra.mxu0 0
      %8019 = vmatprep.subr.bf16.mxu0 0
      %8020 = vmatpush2.bf16.msra.mxu0 0
      %8021 = vmatprep.subr.bf16.mxu0 0
      %8022 = vmatpush2.bf16.msra.mxu0 0
      %8023 = vmatprep.subr.bf16.mxu0 0
      %8024 = vmatpush2.bf16.msra.mxu0 0
      %8025 = vmatprep.mubr.bf16.mxu0 0
      %8026 = vmatmul.mubr.bf16.gmra.mxu0 %v7988
      %v8027 = vpop.f32.mrf.mxu0
      %v8028 = vadd.f32 0.0, %v8027
      %v8029 = vpop.f32.mrf.mxu0
      %v8030 = vpop.f32.mrf.mxu0
      %v8031 = vpop.f32.mrf.mxu0
      %8032 = vdwg.mxu0
      %8033 = vrot.lane.b32.xlu0 %v3773, 48
      %v8034 = vpop.permute.xlu0 %8033
      %v8036 = vsel %vm3413, %v6924, 0
      %v8039 = vsel %vm3784, %v8034, 0
      %8041 = vmatprep.subr.bf16.mxu0 0
      %8042 = vmatpush1.bf16.msra.mxu0 0
      %8043 = vmatprep.subr.bf16.mxu0 0
      %8044 = vmatpush1.bf16.msra.mxu0 0
      %8045 = vmatprep.subr.bf16.mxu0 0
      %8046 = vmatpush1.bf16.msra.mxu0 0
      %8047 = vmatprep.subr.bf16.mxu0 0
      %8048 = vmatpush1.bf16.msra.mxu0 0
      %8049 = vmatprep.subr.bf16.mxu0 0
      %8050 = vmatpush1.bf16.msra.mxu0 0
      %8051 = vmatprep.subr.bf16.mxu0 0
      %8052 = vmatpush1.bf16.msra.mxu0 0
      %8053 = vmatprep.subr.bf16.mxu0 0
      %8054 = vmatpush1.bf16.msra.mxu0 0
      %8055 = vmatprep.subr.bf16.mxu0 0
      %8056 = vmatpush1.bf16.msra.mxu0 %v8039
      %8057 = vmatprep.subr.bf16.mxu0 0
      %8058 = vmatpush2.bf16.msra.mxu0 0
      %8059 = vmatprep.subr.bf16.mxu0 0
      %8060 = vmatpush2.bf16.msra.mxu0 0
      %8061 = vmatprep.subr.bf16.mxu0 0
      %8062 = vmatpush2.bf16.msra.mxu0 0
      %8063 = vmatprep.subr.bf16.mxu0 0
      %8064 = vmatpush2.bf16.msra.mxu0 0
      %8065 = vmatprep.subr.bf16.mxu0 0
      %8066 = vmatpush2.bf16.msra.mxu0 0
      %8067 = vmatprep.subr.bf16.mxu0 0
      %8068 = vmatpush2.bf16.msra.mxu0 0
      %8069 = vmatprep.subr.bf16.mxu0 0
      %8070 = vmatpush2.bf16.msra.mxu0 0
      %8071 = vmatprep.subr.bf16.mxu0 0
      %8072 = vmatpush2.bf16.msra.mxu0 0
      %8073 = vmatprep.mubr.bf16.mxu0 0
      %8074 = vmatmul.mubr.bf16.gmra.mxu0 %v8036
      %v8075 = vpop.f32.mrf.mxu0
      %v8076 = vadd.f32 0.0, %v8075
      %v8077 = vpop.f32.mrf.mxu0
      %v8078 = vpop.f32.mrf.mxu0
      %v8079 = vpop.f32.mrf.mxu0
      %8080 = vdwg.mxu0
      %8081 = vrot.lane.b32.xlu0 %v3774, 48
      %v8082 = vpop.permute.xlu0 %8081
      %v8084 = vsel %vm3413, %v6925, 0
      %v8087 = vsel %vm3784, %v8082, 0
      %8089 = vmatprep.subr.bf16.mxu0 0
      %8090 = vmatpush1.bf16.msra.mxu0 0
      %8091 = vmatprep.subr.bf16.mxu0 0
      %8092 = vmatpush1.bf16.msra.mxu0 0
      %8093 = vmatprep.subr.bf16.mxu0 0
      %8094 = vmatpush1.bf16.msra.mxu0 0
      %8095 = vmatprep.subr.bf16.mxu0 0
      %8096 = vmatpush1.bf16.msra.mxu0 0
      %8097 = vmatprep.subr.bf16.mxu0 0
      %8098 = vmatpush1.bf16.msra.mxu0 0
      %8099 = vmatprep.subr.bf16.mxu0 0
      %8100 = vmatpush1.bf16.msra.mxu0 0
      %8101 = vmatprep.subr.bf16.mxu0 0
      %8102 = vmatpush1.bf16.msra.mxu0 0
      %8103 = vmatprep.subr.bf16.mxu0 0
      %8104 = vmatpush1.bf16.msra.mxu0 %v8087
      %8105 = vmatprep.subr.bf16.mxu0 0
      %8106 = vmatpush2.bf16.msra.mxu0 0
      %8107 = vmatprep.subr.bf16.mxu0 0
      %8108 = vmatpush2.bf16.msra.mxu0 0
      %8109 = vmatprep.subr.bf16.mxu0 0
      %8110 = vmatpush2.bf16.msra.mxu0 0
      %8111 = vmatprep.subr.bf16.mxu0 0
      %8112 = vmatpush2.bf16.msra.mxu0 0
      %8113 = vmatprep.subr.bf16.mxu0 0
      %8114 = vmatpush2.bf16.msra.mxu0 0
      %8115 = vmatprep.subr.bf16.mxu0 0
      %8116 = vmatpush2.bf16.msra.mxu0 0
      %8117 = vmatprep.subr.bf16.mxu0 0
      %8118 = vmatpush2.bf16.msra.mxu0 0
      %8119 = vmatprep.subr.bf16.mxu0 0
      %8120 = vmatpush2.bf16.msra.mxu0 0
      %8121 = vmatprep.mubr.bf16.mxu0 0
      %8122 = vmatmul.mubr.bf16.gmra.mxu0 %v8084
      %v8123 = vpop.f32.mrf.mxu0
      %v8124 = vadd.f32 0.0, %v8123
      %v8125 = vpop.f32.mrf.mxu0
      %v8126 = vpop.f32.mrf.mxu0
      %v8127 = vpop.f32.mrf.mxu0
      %8128 = vdwg.mxu0
      %8129 = vrot.lane.b32.xlu0 %v3775, 48
      %v8130 = vpop.permute.xlu0 %8129
      %v8132 = vsel %vm3413, %v6926, 0
      %v8135 = vsel %vm3784, %v8130, 0
      %8137 = vmatprep.subr.bf16.mxu0 0
      %8138 = vmatpush1.bf16.msra.mxu0 0
      %8139 = vmatprep.subr.bf16.mxu0 0
      %8140 = vmatpush1.bf16.msra.mxu0 0
      %8141 = vmatprep.subr.bf16.mxu0 0
      %8142 = vmatpush1.bf16.msra.mxu0 0
      %8143 = vmatprep.subr.bf16.mxu0 0
      %8144 = vmatpush1.bf16.msra.mxu0 0
      %8145 = vmatprep.subr.bf16.mxu0 0
      %8146 = vmatpush1.bf16.msra.mxu0 0
      %8147 = vmatprep.subr.bf16.mxu0 0
      %8148 = vmatpush1.bf16.msra.mxu0 0
      %8149 = vmatprep.subr.bf16.mxu0 0
      %8150 = vmatpush1.bf16.msra.mxu0 0
      %8151 = vmatprep.subr.bf16.mxu0 0
      %8152 = vmatpush1.bf16.msra.mxu0 %v8135
      %8153 = vmatprep.subr.bf16.mxu0 0
      %8154 = vmatpush2.bf16.msra.mxu0 0
      %8155 = vmatprep.subr.bf16.mxu0 0
      %8156 = vmatpush2.bf16.msra.mxu0 0
      %8157 = vmatprep.subr.bf16.mxu0 0
      %8158 = vmatpush2.bf16.msra.mxu0 0
      %8159 = vmatprep.subr.bf16.mxu0 0
      %8160 = vmatpush2.bf16.msra.mxu0 0
      %8161 = vmatprep.subr.bf16.mxu0 0
      %8162 = vmatpush2.bf16.msra.mxu0 0
      %8163 = vmatprep.subr.bf16.mxu0 0
      %8164 = vmatpush2.bf16.msra.mxu0 0
      %8165 = vmatprep.subr.bf16.mxu0 0
      %8166 = vmatpush2.bf16.msra.mxu0 0
      %8167 = vmatprep.subr.bf16.mxu0 0
      %8168 = vmatpush2.bf16.msra.mxu0 0
      %8169 = vmatprep.mubr.bf16.mxu0 0
      %8170 = vmatmul.mubr.bf16.gmra.mxu0 %v8132
      %v8171 = vpop.f32.mrf.mxu0
      %v8172 = vadd.f32 0.0, %v8171
      %v8173 = vpop.f32.mrf.mxu0
      %v8174 = vpop.f32.mrf.mxu0
      %v8175 = vpop.f32.mrf.mxu0
      %8176 = vdwg.mxu0
      %8177 = vrot.lane.b32.xlu0 %v3776, 48
      %v8178 = vpop.permute.xlu0 %8177
      %v8180 = vsel %vm3413, %v6927, 0
      %v8183 = vsel %vm3784, %v8178, 0
      %8185 = vmatprep.subr.bf16.mxu0 0
      %8186 = vmatpush1.bf16.msra.mxu0 0
      %8187 = vmatprep.subr.bf16.mxu0 0
      %8188 = vmatpush1.bf16.msra.mxu0 0
      %8189 = vmatprep.subr.bf16.mxu0 0
      %8190 = vmatpush1.bf16.msra.mxu0 0
      %8191 = vmatprep.subr.bf16.mxu0 0
      %8192 = vmatpush1.bf16.msra.mxu0 0
      %8193 = vmatprep.subr.bf16.mxu0 0
      %8194 = vmatpush1.bf16.msra.mxu0 0
      %8195 = vmatprep.subr.bf16.mxu0 0
      %8196 = vmatpush1.bf16.msra.mxu0 0
      %8197 = vmatprep.subr.bf16.mxu0 0
      %8198 = vmatpush1.bf16.msra.mxu0 0
      %8199 = vmatprep.subr.bf16.mxu0 0
      %8200 = vmatpush1.bf16.msra.mxu0 %v8183
      %8201 = vmatprep.subr.bf16.mxu0 0
      %8202 = vmatpush2.bf16.msra.mxu0 0
      %8203 = vmatprep.subr.bf16.mxu0 0
      %8204 = vmatpush2.bf16.msra.mxu0 0
      %8205 = vmatprep.subr.bf16.mxu0 0
      %8206 = vmatpush2.bf16.msra.mxu0 0
      %8207 = vmatprep.subr.bf16.mxu0 0
      %8208 = vmatpush2.bf16.msra.mxu0 0
      %8209 = vmatprep.subr.bf16.mxu0 0
      %8210 = vmatpush2.bf16.msra.mxu0 0
      %8211 = vmatprep.subr.bf16.mxu0 0
      %8212 = vmatpush2.bf16.msra.mxu0 0
      %8213 = vmatprep.subr.bf16.mxu0 0
      %8214 = vmatpush2.bf16.msra.mxu0 0
      %8215 = vmatprep.subr.bf16.mxu0 0
      %8216 = vmatpush2.bf16.msra.mxu0 0
      %8217 = vmatprep.mubr.bf16.mxu0 0
      %8218 = vmatmul.mubr.bf16.gmra.mxu0 %v8180
      %v8219 = vpop.f32.mrf.mxu0
      %v8220 = vadd.f32 0.0, %v8219
      %v8221 = vpop.f32.mrf.mxu0
      %v8222 = vpop.f32.mrf.mxu0
      %v8223 = vpop.f32.mrf.mxu0
      %8224 = vdwg.mxu0
      %8225 = vrot.lane.b32.xlu0 %v3777, 48
      %v8226 = vpop.permute.xlu0 %8225
      %v8228 = vsel %vm3413, %v6928, 0
      %v8231 = vsel %vm3784, %v8226, 0
      %8233 = vmatprep.subr.bf16.mxu0 0
      %8234 = vmatpush1.bf16.msra.mxu0 0
      %8235 = vmatprep.subr.bf16.mxu0 0
      %8236 = vmatpush1.bf16.msra.mxu0 0
      %8237 = vmatprep.subr.bf16.mxu0 0
      %8238 = vmatpush1.bf16.msra.mxu0 0
      %8239 = vmatprep.subr.bf16.mxu0 0
      %8240 = vmatpush1.bf16.msra.mxu0 0
      %8241 = vmatprep.subr.bf16.mxu0 0
      %8242 = vmatpush1.bf16.msra.mxu0 0
      %8243 = vmatprep.subr.bf16.mxu0 0
      %8244 = vmatpush1.bf16.msra.mxu0 0
      %8245 = vmatprep.subr.bf16.mxu0 0
      %8246 = vmatpush1.bf16.msra.mxu0 0
      %8247 = vmatprep.subr.bf16.mxu0 0
      %8248 = vmatpush1.bf16.msra.mxu0 %v8231
      %8249 = vmatprep.subr.bf16.mxu0 0
      %8250 = vmatpush2.bf16.msra.mxu0 0
      %8251 = vmatprep.subr.bf16.mxu0 0
      %8252 = vmatpush2.bf16.msra.mxu0 0
      %8253 = vmatprep.subr.bf16.mxu0 0
      %8254 = vmatpush2.bf16.msra.mxu0 0
      %8255 = vmatprep.subr.bf16.mxu0 0
      %8256 = vmatpush2.bf16.msra.mxu0 0
      %8257 = vmatprep.subr.bf16.mxu0 0
      %8258 = vmatpush2.bf16.msra.mxu0 0
      %8259 = vmatprep.subr.bf16.mxu0 0
      %8260 = vmatpush2.bf16.msra.mxu0 0
      %8261 = vmatprep.subr.bf16.mxu0 0
      %8262 = vmatpush2.bf16.msra.mxu0 0
      %8263 = vmatprep.subr.bf16.mxu0 0
      %8264 = vmatpush2.bf16.msra.mxu0 0
      %8265 = vmatprep.mubr.bf16.mxu0 0
      %8266 = vmatmul.mubr.bf16.gmra.mxu0 %v8228
      %v8267 = vpop.f32.mrf.mxu0
      %v8268 = vadd.f32 0.0, %v8267
      %v8269 = vpop.f32.mrf.mxu0
      %v8270 = vpop.f32.mrf.mxu0
      %v8271 = vpop.f32.mrf.mxu0
      %8272 = vdwg.mxu0
      %v8273 = vpack.c.bf16 %v7020, %v6972
      %v8274 = vpack.c.bf16 %v7116, %v7068
      %v8275 = vpack.c.bf16 %v7212, %v7164
      %v8276 = vpack.c.bf16 %v7308, %v7260
      %v8277 = vpack.c.bf16 %v7404, %v7356
      %v8278 = vpack.c.bf16 %v7500, %v7452
      %v8279 = vpack.c.bf16 %v7596, %v7548
      %v8280 = vpack.c.bf16 %v7692, %v7644
      %v8281 = vpack.c.bf16 %v7788, %v7740
      %v8282 = vpack.c.bf16 %v7884, %v7836
      %v8283 = vpack.c.bf16 %v7980, %v7932
      %v8284 = vpack.c.bf16 %v8076, %v8028
      %v8285 = vpack.c.bf16 %v8172, %v8124
      %v8286 = vpack.c.bf16 %v8268, %v8220
      %v8289 = vunpack.c.l.b16 %v1982
      %v8290 = vunpack.c.l.b16 %v1983
      %v8291 = vpack.c.b16 %v8290, %v8289
      %v8294 = vsel %vm2043, %v8273, 0
      %v8297 = vsel %vm2043, %v8274, 0
      %v8300 = vsel %vm2043, %v8275, 0
      %v8303 = vsel %vm2043, %v8276, 0
      %v8306 = vsel %vm2043, %v8277, 0
      %v8309 = vsel %vm2043, %v8278, 0
      %v8312 = vsel %vm2043, %v8279, 0
      %v8315 = vsel %vm2043, %v8280, 0
      %v8318 = vsel %vm2043, %v8281, 0
      %v8321 = vsel %vm2043, %v8282, 0
      %v8324 = vsel %vm2043, %v8283, 0
      %v8327 = vsel %vm2043, %v8284, 0
      %v8330 = vsel %vm2043, %v8285, 0
      %v8333 = vsel %vm2043, %v8286, 0
      %8335 = vmatprep.subr.bf16.mxu0 0
      %8336 = vmatpush1.bf16.msra.mxu0 0
      %8337 = vmatprep.subr.bf16.mxu0 0
      %8338 = vmatpush1.bf16.msra.mxu0 0
      %8339 = vmatprep.subr.bf16.mxu0 0
      %8340 = vmatpush1.bf16.msra.mxu0 0
      %8341 = vmatprep.subr.bf16.mxu0 0
      %8342 = vmatpush1.bf16.msra.mxu0 0
      %8343 = vmatprep.subr.bf16.mxu0 0
      %8344 = vmatpush1.bf16.msra.mxu0 0
      %8345 = vmatprep.subr.bf16.mxu0 0
      %8346 = vmatpush1.bf16.msra.mxu0 0
      %8347 = vmatprep.subr.bf16.mxu0 0
      %8348 = vmatpush1.bf16.msra.mxu0 0
      %8349 = vmatprep.subr.bf16.mxu0 0
      %8350 = vmatpush1.bf16.msra.mxu0 %v8291
      %8351 = vmatprep.subr.bf16.mxu0 0
      %8352 = vmatpush2.bf16.msra.mxu0 0
      %8353 = vmatprep.subr.bf16.mxu0 0
      %8354 = vmatpush2.bf16.msra.mxu0 0
      %8355 = vmatprep.subr.bf16.mxu0 0
      %8356 = vmatpush2.bf16.msra.mxu0 0
      %8357 = vmatprep.subr.bf16.mxu0 0
      %8358 = vmatpush2.bf16.msra.mxu0 0
      %8359 = vmatprep.subr.bf16.mxu0 0
      %8360 = vmatpush2.bf16.msra.mxu0 0
      %8361 = vmatprep.subr.bf16.mxu0 0
      %8362 = vmatpush2.bf16.msra.mxu0 0
      %8363 = vmatprep.subr.bf16.mxu0 0
      %8364 = vmatpush2.bf16.msra.mxu0 0
      %8365 = vmatprep.subr.bf16.mxu0 0
      %8366 = vmatpush2.bf16.msra.mxu0 0
      %8367 = vmatprep.mubr.bf16.mxu0 0
      %8368 = vmatmul.mubr.bf16.gmra.mxu0 %v8294
      %v8369 = vpop.f32.mrf.mxu0
      %v8370 = vadd.f32 0.0, %v8369
      %v8371 = vpop.f32.mrf.mxu0
      %v8372 = vpop.f32.mrf.mxu0
      %v8373 = vadd.f32 0.0, %v8372
      %v8374 = vpop.f32.mrf.mxu0
      %8375 = vmatprep.mubr.bf16.mxu0 0
      %8376 = vmatmul.mubr.bf16.gmra.mxu0 %v8297
      %v8377 = vpop.f32.mrf.mxu0
      %v8378 = vadd.f32 0.0, %v8377
      %v8379 = vpop.f32.mrf.mxu0
      %v8380 = vpop.f32.mrf.mxu0
      %v8381 = vadd.f32 0.0, %v8380
      %v8382 = vpop.f32.mrf.mxu0
      %8383 = vmatprep.mubr.bf16.mxu0 0
      %8384 = vmatmul.mubr.bf16.gmra.mxu0 %v8300
      %v8385 = vpop.f32.mrf.mxu0
      %v8386 = vadd.f32 0.0, %v8385
      %v8387 = vpop.f32.mrf.mxu0
      %v8388 = vpop.f32.mrf.mxu0
      %v8389 = vadd.f32 0.0, %v8388
      %v8390 = vpop.f32.mrf.mxu0
      %8391 = vmatprep.mubr.bf16.mxu0 0
      %8392 = vmatmul.mubr.bf16.gmra.mxu0 %v8303
      %v8393 = vpop.f32.mrf.mxu0
      %v8394 = vadd.f32 0.0, %v8393
      %v8395 = vpop.f32.mrf.mxu0
      %v8396 = vpop.f32.mrf.mxu0
      %v8397 = vadd.f32 0.0, %v8396
      %v8398 = vpop.f32.mrf.mxu0
      %8399 = vmatprep.mubr.bf16.mxu0 0
      %8400 = vmatmul.mubr.bf16.gmra.mxu0 %v8306
      %v8401 = vpop.f32.mrf.mxu0
      %v8402 = vadd.f32 0.0, %v8401
      %v8403 = vpop.f32.mrf.mxu0
      %v8404 = vpop.f32.mrf.mxu0
      %v8405 = vadd.f32 0.0, %v8404
      %v8406 = vpop.f32.mrf.mxu0
      %8407 = vmatprep.mubr.bf16.mxu0 0
      %8408 = vmatmul.mubr.bf16.gmra.mxu0 %v8309
      %v8409 = vpop.f32.mrf.mxu0
      %v8410 = vadd.f32 0.0, %v8409
      %v8411 = vpop.f32.mrf.mxu0
      %v8412 = vpop.f32.mrf.mxu0
      %v8413 = vadd.f32 0.0, %v8412
      %v8414 = vpop.f32.mrf.mxu0
      %8415 = vmatprep.mubr.bf16.mxu0 0
      %8416 = vmatmul.mubr.bf16.gmra.mxu0 %v8312
      %v8417 = vpop.f32.mrf.mxu0
      %v8418 = vadd.f32 0.0, %v8417
      %v8419 = vpop.f32.mrf.mxu0
      %v8420 = vpop.f32.mrf.mxu0
      %v8421 = vadd.f32 0.0, %v8420
      %v8422 = vpop.f32.mrf.mxu0
      %8423 = vmatprep.mubr.bf16.mxu0 0
      %8424 = vmatmul.mubr.bf16.gmra.mxu0 %v8315
      %v8425 = vpop.f32.mrf.mxu0
      %v8426 = vadd.f32 0.0, %v8425
      %v8427 = vpop.f32.mrf.mxu0
      %v8428 = vpop.f32.mrf.mxu0
      %v8429 = vadd.f32 0.0, %v8428
      %v8430 = vpop.f32.mrf.mxu0
      %8431 = vmatprep.mubr.bf16.mxu0 0
      %8432 = vmatmul.mubr.bf16.gmra.mxu0 %v8318
      %v8433 = vpop.f32.mrf.mxu0
      %v8434 = vadd.f32 0.0, %v8433
      %v8435 = vpop.f32.mrf.mxu0
      %v8436 = vpop.f32.mrf.mxu0
      %v8437 = vadd.f32 0.0, %v8436
      %v8438 = vpop.f32.mrf.mxu0
      %8439 = vmatprep.mubr.bf16.mxu0 0
      %8440 = vmatmul.mubr.bf16.gmra.mxu0 %v8321
      %v8441 = vpop.f32.mrf.mxu0
      %v8442 = vadd.f32 0.0, %v8441
      %v8443 = vpop.f32.mrf.mxu0
      %v8444 = vpop.f32.mrf.mxu0
      %v8445 = vadd.f32 0.0, %v8444
      %v8446 = vpop.f32.mrf.mxu0
      %8447 = vmatprep.mubr.bf16.mxu0 0
      %8448 = vmatmul.mubr.bf16.gmra.mxu0 %v8324
      %v8449 = vpop.f32.mrf.mxu0
      %v8450 = vadd.f32 0.0, %v8449
      %v8451 = vpop.f32.mrf.mxu0
      %v8452 = vpop.f32.mrf.mxu0
      %v8453 = vadd.f32 0.0, %v8452
      %v8454 = vpop.f32.mrf.mxu0
      %8455 = vmatprep.mubr.bf16.mxu0 0
      %8456 = vmatmul.mubr.bf16.gmra.mxu0 %v8327
      %v8457 = vpop.f32.mrf.mxu0
      %v8458 = vadd.f32 0.0, %v8457
      %v8459 = vpop.f32.mrf.mxu0
      %v8460 = vpop.f32.mrf.mxu0
      %v8461 = vadd.f32 0.0, %v8460
      %v8462 = vpop.f32.mrf.mxu0
      %8463 = vmatprep.mubr.bf16.mxu0 0
      %8464 = vmatmul.mubr.bf16.gmra.mxu0 %v8330
      %v8465 = vpop.f32.mrf.mxu0
      %v8466 = vadd.f32 0.0, %v8465
      %v8467 = vpop.f32.mrf.mxu0
      %v8468 = vpop.f32.mrf.mxu0
      %v8469 = vadd.f32 0.0, %v8468
      %v8470 = vpop.f32.mrf.mxu0
      %8471 = vmatprep.mubr.bf16.mxu0 0
      %8472 = vmatmul.mubr.bf16.gmra.mxu0 %v8333
      %v8473 = vpop.f32.mrf.mxu0
      %v8474 = vadd.f32 0.0, %v8473
      %v8475 = vpop.f32.mrf.mxu0
      %v8476 = vpop.f32.mrf.mxu0
      %v8477 = vadd.f32 0.0, %v8476
      %v8478 = vpop.f32.mrf.mxu0
      %8479 = vdwg.mxu0
      %v8482 = vunpack.c.l.b16 %v1980
      %v8483 = vunpack.c.l.b16 %v1981
      %v8484 = vpack.c.b16 %v8483, %v8482
      %v8487 = vsel %vm2043, %v5151, 0
      %v8490 = vsel %vm2043, %v5152, 0
      %v8493 = vsel %vm2043, %v5153, 0
      %v8496 = vsel %vm2043, %v5154, 0
      %v8499 = vsel %vm2043, %v5155, 0
      %v8502 = vsel %vm2043, %v5156, 0
      %v8505 = vsel %vm2043, %v5157, 0
      %v8508 = vsel %vm2043, %v5158, 0
      %v8511 = vsel %vm2043, %v5159, 0
      %v8514 = vsel %vm2043, %v5160, 0
      %v8517 = vsel %vm2043, %v5161, 0
      %v8520 = vsel %vm2043, %v5162, 0
      %v8523 = vsel %vm2043, %v5163, 0
      %v8526 = vsel %vm2043, %v5164, 0
      %8528 = vmatprep.subr.bf16.mxu0 0
      %8529 = vmatpush1.bf16.msra.mxu0 0
      %8530 = vmatprep.subr.bf16.mxu0 0
      %8531 = vmatpush1.bf16.msra.mxu0 0
      %8532 = vmatprep.subr.bf16.mxu0 0
      %8533 = vmatpush1.bf16.msra.mxu0 0
      %8534 = vmatprep.subr.bf16.mxu0 0
      %8535 = vmatpush1.bf16.msra.mxu0 0
      %8536 = vmatprep.subr.bf16.mxu0 0
      %8537 = vmatpush1.bf16.msra.mxu0 0
      %8538 = vmatprep.subr.bf16.mxu0 0
      %8539 = vmatpush1.bf16.msra.mxu0 0
      %8540 = vmatprep.subr.bf16.mxu0 0
      %8541 = vmatpush1.bf16.msra.mxu0 0
      %8542 = vmatprep.subr.bf16.mxu0 0
      %8543 = vmatpush1.bf16.msra.mxu0 %v8484
      %8544 = vmatprep.subr.bf16.mxu0 0
      %8545 = vmatpush2.bf16.msra.mxu0 0
      %8546 = vmatprep.subr.bf16.mxu0 0
      %8547 = vmatpush2.bf16.msra.mxu0 0
      %8548 = vmatprep.subr.bf16.mxu0 0
      %8549 = vmatpush2.bf16.msra.mxu0 0
      %8550 = vmatprep.subr.bf16.mxu0 0
      %8551 = vmatpush2.bf16.msra.mxu0 0
      %8552 = vmatprep.subr.bf16.mxu0 0
      %8553 = vmatpush2.bf16.msra.mxu0 0
      %8554 = vmatprep.subr.bf16.mxu0 0
      %8555 = vmatpush2.bf16.msra.mxu0 0
      %8556 = vmatprep.subr.bf16.mxu0 0
      %8557 = vmatpush2.bf16.msra.mxu0 0
      %8558 = vmatprep.subr.bf16.mxu0 0
      %8559 = vmatpush2.bf16.msra.mxu0 0
      %8560 = vmatprep.mubr.bf16.mxu0 0
      %8561 = vmatmul.mubr.bf16.gmra.mxu0 %v8487
      %v8562 = vpop.f32.mrf.mxu0
      %v8563 = vadd.f32 %v8370, %v8562
      %v8564 = vpop.f32.mrf.mxu0
      %v8565 = vpop.f32.mrf.mxu0
      %v8566 = vadd.f32 %v8373, %v8565
      %v8567 = vpop.f32.mrf.mxu0
      %8568 = vmatprep.mubr.bf16.mxu0 0
      %8569 = vmatmul.mubr.bf16.gmra.mxu0 %v8490
      %v8570 = vpop.f32.mrf.mxu0
      %v8571 = vadd.f32 %v8378, %v8570
      %v8572 = vpop.f32.mrf.mxu0
      %v8573 = vpop.f32.mrf.mxu0
      %v8574 = vadd.f32 %v8381, %v8573
      %v8575 = vpop.f32.mrf.mxu0
      %8576 = vmatprep.mubr.bf16.mxu0 0
      %8577 = vmatmul.mubr.bf16.gmra.mxu0 %v8493
      %v8578 = vpop.f32.mrf.mxu0
      %v8579 = vadd.f32 %v8386, %v8578
      %v8580 = vpop.f32.mrf.mxu0
      %v8581 = vpop.f32.mrf.mxu0
      %v8582 = vadd.f32 %v8389, %v8581
      %v8583 = vpop.f32.mrf.mxu0
      %8584 = vmatprep.mubr.bf16.mxu0 0
      %8585 = vmatmul.mubr.bf16.gmra.mxu0 %v8496
      %v8586 = vpop.f32.mrf.mxu0
      %v8587 = vadd.f32 %v8394, %v8586
      %v8588 = vpop.f32.mrf.mxu0
      %v8589 = vpop.f32.mrf.mxu0
      %v8590 = vadd.f32 %v8397, %v8589
      %v8591 = vpop.f32.mrf.mxu0
      %8592 = vmatprep.mubr.bf16.mxu0 0
      %8593 = vmatmul.mubr.bf16.gmra.mxu0 %v8499
      %v8594 = vpop.f32.mrf.mxu0
      %v8595 = vadd.f32 %v8402, %v8594
      %v8596 = vpop.f32.mrf.mxu0
      %v8597 = vpop.f32.mrf.mxu0
      %v8598 = vadd.f32 %v8405, %v8597
      %v8599 = vpop.f32.mrf.mxu0
      %8600 = vmatprep.mubr.bf16.mxu0 0
      %8601 = vmatmul.mubr.bf16.gmra.mxu0 %v8502
      %v8602 = vpop.f32.mrf.mxu0
      %v8603 = vadd.f32 %v8410, %v8602
      %v8604 = vpop.f32.mrf.mxu0
      %v8605 = vpop.f32.mrf.mxu0
      %v8606 = vadd.f32 %v8413, %v8605
      %v8607 = vpop.f32.mrf.mxu0
      %8608 = vmatprep.mubr.bf16.mxu0 0
      %8609 = vmatmul.mubr.bf16.gmra.mxu0 %v8505
      %v8610 = vpop.f32.mrf.mxu0
      %v8611 = vadd.f32 %v8418, %v8610
      %v8612 = vpop.f32.mrf.mxu0
      %v8613 = vpop.f32.mrf.mxu0
      %v8614 = vadd.f32 %v8421, %v8613
      %v8615 = vpop.f32.mrf.mxu0
      %8616 = vmatprep.mubr.bf16.mxu0 0
      %8617 = vmatmul.mubr.bf16.gmra.mxu0 %v8508
      %v8618 = vpop.f32.mrf.mxu0
      %v8619 = vadd.f32 %v8426, %v8618
      %v8620 = vpop.f32.mrf.mxu0
      %v8621 = vpop.f32.mrf.mxu0
      %v8622 = vadd.f32 %v8429, %v8621
      %v8623 = vpop.f32.mrf.mxu0
      %8624 = vmatprep.mubr.bf16.mxu0 0
      %8625 = vmatmul.mubr.bf16.gmra.mxu0 %v8511
      %v8626 = vpop.f32.mrf.mxu0
      %v8627 = vadd.f32 %v8434, %v8626
      %v8628 = vpop.f32.mrf.mxu0
      %v8629 = vpop.f32.mrf.mxu0
      %v8630 = vadd.f32 %v8437, %v8629
      %v8631 = vpop.f32.mrf.mxu0
      %8632 = vmatprep.mubr.bf16.mxu0 0
      %8633 = vmatmul.mubr.bf16.gmra.mxu0 %v8514
      %v8634 = vpop.f32.mrf.mxu0
      %v8635 = vadd.f32 %v8442, %v8634
      %v8636 = vpop.f32.mrf.mxu0
      %v8637 = vpop.f32.mrf.mxu0
      %v8638 = vadd.f32 %v8445, %v8637
      %v8639 = vpop.f32.mrf.mxu0
      %8640 = vmatprep.mubr.bf16.mxu0 0
      %8641 = vmatmul.mubr.bf16.gmra.mxu0 %v8517
      %v8642 = vpop.f32.mrf.mxu0
      %v8643 = vadd.f32 %v8450, %v8642
      %v8644 = vpop.f32.mrf.mxu0
      %v8645 = vpop.f32.mrf.mxu0
      %v8646 = vadd.f32 %v8453, %v8645
      %v8647 = vpop.f32.mrf.mxu0
      %8648 = vmatprep.mubr.bf16.mxu0 0
      %8649 = vmatmul.mubr.bf16.gmra.mxu0 %v8520
      %v8650 = vpop.f32.mrf.mxu0
      %v8651 = vadd.f32 %v8458, %v8650
      %v8652 = vpop.f32.mrf.mxu0
      %v8653 = vpop.f32.mrf.mxu0
      %v8654 = vadd.f32 %v8461, %v8653
      %v8655 = vpop.f32.mrf.mxu0
      %8656 = vmatprep.mubr.bf16.mxu0 0
      %8657 = vmatmul.mubr.bf16.gmra.mxu0 %v8523
      %v8658 = vpop.f32.mrf.mxu0
      %v8659 = vadd.f32 %v8466, %v8658
      %v8660 = vpop.f32.mrf.mxu0
      %v8661 = vpop.f32.mrf.mxu0
      %v8662 = vadd.f32 %v8469, %v8661
      %v8663 = vpop.f32.mrf.mxu0
      %8664 = vmatprep.mubr.bf16.mxu0 0
      %8665 = vmatmul.mubr.bf16.gmra.mxu0 %v8526
      %v8666 = vpop.f32.mrf.mxu0
      %v8667 = vadd.f32 %v8474, %v8666
      %v8668 = vpop.f32.mrf.mxu0
      %v8669 = vpop.f32.mrf.mxu0
      %v8670 = vadd.f32 %v8477, %v8669
      %v8671 = vpop.f32.mrf.mxu0
      %8672 = vdwg.mxu0
      %v8673 = vadd.f32 %v1167, %v8563
      %v8674 = vadd.f32 %v1168, %v8566
      %v8675 = vadd.f32 %v1169, %v8571
      %v8676 = vadd.f32 %v1170, %v8574
      %v8677 = vadd.f32 %v1171, %v8579
      %v8678 = vadd.f32 %v1172, %v8582
      %v8679 = vadd.f32 %v1173, %v8587
      %v8680 = vadd.f32 %v1174, %v8590
      %v8681 = vadd.f32 %v1175, %v8595
      %v8682 = vadd.f32 %v1176, %v8598
      %v8683 = vadd.f32 %v1177, %v8603
      %v8684 = vadd.f32 %v1178, %v8606
      %v8685 = vadd.f32 %v1179, %v8611
      %v8686 = vadd.f32 %v1180, %v8614
      %v8687 = vadd.f32 %v1181, %v8619
      %v8688 = vadd.f32 %v1182, %v8622
      %v8689 = vadd.f32 %v1183, %v8627
      %v8690 = vadd.f32 %v1184, %v8630
      %v8691 = vadd.f32 %v1185, %v8635
      %v8692 = vadd.f32 %v1186, %v8638
      %v8693 = vadd.f32 %v1187, %v8643
      %v8694 = vadd.f32 %v1188, %v8646
      %v8695 = vadd.f32 %v1189, %v8651
      %v8696 = vadd.f32 %v1190, %v8654
      %v8697 = vadd.f32 %v1191, %v8659
      %v8698 = vadd.f32 %v1192, %v8662
      %v8699 = vadd.f32 %v1193, %v8667
      %v8700 = vadd.f32 %v1194, %v8670
      %v8701 = vlaneseq
      %v8702 = vshrl.u32 %v8701, 7
      %v8703 = vsub.s32 5, %v8702
      %v8704 = vrot.slane %v1195, %v8703
      %v8705 = vadd.f32 %v8673, %v8704
      %v8706 = vadd.f32 %v8674, %v8704
      %v8707 = vadd.f32 %v8675, %v8704
      %v8708 = vadd.f32 %v8676, %v8704
      %v8709 = vadd.f32 %v8677, %v8704
      %v8710 = vadd.f32 %v8678, %v8704
      %v8711 = vadd.f32 %v8679, %v8704
      %v8712 = vadd.f32 %v8680, %v8704
      %v8713 = vadd.f32 %v8681, %v8704
      %v8714 = vadd.f32 %v8682, %v8704
      %v8715 = vadd.f32 %v8683, %v8704
      %v8716 = vadd.f32 %v8684, %v8704
      %v8717 = vadd.f32 %v8685, %v8704
      %v8718 = vadd.f32 %v8686, %v8704
      %v8719 = vadd.f32 %v8687, %v8704
      %v8720 = vadd.f32 %v8688, %v8704
      %v8721 = vadd.f32 %v8689, %v8704
      %v8722 = vadd.f32 %v8690, %v8704
      %v8723 = vadd.f32 %v8691, %v8704
      %v8724 = vadd.f32 %v8692, %v8704
      %v8725 = vadd.f32 %v8693, %v8704
      %v8726 = vadd.f32 %v8694, %v8704
      %v8727 = vadd.f32 %v8695, %v8704
      %v8728 = vadd.f32 %v8696, %v8704
      %v8729 = vadd.f32 %v8697, %v8704
      %v8730 = vadd.f32 %v8698, %v8704
      %v8731 = vadd.f32 %v8699, %v8704
      %v8732 = vadd.f32 %v8700, %v8704
      %v8733 = vsel %vm1201, %v8705, 0.0
      %8734 = vadd.xlane.f32.xlu0 %v8733
      %v8735 = vpop.xlane.xlu0 %8734
      %v8736 = vsel %vm1201, %v8706, 0.0
      %8737 = vadd.xlane.f32.xlu0 %v8736
      %v8738 = vpop.xlane.xlu0 %8737
      %v8739 = vsel %vm1201, %v8707, 0.0
      %8740 = vadd.xlane.f32.xlu0 %v8739
      %v8741 = vpop.xlane.xlu0 %8740
      %v8742 = vsel %vm1201, %v8708, 0.0
      %8743 = vadd.xlane.f32.xlu0 %v8742
      %v8744 = vpop.xlane.xlu0 %8743
      %v8745 = vsel %vm1201, %v8709, 0.0
      %8746 = vadd.xlane.f32.xlu0 %v8745
      %v8747 = vpop.xlane.xlu0 %8746
      %v8748 = vsel %vm1201, %v8710, 0.0
      %8749 = vadd.xlane.f32.xlu0 %v8748
      %v8750 = vpop.xlane.xlu0 %8749
      %v8751 = vsel %vm1201, %v8711, 0.0
      %8752 = vadd.xlane.f32.xlu0 %v8751
      %v8753 = vpop.xlane.xlu0 %8752
      %v8754 = vsel %vm1201, %v8712, 0.0
      %8755 = vadd.xlane.f32.xlu0 %v8754
      %v8756 = vpop.xlane.xlu0 %8755
      %v8757 = vsel %vm1201, %v8713, 0.0
      %8758 = vadd.xlane.f32.xlu0 %v8757
      %v8759 = vpop.xlane.xlu0 %8758
      %v8760 = vsel %vm1201, %v8714, 0.0
      %8761 = vadd.xlane.f32.xlu0 %v8760
      %v8762 = vpop.xlane.xlu0 %8761
      %v8763 = vsel %vm1201, %v8715, 0.0
      %8764 = vadd.xlane.f32.xlu0 %v8763
      %v8765 = vpop.xlane.xlu0 %8764
      %v8766 = vsel %vm1201, %v8716, 0.0
      %8767 = vadd.xlane.f32.xlu0 %v8766
      %v8768 = vpop.xlane.xlu0 %8767
      %v8769 = vsel %vm1201, %v8717, 0.0
      %8770 = vadd.xlane.f32.xlu0 %v8769
      %v8771 = vpop.xlane.xlu0 %8770
      %v8772 = vsel %vm1201, %v8718, 0.0
      %8773 = vadd.xlane.f32.xlu0 %v8772
      %v8774 = vpop.xlane.xlu0 %8773
      %v8775 = vsel %vm1201, %v8719, 0.0
      %8776 = vadd.xlane.f32.xlu0 %v8775
      %v8777 = vpop.xlane.xlu0 %8776
      %v8778 = vsel %vm1201, %v8720, 0.0
      %8779 = vadd.xlane.f32.xlu0 %v8778
      %v8780 = vpop.xlane.xlu0 %8779
      %v8781 = vsel %vm1201, %v8721, 0.0
      %8782 = vadd.xlane.f32.xlu0 %v8781
      %v8783 = vpop.xlane.xlu0 %8782
      %v8784 = vsel %vm1201, %v8722, 0.0
      %8785 = vadd.xlane.f32.xlu0 %v8784
      %v8786 = vpop.xlane.xlu0 %8785
      %v8787 = vsel %vm1201, %v8723, 0.0
      %8788 = vadd.xlane.f32.xlu0 %v8787
      %v8789 = vpop.xlane.xlu0 %8788
      %v8790 = vsel %vm1201, %v8724, 0.0
      %8791 = vadd.xlane.f32.xlu0 %v8790
      %v8792 = vpop.xlane.xlu0 %8791
      %v8793 = vsel %vm1201, %v8725, 0.0
      %8794 = vadd.xlane.f32.xlu0 %v8793
      %v8795 = vpop.xlane.xlu0 %8794
      %v8796 = vsel %vm1201, %v8726, 0.0
      %8797 = vadd.xlane.f32.xlu0 %v8796
      %v8798 = vpop.xlane.xlu0 %8797
      %v8799 = vsel %vm1201, %v8727, 0.0
      %8800 = vadd.xlane.f32.xlu0 %v8799
      %v8801 = vpop.xlane.xlu0 %8800
      %v8802 = vsel %vm1201, %v8728, 0.0
      %8803 = vadd.xlane.f32.xlu0 %v8802
      %v8804 = vpop.xlane.xlu0 %8803
      %v8805 = vsel %vm1201, %v8729, 0.0
      %8806 = vadd.xlane.f32.xlu0 %v8805
      %v8807 = vpop.xlane.xlu0 %8806
      %v8808 = vsel %vm1201, %v8730, 0.0
      %8809 = vadd.xlane.f32.xlu0 %v8808
      %v8810 = vpop.xlane.xlu0 %8809
      %v8811 = vsel %vm1201, %v8731, 0.0
      %8812 = vadd.xlane.f32.xlu0 %v8811
      %v8813 = vpop.xlane.xlu0 %8812
      %v8814 = vsel %vm1201, %v8732, 0.0
      %8815 = vadd.xlane.f32.xlu0 %v8814
      %v8816 = vpop.xlane.xlu0 %8815
      %v8817 = vmul.f32 %v8735, %v1286
      %v8818 = vmul.f32 %v8738, %v1286
      %v8819 = vmul.f32 %v8741, %v1286
      %v8820 = vmul.f32 %v8744, %v1286
      %v8821 = vmul.f32 %v8747, %v1286
      %v8822 = vmul.f32 %v8750, %v1286
      %v8823 = vmul.f32 %v8753, %v1286
      %v8824 = vmul.f32 %v8756, %v1286
      %v8825 = vmul.f32 %v8759, %v1286
      %v8826 = vmul.f32 %v8762, %v1286
      %v8827 = vmul.f32 %v8765, %v1286
      %v8828 = vmul.f32 %v8768, %v1286
      %v8829 = vmul.f32 %v8771, %v1286
      %v8830 = vmul.f32 %v8774, %v1286
      %v8831 = vmul.f32 %v8777, %v1286
      %v8832 = vmul.f32 %v8780, %v1286
      %v8833 = vmul.f32 %v8783, %v1286
      %v8834 = vmul.f32 %v8786, %v1286
      %v8835 = vmul.f32 %v8789, %v1286
      %v8836 = vmul.f32 %v8792, %v1286
      %v8837 = vmul.f32 %v8795, %v1286
      %v8838 = vmul.f32 %v8798, %v1286
      %v8839 = vmul.f32 %v8801, %v1286
      %v8840 = vmul.f32 %v8804, %v1286
      %v8841 = vmul.f32 %v8807, %v1286
      %v8842 = vmul.f32 %v8810, %v1286
      %v8843 = vmul.f32 %v8813, %v1286
      %v8844 = vmul.f32 %v8816, %v1286
      %v8845 = vsub.f32 %v8705, %v8817
      %v8846 = vsub.f32 %v8706, %v8818
      %v8847 = vsub.f32 %v8707, %v8819
      %v8848 = vsub.f32 %v8708, %v8820
      %v8849 = vsub.f32 %v8709, %v8821
      %v8850 = vsub.f32 %v8710, %v8822
      %v8851 = vsub.f32 %v8711, %v8823
      %v8852 = vsub.f32 %v8712, %v8824
      %v8853 = vsub.f32 %v8713, %v8825
      %v8854 = vsub.f32 %v8714, %v8826
      %v8855 = vsub.f32 %v8715, %v8827
      %v8856 = vsub.f32 %v8716, %v8828
      %v8857 = vsub.f32 %v8717, %v8829
      %v8858 = vsub.f32 %v8718, %v8830
      %v8859 = vsub.f32 %v8719, %v8831
      %v8860 = vsub.f32 %v8720, %v8832
      %v8861 = vsub.f32 %v8721, %v8833
      %v8862 = vsub.f32 %v8722, %v8834
      %v8863 = vsub.f32 %v8723, %v8835
      %v8864 = vsub.f32 %v8724, %v8836
      %v8865 = vsub.f32 %v8725, %v8837
      %v8866 = vsub.f32 %v8726, %v8838
      %v8867 = vsub.f32 %v8727, %v8839
      %v8868 = vsub.f32 %v8728, %v8840
      %v8869 = vsub.f32 %v8729, %v8841
      %v8870 = vsub.f32 %v8730, %v8842
      %v8871 = vsub.f32 %v8731, %v8843
      %v8872 = vsub.f32 %v8732, %v8844
      %v8873 = vmul.f32 %v8845, %v8845
      %v8874 = vmul.f32 %v8846, %v8846
      %v8875 = vmul.f32 %v8847, %v8847
      %v8876 = vmul.f32 %v8848, %v8848
      %v8877 = vmul.f32 %v8849, %v8849
      %v8878 = vmul.f32 %v8850, %v8850
      %v8879 = vmul.f32 %v8851, %v8851
      %v8880 = vmul.f32 %v8852, %v8852
      %v8881 = vmul.f32 %v8853, %v8853
      %v8882 = vmul.f32 %v8854, %v8854
      %v8883 = vmul.f32 %v8855, %v8855
      %v8884 = vmul.f32 %v8856, %v8856
      %v8885 = vmul.f32 %v8857, %v8857
      %v8886 = vmul.f32 %v8858, %v8858
      %v8887 = vmul.f32 %v8859, %v8859
      %v8888 = vmul.f32 %v8860, %v8860
      %v8889 = vmul.f32 %v8861, %v8861
      %v8890 = vmul.f32 %v8862, %v8862
      %v8891 = vmul.f32 %v8863, %v8863
      %v8892 = vmul.f32 %v8864, %v8864
      %v8893 = vmul.f32 %v8865, %v8865
      %v8894 = vmul.f32 %v8866, %v8866
      %v8895 = vmul.f32 %v8867, %v8867
      %v8896 = vmul.f32 %v8868, %v8868
      %v8897 = vmul.f32 %v8869, %v8869
      %v8898 = vmul.f32 %v8870, %v8870
      %v8899 = vmul.f32 %v8871, %v8871
      %v8900 = vmul.f32 %v8872, %v8872
      %v8901 = vsel %vm1201, %v8873, 0.0
      %8902 = vadd.xlane.f32.xlu0 %v8901
      %v8903 = vpop.xlane.xlu0 %8902
      %v8904 = vsel %vm1201, %v8874, 0.0
      %8905 = vadd.xlane.f32.xlu0 %v8904
      %v8906 = vpop.xlane.xlu0 %8905
      %v8907 = vsel %vm1201, %v8875, 0.0
      %8908 = vadd.xlane.f32.xlu0 %v8907
      %v8909 = vpop.xlane.xlu0 %8908
      %v8910 = vsel %vm1201, %v8876, 0.0
      %8911 = vadd.xlane.f32.xlu0 %v8910
      %v8912 = vpop.xlane.xlu0 %8911
      %v8913 = vsel %vm1201, %v8877, 0.0
      %8914 = vadd.xlane.f32.xlu0 %v8913
      %v8915 = vpop.xlane.xlu0 %8914
      %v8916 = vsel %vm1201, %v8878, 0.0
      %8917 = vadd.xlane.f32.xlu0 %v8916
      %v8918 = vpop.xlane.xlu0 %8917
      %v8919 = vsel %vm1201, %v8879, 0.0
      %8920 = vadd.xlane.f32.xlu0 %v8919
      %v8921 = vpop.xlane.xlu0 %8920
      %v8922 = vsel %vm1201, %v8880, 0.0
      %8923 = vadd.xlane.f32.xlu0 %v8922
      %v8924 = vpop.xlane.xlu0 %8923
      %v8925 = vsel %vm1201, %v8881, 0.0
      %8926 = vadd.xlane.f32.xlu0 %v8925
      %v8927 = vpop.xlane.xlu0 %8926
      %v8928 = vsel %vm1201, %v8882, 0.0
      %8929 = vadd.xlane.f32.xlu0 %v8928
      %v8930 = vpop.xlane.xlu0 %8929
      %v8931 = vsel %vm1201, %v8883, 0.0
      %8932 = vadd.xlane.f32.xlu0 %v8931
      %v8933 = vpop.xlane.xlu0 %8932
      %v8934 = vsel %vm1201, %v8884, 0.0
      %8935 = vadd.xlane.f32.xlu0 %v8934
      %v8936 = vpop.xlane.xlu0 %8935
      %v8937 = vsel %vm1201, %v8885, 0.0
      %8938 = vadd.xlane.f32.xlu0 %v8937
      %v8939 = vpop.xlane.xlu0 %8938
      %v8940 = vsel %vm1201, %v8886, 0.0
      %8941 = vadd.xlane.f32.xlu0 %v8940
      %v8942 = vpop.xlane.xlu0 %8941
      %v8943 = vsel %vm1201, %v8887, 0.0
      %8944 = vadd.xlane.f32.xlu0 %v8943
      %v8945 = vpop.xlane.xlu0 %8944
      %v8946 = vsel %vm1201, %v8888, 0.0
      %8947 = vadd.xlane.f32.xlu0 %v8946
      %v8948 = vpop.xlane.xlu0 %8947
      %v8949 = vsel %vm1201, %v8889, 0.0
      %8950 = vadd.xlane.f32.xlu0 %v8949
      %v8951 = vpop.xlane.xlu0 %8950
      %v8952 = vsel %vm1201, %v8890, 0.0
      %8953 = vadd.xlane.f32.xlu0 %v8952
      %v8954 = vpop.xlane.xlu0 %8953
      %v8955 = vsel %vm1201, %v8891, 0.0
      %8956 = vadd.xlane.f32.xlu0 %v8955
      %v8957 = vpop.xlane.xlu0 %8956
      %v8958 = vsel %vm1201, %v8892, 0.0
      %8959 = vadd.xlane.f32.xlu0 %v8958
      %v8960 = vpop.xlane.xlu0 %8959
      %v8961 = vsel %vm1201, %v8893, 0.0
      %8962 = vadd.xlane.f32.xlu0 %v8961
      %v8963 = vpop.xlane.xlu0 %8962
      %v8964 = vsel %vm1201, %v8894, 0.0
      %8965 = vadd.xlane.f32.xlu0 %v8964
      %v8966 = vpop.xlane.xlu0 %8965
      %v8967 = vsel %vm1201, %v8895, 0.0
      %8968 = vadd.xlane.f32.xlu0 %v8967
      %v8969 = vpop.xlane.xlu0 %8968
      %v8970 = vsel %vm1201, %v8896, 0.0
      %8971 = vadd.xlane.f32.xlu0 %v8970
      %v8972 = vpop.xlane.xlu0 %8971
      %v8973 = vsel %vm1201, %v8897, 0.0
      %8974 = vadd.xlane.f32.xlu0 %v8973
      %v8975 = vpop.xlane.xlu0 %8974
      %v8976 = vsel %vm1201, %v8898, 0.0
      %8977 = vadd.xlane.f32.xlu0 %v8976
      %v8978 = vpop.xlane.xlu0 %8977
      %v8979 = vsel %vm1201, %v8899, 0.0
      %8980 = vadd.xlane.f32.xlu0 %v8979
      %v8981 = vpop.xlane.xlu0 %8980
      %v8982 = vsel %vm1201, %v8900, 0.0
      %8983 = vadd.xlane.f32.xlu0 %v8982
      %v8984 = vpop.xlane.xlu0 %8983
      %v8985 = vmul.f32 %v8903, %v1286
      %v8986 = vmul.f32 %v8906, %v1286
      %v8987 = vmul.f32 %v8909, %v1286
      %v8988 = vmul.f32 %v8912, %v1286
      %v8989 = vmul.f32 %v8915, %v1286
      %v8990 = vmul.f32 %v8918, %v1286
      %v8991 = vmul.f32 %v8921, %v1286
      %v8992 = vmul.f32 %v8924, %v1286
      %v8993 = vmul.f32 %v8927, %v1286
      %v8994 = vmul.f32 %v8930, %v1286
      %v8995 = vmul.f32 %v8933, %v1286
      %v8996 = vmul.f32 %v8936, %v1286
      %v8997 = vmul.f32 %v8939, %v1286
      %v8998 = vmul.f32 %v8942, %v1286
      %v8999 = vmul.f32 %v8945, %v1286
      %v9000 = vmul.f32 %v8948, %v1286
      %v9001 = vmul.f32 %v8951, %v1286
      %v9002 = vmul.f32 %v8954, %v1286
      %v9003 = vmul.f32 %v8957, %v1286
      %v9004 = vmul.f32 %v8960, %v1286
      %v9005 = vmul.f32 %v8963, %v1286
      %v9006 = vmul.f32 %v8966, %v1286
      %v9007 = vmul.f32 %v8969, %v1286
      %v9008 = vmul.f32 %v8972, %v1286
      %v9009 = vmul.f32 %v8975, %v1286
      %v9010 = vmul.f32 %v8978, %v1286
      %v9011 = vmul.f32 %v8981, %v1286
      %v9012 = vmul.f32 %v8984, %v1286
      %v9013 = vadd.f32 %v8985, 1e-05
      %v9014 = vadd.f32 %v8986, 1e-05
      %v9015 = vadd.f32 %v8987, 1e-05
      %v9016 = vadd.f32 %v8988, 1e-05
      %v9017 = vadd.f32 %v8989, 1e-05
      %v9018 = vadd.f32 %v8990, 1e-05
      %v9019 = vadd.f32 %v8991, 1e-05
      %v9020 = vadd.f32 %v8992, 1e-05
      %v9021 = vadd.f32 %v8993, 1e-05
      %v9022 = vadd.f32 %v8994, 1e-05
      %v9023 = vadd.f32 %v8995, 1e-05
      %v9024 = vadd.f32 %v8996, 1e-05
      %v9025 = vadd.f32 %v8997, 1e-05
      %v9026 = vadd.f32 %v8998, 1e-05
      %v9027 = vadd.f32 %v8999, 1e-05
      %v9028 = vadd.f32 %v9000, 1e-05
      %v9029 = vadd.f32 %v9001, 1e-05
      %v9030 = vadd.f32 %v9002, 1e-05
      %v9031 = vadd.f32 %v9003, 1e-05
      %v9032 = vadd.f32 %v9004, 1e-05
      %v9033 = vadd.f32 %v9005, 1e-05
      %v9034 = vadd.f32 %v9006, 1e-05
      %v9035 = vadd.f32 %v9007, 1e-05
      %v9036 = vadd.f32 %v9008, 1e-05
      %v9037 = vadd.f32 %v9009, 1e-05
      %v9038 = vadd.f32 %v9010, 1e-05
      %v9039 = vadd.f32 %v9011, 1e-05
      %v9040 = vadd.f32 %v9012, 1e-05
      %v9041 = vrsqrt.pop %v9013
      %v9042 = vrsqrt.pop %v9014
      %v9043 = vrsqrt.pop %v9015
      %v9044 = vrsqrt.pop %v9016
      %v9045 = vrsqrt.pop %v9017
      %v9046 = vrsqrt.pop %v9018
      %v9047 = vrsqrt.pop %v9019
      %v9048 = vrsqrt.pop %v9020
      %v9049 = vrsqrt.pop %v9021
      %v9050 = vrsqrt.pop %v9022
      %v9051 = vrsqrt.pop %v9023
      %v9052 = vrsqrt.pop %v9024
      %v9053 = vrsqrt.pop %v9025
      %v9054 = vrsqrt.pop %v9026
      %v9055 = vrsqrt.pop %v9027
      %v9056 = vrsqrt.pop %v9028
      %v9057 = vrsqrt.pop %v9029
      %v9058 = vrsqrt.pop %v9030
      %v9059 = vrsqrt.pop %v9031
      %v9060 = vrsqrt.pop %v9032
      %v9061 = vrsqrt.pop %v9033
      %v9062 = vrsqrt.pop %v9034
      %v9063 = vrsqrt.pop %v9035
      %v9064 = vrsqrt.pop %v9036
      %v9065 = vrsqrt.pop %v9037
      %v9066 = vrsqrt.pop %v9038
      %v9067 = vrsqrt.pop %v9039
      %v9068 = vrsqrt.pop %v9040
      %v9069 = vmul.f32 %v8845, %v9041
      %v9070 = vmul.f32 %v8846, %v9042
      %v9071 = vmul.f32 %v8847, %v9043
      %v9072 = vmul.f32 %v8848, %v9044
      %v9073 = vmul.f32 %v8849, %v9045
      %v9074 = vmul.f32 %v8850, %v9046
      %v9075 = vmul.f32 %v8851, %v9047
      %v9076 = vmul.f32 %v8852, %v9048
      %v9077 = vmul.f32 %v8853, %v9049
      %v9078 = vmul.f32 %v8854, %v9050
      %v9079 = vmul.f32 %v8855, %v9051
      %v9080 = vmul.f32 %v8856, %v9052
      %v9081 = vmul.f32 %v8857, %v9053
      %v9082 = vmul.f32 %v8858, %v9054
      %v9083 = vmul.f32 %v8859, %v9055
      %v9084 = vmul.f32 %v8860, %v9056
      %v9085 = vmul.f32 %v8861, %v9057
      %v9086 = vmul.f32 %v8862, %v9058
      %v9087 = vmul.f32 %v8863, %v9059
      %v9088 = vmul.f32 %v8864, %v9060
      %v9089 = vmul.f32 %v8865, %v9061
      %v9090 = vmul.f32 %v8866, %v9062
      %v9091 = vmul.f32 %v8867, %v9063
      %v9092 = vmul.f32 %v8868, %v9064
      %v9093 = vmul.f32 %v8869, %v9065
      %v9094 = vmul.f32 %v8870, %v9066
      %v9095 = vmul.f32 %v8871, %v9067
      %v9096 = vmul.f32 %v8872, %v9068
      %v9097 = vlaneseq
      %v9098 = vshrl.u32 %v9097, 7
      %v9099 = vsub.s32 6, %v9098
      %v9100 = vrot.slane %v1195, %v9099
      %v9101 = vmul.f32 %v9069, %v9100
      %v9102 = vmul.f32 %v9070, %v9100
      %v9103 = vmul.f32 %v9071, %v9100
      %v9104 = vmul.f32 %v9072, %v9100
      %v9105 = vmul.f32 %v9073, %v9100
      %v9106 = vmul.f32 %v9074, %v9100
      %v9107 = vmul.f32 %v9075, %v9100
      %v9108 = vmul.f32 %v9076, %v9100
      %v9109 = vmul.f32 %v9077, %v9100
      %v9110 = vmul.f32 %v9078, %v9100
      %v9111 = vmul.f32 %v9079, %v9100
      %v9112 = vmul.f32 %v9080, %v9100
      %v9113 = vmul.f32 %v9081, %v9100
      %v9114 = vmul.f32 %v9082, %v9100
      %v9115 = vmul.f32 %v9083, %v9100
      %v9116 = vmul.f32 %v9084, %v9100
      %v9117 = vmul.f32 %v9085, %v9100
      %v9118 = vmul.f32 %v9086, %v9100
      %v9119 = vmul.f32 %v9087, %v9100
      %v9120 = vmul.f32 %v9088, %v9100
      %v9121 = vmul.f32 %v9089, %v9100
      %v9122 = vmul.f32 %v9090, %v9100
      %v9123 = vmul.f32 %v9091, %v9100
      %v9124 = vmul.f32 %v9092, %v9100
      %v9125 = vmul.f32 %v9093, %v9100
      %v9126 = vmul.f32 %v9094, %v9100
      %v9127 = vmul.f32 %v9095, %v9100
      %v9128 = vmul.f32 %v9096, %v9100
      %v9129 = vlaneseq
      %v9130 = vshrl.u32 %v9129, 7
      %v9131 = vsub.s32 7, %v9130
      %v9132 = vrot.slane %v1195, %v9131
      %v9133 = vadd.f32 %v9101, %v9132
      %v9134 = vadd.f32 %v9102, %v9132
      %v9135 = vadd.f32 %v9103, %v9132
      %v9136 = vadd.f32 %v9104, %v9132
      %v9137 = vadd.f32 %v9105, %v9132
      %v9138 = vadd.f32 %v9106, %v9132
      %v9139 = vadd.f32 %v9107, %v9132
      %v9140 = vadd.f32 %v9108, %v9132
      %v9141 = vadd.f32 %v9109, %v9132
      %v9142 = vadd.f32 %v9110, %v9132
      %v9143 = vadd.f32 %v9111, %v9132
      %v9144 = vadd.f32 %v9112, %v9132
      %v9145 = vadd.f32 %v9113, %v9132
      %v9146 = vadd.f32 %v9114, %v9132
      %v9147 = vadd.f32 %v9115, %v9132
      %v9148 = vadd.f32 %v9116, %v9132
      %v9149 = vadd.f32 %v9117, %v9132
      %v9150 = vadd.f32 %v9118, %v9132
      %v9151 = vadd.f32 %v9119, %v9132
      %v9152 = vadd.f32 %v9120, %v9132
      %v9153 = vadd.f32 %v9121, %v9132
      %v9154 = vadd.f32 %v9122, %v9132
      %v9155 = vadd.f32 %v9123, %v9132
      %v9156 = vadd.f32 %v9124, %v9132
      %v9157 = vadd.f32 %v9125, %v9132
      %v9158 = vadd.f32 %v9126, %v9132
      %v9159 = vadd.f32 %v9127, %v9132
      %v9160 = vadd.f32 %v9128, %v9132
      %v9161 = vpack.c.bf16 %v9134, %v9133
      %v9162 = vpack.c.bf16 %v9136, %v9135
      %v9163 = vpack.c.bf16 %v9138, %v9137
      %v9164 = vpack.c.bf16 %v9140, %v9139
      %v9165 = vpack.c.bf16 %v9142, %v9141
      %v9166 = vpack.c.bf16 %v9144, %v9143
      %v9167 = vpack.c.bf16 %v9146, %v9145
      %v9168 = vpack.c.bf16 %v9148, %v9147
      %v9169 = vpack.c.bf16 %v9150, %v9149
      %v9170 = vpack.c.bf16 %v9152, %v9151
      %v9171 = vpack.c.bf16 %v9154, %v9153
      %v9172 = vpack.c.bf16 %v9156, %v9155
      %v9173 = vpack.c.bf16 %v9158, %v9157
      %v9174 = vpack.c.bf16 %v9160, %v9159
      %v9175 = vld [vmem:[%s431] sm:$0xf]
      %v9176 = vld [vmem:[%s431 + $0x4] sm:$0xf]
      %v9177 = vld [vmem:[%s431 + $0x8] sm:$0xf]
      %v9178 = vld [vmem:[%s431 + $0xc] sm:$0xf]
      %v9179 = vlaneseq
      %v9180 = vshrl.u32 %v9179, 7
      %v9181 = vsub.s32 1, %v9180
      %v9182 = vrot.slane %v1196, %v9181
      %v9187 = vunpack.c.l.b16 %v9175
      %v9188 = vunpack.c.l.b16 %v9176
      %v9189 = vunpack.c.l.b16 %v9177
      %v9190 = vunpack.c.l.b16 %v9178
      %v9191 = vpack.c.b16 %v9188, %v9187
      %v9192 = vpack.c.b16 %v9190, %v9189
      %v9196 = vsel %vm1201, %v9161, 0
      %v9199 = vsel %vm1201, %v9162, 0
      %v9202 = vsel %vm1201, %v9163, 0
      %v9205 = vsel %vm1201, %v9164, 0
      %v9208 = vsel %vm1201, %v9165, 0
      %v9211 = vsel %vm1201, %v9166, 0
      %v9214 = vsel %vm1201, %v9167, 0
      %v9217 = vsel %vm1201, %v9168, 0
      %v9220 = vsel %vm1201, %v9169, 0
      %v9223 = vsel %vm1201, %v9170, 0
      %v9226 = vsel %vm1201, %v9171, 0
      %v9229 = vsel %vm1201, %v9172, 0
      %v9232 = vsel %vm1201, %v9173, 0
      %v9235 = vsel %vm1201, %v9174, 0
      %9237 = vmatprep.subr.bf16.mxu0 0
      %9238 = vmatpush1.bf16.msra.mxu0 0
      %9239 = vmatprep.subr.bf16.mxu0 0
      %9240 = vmatpush1.bf16.msra.mxu0 0
      %9241 = vmatprep.subr.bf16.mxu0 0
      %9242 = vmatpush1.bf16.msra.mxu0 0
      %9243 = vmatprep.subr.bf16.mxu0 0
      %9244 = vmatpush1.bf16.msra.mxu0 0
      %9245 = vmatprep.subr.bf16.mxu0 0
      %9246 = vmatpush1.bf16.msra.mxu0 0
      %9247 = vmatprep.subr.bf16.mxu0 0
      %9248 = vmatpush1.bf16.msra.mxu0 0
      %9249 = vmatprep.subr.bf16.mxu0 0
      %9250 = vmatpush1.bf16.msra.mxu0 %v9192
      %9251 = vmatprep.subr.bf16.mxu0 0
      %9252 = vmatpush1.bf16.msra.mxu0 %v9191
      %9253 = vmatprep.subr.bf16.mxu0 0
      %9254 = vmatpush2.bf16.msra.mxu0 0
      %9255 = vmatprep.subr.bf16.mxu0 0
      %9256 = vmatpush2.bf16.msra.mxu0 0
      %9257 = vmatprep.subr.bf16.mxu0 0
      %9258 = vmatpush2.bf16.msra.mxu0 0
      %9259 = vmatprep.subr.bf16.mxu0 0
      %9260 = vmatpush2.bf16.msra.mxu0 0
      %9261 = vmatprep.subr.bf16.mxu0 0
      %9262 = vmatpush2.bf16.msra.mxu0 0
      %9263 = vmatprep.subr.bf16.mxu0 0
      %9264 = vmatpush2.bf16.msra.mxu0 0
      %9265 = vmatprep.subr.bf16.mxu0 0
      %9266 = vmatpush2.bf16.msra.mxu0 0
      %9267 = vmatprep.subr.bf16.mxu0 0
      %9268 = vmatpush2.bf16.msra.mxu0 0
      %9269 = vmatprep.mubr.bf16.mxu0 0
      %9270 = vmatmul.mubr.bf16.gmra.mxu0 %v9196
      %v9271 = vpop.f32.mrf.mxu0
      %v9272 = vadd.f32 %v9182, %v9271
      %v9273 = vpop.f32.mrf.mxu0
      %v9274 = vpop.f32.mrf.mxu0
      %v9275 = vadd.f32 %v9182, %v9274
      %v9276 = vpop.f32.mrf.mxu0
      %9277 = vmatprep.mubr.bf16.mxu0 0
      %9278 = vmatmul.mubr.bf16.gmra.mxu0 %v9199
      %v9279 = vpop.f32.mrf.mxu0
      %v9280 = vadd.f32 %v9182, %v9279
      %v9281 = vpop.f32.mrf.mxu0
      %v9282 = vpop.f32.mrf.mxu0
      %v9283 = vadd.f32 %v9182, %v9282
      %v9284 = vpop.f32.mrf.mxu0
      %9285 = vmatprep.mubr.bf16.mxu0 0
      %9286 = vmatmul.mubr.bf16.gmra.mxu0 %v9202
      %v9287 = vpop.f32.mrf.mxu0
      %v9288 = vadd.f32 %v9182, %v9287
      %v9289 = vpop.f32.mrf.mxu0
      %v9290 = vpop.f32.mrf.mxu0
      %v9291 = vadd.f32 %v9182, %v9290
      %v9292 = vpop.f32.mrf.mxu0
      %9293 = vmatprep.mubr.bf16.mxu0 0
      %9294 = vmatmul.mubr.bf16.gmra.mxu0 %v9205
      %v9295 = vpop.f32.mrf.mxu0
      %v9296 = vadd.f32 %v9182, %v9295
      %v9297 = vpop.f32.mrf.mxu0
      %v9298 = vpop.f32.mrf.mxu0
      %v9299 = vadd.f32 %v9182, %v9298
      %v9300 = vpop.f32.mrf.mxu0
      %9301 = vmatprep.mubr.bf16.mxu0 0
      %9302 = vmatmul.mubr.bf16.gmra.mxu0 %v9208
      %v9303 = vpop.f32.mrf.mxu0
      %v9304 = vadd.f32 %v9182, %v9303
      %v9305 = vpop.f32.mrf.mxu0
      %v9306 = vpop.f32.mrf.mxu0
      %v9307 = vadd.f32 %v9182, %v9306
      %v9308 = vpop.f32.mrf.mxu0
      %9309 = vmatprep.mubr.bf16.mxu0 0
      %9310 = vmatmul.mubr.bf16.gmra.mxu0 %v9211
      %v9311 = vpop.f32.mrf.mxu0
      %v9312 = vadd.f32 %v9182, %v9311
      %v9313 = vpop.f32.mrf.mxu0
      %v9314 = vpop.f32.mrf.mxu0
      %v9315 = vadd.f32 %v9182, %v9314
      %v9316 = vpop.f32.mrf.mxu0
      %9317 = vmatprep.mubr.bf16.mxu0 0
      %9318 = vmatmul.mubr.bf16.gmra.mxu0 %v9214
      %v9319 = vpop.f32.mrf.mxu0
      %v9320 = vadd.f32 %v9182, %v9319
      %v9321 = vpop.f32.mrf.mxu0
      %v9322 = vpop.f32.mrf.mxu0
      %v9323 = vadd.f32 %v9182, %v9322
      %v9324 = vpop.f32.mrf.mxu0
      %9325 = vmatprep.mubr.bf16.mxu0 0
      %9326 = vmatmul.mubr.bf16.gmra.mxu0 %v9217
      %v9327 = vpop.f32.mrf.mxu0
      %v9328 = vadd.f32 %v9182, %v9327
      %v9329 = vpop.f32.mrf.mxu0
      %v9330 = vpop.f32.mrf.mxu0
      %v9331 = vadd.f32 %v9182, %v9330
      %v9332 = vpop.f32.mrf.mxu0
      %9333 = vmatprep.mubr.bf16.mxu0 0
      %9334 = vmatmul.mubr.bf16.gmra.mxu0 %v9220
      %v9335 = vpop.f32.mrf.mxu0
      %v9336 = vadd.f32 %v9182, %v9335
      %v9337 = vpop.f32.mrf.mxu0
      %v9338 = vpop.f32.mrf.mxu0
      %v9339 = vadd.f32 %v9182, %v9338
      %v9340 = vpop.f32.mrf.mxu0
      %9341 = vmatprep.mubr.bf16.mxu0 0
      %9342 = vmatmul.mubr.bf16.gmra.mxu0 %v9223
      %v9343 = vpop.f32.mrf.mxu0
      %v9344 = vadd.f32 %v9182, %v9343
      %v9345 = vpop.f32.mrf.mxu0
      %v9346 = vpop.f32.mrf.mxu0
      %v9347 = vadd.f32 %v9182, %v9346
      %v9348 = vpop.f32.mrf.mxu0
      %9349 = vmatprep.mubr.bf16.mxu0 0
      %9350 = vmatmul.mubr.bf16.gmra.mxu0 %v9226
      %v9351 = vpop.f32.mrf.mxu0
      %v9352 = vadd.f32 %v9182, %v9351
      %v9353 = vpop.f32.mrf.mxu0
      %v9354 = vpop.f32.mrf.mxu0
      %v9355 = vadd.f32 %v9182, %v9354
      %v9356 = vpop.f32.mrf.mxu0
      %9357 = vmatprep.mubr.bf16.mxu0 0
      %9358 = vmatmul.mubr.bf16.gmra.mxu0 %v9229
      %v9359 = vpop.f32.mrf.mxu0
      %v9360 = vadd.f32 %v9182, %v9359
      %v9361 = vpop.f32.mrf.mxu0
      %v9362 = vpop.f32.mrf.mxu0
      %v9363 = vadd.f32 %v9182, %v9362
      %v9364 = vpop.f32.mrf.mxu0
      %9365 = vmatprep.mubr.bf16.mxu0 0
      %9366 = vmatmul.mubr.bf16.gmra.mxu0 %v9232
      %v9367 = vpop.f32.mrf.mxu0
      %v9368 = vadd.f32 %v9182, %v9367
      %v9369 = vpop.f32.mrf.mxu0
      %v9370 = vpop.f32.mrf.mxu0
      %v9371 = vadd.f32 %v9182, %v9370
      %v9372 = vpop.f32.mrf.mxu0
      %9373 = vmatprep.mubr.bf16.mxu0 0
      %9374 = vmatmul.mubr.bf16.gmra.mxu0 %v9235
      %v9375 = vpop.f32.mrf.mxu0
      %v9376 = vadd.f32 %v9182, %v9375
      %v9377 = vpop.f32.mrf.mxu0
      %v9378 = vpop.f32.mrf.mxu0
      %v9379 = vadd.f32 %v9182, %v9378
      %v9380 = vpop.f32.mrf.mxu0
      %9381 = vdwg.mxu0
      %v9382 = vmul.f32 %v9272, 1.702
      %v9383 = vmul.f32 %v9275, 1.702
      %v9384 = vmul.f32 %v9280, 1.702
      %v9385 = vmul.f32 %v9283, 1.702
      %v9386 = vmul.f32 %v9288, 1.702
      %v9387 = vmul.f32 %v9291, 1.702
      %v9388 = vmul.f32 %v9296, 1.702
      %v9389 = vmul.f32 %v9299, 1.702
      %v9390 = vmul.f32 %v9304, 1.702
      %v9391 = vmul.f32 %v9307, 1.702
      %v9392 = vmul.f32 %v9312, 1.702
      %v9393 = vmul.f32 %v9315, 1.702
      %v9394 = vmul.f32 %v9320, 1.702
      %v9395 = vmul.f32 %v9323, 1.702
      %v9396 = vmul.f32 %v9328, 1.702
      %v9397 = vmul.f32 %v9331, 1.702
      %v9398 = vmul.f32 %v9336, 1.702
      %v9399 = vmul.f32 %v9339, 1.702
      %v9400 = vmul.f32 %v9344, 1.702
      %v9401 = vmul.f32 %v9347, 1.702
      %v9402 = vmul.f32 %v9352, 1.702
      %v9403 = vmul.f32 %v9355, 1.702
      %v9404 = vmul.f32 %v9360, 1.702
      %v9405 = vmul.f32 %v9363, 1.702
      %v9406 = vmul.f32 %v9368, 1.702
      %v9407 = vmul.f32 %v9371, 1.702
      %v9408 = vmul.f32 %v9376, 1.702
      %v9409 = vmul.f32 %v9379, 1.702
      %v9410 = vxor.u32 %v9382, 2147483648
      %v9411 = vxor.u32 %v9383, 2147483648
      %v9412 = vxor.u32 %v9384, 2147483648
      %v9413 = vxor.u32 %v9385, 2147483648
      %v9414 = vxor.u32 %v9386, 2147483648
      %v9415 = vxor.u32 %v9387, 2147483648
      %v9416 = vxor.u32 %v9388, 2147483648
      %v9417 = vxor.u32 %v9389, 2147483648
      %v9418 = vxor.u32 %v9390, 2147483648
      %v9419 = vxor.u32 %v9391, 2147483648
      %v9420 = vxor.u32 %v9392, 2147483648
      %v9421 = vxor.u32 %v9393, 2147483648
      %v9422 = vxor.u32 %v9394, 2147483648
      %v9423 = vxor.u32 %v9395, 2147483648
      %v9424 = vxor.u32 %v9396, 2147483648
      %v9425 = vxor.u32 %v9397, 2147483648
      %v9426 = vxor.u32 %v9398, 2147483648
      %v9427 = vxor.u32 %v9399, 2147483648
      %v9428 = vxor.u32 %v9400, 2147483648
      %v9429 = vxor.u32 %v9401, 2147483648
      %v9430 = vxor.u32 %v9402, 2147483648
      %v9431 = vxor.u32 %v9403, 2147483648
      %v9432 = vxor.u32 %v9404, 2147483648
      %v9433 = vxor.u32 %v9405, 2147483648
      %v9434 = vxor.u32 %v9406, 2147483648
      %v9435 = vxor.u32 %v9407, 2147483648
      %v9436 = vxor.u32 %v9408, 2147483648
      %v9437 = vxor.u32 %v9409, 2147483648
      %v9438 = vmul.f32 %v9410, 1.442695
      %v9439 = vpow.pop %v9438
      %v9440 = vmul.f32 %v9411, 1.442695
      %v9441 = vpow.pop %v9440
      %v9442 = vmul.f32 %v9412, 1.442695
      %v9443 = vpow.pop %v9442
      %v9444 = vmul.f32 %v9413, 1.442695
      %v9445 = vpow.pop %v9444
      %v9446 = vmul.f32 %v9414, 1.442695
      %v9447 = vpow.pop %v9446
      %v9448 = vmul.f32 %v9415, 1.442695
      %v9449 = vpow.pop %v9448
      %v9450 = vmul.f32 %v9416, 1.442695
      %v9451 = vpow.pop %v9450
      %v9452 = vmul.f32 %v9417, 1.442695
      %v9453 = vpow.pop %v9452
      %v9454 = vmul.f32 %v9418, 1.442695
      %v9455 = vpow.pop %v9454
      %v9456 = vmul.f32 %v9419, 1.442695
      %v9457 = vpow.pop %v9456
      %v9458 = vmul.f32 %v9420, 1.442695
      %v9459 = vpow.pop %v9458
      %v9460 = vmul.f32 %v9421, 1.442695
      %v9461 = vpow.pop %v9460
      %v9462 = vmul.f32 %v9422, 1.442695
      %v9463 = vpow.pop %v9462
      %v9464 = vmul.f32 %v9423, 1.442695
      %v9465 = vpow.pop %v9464
      %v9466 = vmul.f32 %v9424, 1.442695
      %v9467 = vpow.pop %v9466
      %v9468 = vmul.f32 %v9425, 1.442695
      %v9469 = vpow.pop %v9468
      %v9470 = vmul.f32 %v9426, 1.442695
      %v9471 = vpow.pop %v9470
      %v9472 = vmul.f32 %v9427, 1.442695
      %v9473 = vpow.pop %v9472
      %v9474 = vmul.f32 %v9428, 1.442695
      %v9475 = vpow.pop %v9474
      %v9476 = vmul.f32 %v9429, 1.442695
      %v9477 = vpow.pop %v9476
      %v9478 = vmul.f32 %v9430, 1.442695
      %v9479 = vpow.pop %v9478
      %v9480 = vmul.f32 %v9431, 1.442695
      %v9481 = vpow.pop %v9480
      %v9482 = vmul.f32 %v9432, 1.442695
      %v9483 = vpow.pop %v9482
      %v9484 = vmul.f32 %v9433, 1.442695
      %v9485 = vpow.pop %v9484
      %v9486 = vmul.f32 %v9434, 1.442695
      %v9487 = vpow.pop %v9486
      %v9488 = vmul.f32 %v9435, 1.442695
      %v9489 = vpow.pop %v9488
      %v9490 = vmul.f32 %v9436, 1.442695
      %v9491 = vpow.pop %v9490
      %v9492 = vmul.f32 %v9437, 1.442695
      %v9493 = vpow.pop %v9492
      %v9494 = vadd.f32 %v9439, 1.0
      %v9495 = vadd.f32 %v9441, 1.0
      %v9496 = vadd.f32 %v9443, 1.0
      %v9497 = vadd.f32 %v9445, 1.0
      %v9498 = vadd.f32 %v9447, 1.0
      %v9499 = vadd.f32 %v9449, 1.0
      %v9500 = vadd.f32 %v9451, 1.0
      %v9501 = vadd.f32 %v9453, 1.0
      %v9502 = vadd.f32 %v9455, 1.0
      %v9503 = vadd.f32 %v9457, 1.0
      %v9504 = vadd.f32 %v9459, 1.0
      %v9505 = vadd.f32 %v9461, 1.0
      %v9506 = vadd.f32 %v9463, 1.0
      %v9507 = vadd.f32 %v9465, 1.0
      %v9508 = vadd.f32 %v9467, 1.0
      %v9509 = vadd.f32 %v9469, 1.0
      %v9510 = vadd.f32 %v9471, 1.0
      %v9511 = vadd.f32 %v9473, 1.0
      %v9512 = vadd.f32 %v9475, 1.0
      %v9513 = vadd.f32 %v9477, 1.0
      %v9514 = vadd.f32 %v9479, 1.0
      %v9515 = vadd.f32 %v9481, 1.0
      %v9516 = vadd.f32 %v9483, 1.0
      %v9517 = vadd.f32 %v9485, 1.0
      %v9518 = vadd.f32 %v9487, 1.0
      %v9519 = vadd.f32 %v9489, 1.0
      %v9520 = vadd.f32 %v9491, 1.0
      %v9521 = vadd.f32 %v9493, 1.0
      %v9522 = vrcp.pop %v9494
      %v9523 = vmul.f32 1.0, %v9522
      %v9524 = vrcp.pop %v9495
      %v9525 = vmul.f32 1.0, %v9524
      %v9526 = vrcp.pop %v9496
      %v9527 = vmul.f32 1.0, %v9526
      %v9528 = vrcp.pop %v9497
      %v9529 = vmul.f32 1.0, %v9528
      %v9530 = vrcp.pop %v9498
      %v9531 = vmul.f32 1.0, %v9530
      %v9532 = vrcp.pop %v9499
      %v9533 = vmul.f32 1.0, %v9532
      %v9534 = vrcp.pop %v9500
      %v9535 = vmul.f32 1.0, %v9534
      %v9536 = vrcp.pop %v9501
      %v9537 = vmul.f32 1.0, %v9536
      %v9538 = vrcp.pop %v9502
      %v9539 = vmul.f32 1.0, %v9538
      %v9540 = vrcp.pop %v9503
      %v9541 = vmul.f32 1.0, %v9540
      %v9542 = vrcp.pop %v9504
      %v9543 = vmul.f32 1.0, %v9542
      %v9544 = vrcp.pop %v9505
      %v9545 = vmul.f32 1.0, %v9544
      %v9546 = vrcp.pop %v9506
      %v9547 = vmul.f32 1.0, %v9546
      %v9548 = vrcp.pop %v9507
      %v9549 = vmul.f32 1.0, %v9548
      %v9550 = vrcp.pop %v9508
      %v9551 = vmul.f32 1.0, %v9550
      %v9552 = vrcp.pop %v9509
      %v9553 = vmul.f32 1.0, %v9552
      %v9554 = vrcp.pop %v9510
      %v9555 = vmul.f32 1.0, %v9554
      %v9556 = vrcp.pop %v9511
      %v9557 = vmul.f32 1.0, %v9556
      %v9558 = vrcp.pop %v9512
      %v9559 = vmul.f32 1.0, %v9558
      %v9560 = vrcp.pop %v9513
      %v9561 = vmul.f32 1.0, %v9560
      %v9562 = vrcp.pop %v9514
      %v9563 = vmul.f32 1.0, %v9562
      %v9564 = vrcp.pop %v9515
      %v9565 = vmul.f32 1.0, %v9564
      %v9566 = vrcp.pop %v9516
      %v9567 = vmul.f32 1.0, %v9566
      %v9568 = vrcp.pop %v9517
      %v9569 = vmul.f32 1.0, %v9568
      %v9570 = vrcp.pop %v9518
      %v9571 = vmul.f32 1.0, %v9570
      %v9572 = vrcp.pop %v9519
      %v9573 = vmul.f32 1.0, %v9572
      %v9574 = vrcp.pop %v9520
      %v9575 = vmul.f32 1.0, %v9574
      %v9576 = vrcp.pop %v9521
      %v9577 = vmul.f32 1.0, %v9576
      %v9578 = vmul.f32 %v9272, %v9523
      %v9579 = vmul.f32 %v9275, %v9525
      %v9580 = vmul.f32 %v9280, %v9527
      %v9581 = vmul.f32 %v9283, %v9529
      %v9582 = vmul.f32 %v9288, %v9531
      %v9583 = vmul.f32 %v9291, %v9533
      %v9584 = vmul.f32 %v9296, %v9535
      %v9585 = vmul.f32 %v9299, %v9537
      %v9586 = vmul.f32 %v9304, %v9539
      %v9587 = vmul.f32 %v9307, %v9541
      %v9588 = vmul.f32 %v9312, %v9543
      %v9589 = vmul.f32 %v9315, %v9545
      %v9590 = vmul.f32 %v9320, %v9547
      %v9591 = vmul.f32 %v9323, %v9549
      %v9592 = vmul.f32 %v9328, %v9551
      %v9593 = vmul.f32 %v9331, %v9553
      %v9594 = vmul.f32 %v9336, %v9555
      %v9595 = vmul.f32 %v9339, %v9557
      %v9596 = vmul.f32 %v9344, %v9559
      %v9597 = vmul.f32 %v9347, %v9561
      %v9598 = vmul.f32 %v9352, %v9563
      %v9599 = vmul.f32 %v9355, %v9565
      %v9600 = vmul.f32 %v9360, %v9567
      %v9601 = vmul.f32 %v9363, %v9569
      %v9602 = vmul.f32 %v9368, %v9571
      %v9603 = vmul.f32 %v9371, %v9573
      %v9604 = vmul.f32 %v9376, %v9575
      %v9605 = vmul.f32 %v9379, %v9577
      %v9606 = vpack.c.bf16 %v9579, %v9578
      %v9607 = vpack.c.bf16 %v9581, %v9580
      %v9608 = vpack.c.bf16 %v9583, %v9582
      %v9609 = vpack.c.bf16 %v9585, %v9584
      %v9610 = vpack.c.bf16 %v9587, %v9586
      %v9611 = vpack.c.bf16 %v9589, %v9588
      %v9612 = vpack.c.bf16 %v9591, %v9590
      %v9613 = vpack.c.bf16 %v9593, %v9592
      %v9614 = vpack.c.bf16 %v9595, %v9594
      %v9615 = vpack.c.bf16 %v9597, %v9596
      %v9616 = vpack.c.bf16 %v9599, %v9598
      %v9617 = vpack.c.bf16 %v9601, %v9600
      %v9618 = vpack.c.bf16 %v9603, %v9602
      %v9619 = vpack.c.bf16 %v9605, %v9604
      %v9620 = vld [vmem:[%s436] sm:$0xf]
      %v9621 = vld [vmem:[%s436 + $0x4] sm:$0xf]
      %v9622 = vld [vmem:[%s436 + $0x8] sm:$0xf]
      %v9623 = vld [vmem:[%s436 + $0xc] sm:$0xf]
      %v9624 = vld [vmem:[%s436 + $0x10] sm:$0xf]
      %v9625 = vld [vmem:[%s436 + $0x14] sm:$0xf]
      %v9626 = vld [vmem:[%s436 + $0x18] sm:$0xf]
      %v9627 = vld [vmem:[%s436 + $0x1c] sm:$0xf]
      %v9628 = vlaneseq
      %v9629 = vshrl.u32 %v9628, 7
      %v9630 = vsub.s32 0, %v9629
      %v9631 = vrot.slane %v1196, %v9630
      %v9640 = vunpack.c.l.b16 %v9620
      %v9641 = vunpack.c.l.b16 %v9621
      %v9642 = vunpack.c.l.b16 %v9622
      %v9643 = vunpack.c.l.b16 %v9623
      %v9644 = vunpack.c.l.b16 %v9624
      %v9645 = vunpack.c.l.b16 %v9625
      %v9646 = vunpack.c.l.b16 %v9626
      %v9647 = vunpack.c.l.b16 %v9627
      %v9648 = vpack.c.b16 %v9641, %v9640
      %v9649 = vpack.c.b16 %v9643, %v9642
      %v9650 = vpack.c.b16 %v9645, %v9644
      %v9651 = vpack.c.b16 %v9647, %v9646
      %vm9656 = vcmask 523264
      %v9658 = vsel %vm9656, %v9606, 0
      %v9661 = vsel %vm9656, %v9607, 0
      %v9664 = vsel %vm9656, %v9608, 0
      %v9667 = vsel %vm9656, %v9609, 0
      %v9670 = vsel %vm9656, %v9610, 0
      %v9673 = vsel %vm9656, %v9611, 0
      %v9676 = vsel %vm9656, %v9612, 0
      %v9679 = vsel %vm9656, %v9613, 0
      %v9682 = vsel %vm9656, %v9614, 0
      %v9685 = vsel %vm9656, %v9615, 0
      %v9688 = vsel %vm9656, %v9616, 0
      %v9691 = vsel %vm9656, %v9617, 0
      %v9694 = vsel %vm9656, %v9618, 0
      %v9697 = vsel %vm9656, %v9619, 0
      %9699 = vmatprep.subr.bf16.mxu0 0
      %9700 = vmatpush1.bf16.msra.mxu0 0
      %9701 = vmatprep.subr.bf16.mxu0 0
      %9702 = vmatpush1.bf16.msra.mxu0 0
      %9703 = vmatprep.subr.bf16.mxu0 0
      %9704 = vmatpush1.bf16.msra.mxu0 0
      %9705 = vmatprep.subr.bf16.mxu0 0
      %9706 = vmatpush1.bf16.msra.mxu0 0
      %9707 = vmatprep.subr.bf16.mxu0 0
      %9708 = vmatpush1.bf16.msra.mxu0 %v9651
      %9709 = vmatprep.subr.bf16.mxu0 0
      %9710 = vmatpush1.bf16.msra.mxu0 %v9650
      %9711 = vmatprep.subr.bf16.mxu0 0
      %9712 = vmatpush1.bf16.msra.mxu0 %v9649
      %9713 = vmatprep.subr.bf16.mxu0 0
      %9714 = vmatpush1.bf16.msra.mxu0 %v9648
      %9715 = vmatprep.subr.bf16.mxu0 0
      %9716 = vmatpush2.bf16.msra.mxu0 0
      %9717 = vmatprep.subr.bf16.mxu0 0
      %9718 = vmatpush2.bf16.msra.mxu0 0
      %9719 = vmatprep.subr.bf16.mxu0 0
      %9720 = vmatpush2.bf16.msra.mxu0 0
      %9721 = vmatprep.subr.bf16.mxu0 0
      %9722 = vmatpush2.bf16.msra.mxu0 0
      %9723 = vmatprep.subr.bf16.mxu0 0
      %9724 = vmatpush2.bf16.msra.mxu0 0
      %9725 = vmatprep.subr.bf16.mxu0 0
      %9726 = vmatpush2.bf16.msra.mxu0 0
      %9727 = vmatprep.subr.bf16.mxu0 0
      %9728 = vmatpush2.bf16.msra.mxu0 0
      %9729 = vmatprep.subr.bf16.mxu0 0
      %9730 = vmatpush2.bf16.msra.mxu0 0
      %9731 = vmatprep.mubr.bf16.mxu0 0
      %9732 = vmatmul.mubr.bf16.gmra.mxu0 %v9658
      %v9733 = vpop.f32.mrf.mxu0
      %v9734 = vadd.f32 %v9631, %v9733
      %v9735 = vpop.f32.mrf.mxu0
      %v9736 = vpop.f32.mrf.mxu0
      %v9737 = vadd.f32 %v9631, %v9736
      %v9738 = vpop.f32.mrf.mxu0
      %9739 = vmatprep.mubr.bf16.mxu0 0
      %9740 = vmatmul.mubr.bf16.gmra.mxu0 %v9661
      %v9741 = vpop.f32.mrf.mxu0
      %v9742 = vadd.f32 %v9631, %v9741
      %v9743 = vpop.f32.mrf.mxu0
      %v9744 = vpop.f32.mrf.mxu0
      %v9745 = vadd.f32 %v9631, %v9744
      %v9746 = vpop.f32.mrf.mxu0
      %9747 = vmatprep.mubr.bf16.mxu0 0
      %9748 = vmatmul.mubr.bf16.gmra.mxu0 %v9664
      %v9749 = vpop.f32.mrf.mxu0
      %v9750 = vadd.f32 %v9631, %v9749
      %v9751 = vpop.f32.mrf.mxu0
      %v9752 = vpop.f32.mrf.mxu0
      %v9753 = vadd.f32 %v9631, %v9752
      %v9754 = vpop.f32.mrf.mxu0
      %9755 = vmatprep.mubr.bf16.mxu0 0
      %9756 = vmatmul.mubr.bf16.gmra.mxu0 %v9667
      %v9757 = vpop.f32.mrf.mxu0
      %v9758 = vadd.f32 %v9631, %v9757
      %v9759 = vpop.f32.mrf.mxu0
      %v9760 = vpop.f32.mrf.mxu0
      %v9761 = vadd.f32 %v9631, %v9760
      %v9762 = vpop.f32.mrf.mxu0
      %9763 = vmatprep.mubr.bf16.mxu0 0
      %9764 = vmatmul.mubr.bf16.gmra.mxu0 %v9670
      %v9765 = vpop.f32.mrf.mxu0
      %v9766 = vadd.f32 %v9631, %v9765
      %v9767 = vpop.f32.mrf.mxu0
      %v9768 = vpop.f32.mrf.mxu0
      %v9769 = vadd.f32 %v9631, %v9768
      %v9770 = vpop.f32.mrf.mxu0
      %9771 = vmatprep.mubr.bf16.mxu0 0
      %9772 = vmatmul.mubr.bf16.gmra.mxu0 %v9673
      %v9773 = vpop.f32.mrf.mxu0
      %v9774 = vadd.f32 %v9631, %v9773
      %v9775 = vpop.f32.mrf.mxu0
      %v9776 = vpop.f32.mrf.mxu0
      %v9777 = vadd.f32 %v9631, %v9776
      %v9778 = vpop.f32.mrf.mxu0
      %9779 = vmatprep.mubr.bf16.mxu0 0
      %9780 = vmatmul.mubr.bf16.gmra.mxu0 %v9676
      %v9781 = vpop.f32.mrf.mxu0
      %v9782 = vadd.f32 %v9631, %v9781
      %v9783 = vpop.f32.mrf.mxu0
      %v9784 = vpop.f32.mrf.mxu0
      %v9785 = vadd.f32 %v9631, %v9784
      %v9786 = vpop.f32.mrf.mxu0
      %9787 = vmatprep.mubr.bf16.mxu0 0
      %9788 = vmatmul.mubr.bf16.gmra.mxu0 %v9679
      %v9789 = vpop.f32.mrf.mxu0
      %v9790 = vadd.f32 %v9631, %v9789
      %v9791 = vpop.f32.mrf.mxu0
      %v9792 = vpop.f32.mrf.mxu0
      %v9793 = vadd.f32 %v9631, %v9792
      %v9794 = vpop.f32.mrf.mxu0
      %9795 = vmatprep.mubr.bf16.mxu0 0
      %9796 = vmatmul.mubr.bf16.gmra.mxu0 %v9682
      %v9797 = vpop.f32.mrf.mxu0
      %v9798 = vadd.f32 %v9631, %v9797
      %v9799 = vpop.f32.mrf.mxu0
      %v9800 = vpop.f32.mrf.mxu0
      %v9801 = vadd.f32 %v9631, %v9800
      %v9802 = vpop.f32.mrf.mxu0
      %9803 = vmatprep.mubr.bf16.mxu0 0
      %9804 = vmatmul.mubr.bf16.gmra.mxu0 %v9685
      %v9805 = vpop.f32.mrf.mxu0
      %v9806 = vadd.f32 %v9631, %v9805
      %v9807 = vpop.f32.mrf.mxu0
      %v9808 = vpop.f32.mrf.mxu0
      %v9809 = vadd.f32 %v9631, %v9808
      %v9810 = vpop.f32.mrf.mxu0
      %9811 = vmatprep.mubr.bf16.mxu0 0
      %9812 = vmatmul.mubr.bf16.gmra.mxu0 %v9688
      %v9813 = vpop.f32.mrf.mxu0
      %v9814 = vadd.f32 %v9631, %v9813
      %v9815 = vpop.f32.mrf.mxu0
      %v9816 = vpop.f32.mrf.mxu0
      %v9817 = vadd.f32 %v9631, %v9816
      %v9818 = vpop.f32.mrf.mxu0
      %9819 = vmatprep.mubr.bf16.mxu0 0
      %9820 = vmatmul.mubr.bf16.gmra.mxu0 %v9691
      %v9821 = vpop.f32.mrf.mxu0
      %v9822 = vadd.f32 %v9631, %v9821
      %v9823 = vpop.f32.mrf.mxu0
      %v9824 = vpop.f32.mrf.mxu0
      %v9825 = vadd.f32 %v9631, %v9824
      %v9826 = vpop.f32.mrf.mxu0
      %9827 = vmatprep.mubr.bf16.mxu0 0
      %9828 = vmatmul.mubr.bf16.gmra.mxu0 %v9694
      %v9829 = vpop.f32.mrf.mxu0
      %v9830 = vadd.f32 %v9631, %v9829
      %v9831 = vpop.f32.mrf.mxu0
      %v9832 = vpop.f32.mrf.mxu0
      %v9833 = vadd.f32 %v9631, %v9832
      %v9834 = vpop.f32.mrf.mxu0
      %9835 = vmatprep.mubr.bf16.mxu0 0
      %9836 = vmatmul.mubr.bf16.gmra.mxu0 %v9697
      %v9837 = vpop.f32.mrf.mxu0
      %v9838 = vadd.f32 %v9631, %v9837
      %v9839 = vpop.f32.mrf.mxu0
      %v9840 = vpop.f32.mrf.mxu0
      %v9841 = vadd.f32 %v9631, %v9840
      %v9842 = vpop.f32.mrf.mxu0
      %9843 = vdwg.mxu0
      %v9844 = vadd.f32 %v8705, %v9734
      %v9845 = vadd.f32 %v8706, %v9737
      %v9846 = vadd.f32 %v8707, %v9742
      %v9847 = vadd.f32 %v8708, %v9745
      %v9848 = vadd.f32 %v8709, %v9750
      %v9849 = vadd.f32 %v8710, %v9753
      %v9850 = vadd.f32 %v8711, %v9758
      %v9851 = vadd.f32 %v8712, %v9761
      %v9852 = vadd.f32 %v8713, %v9766
      %v9853 = vadd.f32 %v8714, %v9769
      %v9854 = vadd.f32 %v8715, %v9774
      %v9855 = vadd.f32 %v8716, %v9777
      %v9856 = vadd.f32 %v8717, %v9782
      %v9857 = vadd.f32 %v8718, %v9785
      %v9858 = vadd.f32 %v8719, %v9790
      %v9859 = vadd.f32 %v8720, %v9793
      %v9860 = vadd.f32 %v8721, %v9798
      %v9861 = vadd.f32 %v8722, %v9801
      %v9862 = vadd.f32 %v8723, %v9806
      %v9863 = vadd.f32 %v8724, %v9809
      %v9864 = vadd.f32 %v8725, %v9814
      %v9865 = vadd.f32 %v8726, %v9817
      %v9866 = vadd.f32 %v8727, %v9822
      %v9867 = vadd.f32 %v8728, %v9825
      %v9868 = vadd.f32 %v8729, %v9830
      %v9869 = vadd.f32 %v8730, %v9833
      %v9870 = vadd.f32 %v8731, %v9838
      %v9871 = vadd.f32 %v8732, %v9841
      %9872 = vst.msk [vmem:[#allocation2] sm:$0xff] %vm1201, %v9844
      %9873 = vst.msk [vmem:[#allocation2 + $0x8] sm:$0xff] %vm1201, %v9845
      %9874 = vst.msk [vmem:[#allocation2 + $0x10] sm:$0xff] %vm1201, %v9846
      %9875 = vst.msk [vmem:[#allocation2 + $0x18] sm:$0xff] %vm1201, %v9847
      %9876 = vst.msk [vmem:[#allocation2 + $0x20] sm:$0xff] %vm1201, %v9848
      %9877 = vst.msk [vmem:[#allocation2 + $0x28] sm:$0xff] %vm1201, %v9849
      %9878 = vst.msk [vmem:[#allocation2 + $0x30] sm:$0xff] %vm1201, %v9850
      %9879 = vst.msk [vmem:[#allocation2 + $0x38] sm:$0xff] %vm1201, %v9851
      %9880 = vst.msk [vmem:[#allocation2 + $0x40] sm:$0xff] %vm1201, %v9852
      %9881 = vst.msk [vmem:[#allocation2 + $0x48] sm:$0xff] %vm1201, %v9853
      %9882 = vst.msk [vmem:[#allocation2 + $0x50] sm:$0xff] %vm1201, %v9854
      %9883 = vst.msk [vmem:[#allocation2 + $0x58] sm:$0xff] %vm1201, %v9855
      %9884 = vst.msk [vmem:[#allocation2 + $0x60] sm:$0xff] %vm1201, %v9856
      %9885 = vst.msk [vmem:[#allocation2 + $0x68] sm:$0xff] %vm1201, %v9857
      %9886 = vst.msk [vmem:[#allocation2 + $0x70] sm:$0xff] %vm1201, %v9858
      %9887 = vst.msk [vmem:[#allocation2 + $0x78] sm:$0xff] %vm1201, %v9859
      %9888 = vst.msk [vmem:[#allocation2 + $0x80] sm:$0xff] %vm1201, %v9860
      %9889 = vst.msk [vmem:[#allocation2 + $0x88] sm:$0xff] %vm1201, %v9861
      %9890 = vst.msk [vmem:[#allocation2 + $0x90] sm:$0xff] %vm1201, %v9862
      %9891 = vst.msk [vmem:[#allocation2 + $0x98] sm:$0xff] %vm1201, %v9863
      %9892 = vst.msk [vmem:[#allocation2 + $0xa0] sm:$0xff] %vm1201, %v9864
      %9893 = vst.msk [vmem:[#allocation2 + $0xa8] sm:$0xff] %vm1201, %v9865
      %9894 = vst.msk [vmem:[#allocation2 + $0xb0] sm:$0xff] %vm1201, %v9866
      %9895 = vst.msk [vmem:[#allocation2 + $0xb8] sm:$0xff] %vm1201, %v9867
      %9896 = vst.msk [vmem:[#allocation2 + $0xc0] sm:$0xff] %vm1201, %v9868
      %9897 = vst.msk [vmem:[#allocation2 + $0xc8] sm:$0xff] %vm1201, %v9869
      %9898 = vst.msk [vmem:[#allocation2 + $0xd0] sm:$0xff] %vm1201, %v9870
      %9899 = vst.msk [vmem:[#allocation2 + $0xd8] sm:$0xff] %vm1201, %v9871
      %p9900 = scmp.eq.s32.totalorder %s25, 1
      // Predicated region
      $region61: #{tower_forward.1} parent=55 // pred_check
        %p9901 = pneg %p9900
      $region62: #{tower_forward.1} parent=55 // pred_check_branch
        %9903 = sbr.rel (%p9901) target = $region64
      $region63: #{tower_forward.1} parent=55 // pred_region
        %9904 = vst.msk [vmem:[%s446] sm:$0xff] %vm1201, %v9844
        %9905 = vst.msk [vmem:[%s446 + $0x8] sm:$0xff] %vm1201, %v9845
        %9906 = vst.msk [vmem:[%s446 + $0x10] sm:$0xff] %vm1201, %v9846
        %9907 = vst.msk [vmem:[%s446 + $0x18] sm:$0xff] %vm1201, %v9847
        %9908 = vst.msk [vmem:[%s446 + $0x20] sm:$0xff] %vm1201, %v9848
        %9909 = vst.msk [vmem:[%s446 + $0x28] sm:$0xff] %vm1201, %v9849
        %9910 = vst.msk [vmem:[%s446 + $0x30] sm:$0xff] %vm1201, %v9850
        %9911 = vst.msk [vmem:[%s446 + $0x38] sm:$0xff] %vm1201, %v9851
        %9912 = vst.msk [vmem:[%s446 + $0x40] sm:$0xff] %vm1201, %v9852
        %9913 = vst.msk [vmem:[%s446 + $0x48] sm:$0xff] %vm1201, %v9853
        %9914 = vst.msk [vmem:[%s446 + $0x50] sm:$0xff] %vm1201, %v9854
        %9915 = vst.msk [vmem:[%s446 + $0x58] sm:$0xff] %vm1201, %v9855
        %9916 = vst.msk [vmem:[%s446 + $0x60] sm:$0xff] %vm1201, %v9856
        %9917 = vst.msk [vmem:[%s446 + $0x68] sm:$0xff] %vm1201, %v9857
        %9918 = vst.msk [vmem:[%s446 + $0x70] sm:$0xff] %vm1201, %v9858
        %9919 = vst.msk [vmem:[%s446 + $0x78] sm:$0xff] %vm1201, %v9859
        %9920 = vst.msk [vmem:[%s446 + $0x80] sm:$0xff] %vm1201, %v9860
        %9921 = vst.msk [vmem:[%s446 + $0x88] sm:$0xff] %vm1201, %v9861
        %9922 = vst.msk [vmem:[%s446 + $0x90] sm:$0xff] %vm1201, %v9862
        %9923 = vst.msk [vmem:[%s446 + $0x98] sm:$0xff] %vm1201, %v9863
        %9924 = vst.msk [vmem:[%s446 + $0xa0] sm:$0xff] %vm1201, %v9864
        %9925 = vst.msk [vmem:[%s446 + $0xa8] sm:$0xff] %vm1201, %v9865
        %9926 = vst.msk [vmem:[%s446 + $0xb0] sm:$0xff] %vm1201, %v9866
        %9927 = vst.msk [vmem:[%s446 + $0xb8] sm:$0xff] %vm1201, %v9867
        %9928 = vst.msk [vmem:[%s446 + $0xc0] sm:$0xff] %vm1201, %v9868
        %9929 = vst.msk [vmem:[%s446 + $0xc8] sm:$0xff] %vm1201, %v9869
        %9930 = vst.msk [vmem:[%s446 + $0xd0] sm:$0xff] %vm1201, %v9870
        %9931 = vst.msk [vmem:[%s446 + $0xd8] sm:$0xff] %vm1201, %v9871
      $region64: #{tower_forward.1} parent=55 // pred_fallthru
        _
      %s9932 = smul.u32 28, %s24
      %p9933 = scmp.lt.s32.totalorder %s9932, 27
      %s9934 = scalar_select %p9933, %s9932, 27
      %s9935 = smul.addr %s9934, 8
      %s9936 = scalar_lea.vmem %s9, %s9935
      // Predicated region
      $region65: #{tower_forward.1} parent=55 // pred_check
        %p9937 = pneg %p269
      $region66: #{tower_forward.1} parent=55 // pred_check_branch
        %9939 = sbr.rel (%p9937) target = $region68
      $region67: #{tower_forward.1} parent=55 // pred_region
        %s9940 = smul.u32 28, %s24
      $region68: #{tower_forward.1} parent=55 // pred_fallthru
        _
      // Predicated region
      $region69: #{tower_forward.1} parent=55 // pred_check
        %p9941 = pneg %p269
      $region70: #{tower_forward.1} parent=55 // pred_check_branch
        %9943 = sbr.rel (%p9941) target = $region72
      $region71: #{tower_forward.1} parent=55 // pred_region
        %s9944 = smul.u32 28, %s24
        %p9945 = scmp.lt.s32.totalorder %s9944, 27
        %s9946 = scalar_select %p9945, %s9944, 27
        %s9947 = smul.addr %s9946, 8
        %s9948 = scalar_lea.vmem %s9, %s9947
      $region72: #{tower_forward.1} parent=55 // pred_fallthru
        _
    $region56: #{tower_forward.1} parent=5 // pred_fallthru
      _
    %p9949 = scmp.le.s32.totalorder 2, %s15
    // Predicated region
    $region73: #{tower_forward.1} parent=5 // pred_check
      %p9950 = pneg %p9949
    $region74: #{tower_forward.1} parent=5 // pred_check_branch
      %9952 = sbr.rel (%p9950) target = $region76
    $region75: #{tower_forward.1} parent=5 // pred_region
      %s9953 = ssub.s32 %s15, 2
    $region76: #{tower_forward.1} parent=5 // pred_fallthru
      _
  $region6: #{tower_forward.1} parent=0 // loop_footer
    %s19 = sadd.s32 1, %s15
  $region7: #{tower_forward.1} parent=0 // loop_footer_branch
    %14 = sbr.rel target = $region3
  $region8: #{tower_forward.1} parent=0 // loop_exit
    _

</llo_original>
